<compile_context>
chip_gen: v7x
topology: tpu7x:2x2x1
jax: 0.10.0
libtpu: 0.0.40
codegen_flags: <defaults>
</compile_context>

<pallas_src>
import functools

import numpy as np

import jax
import jax.numpy as jnp
from jax import lax
from jax.experimental import pallas as pl
from jax.experimental.pallas import tpu as pltpu


# Explicit VMEM budget: actual per-step usage is <~15 MiB for every kernel below,
# so 48 MiB is safe headroom on v5e/v6e (128 MiB physical) and v7x (64 MiB).
_VMEM_LIMIT = 48 * 1024 * 1024


def _largest_divisor_leq(n, k):
    for d in range(min(n, k), 0, -1):
        if n % d == 0:
            return d
    return 1


# ----------------------------------------------------------------------------
# Kernel 1: fused encoder  (Conv 3->48 k2s2 + ReLU + Conv 48->96 k2s2 + ReLU)
# ----------------------------------------------------------------------------
def _encoder_kernel(x_ref, a_ref, bmat_ref, b1_ref, b2_ref, o_ref):
    # x_ref:    (tm, 48)   bf16 super-patch rows (one 4x4x3 input block per row)
    # a_ref:    (48, 192)  bf16 conv1 weights embedded for the 4 local pixels
    # bmat_ref: (192, 96)  bf16 conv2 weights (2x2x48 stacked along K)
    h = jnp.dot(x_ref[...], a_ref[...], preferred_element_type=jnp.float32)
    h = jnp.maximum(h + b1_ref[...], 0.0).astype(jnp.bfloat16)          # (tm, 192)
    o = jnp.dot(h, bmat_ref[...], preferred_element_type=jnp.float32)
    o_ref[...] = jnp.maximum(o + b2_ref[...], 0.0).astype(o_ref.dtype)  # (tm, 96)


def fused_encoder(x_nchw, w1, b1, w2, b2, *, tm=4096):
    """(N,3,H,W) f32 -> (N, H//4, W//4, 96) bf16; both strided convs in one kernel."""
    n, c, h, w = x_nchw.shape
    assert c == 3 and h % 4 == 0 and w % 4 == 0
    hq, wq = h // 4, w // 4
    m = n * hq * wq

    # Super-patch matrix: one row per conv2 output pixel holding the 4x4x3 input
    # block producing it.  Pure permutation (bf16 cast fused into the same pass).
    xs = (x_nchw.astype(jnp.bfloat16)
                .reshape(n, 3, hq, 4, wq, 4)
                .transpose(0, 2, 4, 3, 5, 1)
                .reshape(m, 48))

    # Embed conv1 weights: A[r4*12 + c4*3 + ch, (a*2+b)*48 + co]
    a6 = jnp.zeros((4, 4, 3, 2, 2, 48), jnp.float32)
    for ai in range(2):
        for bi in range(2):
            a6 = a6.at[2 * ai:2 * ai + 2, 2 * bi:2 * bi + 2, :, ai, bi, :].set(w1)
    a_mat = a6.reshape(48, 192).astype(jnp.bfloat16)
    b_mat = w2.reshape(192, 96).astype(jnp.bfloat16)      # (a,b,cin) stacked along K
    b1t = jnp.tile(b1, 4).reshape(1, 192).astype(jnp.float32)
    b2r = b2.reshape(1, 96).astype(jnp.float32)

    tm_eff = min(tm, m)
    out = pl.pallas_call(
        _encoder_kernel,
        out_shape=jax.ShapeDtypeStruct((m, 96), jnp.bfloat16),
        grid=(pl.cdiv(m, tm_eff),),
        in_specs=[
            pl.BlockSpec((tm_eff, 48), lambda i: (i, 0)),
            pl.BlockSpec((48, 192), lambda i: (0, 0)),
            pl.BlockSpec((192, 96), lambda i: (0, 0)),
            pl.BlockSpec((1, 192), lambda i: (0, 0)),
            pl.BlockSpec((1, 96), lambda i: (0, 0)),
        ],
        out_specs=pl.BlockSpec((tm_eff, 96), lambda i: (i, 0)),
        compiler_params=pltpu.CompilerParams(
            dimension_semantics=("parallel",),
            vmem_limit_bytes=_VMEM_LIMIT),
    )(xs, a_mat, b_mat, b1t, b2r)
    return out.reshape(n, hq, wq, 96)


# ----------------------------------------------------------------------------
# Kernel 2/3: Upsampling layer  (NN-upsample x2 -> conv3x3 pad1 -> activation)
# Row-matmul formulation: one deep-K, wide-N matmul per (row parity, vertical tap).
# ----------------------------------------------------------------------------
def _upsample_row_kernel(x_ref, w_ref, b_ref, o_ref, p_ref, *, activation):
    # x_ref: (nb, hs, ws*cin)           bf16 source rows, channels-last flattened W
    # w_ref: (2, 2, ws*cin, ws*2*cout)  bf16 banded sub-pixel weights [row-par, v-tap]
    # b_ref: (1, ws*2*cout)             f32 bias tiled over (out col, col parity)
    # o_ref: (nb, hs, 2, ws*2*cout)     row-parity-split output (row-major == NHWC x2)
    # p_ref: (nb, hs+2, ws*cin)         VMEM scratch: source with 1-row vertical halo
    nb, hs, wcin = x_ref.shape
    lanes = o_ref.shape[-1]

    # Vertical halo in VMEM (two zero rows).  The horizontal halo is folded into
    # the banded weight, so no padded tensor ever exists in HBM.
    zrow = jnp.zeros((nb, 1, wcin), x_ref.dtype)
    p_ref[:, 0:1, :] = zrow
    p_ref[:, hs + 1:hs + 2, :] = zrow
    p_ref[:, 1:hs + 1, :] = x_ref[...]

    bias = b_ref[...]
    for a in range(2):                       # output row parity
        acc = jnp.zeros((nb * hs, lanes), jnp.float32)
        for u in range(2):                   # vertical source tap
            lhs = p_ref[:, a + u:a + u + hs, :].reshape(nb * hs, wcin)
            acc = acc + jnp.dot(lhs, w_ref[a, u],
                                preferred_element_type=jnp.float32)
        acc = acc + bias
        if activation == "relu":
            acc = jnp.maximum(acc, 0.0)
        else:                                # sigmoid
            acc = jax.nn.sigmoid(acc)
        o_ref[:, :, a:a + 1, :] = acc.astype(o_ref.dtype).reshape(nb, hs, 1, lanes)


def _banded_subpixel_weights(w, ws):
    """w: (3,3,cin,cout) HWIO kernel of NN-upsample(x2) . conv3x3(pad1).

    Returns W of shape (2, 2, ws*cin, ws*2*cout) such that, with each source row
    flattened as a (col, chan) vector, the full-resolution output row of parity
    `a` equals  sum_u  padded_src_row[i + a + u - 1] @ W[a, u]  (+ bias), with
    output columns ordered (out col j, col parity b, out chan).
    """
    # R[p, t, d] = 1 iff 3x3-kernel index d hits sub-pixel tap t of output parity p.
    R = np.zeros((2, 2, 3), np.float32)
    for p in range(2):
        for d in range(3):
            R[p, 1 + (p + d - 1) // 2 - p, d] = 1.0
    # Band placement: source column s feeds (out col j, col parity bp, h-tap v)
    # iff s == j + bp + v - 1; out-of-range s dropped == horizontal zero padding.
    M = np.zeros((2, 2, ws, ws), np.float32)
    for bp in range(2):
        for v in range(2):
            for j in range(ws):
                s = j + bp + v - 1
                if 0 <= s < ws:
                    M[bp, v, s, j] = 1.0
    cin, cout = w.shape[2], w.shape[3]
    weff = jnp.einsum("aud,bve,decf->abuvcf", R, R, w)    # (2,2,2,2,cin,cout)
    w4 = jnp.einsum("bvsj,abuvcf->auscjbf", M, weff)      # (2,2,ws,cin,ws,2,cout)
    return w4.reshape(2, 2, ws * cin, ws * 2 * cout)


def upsample_conv3x3(x_nhwc, w, b, activation, *, max_nb=32):
    """NN-upsample x2 -> conv3x3 (pad 1) -> activation, as one Pallas kernel.

    Returns (n, hs, 2, ws*2*cout) bf16 whose row-major layout is bit-identical to
    the interleaved NHWC result (n, 2*hs, 2*ws, cout); callers reshape for free.
    """
    n, hs, ws, cin = x_nhwc.shape
    cout = w.shape[-1]
    lanes = ws * 2 * cout

    w4 = _banded_subpixel_weights(w, ws).astype(jnp.bfloat16)
    b4 = jnp.tile(b, ws * 2).reshape(1, lanes).astype(jnp.float32)
    x2 = x_nhwc.astype(jnp.bfloat16).reshape(n, hs, ws * cin)   # metadata-only

    nb = _largest_divisor_leq(n, max_nb)
    out = pl.pallas_call(
        functools.partial(_upsample_row_kernel, activation=activation),
        out_shape=jax.ShapeDtypeStruct((n, hs, 2, lanes), jnp.bfloat16),
        grid=(n // nb,),
        in_specs=[
            pl.BlockSpec((nb, hs, ws * cin), lambda i: (i, 0, 0)),
            pl.BlockSpec((2, 2, ws * cin, lanes), lambda i: (0, 0, 0, 0)),
            pl.BlockSpec((1, lanes), lambda i: (0, 0)),
        ],
        out_specs=pl.BlockSpec((nb, hs, 2, lanes), lambda i: (i, 0, 0, 0)),
        scratch_shapes=[pltpu.VMEM((nb, hs + 2, ws * cin), jnp.bfloat16)],
        compiler_params=pltpu.CompilerParams(
            dimension_semantics=("parallel",),
            vmem_limit_bytes=_VMEM_LIMIT),
    )(x2, w4, b4)
    return out


# ----------------------------------------------------------------------------
# Parameters (deterministic synthetic init, PyTorch-style U(-1/sqrt(fan), +))
# ----------------------------------------------------------------------------
def init_params(key):
    def conv_init(k, kh, kw, cin, cout):
        k1, k2 = jax.random.split(k)
        bound = 1.0 / float(jnp.sqrt(cin * kh * kw))
        wgt = jax.random.uniform(k1, (kh, kw, cin, cout), jnp.float32, -bound, bound)
        bia = jax.random.uniform(k2, (cout,), jnp.float32, -bound, bound)
        return wgt, bia

    keys = jax.random.split(key, 4)
    return {
        "conv1": conv_init(keys[0], 2, 2, 3, 48),    # Conv2d(48, 3, 2, 2)
        "conv2": conv_init(keys[1], 2, 2, 48, 96),   # Conv2d(96, 48, 2, 2)
        "up1":   conv_init(keys[2], 3, 3, 96, 48),   # Upsampling(48, 96, 3, 1, 2)
        "up2":   conv_init(keys[3], 3, 3, 48, 3),    # Upsampling(3, 48, 3, 1, 2)
    }


# ----------------------------------------------------------------------------
# Model.forward equivalent (input/output NCHW like the PyTorch reference)
# ----------------------------------------------------------------------------
def forward(params, x_nchw):
    n, _, h, w = x_nchw.shape
    # conv1 + ReLU + conv2 + ReLU, fused (48-channel intermediate never hits HBM)
    f2 = fused_encoder(x_nchw, *params["conv1"], *params["conv2"])   # (n, h/4, w/4, 96)

    # Upsampling(96->48) + ReLU; kernel output layout == interleaved NHWC
    u1 = upsample_conv3x3(f2, *params["up1"], "relu")                # (n, h/4, 2, (w/4)*96)
    u1 = u1.reshape(n, h // 2, w // 2, 48)                           # free (metadata)

    # Upsampling(48->3) + Sigmoid
    u2 = upsample_conv3x3(u1, *params["up2"], "sigmoid")             # (n, h/2, 2, (w/2)*6)
    out_nhwc = u2.reshape(n, h, w, 3)                                # free (metadata)

    # Single XLA pass: NHWC -> NCHW transpose fused with the bf16 -> f32 cast.
    return jnp.transpose(out_nhwc, (0, 3, 1, 2)).astype(jnp.float32)


def predict(params, test_input_nchw):
    """Mirrors Model.predict: scale to [0,1], forward, scale back, clip."""
    out = forward(params, test_input_nchw / 255.0) * 255.0
    return jnp.clip(out, 0.0, 255.0)


# ----------------------------------------------------------------------------
# Pure-JAX reference (for correctness check only)
# ----------------------------------------------------------------------------
def _reference_forward(params, x_nchw):
    def conv(x, wgt, bia, stride, padding):
        y = lax.conv_general_dilated(
            x, wgt, (stride, stride), padding,
            dimension_numbers=("NHWC", "HWIO", "NHWC"))
        return y + bia

    (w1, b1), (w2, b2) = params["conv1"], params["conv2"]
    (w3, b3), (w4, b4) = params["up1"], params["up2"]
    x = jnp.transpose(x_nchw, (0, 2, 3, 1))
    x = jax.nn.relu(conv(x, w1, b1, 2, "VALID"))
    x = jax.nn.relu(conv(x, w2, b2, 2, "VALID"))
    x = jnp.repeat(jnp.repeat(x, 2, axis=1), 2, axis=2)
    x = jax.nn.relu(conv(x, w3, b3, 1, [(1, 1), (1, 1)]))
    x = jnp.repeat(jnp.repeat(x, 2, axis=1), 2, axis=2)
    x = jax.nn.sigmoid(conv(x, w4, b4, 1, [(1, 1), (1, 1)]))
    return jnp.transpose(x, (0, 3, 1, 2))


if __name__ == "__main__":
    key = jax.random.PRNGKey(0)
    kp, kx = jax.random.split(key)
    params = init_params(kp)

    # Small NCHW input; spatial divisible by 4 (two stride-2 convs).
    x = jax.random.uniform(kx, (2, 3, 32, 32), jnp.float32) * 255.0

    out = jax.block_until_ready(jax.jit(forward)(params, x / 255.0))
    assert out.shape == (2, 3, 32, 32)
    assert bool(jnp.all((out >= 0.0) & (out <= 1.0)))        # sigmoid output

    ref = jax.block_until_ready(jax.jit(_reference_forward)(params, x / 255.0))
    max_err = float(jnp.max(jnp.abs(out - ref)))
    assert max_err < 3e-2, f"mismatch vs reference: {max_err}"

    pred = jax.block_until_ready(jax.jit(predict)(params, x))
    assert pred.shape == (2, 3, 32, 32)

    print("KERNEL_OK")
</pallas_src>

<mosaic_0001>
module attributes {stable_mosaic.version = 11 : i64} {
  func.func @_encoder_kernel(%arg0: i32, %arg1: memref<128x48xbf16, #tpu.memory_space<vmem>>, %arg2: memref<48x192xbf16, #tpu.memory_space<vmem>>, %arg3: memref<192x96xbf16, #tpu.memory_space<vmem>>, %arg4: memref<1x192xf32, #tpu.memory_space<vmem>>, %arg5: memref<1x96xf32, #tpu.memory_space<vmem>>, %arg6: memref<128x96xbf16, #tpu.memory_space<vmem>>) attributes {dimension_semantics = [#tpu.dimension_semantics<parallel>], iteration_bounds = array<i64: 1>, scalar_prefetch = 0 : i64, scratch_operands = 0 : i64, tpu.core_type = #tpu.core_type<tc>, window_params = [{transform_indices = @transform_0, window_bounds = array<i64: 128, 48>}, {pipeline_mode = #tpu.pipeline_mode<synchronous>, transform_indices = @transform_1, window_bounds = array<i64: 48, 192>}, {pipeline_mode = #tpu.pipeline_mode<synchronous>, transform_indices = @transform_2, window_bounds = array<i64: 192, 96>}, {pipeline_mode = #tpu.pipeline_mode<synchronous>, transform_indices = @transform_3, window_bounds = array<i64: 1, 192>}, {pipeline_mode = #tpu.pipeline_mode<synchronous>, transform_indices = @transform_4, window_bounds = array<i64: 1, 96>}, {transform_indices = @transform_5, window_bounds = array<i64: 128, 96>}]} {
    %c0 = arith.constant 0 : index
    %c0_0 = arith.constant 0 : index
    %0 = vector.load %arg1[%c0, %c0_0] : memref<128x48xbf16, #tpu.memory_space<vmem>>, vector<128x48xbf16>
    %c0_1 = arith.constant 0 : index
    %c0_2 = arith.constant 0 : index
    %1 = vector.load %arg2[%c0_1, %c0_2] : memref<48x192xbf16, #tpu.memory_space<vmem>>, vector<48x192xbf16>
    %cst = arith.constant dense<0.000000e+00> : vector<128x192xf32>
    %2 = tpu.matmul %0, %1, %cst {dimension_numbers = #tpu.dot_dimension_numbers<[1], [0], [0], [1], [0, 0, 1, 1], [], []>} : vector<128x48xbf16>, vector<48x192xbf16>, vector<128x192xf32> -> vector<128x192xf32>
    %c0_3 = arith.constant 0 : index
    %c0_4 = arith.constant 0 : index
    %3 = vector.load %arg4[%c0_3, %c0_4] : memref<1x192xf32, #tpu.memory_space<vmem>>, vector<1x192xf32>
    %4 = vector.broadcast %3 : vector<1x192xf32> to vector<128x192xf32>
    %5 = arith.addf %2, %4 : vector<128x192xf32>
    %cst_5 = arith.constant 0.000000e+00 : f32
    %6 = vector.broadcast %cst_5 : f32 to vector<128x192xf32>
    %7 = arith.maximumf %5, %6 : vector<128x192xf32>
    %8 = arith.truncf %7 : vector<128x192xf32> to vector<128x192xbf16>
    %c0_6 = arith.constant 0 : index
    %c0_7 = arith.constant 0 : index
    %9 = vector.load %arg3[%c0_6, %c0_7] : memref<192x96xbf16, #tpu.memory_space<vmem>>, vector<192x96xbf16>
    %cst_8 = arith.constant dense<0.000000e+00> : vector<128x96xf32>
    %10 = tpu.matmul %8, %9, %cst_8 {dimension_numbers = #tpu.dot_dimension_numbers<[1], [0], [0], [1], [0, 0, 1, 1], [], []>} : vector<128x192xbf16>, vector<192x96xbf16>, vector<128x96xf32> -> vector<128x96xf32>
    %c0_9 = arith.constant 0 : index
    %c0_10 = arith.constant 0 : index
    %11 = vector.load %arg5[%c0_9, %c0_10] : memref<1x96xf32, #tpu.memory_space<vmem>>, vector<1x96xf32>
    %12 = vector.broadcast %11 : vector<1x96xf32> to vector<128x96xf32>
    %13 = arith.addf %10, %12 : vector<128x96xf32>
    %cst_11 = arith.constant 0.000000e+00 : f32
    %14 = vector.broadcast %cst_11 : f32 to vector<128x96xf32>
    %15 = arith.maximumf %13, %14 : vector<128x96xf32>
    %16 = arith.truncf %15 : vector<128x96xf32> to vector<128x96xbf16>
    %c0_12 = arith.constant 0 : index
    %c0_13 = arith.constant 0 : index
    %17 = vector.load %arg6[%c0_12, %c0_13] : memref<128x96xbf16, #tpu.memory_space<vmem>>, vector<128x96xbf16>
    tpu.vector_store %arg6[%c0_12, %c0_13], %16 {strides = array<i32>} : memref<128x96xbf16, #tpu.memory_space<vmem>>, vector<128x96xbf16>,
    return
  }
  func.func @transform_0(%arg0: i32) -> (i32, i32) {
    %c0_i32 = arith.constant 0 : i32
    %c0_i32_0 = arith.constant 0 : i32
    return %arg0, %c0_i32 : i32, i32
  }
  func.func @transform_1(%arg0: i32) -> (i32, i32) {
    %c0_i32 = arith.constant 0 : i32
    %c0_i32_0 = arith.constant 0 : i32
    %c0_i32_1 = arith.constant 0 : i32
    return %c0_i32, %c0_i32_0 : i32, i32
  }
  func.func @transform_2(%arg0: i32) -> (i32, i32) {
    %c0_i32 = arith.constant 0 : i32
    %c0_i32_0 = arith.constant 0 : i32
    %c0_i32_1 = arith.constant 0 : i32
    return %c0_i32, %c0_i32_0 : i32, i32
  }
  func.func @transform_3(%arg0: i32) -> (i32, i32) {
    %c0_i32 = arith.constant 0 : i32
    %c0_i32_0 = arith.constant 0 : i32
    %c0_i32_1 = arith.constant 0 : i32
    return %c0_i32, %c0_i32_0 : i32, i32
  }
  func.func @transform_4(%arg0: i32) -> (i32, i32) {
    %c0_i32 = arith.constant 0 : i32
    %c0_i32_0 = arith.constant 0 : i32
    %c0_i32_1 = arith.constant 0 : i32
    return %c0_i32, %c0_i32_0 : i32, i32
  }
  func.func @transform_5(%arg0: i32) -> (i32, i32) {
    %c0_i32 = arith.constant 0 : i32
    %c0_i32_0 = arith.constant 0 : i32
    return %arg0, %c0_i32 : i32, i32
  }
}

module attributes {stable_mosaic.version = 11 : i64} {
  func.func @_upsample_row_kernel(%arg0: i32, %arg1: memref<2x8x768xbf16, #tpu.memory_space<vmem>>, %arg2: memref<2x2x768x768xbf16, #tpu.memory_space<vmem>>, %arg3: memref<1x768xf32, #tpu.memory_space<vmem>>, %arg4: memref<2x8x2x768xbf16, #tpu.memory_space<vmem>>, %arg5: memref<2x10x768xbf16, #tpu.memory_space<vmem>>) attributes {dimension_semantics = [#tpu.dimension_semantics<parallel>], iteration_bounds = array<i64: 1>, scalar_prefetch = 0 : i64, scratch_operands = 1 : i64, tpu.core_type = #tpu.core_type<tc>, window_params = [{transform_indices = @transform_0, window_bounds = array<i64: 2, 8, 768>}, {pipeline_mode = #tpu.pipeline_mode<synchronous>, transform_indices = @transform_1, window_bounds = array<i64: 2, 2, 768, 768>}, {pipeline_mode = #tpu.pipeline_mode<synchronous>, transform_indices = @transform_2, window_bounds = array<i64: 1, 768>}, {transform_indices = @transform_3, window_bounds = array<i64: 2, 8, 2, 768>}]} {
    %cst = arith.constant 0.000000e+00 : bf16
    %0 = vector.broadcast %cst : bf16 to vector<2x1x768xbf16>
    %c0 = arith.constant 0 : index
    %c0_0 = arith.constant 0 : index
    %c0_1 = arith.constant 0 : index
    %1 = vector.load %arg5[%c0, %c0_0, %c0_1] : memref<2x10x768xbf16, #tpu.memory_space<vmem>>, vector<2x1x768xbf16>
    tpu.vector_store %arg5[%c0, %c0_0, %c0_1], %0 {strides = array<i32>} : memref<2x10x768xbf16, #tpu.memory_space<vmem>>, vector<2x1x768xbf16>,
    %c0_2 = arith.constant 0 : index
    %c9 = arith.constant 9 : index
    %c0_3 = arith.constant 0 : index
    %2 = vector.load %arg5[%c0_2, %c9, %c0_3] : memref<2x10x768xbf16, #tpu.memory_space<vmem>>, vector<2x1x768xbf16>
    tpu.vector_store %arg5[%c0_2, %c9, %c0_3], %0 {strides = array<i32>} : memref<2x10x768xbf16, #tpu.memory_space<vmem>>, vector<2x1x768xbf16>,
    %c0_4 = arith.constant 0 : index
    %c0_5 = arith.constant 0 : index
    %c0_6 = arith.constant 0 : index
    %3 = vector.load %arg1[%c0_4, %c0_5, %c0_6] : memref<2x8x768xbf16, #tpu.memory_space<vmem>>, vector<2x8x768xbf16>
    %c0_7 = arith.constant 0 : index
    %c1 = arith.constant 1 : index
    %c0_8 = arith.constant 0 : index
    %4 = vector.load %arg5[%c0_7, %c1, %c0_8] : memref<2x10x768xbf16, #tpu.memory_space<vmem>>, vector<2x8x768xbf16>
    tpu.vector_store %arg5[%c0_7, %c1, %c0_8], %3 {strides = array<i32>} : memref<2x10x768xbf16, #tpu.memory_space<vmem>>, vector<2x8x768xbf16>,
    %c0_9 = arith.constant 0 : index
    %c0_10 = arith.constant 0 : index
    %5 = vector.load %arg3[%c0_9, %c0_10] : memref<1x768xf32, #tpu.memory_space<vmem>>, vector<1x768xf32>
    %cst_11 = arith.constant 0.000000e+00 : f32
    %6 = vector.broadcast %cst_11 : f32 to vector<16x768xf32>
    %c0_12 = arith.constant 0 : index
    %c0_13 = arith.constant 0 : index
    %c0_14 = arith.constant 0 : index
    %7 = vector.load %arg5[%c0_12, %c0_13, %c0_14] : memref<2x10x768xbf16, #tpu.memory_space<vmem>>, vector<2x8x768xbf16>
    %8 = vector.shape_cast %7 : vector<2x8x768xbf16> to vector<16x768xbf16>
    %c0_15 = arith.constant 0 : index
    %c0_16 = arith.constant 0 : index
    %c0_17 = arith.constant 0 : index
    %c0_18 = arith.constant 0 : index
    %9 = vector.load %arg2[%c0_15, %c0_16, %c0_17, %c0_18] : memref<2x2x768x768xbf16, #tpu.memory_space<vmem>>, vector<1x1x768x768xbf16>
    %10 = vector.shape_cast %9 : vector<1x1x768x768xbf16> to vector<768x768xbf16>
    %cst_19 = arith.constant dense<0.000000e+00> : vector<16x768xf32>
    %11 = tpu.matmul %8, %10, %cst_19 {dimension_numbers = #tpu.dot_dimension_numbers<[1], [0], [0], [1], [0, 0, 1, 1], [], []>} : vector<16x768xbf16>, vector<768x768xbf16>, vector<16x768xf32> -> vector<16x768xf32>
    %12 = arith.addf %6, %11 : vector<16x768xf32>
    %c0_20 = arith.constant 0 : index
    %c1_21 = arith.constant 1 : index
    %c0_22 = arith.constant 0 : index
    %13 = vector.load %arg5[%c0_20, %c1_21, %c0_22] : memref<2x10x768xbf16, #tpu.memory_space<vmem>>, vector<2x8x768xbf16>
    %14 = vector.shape_cast %13 : vector<2x8x768xbf16> to vector<16x768xbf16>
    %c0_23 = arith.constant 0 : index
    %c1_24 = arith.constant 1 : index
    %c0_25 = arith.constant 0 : index
    %c0_26 = arith.constant 0 : index
    %15 = vector.load %arg2[%c0_23, %c1_24, %c0_25, %c0_26] : memref<2x2x768x768xbf16, #tpu.memory_space<vmem>>, vector<1x1x768x768xbf16>
    %16 = vector.shape_cast %15 : vector<1x1x768x768xbf16> to vector<768x768xbf16>
    %cst_27 = arith.constant dense<0.000000e+00> : vector<16x768xf32>
    %17 = tpu.matmul %14, %16, %cst_27 {dimension_numbers = #tpu.dot_dimension_numbers<[1], [0], [0], [1], [0, 0, 1, 1], [], []>} : vector<16x768xbf16>, vector<768x768xbf16>, vector<16x768xf32> -> vector<16x768xf32>
    %18 = arith.addf %12, %17 : vector<16x768xf32>
    %19 = vector.broadcast %5 : vector<1x768xf32> to vector<16x768xf32>
    %20 = arith.addf %18, %19 : vector<16x768xf32>
    %cst_28 = arith.constant 0.000000e+00 : f32
    %21 = vector.broadcast %cst_28 : f32 to vector<16x768xf32>
    %22 = arith.maximumf %20, %21 : vector<16x768xf32>
    %23 = arith.truncf %22 : vector<16x768xf32> to vector<16x768xbf16>
    %24 = vector.shape_cast %23 : vector<16x768xbf16> to vector<2x8x1x768xbf16>
    %c0_29 = arith.constant 0 : index
    %c0_30 = arith.constant 0 : index
    %c0_31 = arith.constant 0 : index
    %c0_32 = arith.constant 0 : index
    %25 = vector.load %arg4[%c0_29, %c0_30, %c0_31, %c0_32] : memref<2x8x2x768xbf16, #tpu.memory_space<vmem>>, vector<2x8x1x768xbf16>
    tpu.vector_store %arg4[%c0_29, %c0_30, %c0_31, %c0_32], %24 {strides = array<i32>} : memref<2x8x2x768xbf16, #tpu.memory_space<vmem>>, vector<2x8x1x768xbf16>,
    %cst_33 = arith.constant 0.000000e+00 : f32
    %26 = vector.broadcast %cst_33 : f32 to vector<16x768xf32>
    %c0_34 = arith.constant 0 : index
    %c1_35 = arith.constant 1 : index
    %c0_36 = arith.constant 0 : index
    %27 = vector.load %arg5[%c0_34, %c1_35, %c0_36] : memref<2x10x768xbf16, #tpu.memory_space<vmem>>, vector<2x8x768xbf16>
    %28 = vector.shape_cast %27 : vector<2x8x768xbf16> to vector<16x768xbf16>
    %c1_37 = arith.constant 1 : index
    %c0_38 = arith.constant 0 : index
    %c0_39 = arith.constant 0 : index
    %c0_40 = arith.constant 0 : index
    %29 = vector.load %arg2[%c1_37, %c0_38, %c0_39, %c0_40] : memref<2x2x768x768xbf16, #tpu.memory_space<vmem>>, vector<1x1x768x768xbf16>
    %30 = vector.shape_cast %29 : vector<1x1x768x768xbf16> to vector<768x768xbf16>
    %cst_41 = arith.constant dense<0.000000e+00> : vector<16x768xf32>
    %31 = tpu.matmul %28, %30, %cst_41 {dimension_numbers = #tpu.dot_dimension_numbers<[1], [0], [0], [1], [0, 0, 1, 1], [], []>} : vector<16x768xbf16>, vector<768x768xbf16>, vector<16x768xf32> -> vector<16x768xf32>
    %32 = arith.addf %26, %31 : vector<16x768xf32>
    %c0_42 = arith.constant 0 : index
    %c2 = arith.constant 2 : index
    %c0_43 = arith.constant 0 : index
    %33 = vector.load %arg5[%c0_42, %c2, %c0_43] : memref<2x10x768xbf16, #tpu.memory_space<vmem>>, vector<2x8x768xbf16>
    %34 = vector.shape_cast %33 : vector<2x8x768xbf16> to vector<16x768xbf16>
    %c1_44 = arith.constant 1 : index
    %c1_45 = arith.constant 1 : index
    %c0_46 = arith.constant 0 : index
    %c0_47 = arith.constant 0 : index
    %35 = vector.load %arg2[%c1_44, %c1_45, %c0_46, %c0_47] : memref<2x2x768x768xbf16, #tpu.memory_space<vmem>>, vector<1x1x768x768xbf16>
    %36 = vector.shape_cast %35 : vector<1x1x768x768xbf16> to vector<768x768xbf16>
    %cst_48 = arith.constant dense<0.000000e+00> : vector<16x768xf32>
    %37 = tpu.matmul %34, %36, %cst_48 {dimension_numbers = #tpu.dot_dimension_numbers<[1], [0], [0], [1], [0, 0, 1, 1], [], []>} : vector<16x768xbf16>, vector<768x768xbf16>, vector<16x768xf32> -> vector<16x768xf32>
    %38 = arith.addf %32, %37 : vector<16x768xf32>
    %39 = vector.broadcast %5 : vector<1x768xf32> to vector<16x768xf32>
    %40 = arith.addf %38, %39 : vector<16x768xf32>
    %cst_49 = arith.constant 0.000000e+00 : f32
    %41 = vector.broadcast %cst_49 : f32 to vector<16x768xf32>
    %42 = arith.maximumf %40, %41 : vector<16x768xf32>
    %43 = arith.truncf %42 : vector<16x768xf32> to vector<16x768xbf16>
    %44 = vector.shape_cast %43 : vector<16x768xbf16> to vector<2x8x1x768xbf16>
    %c0_50 = arith.constant 0 : index
    %c0_51 = arith.constant 0 : index
    %c1_52 = arith.constant 1 : index
    %c0_53 = arith.constant 0 : index
    %45 = vector.load %arg4[%c0_50, %c0_51, %c1_52, %c0_53] : memref<2x8x2x768xbf16, #tpu.memory_space<vmem>>, vector<2x8x1x768xbf16>
    tpu.vector_store %arg4[%c0_50, %c0_51, %c1_52, %c0_53], %44 {strides = array<i32>} : memref<2x8x2x768xbf16, #tpu.memory_space<vmem>>, vector<2x8x1x768xbf16>,
    return
  }
  func.func @transform_0(%arg0: i32) -> (i32, i32, i32) {
    %c0_i32 = arith.constant 0 : i32
    %c0_i32_0 = arith.constant 0 : i32
    %c0_i32_1 = arith.constant 0 : i32
    return %arg0, %c0_i32, %c0_i32_0 : i32, i32, i32
  }
  func.func @transform_1(%arg0: i32) -> (i32, i32, i32, i32) {
    %c0_i32 = arith.constant 0 : i32
    %c0_i32_0 = arith.constant 0 : i32
    %c0_i32_1 = arith.constant 0 : i32
    %c0_i32_2 = arith.constant 0 : i32
    %c0_i32_3 = arith.constant 0 : i32
    return %c0_i32, %c0_i32_0, %c0_i32_1, %c0_i32_2 : i32, i32, i32, i32
  }
  func.func @transform_2(%arg0: i32) -> (i32, i32) {
    %c0_i32 = arith.constant 0 : i32
    %c0_i32_0 = arith.constant 0 : i32
    %c0_i32_1 = arith.constant 0 : i32
    return %c0_i32, %c0_i32_0 : i32, i32
  }
  func.func @transform_3(%arg0: i32) -> (i32, i32, i32, i32) {
    %c0_i32 = arith.constant 0 : i32
    %c0_i32_0 = arith.constant 0 : i32
    %c0_i32_1 = arith.constant 0 : i32
    %c0_i32_2 = arith.constant 0 : i32
    return %arg0, %c0_i32, %c0_i32_0, %c0_i32_1 : i32, i32, i32, i32
  }
}

module attributes {stable_mosaic.version = 11 : i64} {
  func.func @_upsample_row_kernel(%arg0: i32, %arg1: memref<2x16x768xbf16, #tpu.memory_space<vmem>>, %arg2: memref<2x2x768x96xbf16, #tpu.memory_space<vmem>>, %arg3: memref<1x96xf32, #tpu.memory_space<vmem>>, %arg4: memref<2x16x2x96xbf16, #tpu.memory_space<vmem>>, %arg5: memref<2x18x768xbf16, #tpu.memory_space<vmem>>) attributes {dimension_semantics = [#tpu.dimension_semantics<parallel>], iteration_bounds = array<i64: 1>, scalar_prefetch = 0 : i64, scratch_operands = 1 : i64, tpu.core_type = #tpu.core_type<tc>, window_params = [{transform_indices = @transform_0, window_bounds = array<i64: 2, 16, 768>}, {pipeline_mode = #tpu.pipeline_mode<synchronous>, transform_indices = @transform_1, window_bounds = array<i64: 2, 2, 768, 96>}, {pipeline_mode = #tpu.pipeline_mode<synchronous>, transform_indices = @transform_2, window_bounds = array<i64: 1, 96>}, {transform_indices = @transform_3, window_bounds = array<i64: 2, 16, 2, 96>}]} {
    %cst = arith.constant 0.000000e+00 : bf16
    %0 = vector.broadcast %cst : bf16 to vector<2x1x768xbf16>
    %c0 = arith.constant 0 : index
    %c0_0 = arith.constant 0 : index
    %c0_1 = arith.constant 0 : index
    %1 = vector.load %arg5[%c0, %c0_0, %c0_1] : memref<2x18x768xbf16, #tpu.memory_space<vmem>>, vector<2x1x768xbf16>
    tpu.vector_store %arg5[%c0, %c0_0, %c0_1], %0 {strides = array<i32>} : memref<2x18x768xbf16, #tpu.memory_space<vmem>>, vector<2x1x768xbf16>,
    %c0_2 = arith.constant 0 : index
    %c17 = arith.constant 17 : index
    %c0_3 = arith.constant 0 : index
    %2 = vector.load %arg5[%c0_2, %c17, %c0_3] : memref<2x18x768xbf16, #tpu.memory_space<vmem>>, vector<2x1x768xbf16>
    tpu.vector_store %arg5[%c0_2, %c17, %c0_3], %0 {strides = array<i32>} : memref<2x18x768xbf16, #tpu.memory_space<vmem>>, vector<2x1x768xbf16>,
    %c0_4 = arith.constant 0 : index
    %c0_5 = arith.constant 0 : index
    %c0_6 = arith.constant 0 : index
    %3 = vector.load %arg1[%c0_4, %c0_5, %c0_6] : memref<2x16x768xbf16, #tpu.memory_space<vmem>>, vector<2x16x768xbf16>
    %c0_7 = arith.constant 0 : index
    %c1 = arith.constant 1 : index
    %c0_8 = arith.constant 0 : index
    %4 = vector.load %arg5[%c0_7, %c1, %c0_8] : memref<2x18x768xbf16, #tpu.memory_space<vmem>>, vector<2x16x768xbf16>
    tpu.vector_store %arg5[%c0_7, %c1, %c0_8], %3 {strides = array<i32>} : memref<2x18x768xbf16, #tpu.memory_space<vmem>>, vector<2x16x768xbf16>,
    %c0_9 = arith.constant 0 : index
    %c0_10 = arith.constant 0 : index
    %5 = vector.load %arg3[%c0_9, %c0_10] : memref<1x96xf32, #tpu.memory_space<vmem>>, vector<1x96xf32>
    %cst_11 = arith.constant 0.000000e+00 : f32
    %6 = vector.broadcast %cst_11 : f32 to vector<32x96xf32>
    %c0_12 = arith.constant 0 : index
    %c0_13 = arith.constant 0 : index
    %c0_14 = arith.constant 0 : index
    %7 = vector.load %arg5[%c0_12, %c0_13, %c0_14] : memref<2x18x768xbf16, #tpu.memory_space<vmem>>, vector<2x16x768xbf16>
    %8 = vector.shape_cast %7 : vector<2x16x768xbf16> to vector<32x768xbf16>
    %c0_15 = arith.constant 0 : index
    %c0_16 = arith.constant 0 : index
    %c0_17 = arith.constant 0 : index
    %c0_18 = arith.constant 0 : index
    %9 = vector.load %arg2[%c0_15, %c0_16, %c0_17, %c0_18] : memref<2x2x768x96xbf16, #tpu.memory_space<vmem>>, vector<1x1x768x96xbf16>
    %10 = vector.shape_cast %9 : vector<1x1x768x96xbf16> to vector<768x96xbf16>
    %cst_19 = arith.constant dense<0.000000e+00> : vector<32x96xf32>
    %11 = tpu.matmul %8, %10, %cst_19 {dimension_numbers = #tpu.dot_dimension_numbers<[1], [0], [0], [1], [0, 0, 1, 1], [], []>} : vector<32x768xbf16>, vector<768x96xbf16>, vector<32x96xf32> -> vector<32x96xf32>
    %12 = arith.addf %6, %11 : vector<32x96xf32>
    %c0_20 = arith.constant 0 : index
    %c1_21 = arith.constant 1 : index
    %c0_22 = arith.constant 0 : index
    %13 = vector.load %arg5[%c0_20, %c1_21, %c0_22] : memref<2x18x768xbf16, #tpu.memory_space<vmem>>, vector<2x16x768xbf16>
    %14 = vector.shape_cast %13 : vector<2x16x768xbf16> to vector<32x768xbf16>
    %c0_23 = arith.constant 0 : index
    %c1_24 = arith.constant 1 : index
    %c0_25 = arith.constant 0 : index
    %c0_26 = arith.constant 0 : index
    %15 = vector.load %arg2[%c0_23, %c1_24, %c0_25, %c0_26] : memref<2x2x768x96xbf16, #tpu.memory_space<vmem>>, vector<1x1x768x96xbf16>
    %16 = vector.shape_cast %15 : vector<1x1x768x96xbf16> to vector<768x96xbf16>
    %cst_27 = arith.constant dense<0.000000e+00> : vector<32x96xf32>
    %17 = tpu.matmul %14, %16, %cst_27 {dimension_numbers = #tpu.dot_dimension_numbers<[1], [0], [0], [1], [0, 0, 1, 1], [], []>} : vector<32x768xbf16>, vector<768x96xbf16>, vector<32x96xf32> -> vector<32x96xf32>
    %18 = arith.addf %12, %17 : vector<32x96xf32>
    %19 = vector.broadcast %5 : vector<1x96xf32> to vector<32x96xf32>
    %20 = arith.addf %18, %19 : vector<32x96xf32>
    %21 = arith.negf %20 : vector<32x96xf32>
    %22 = math.exp %21 : vector<32x96xf32>
    %cst_28 = arith.constant 1.000000e+00 : f32
    %23 = vector.broadcast %cst_28 : f32 to vector<32x96xf32>
    %24 = arith.addf %23, %22 : vector<32x96xf32>
    %25 = arith.divf %23, %24 : vector<32x96xf32>
    %26 = arith.truncf %25 : vector<32x96xf32> to vector<32x96xbf16>
    %27 = vector.shape_cast %26 : vector<32x96xbf16> to vector<2x16x1x96xbf16>
    %c0_29 = arith.constant 0 : index
    %c0_30 = arith.constant 0 : index
    %c0_31 = arith.constant 0 : index
    %c0_32 = arith.constant 0 : index
    %28 = vector.load %arg4[%c0_29, %c0_30, %c0_31, %c0_32] : memref<2x16x2x96xbf16, #tpu.memory_space<vmem>>, vector<2x16x1x96xbf16>
    tpu.vector_store %arg4[%c0_29, %c0_30, %c0_31, %c0_32], %27 {strides = array<i32>} : memref<2x16x2x96xbf16, #tpu.memory_space<vmem>>, vector<2x16x1x96xbf16>,
    %cst_33 = arith.constant 0.000000e+00 : f32
    %29 = vector.broadcast %cst_33 : f32 to vector<32x96xf32>
    %c0_34 = arith.constant 0 : index
    %c1_35 = arith.constant 1 : index
    %c0_36 = arith.constant 0 : index
    %30 = vector.load %arg5[%c0_34, %c1_35, %c0_36] : memref<2x18x768xbf16, #tpu.memory_space<vmem>>, vector<2x16x768xbf16>
    %31 = vector.shape_cast %30 : vector<2x16x768xbf16> to vector<32x768xbf16>
    %c1_37 = arith.constant 1 : index
    %c0_38 = arith.constant 0 : index
    %c0_39 = arith.constant 0 : index
    %c0_40 = arith.constant 0 : index
    %32 = vector.load %arg2[%c1_37, %c0_38, %c0_39, %c0_40] : memref<2x2x768x96xbf16, #tpu.memory_space<vmem>>, vector<1x1x768x96xbf16>
    %33 = vector.shape_cast %32 : vector<1x1x768x96xbf16> to vector<768x96xbf16>
    %cst_41 = arith.constant dense<0.000000e+00> : vector<32x96xf32>
    %34 = tpu.matmul %31, %33, %cst_41 {dimension_numbers = #tpu.dot_dimension_numbers<[1], [0], [0], [1], [0, 0, 1, 1], [], []>} : vector<32x768xbf16>, vector<768x96xbf16>, vector<32x96xf32> -> vector<32x96xf32>
    %35 = arith.addf %29, %34 : vector<32x96xf32>
    %c0_42 = arith.constant 0 : index
    %c2 = arith.constant 2 : index
    %c0_43 = arith.constant 0 : index
    %36 = vector.load %arg5[%c0_42, %c2, %c0_43] : memref<2x18x768xbf16, #tpu.memory_space<vmem>>, vector<2x16x768xbf16>
    %37 = vector.shape_cast %36 : vector<2x16x768xbf16> to vector<32x768xbf16>
    %c1_44 = arith.constant 1 : index
    %c1_45 = arith.constant 1 : index
    %c0_46 = arith.constant 0 : index
    %c0_47 = arith.constant 0 : index
    %38 = vector.load %arg2[%c1_44, %c1_45, %c0_46, %c0_47] : memref<2x2x768x96xbf16, #tpu.memory_space<vmem>>, vector<1x1x768x96xbf16>
    %39 = vector.shape_cast %38 : vector<1x1x768x96xbf16> to vector<768x96xbf16>
    %cst_48 = arith.constant dense<0.000000e+00> : vector<32x96xf32>
    %40 = tpu.matmul %37, %39, %cst_48 {dimension_numbers = #tpu.dot_dimension_numbers<[1], [0], [0], [1], [0, 0, 1, 1], [], []>} : vector<32x768xbf16>, vector<768x96xbf16>, vector<32x96xf32> -> vector<32x96xf32>
    %41 = arith.addf %35, %40 : vector<32x96xf32>
    %42 = vector.broadcast %5 : vector<1x96xf32> to vector<32x96xf32>
    %43 = arith.addf %41, %42 : vector<32x96xf32>
    %44 = arith.negf %43 : vector<32x96xf32>
    %45 = math.exp %44 : vector<32x96xf32>
    %cst_49 = arith.constant 1.000000e+00 : f32
    %46 = vector.broadcast %cst_49 : f32 to vector<32x96xf32>
    %47 = arith.addf %46, %45 : vector<32x96xf32>
    %48 = arith.divf %46, %47 : vector<32x96xf32>
    %49 = arith.truncf %48 : vector<32x96xf32> to vector<32x96xbf16>
    %50 = vector.shape_cast %49 : vector<32x96xbf16> to vector<2x16x1x96xbf16>
    %c0_50 = arith.constant 0 : index
    %c0_51 = arith.constant 0 : index
    %c1_52 = arith.constant 1 : index
    %c0_53 = arith.constant 0 : index
    %51 = vector.load %arg4[%c0_50, %c0_51, %c1_52, %c0_53] : memref<2x16x2x96xbf16, #tpu.memory_space<vmem>>, vector<2x16x1x96xbf16>
    tpu.vector_store %arg4[%c0_50, %c0_51, %c1_52, %c0_53], %50 {strides = array<i32>} : memref<2x16x2x96xbf16, #tpu.memory_space<vmem>>, vector<2x16x1x96xbf16>,
    return
  }
  func.func @transform_0(%arg0: i32) -> (i32, i32, i32) {
    %c0_i32 = arith.constant 0 : i32
    %c0_i32_0 = arith.constant 0 : i32
    %c0_i32_1 = arith.constant 0 : i32
    return %arg0, %c0_i32, %c0_i32_0 : i32, i32, i32
  }
  func.func @transform_1(%arg0: i32) -> (i32, i32, i32, i32) {
    %c0_i32 = arith.constant 0 : i32
    %c0_i32_0 = arith.constant 0 : i32
    %c0_i32_1 = arith.constant 0 : i32
    %c0_i32_2 = arith.constant 0 : i32
    %c0_i32_3 = arith.constant 0 : i32
    return %c0_i32, %c0_i32_0, %c0_i32_1, %c0_i32_2 : i32, i32, i32, i32
  }
  func.func @transform_2(%arg0: i32) -> (i32, i32) {
    %c0_i32 = arith.constant 0 : i32
    %c0_i32_0 = arith.constant 0 : i32
    %c0_i32_1 = arith.constant 0 : i32
    return %c0_i32, %c0_i32_0 : i32, i32
  }
  func.func @transform_3(%arg0: i32) -> (i32, i32, i32, i32) {
    %c0_i32 = arith.constant 0 : i32
    %c0_i32_0 = arith.constant 0 : i32
    %c0_i32_1 = arith.constant 0 : i32
    %c0_i32_2 = arith.constant 0 : i32
    return %arg0, %c0_i32, %c0_i32_0, %c0_i32_1 : i32, i32, i32, i32
  }
}

</mosaic_0001>

<llo_original>
// kernel: tile.18
$region0: #{tile.18}
  #allocation2 [shape = 's32[1]{0}', space=sflag, size = 0x4, scoped, tag = 'scoped memory for tile.18']
  %s0 = inlined_call_operand.hbm [shape: f32[48], index: 0, kind: input, shape index: {}]
  %s1 = inlined_call_operand.vmem [shape: f32[4,48], index: 1, kind: output, shape index: {}]
  $region1: #{tile.18} parent=0
    #allocation0 [shape = 'u8[512]{0}', space=vmem, size = 0x400, scoped, tag = 'operand span for operand 0']
    #allocation1 [shape = 's32[1]{0}', space=sflag, size = 0x4, scoped, tag = 'scoped memory for tile.18']
    %2 = vsyncpa [#allocation1], 0
    // Predicated region
    $region2: #{tile.18} parent=1 // pred_check
      _
    $region3: #{tile.18} parent=1 // pred_check_branch
      %4 = sbr.rel (0) target = $region5
    $region4: #{tile.18} parent=1 // pred_region
      %s6 = ssub.s32 16, 16
      %7 = vsyncadd [#allocation1], %s6
      %s9 = sshll.u32 [#allocation0], 4
      %s10 = int_to_ptr.vmem [resolvable:$true] %s9
      %12 = dma.hbm_to_vmem [thread:$0]  %s0, 16, %s10, [#allocation1]
    $region5: #{tile.18} parent=1 // pred_fallthru
      _
    // Predicated region
    $region6: #{tile.18} parent=1 // pred_check
      _
    $region7: #{tile.18} parent=1 // pred_check_branch
      %14 = sbr.rel (0) target = $region9
    $region8: #{tile.18} parent=1 // pred_region
      %15 = dma.done [#allocation1], 16
    $region9: #{tile.18} parent=1 // pred_fallthru
      _
    %v16 = vld [vmem:[#allocation0] ss:$0 sm:$0xff]
    %17 = vst [vmem:[%s1] sm:$0xf] %v16
    %18 = vsyncpa [#allocation1], 1

// kernel: tile.19
$region0: #{tile.19}
  %s0 = inlined_call_operand.vmem [shape: f32[4,48], index: 0, kind: input, shape index: {}]
  %s1 = inlined_call_operand.vmem [shape: f32[1,192], index: 1, kind: output, shape index: {}]
  $region1: #{tile.19} parent=0
    #allocation0 [shape = 'u8[8192]{0}', space=vmem, size = 0x2000, scoped, tag = 'scoped mem for output reshape']
    #allocation1 [shape = 'u8[4096]{0}', space=vmem, size = 0x1000, scoped, tag = 'scoped mem for input reshape']
    %s3 = sshllo.u32 0, 4
    %v4 = vld [vmem:[%s0] sm:%s3]
    %5 = vst [vmem:[#allocation1] sm:%s3] %v4
    %v6 = vld [vmem:[#allocation1] sm:$0x1]
    %vm7 = vcmask 392192
    %8 = vst.msk [vmem:[#allocation0] sm:$0x1] %vm7, %v6
    %s9 = scalar_lea.vmem [#allocation1], 2
    %v10 = vld [vmem:[%s9] sm:$0x1]
    %s11 = scalar_lea.vmem [#allocation1], 2
    %v12 = vld [vmem:[%s11] sm:$0x1]
    %vm13 = vcmask 261120
    %v14 = vsel %vm13, %v12, %v10
    %15 = vrot.lane.b32.xlu0 %v14, 96
    %v16 = vpop.permute.xlu0 %15
    %vm17 = vcmask 130048
    %s18 = scalar_lea.vmem [#allocation0], 8
    %19 = vst.msk [vmem:[%s18] sm:$0x1] %vm17, %v16
    %vm20 = vcmask 1048320
    %21 = vst.msk [vmem:[#allocation0] sm:$0x1] %vm20, %v16
    %s22 = scalar_lea.vmem [#allocation1], 1
    %v23 = vld [vmem:[%s22] sm:$0x1]
    %24 = vrot.lane.b32.xlu0 %v23, 48
    %v25 = vpop.permute.xlu0 %24
    %vm26 = vcmask 785792
    %27 = vst.msk [vmem:[#allocation0] sm:$0x1] %vm26, %v25
    %s28 = scalar_lea.vmem [#allocation1], 3
    %v29 = vld [vmem:[%s28] sm:$0x1]
    %30 = vrot.lane.b32.xlu0 %v29, 16
    %v31 = vpop.permute.xlu0 %30
    %vm32 = vcmask 523392
    %s33 = scalar_lea.vmem [#allocation0], 8
    %34 = vst.msk [vmem:[%s33] sm:$0x1] %vm32, %v31
    %s36 = sshllo.u32 0, 1
    %v38 = vld [vmem:[#allocation0] sm:%s36]
    %s39 = sshllo.u32 0, 1
    %40 = vst [vmem:[%s1] sm:%s39] %v38
    %s41 = scalar_lea.vmem [#allocation0], 8
    %v42 = vld [vmem:[%s41] sm:%s36]
    %s43 = sshllo.u32 0, 1
    %s44 = scalar_lea.vmem %s1, 1
    %45 = vst [vmem:[%s44] sm:%s43] %v42

// kernel: forward.3
$region0: #{forward.3}
  #allocation0 [shape = 'u32[]', space=smem, size = 0x4, offset = 0x4, fixed_abs, tag = 'smem constant byte address 0x4 - core index']
  #allocation1 [shape = 'u32[144,128]{1,0:T(1,128)}', space=vmem, size = 0x12000, scoped, tag = 'internal scratch']
  %s0 = inlined_call_operand.vmem [shape: bf16[128,48], index: 0, kind: input, shape index: {}]
  %s1 = inlined_call_operand.vmem [shape: bf16[48,192], index: 1, kind: input, shape index: {}]
  %s2 = inlined_call_operand.vmem [shape: bf16[192,96], index: 2, kind: input, shape index: {}]
  %s3 = inlined_call_operand.vmem [shape: f32[1,192], index: 3, kind: input, shape index: {}]
  %s4 = inlined_call_operand.hbm [shape: f32[1,96], index: 4, kind: input, shape index: {}]
  %s5 = inlined_call_operand.vmem [shape: bf16[128,96], index: 5, kind: output, shape index: {}]
  %s6 = sld [smem:[#allocation0]]
  $region34: #{forward.3} parent=0
    _
  %s8 = ssub.s32 1, %s6
  %s9 = scalar_select 0, %s8, %s6
  $region1: #{forward.3} parent=0
    #allocation2 [shape = 'u8[512]{0}', space=vmem, size = 0x400, scoped, tag = 'input window, operand 4, single buffered']
    #allocation3 [shape = 's32[1]{0}', space=sflag, size = 0x4, scoped, tag = 'scoped memory for forward.3']
    %10 = vsyncpa [#allocation3], 0
    // Predicated region
    $region2: #{forward.3} parent=1 // pred_check
      _
    $region3: #{forward.3} parent=1 // pred_check_branch
      %12 = sbr.rel (0) target = $region5
    $region4: #{forward.3} parent=1 // pred_region
      _
    $region5: #{forward.3} parent=1 // pred_fallthru
      _
    // Predicated region
    $region6: #{forward.3} parent=1 // pred_check
      _
    $region7: #{forward.3} parent=1 // pred_check_branch
      %14 = sbr.rel (0) target = $region9
    $region8: #{forward.3} parent=1 // pred_region
      _
    $region9: #{forward.3} parent=1 // pred_fallthru
      _
    // Predicated region
    $region10: #{forward.3} parent=1 // pred_check
      _
    $region11: #{forward.3} parent=1 // pred_check_branch
      %16 = sbr.rel (0) target = $region13
    $region12: #{forward.3} parent=1 // pred_region
      _
    $region13: #{forward.3} parent=1 // pred_fallthru
      _
    // Predicated region
    $region14: #{forward.3} parent=1 // pred_check
      _
    $region15: #{forward.3} parent=1 // pred_check_branch
      %18 = sbr.rel (0) target = $region17
    $region16: #{forward.3} parent=1 // pred_region
      _
    $region17: #{forward.3} parent=1 // pred_fallthru
      _
    // Predicated region
    $region18: #{forward.3} parent=1 // pred_check
      _
    $region19: #{forward.3} parent=1 // pred_check_branch
      %20 = sbr.rel (0) target = $region21
    $region20: #{forward.3} parent=1 // pred_region
      %s22 = ssub.s32 16, 16
      %23 = vsyncadd [#allocation3], %s22
      %s25 = sshll.u32 [#allocation2], 4
      %s26 = int_to_ptr.vmem [resolvable:$true] %s25
      %28 = dma.hbm_to_vmem [thread:$0]  %s4, 16, %s26, [#allocation3]
    $region21: #{forward.3} parent=1 // pred_fallthru
      _
    // Predicated region
    $region22: #{forward.3} parent=1 // pred_check
      _
    $region23: #{forward.3} parent=1 // pred_check_branch
      %30 = sbr.rel (0) target = $region25
    $region24: #{forward.3} parent=1 // pred_region
      %31 = dma.done [#allocation3], 16
    $region25: #{forward.3} parent=1 // pred_fallthru
      _
    %v33 = vld [vmem:[%s0] sm:$0xf]
    %v34 = vld [vmem:[%s0 + $0x4] sm:$0xf]
    %v35 = vld [vmem:[%s0 + $0x8] sm:$0xf]
    %v36 = vld [vmem:[%s0 + $0xc] sm:$0xf]
    %v37 = vld [vmem:[%s0 + $0x10] sm:$0xf]
    %v38 = vld [vmem:[%s0 + $0x14] sm:$0xf]
    %v39 = vld [vmem:[%s0 + $0x18] sm:$0xf]
    %v40 = vld [vmem:[%s0 + $0x1c] sm:$0xf]
    %v41 = vld [vmem:[%s0 + $0x20] sm:$0xf]
    %v42 = vld [vmem:[%s0 + $0x24] sm:$0xf]
    %v43 = vld [vmem:[%s0 + $0x28] sm:$0xf]
    %v44 = vld [vmem:[%s0 + $0x2c] sm:$0xf]
    %v45 = vld [vmem:[%s0 + $0x30] sm:$0xf]
    %v46 = vld [vmem:[%s0 + $0x34] sm:$0xf]
    %v47 = vld [vmem:[%s0 + $0x38] sm:$0xf]
    %v48 = vld [vmem:[%s0 + $0x3c] sm:$0xf]
    %v49 = vld [vmem:[%s1] sm:$0xff]
    %v50 = vld [vmem:[%s1 + $0x8] sm:$0xff]
    %v51 = vld [vmem:[%s1 + $0x10] sm:$0xff]
    %v52 = vld [vmem:[%s1 + $0x18] sm:$0xff]
    %v53 = vld [vmem:[%s1 + $0x20] sm:$0xff]
    %v54 = vld [vmem:[%s1 + $0x28] sm:$0xff]
    %v55 = vld [vmem:[%s3] sm:$0x3]
    %v57 = vlaneseq
    %v58 = vshrl.u32 %v57, 7
    %v59 = vsub.s32 0, %v58
    %v60 = vrot.slane %v55, %v59
    %v61 = vlaneseq
    %v62 = vshrl.u32 %v61, 7
    %v63 = vsub.s32 1, %v62
    %v64 = vrot.slane %v55, %v63
    %v83 = vunpack.c.l.b16 %v33
    %v84 = vunpack.c.l.b16 %v34
    %v85 = vunpack.c.l.b16 %v35
    %v86 = vunpack.c.l.b16 %v36
    %v87 = vunpack.c.l.b16 %v37
    %v88 = vunpack.c.l.b16 %v38
    %v89 = vunpack.c.l.b16 %v39
    %v90 = vunpack.c.l.b16 %v40
    %v91 = vunpack.c.l.b16 %v41
    %v92 = vunpack.c.l.b16 %v42
    %v93 = vunpack.c.l.b16 %v43
    %v94 = vunpack.c.l.b16 %v44
    %v95 = vunpack.c.l.b16 %v45
    %v96 = vunpack.c.l.b16 %v46
    %v97 = vunpack.c.l.b16 %v47
    %v98 = vunpack.c.l.b16 %v48
    %v99 = vpack.c.b16 %v84, %v83
    %v100 = vpack.c.b16 %v86, %v85
    %v101 = vpack.c.b16 %v88, %v87
    %v102 = vpack.c.b16 %v90, %v89
    %v103 = vpack.c.b16 %v92, %v91
    %v104 = vpack.c.b16 %v94, %v93
    %v105 = vpack.c.b16 %v96, %v95
    %v106 = vpack.c.b16 %v98, %v97
    %v113 = vunpack.c.l.b16 %v49
    %v114 = vunpack.c.h.b16 %v49
    %v115 = vunpack.c.l.b16 %v50
    %v116 = vunpack.c.h.b16 %v50
    %v117 = vunpack.c.l.b16 %v51
    %v118 = vunpack.c.h.b16 %v51
    %v119 = vunpack.c.l.b16 %v52
    %v120 = vunpack.c.h.b16 %v52
    %v121 = vunpack.c.l.b16 %v53
    %v122 = vunpack.c.h.b16 %v53
    %v123 = vunpack.c.l.b16 %v54
    %v124 = vunpack.c.h.b16 %v54
    %v125 = vpack.c.b16 %v115, %v113
    %v126 = vpack.c.b16 %v116, %v114
    %v127 = vpack.c.b16 %v119, %v117
    %v128 = vpack.c.b16 %v120, %v118
    %v129 = vpack.c.b16 %v123, %v121
    %v130 = vpack.c.b16 %v124, %v122
    %vm137 = vcmask 392192
    %v139 = vsel %vm137, %v99, 0
    %v142 = vsel %vm137, %v100, 0
    %v145 = vsel %vm137, %v101, 0
    %v148 = vsel %vm137, %v102, 0
    %v151 = vsel %vm137, %v103, 0
    %v154 = vsel %vm137, %v104, 0
    %v157 = vsel %vm137, %v105, 0
    %v160 = vsel %vm137, %v106, 0
    %162 = vmatprep.subr.bf16.mxu0 %v126
    %163 = vmatpush1.bf16.msra.mxu0 %v125
    %164 = vmatprep.subr.bf16.mxu0 %v128
    %165 = vmatpush1.bf16.msra.mxu0 %v127
    %166 = vmatprep.subr.bf16.mxu0 %v130
    %167 = vmatpush1.bf16.msra.mxu0 %v129
    %168 = vmatprep.subr.bf16.mxu0 0
    %169 = vmatpush1.bf16.msra.mxu0 0
    %170 = vmatprep.subr.bf16.mxu0 0
    %171 = vmatpush1.bf16.msra.mxu0 0
    %172 = vmatprep.subr.bf16.mxu0 0
    %173 = vmatpush1.bf16.msra.mxu0 0
    %174 = vmatprep.subr.bf16.mxu0 0
    %175 = vmatpush1.bf16.msra.mxu0 0
    %176 = vmatprep.subr.bf16.mxu0 0
    %177 = vmatpush1.bf16.msra.mxu0 0
    %178 = vmatprep.subr.bf16.mxu0 0
    %179 = vmatpush1.bf16.msra.mxu0 0
    %180 = vmatprep.subr.bf16.mxu0 0
    %181 = vmatpush1.bf16.msra.mxu0 0
    %182 = vmatprep.subr.bf16.mxu0 0
    %183 = vmatpush1.bf16.msra.mxu0 0
    %184 = vmatprep.subr.bf16.mxu0 0
    %185 = vmatpush1.bf16.msra.mxu0 0
    %186 = vmatprep.subr.bf16.mxu0 0
    %187 = vmatpush1.bf16.msra.mxu0 0
    %188 = vmatprep.subr.bf16.mxu0 0
    %189 = vmatpush1.bf16.msra.mxu0 0
    %190 = vmatprep.subr.bf16.mxu0 0
    %191 = vmatpush1.bf16.msra.mxu0 0
    %192 = vmatprep.subr.bf16.mxu0 0
    %193 = vmatpush1.bf16.msra.mxu0 0
    %194 = vmatprep.mubr.bf16.mxu0 0
    %195 = vmatmul.mubr.bf16.gmra.mrb[0].mxu0 %v139
    %v196 = vpop.f32.mrb[0].mxu0
    %v197 = vadd.f32 %v60, %v196
    %v198 = vpop.f32.mrb[0].mxu0
    %v199 = vadd.f32 %v64, %v198
    %v200 = vpop.f32.mrb[0].mxu0
    %v201 = vadd.f32 %v60, %v200
    %v202 = vpop.f32.mrb[0].mxu0
    %v203 = vadd.f32 %v64, %v202
    %204 = vmatprep.mubr.bf16.mxu0 0
    %205 = vmatmul.mubr.bf16.gmra.mrb[0].mxu0 %v142
    %v206 = vpop.f32.mrb[0].mxu0
    %v207 = vadd.f32 %v60, %v206
    %v208 = vpop.f32.mrb[0].mxu0
    %v209 = vadd.f32 %v64, %v208
    %v210 = vpop.f32.mrb[0].mxu0
    %v211 = vadd.f32 %v60, %v210
    %v212 = vpop.f32.mrb[0].mxu0
    %v213 = vadd.f32 %v64, %v212
    %214 = vmatprep.mubr.bf16.mxu0 0
    %215 = vmatmul.mubr.bf16.gmra.mrb[0].mxu0 %v145
    %v216 = vpop.f32.mrb[0].mxu0
    %v217 = vadd.f32 %v60, %v216
    %v218 = vpop.f32.mrb[0].mxu0
    %v219 = vadd.f32 %v64, %v218
    %v220 = vpop.f32.mrb[0].mxu0
    %v221 = vadd.f32 %v60, %v220
    %v222 = vpop.f32.mrb[0].mxu0
    %v223 = vadd.f32 %v64, %v222
    %224 = vmatprep.mubr.bf16.mxu0 0
    %225 = vmatmul.mubr.bf16.gmra.mrb[0].mxu0 %v148
    %v226 = vpop.f32.mrb[0].mxu0
    %v227 = vadd.f32 %v60, %v226
    %v228 = vpop.f32.mrb[0].mxu0
    %v229 = vadd.f32 %v64, %v228
    %v230 = vpop.f32.mrb[0].mxu0
    %v231 = vadd.f32 %v60, %v230
    %v232 = vpop.f32.mrb[0].mxu0
    %v233 = vadd.f32 %v64, %v232
    %234 = vmatprep.mubr.bf16.mxu0 0
    %235 = vmatmul.mubr.bf16.gmra.mrb[0].mxu0 %v151
    %v236 = vpop.f32.mrb[0].mxu0
    %v237 = vadd.f32 %v60, %v236
    %v238 = vpop.f32.mrb[0].mxu0
    %v239 = vadd.f32 %v64, %v238
    %v240 = vpop.f32.mrb[0].mxu0
    %v241 = vadd.f32 %v60, %v240
    %v242 = vpop.f32.mrb[0].mxu0
    %v243 = vadd.f32 %v64, %v242
    %244 = vmatprep.mubr.bf16.mxu0 0
    %245 = vmatmul.mubr.bf16.gmra.mrb[0].mxu0 %v154
    %v246 = vpop.f32.mrb[0].mxu0
    %v247 = vadd.f32 %v60, %v246
    %v248 = vpop.f32.mrb[0].mxu0
    %v249 = vadd.f32 %v64, %v248
    %v250 = vpop.f32.mrb[0].mxu0
    %v251 = vadd.f32 %v60, %v250
    %v252 = vpop.f32.mrb[0].mxu0
    %v253 = vadd.f32 %v64, %v252
    %254 = vmatprep.mubr.bf16.mxu0 0
    %255 = vmatmul.mubr.bf16.gmra.mrb[0].mxu0 %v157
    %v256 = vpop.f32.mrb[0].mxu0
    %v257 = vadd.f32 %v60, %v256
    %v258 = vpop.f32.mrb[0].mxu0
    %v259 = vadd.f32 %v64, %v258
    %v260 = vpop.f32.mrb[0].mxu0
    %v261 = vadd.f32 %v60, %v260
    %v262 = vpop.f32.mrb[0].mxu0
    %v263 = vadd.f32 %v64, %v262
    %264 = vmatprep.mubr.bf16.mxu0 0
    %265 = vmatmul.mubr.bf16.gmra.mrb[0].mxu0 %v160
    %v266 = vpop.f32.mrb[0].mxu0
    %v267 = vadd.f32 %v60, %v266
    %v268 = vpop.f32.mrb[0].mxu0
    %v269 = vadd.f32 %v64, %v268
    %v270 = vpop.f32.mrb[0].mxu0
    %v271 = vadd.f32 %v60, %v270
    %v272 = vpop.f32.mrb[0].mxu0
    %v273 = vadd.f32 %v64, %v272
    %274 = vdwg.mxu0
    %v275 = vmax.f32 %v197, 0.0
    %v276 = vmax.f32 %v199, 0.0
    %v277 = vmax.f32 %v201, 0.0
    %v278 = vmax.f32 %v203, 0.0
    %v279 = vmax.f32 %v207, 0.0
    %v280 = vmax.f32 %v209, 0.0
    %v281 = vmax.f32 %v211, 0.0
    %v282 = vmax.f32 %v213, 0.0
    %v283 = vmax.f32 %v217, 0.0
    %v284 = vmax.f32 %v219, 0.0
    %v285 = vmax.f32 %v221, 0.0
    %v286 = vmax.f32 %v223, 0.0
    %v287 = vmax.f32 %v227, 0.0
    %v288 = vmax.f32 %v229, 0.0
    %v289 = vmax.f32 %v231, 0.0
    %v290 = vmax.f32 %v233, 0.0
    %v291 = vmax.f32 %v237, 0.0
    %v292 = vmax.f32 %v239, 0.0
    %v293 = vmax.f32 %v241, 0.0
    %v294 = vmax.f32 %v243, 0.0
    %v295 = vmax.f32 %v247, 0.0
    %v296 = vmax.f32 %v249, 0.0
    %v297 = vmax.f32 %v251, 0.0
    %v298 = vmax.f32 %v253, 0.0
    %v299 = vmax.f32 %v257, 0.0
    %v300 = vmax.f32 %v259, 0.0
    %v301 = vmax.f32 %v261, 0.0
    %v302 = vmax.f32 %v263, 0.0
    %v303 = vmax.f32 %v267, 0.0
    %v304 = vmax.f32 %v269, 0.0
    %v305 = vmax.f32 %v271, 0.0
    %v306 = vmax.f32 %v273, 0.0
    %v307 = vpack.c.bf16 %v277, %v275
    %v308 = vpack.c.bf16 %v278, %v276
    %v309 = vpack.c.bf16 %v281, %v279
    %v310 = vpack.c.bf16 %v282, %v280
    %v311 = vpack.c.bf16 %v285, %v283
    %v312 = vpack.c.bf16 %v286, %v284
    %v313 = vpack.c.bf16 %v289, %v287
    %v314 = vpack.c.bf16 %v290, %v288
    %v315 = vpack.c.bf16 %v293, %v291
    %v316 = vpack.c.bf16 %v294, %v292
    %v317 = vpack.c.bf16 %v297, %v295
    %v318 = vpack.c.bf16 %v298, %v296
    %v319 = vpack.c.bf16 %v301, %v299
    %v320 = vpack.c.bf16 %v302, %v300
    %v321 = vpack.c.bf16 %v305, %v303
    %v322 = vpack.c.bf16 %v306, %v304
    %v323 = vld [vmem:[%s2] sm:$0xf]
    %v324 = vld [vmem:[%s2 + $0x4] sm:$0xf]
    %v325 = vld [vmem:[%s2 + $0x8] sm:$0xf]
    %v326 = vld [vmem:[%s2 + $0xc] sm:$0xf]
    %v327 = vld [vmem:[%s2 + $0x10] sm:$0xf]
    %v328 = vld [vmem:[%s2 + $0x14] sm:$0xf]
    %v329 = vld [vmem:[%s2 + $0x18] sm:$0xf]
    %v330 = vld [vmem:[%s2 + $0x1c] sm:$0xf]
    %v331 = vld [vmem:[%s2 + $0x20] sm:$0xf]
    %v332 = vld [vmem:[%s2 + $0x24] sm:$0xf]
    %v333 = vld [vmem:[%s2 + $0x28] sm:$0xf]
    %v334 = vld [vmem:[%s2 + $0x2c] sm:$0xf]
    %v335 = vld [vmem:[%s2 + $0x30] sm:$0xf]
    %v336 = vld [vmem:[%s2 + $0x34] sm:$0xf]
    %v337 = vld [vmem:[%s2 + $0x38] sm:$0xf]
    %v338 = vld [vmem:[%s2 + $0x3c] sm:$0xf]
    %v339 = vld [vmem:[%s2 + $0x40] sm:$0xf]
    %v340 = vld [vmem:[%s2 + $0x44] sm:$0xf]
    %v341 = vld [vmem:[%s2 + $0x48] sm:$0xf]
    %v342 = vld [vmem:[%s2 + $0x4c] sm:$0xf]
    %v343 = vld [vmem:[%s2 + $0x50] sm:$0xf]
    %v344 = vld [vmem:[%s2 + $0x54] sm:$0xf]
    %v345 = vld [vmem:[%s2 + $0x58] sm:$0xf]
    %v346 = vld [vmem:[%s2 + $0x5c] sm:$0xf]
    %v347 = vld [vmem:[#allocation2] sm:$0x1]
    %v349 = vlaneseq
    %v350 = vshrl.u32 %v349, 7
    %v351 = vsub.s32 0, %v350
    %v352 = vrot.slane %v347, %v351
    %v378 = vunpack.c.l.b16 %v323
    %v379 = vunpack.c.l.b16 %v324
    %v380 = vunpack.c.l.b16 %v325
    %v381 = vunpack.c.l.b16 %v326
    %v382 = vunpack.c.l.b16 %v327
    %v383 = vunpack.c.l.b16 %v328
    %v384 = vunpack.c.l.b16 %v329
    %v385 = vunpack.c.l.b16 %v330
    %v386 = vunpack.c.l.b16 %v331
    %v387 = vunpack.c.l.b16 %v332
    %v388 = vunpack.c.l.b16 %v333
    %v389 = vunpack.c.l.b16 %v334
    %v390 = vunpack.c.l.b16 %v335
    %v391 = vunpack.c.l.b16 %v336
    %v392 = vunpack.c.l.b16 %v337
    %v393 = vunpack.c.l.b16 %v338
    %v394 = vunpack.c.l.b16 %v339
    %v395 = vunpack.c.l.b16 %v340
    %v396 = vunpack.c.l.b16 %v341
    %v397 = vunpack.c.l.b16 %v342
    %v398 = vunpack.c.l.b16 %v343
    %v399 = vunpack.c.l.b16 %v344
    %v400 = vunpack.c.l.b16 %v345
    %v401 = vunpack.c.l.b16 %v346
    %v402 = vpack.c.b16 %v379, %v378
    %v403 = vpack.c.b16 %v381, %v380
    %v404 = vpack.c.b16 %v383, %v382
    %v405 = vpack.c.b16 %v385, %v384
    %v406 = vpack.c.b16 %v387, %v386
    %v407 = vpack.c.b16 %v389, %v388
    %v408 = vpack.c.b16 %v391, %v390
    %v409 = vpack.c.b16 %v393, %v392
    %v410 = vpack.c.b16 %v395, %v394
    %v411 = vpack.c.b16 %v397, %v396
    %v412 = vpack.c.b16 %v399, %v398
    %v413 = vpack.c.b16 %v401, %v400
    %vm426 = vcmask 523264
    %v428 = vsel %vm426, %v308, 0
    %v431 = vsel %vm426, %v310, 0
    %v434 = vsel %vm426, %v312, 0
    %v437 = vsel %vm426, %v314, 0
    %v440 = vsel %vm426, %v316, 0
    %v443 = vsel %vm426, %v318, 0
    %v446 = vsel %vm426, %v320, 0
    %v449 = vsel %vm426, %v322, 0
    %451 = vmatprep.subr.bf16.mxu0 0
    %452 = vmatpush1.bf16.msra.mxu0 %v402
    %453 = vmatprep.subr.bf16.mxu0 0
    %454 = vmatpush1.bf16.msra.mxu0 %v403
    %455 = vmatprep.subr.bf16.mxu0 0
    %456 = vmatpush1.bf16.msra.mxu0 %v404
    %457 = vmatprep.subr.bf16.mxu0 0
    %458 = vmatpush1.bf16.msra.mxu0 %v405
    %459 = vmatprep.subr.bf16.mxu0 0
    %460 = vmatpush1.bf16.msra.mxu0 %v406
    %461 = vmatprep.subr.bf16.mxu0 0
    %462 = vmatpush1.bf16.msra.mxu0 %v407
    %463 = vmatprep.subr.bf16.mxu0 0
    %464 = vmatpush1.bf16.msra.mxu0 %v408
    %465 = vmatprep.subr.bf16.mxu0 0
    %466 = vmatpush1.bf16.msra.mxu0 %v409
    %467 = vmatprep.subr.bf16.mxu0 0
    %468 = vmatpush1.bf16.msra.mxu0 %v410
    %469 = vmatprep.subr.bf16.mxu0 0
    %470 = vmatpush1.bf16.msra.mxu0 %v411
    %471 = vmatprep.subr.bf16.mxu0 0
    %472 = vmatpush1.bf16.msra.mxu0 %v412
    %473 = vmatprep.subr.bf16.mxu0 0
    %474 = vmatpush1.bf16.msra.mxu0 %v413
    %475 = vmatprep.subr.bf16.mxu0 0
    %476 = vmatpush1.bf16.msra.mxu0 0
    %477 = vmatprep.subr.bf16.mxu0 0
    %478 = vmatpush1.bf16.msra.mxu0 0
    %479 = vmatprep.subr.bf16.mxu0 0
    %480 = vmatpush1.bf16.msra.mxu0 0
    %481 = vmatprep.subr.bf16.mxu0 0
    %482 = vmatpush1.bf16.msra.mxu0 0
    %483 = vmatprep.mubr.bf16.mxu0 %v428
    %484 = vmatmul.mubr.bf16.gmra.mrb[0].mxu0 %v307
    %v485 = vpop.f32.mrb[0].mxu0
    %v486 = vadd.f32 %v352, %v485
    %v487 = vpop.f32.mrb[0].mxu0
    %v488 = vpop.f32.mrb[0].mxu0
    %v489 = vadd.f32 %v352, %v488
    %v490 = vpop.f32.mrb[0].mxu0
    %491 = vmatprep.mubr.bf16.mxu0 %v431
    %492 = vmatmul.mubr.bf16.gmra.mrb[0].mxu0 %v309
    %v493 = vpop.f32.mrb[0].mxu0
    %v494 = vadd.f32 %v352, %v493
    %v495 = vpop.f32.mrb[0].mxu0
    %v496 = vpop.f32.mrb[0].mxu0
    %v497 = vadd.f32 %v352, %v496
    %v498 = vpop.f32.mrb[0].mxu0
    %499 = vmatprep.mubr.bf16.mxu0 %v434
    %500 = vmatmul.mubr.bf16.gmra.mrb[0].mxu0 %v311
    %v501 = vpop.f32.mrb[0].mxu0
    %v502 = vadd.f32 %v352, %v501
    %v503 = vpop.f32.mrb[0].mxu0
    %v504 = vpop.f32.mrb[0].mxu0
    %v505 = vadd.f32 %v352, %v504
    %v506 = vpop.f32.mrb[0].mxu0
    %507 = vmatprep.mubr.bf16.mxu0 %v437
    %508 = vmatmul.mubr.bf16.gmra.mrb[0].mxu0 %v313
    %v509 = vpop.f32.mrb[0].mxu0
    %v510 = vadd.f32 %v352, %v509
    %v511 = vpop.f32.mrb[0].mxu0
    %v512 = vpop.f32.mrb[0].mxu0
    %v513 = vadd.f32 %v352, %v512
    %v514 = vpop.f32.mrb[0].mxu0
    %515 = vmatprep.mubr.bf16.mxu0 %v440
    %516 = vmatmul.mubr.bf16.gmra.mrb[0].mxu0 %v315
    %v517 = vpop.f32.mrb[0].mxu0
    %v518 = vadd.f32 %v352, %v517
    %v519 = vpop.f32.mrb[0].mxu0
    %v520 = vpop.f32.mrb[0].mxu0
    %v521 = vadd.f32 %v352, %v520
    %v522 = vpop.f32.mrb[0].mxu0
    %523 = vmatprep.mubr.bf16.mxu0 %v443
    %524 = vmatmul.mubr.bf16.gmra.mrb[0].mxu0 %v317
    %v525 = vpop.f32.mrb[0].mxu0
    %v526 = vadd.f32 %v352, %v525
    %v527 = vpop.f32.mrb[0].mxu0
    %v528 = vpop.f32.mrb[0].mxu0
    %v529 = vadd.f32 %v352, %v528
    %v530 = vpop.f32.mrb[0].mxu0
    %531 = vmatprep.mubr.bf16.mxu0 %v446
    %532 = vmatmul.mubr.bf16.gmra.mrb[0].mxu0 %v319
    %v533 = vpop.f32.mrb[0].mxu0
    %v534 = vadd.f32 %v352, %v533
    %v535 = vpop.f32.mrb[0].mxu0
    %v536 = vpop.f32.mrb[0].mxu0
    %v537 = vadd.f32 %v352, %v536
    %v538 = vpop.f32.mrb[0].mxu0
    %539 = vmatprep.mubr.bf16.mxu0 %v449
    %540 = vmatmul.mubr.bf16.gmra.mrb[0].mxu0 %v321
    %v541 = vpop.f32.mrb[0].mxu0
    %v542 = vadd.f32 %v352, %v541
    %v543 = vpop.f32.mrb[0].mxu0
    %v544 = vpop.f32.mrb[0].mxu0
    %v545 = vadd.f32 %v352, %v544
    %v546 = vpop.f32.mrb[0].mxu0
    %547 = vdwg.mxu0
    %v548 = vmax.f32 %v486, 0.0
    %v549 = vmax.f32 %v489, 0.0
    %v550 = vmax.f32 %v494, 0.0
    %v551 = vmax.f32 %v497, 0.0
    %v552 = vmax.f32 %v502, 0.0
    %v553 = vmax.f32 %v505, 0.0
    %v554 = vmax.f32 %v510, 0.0
    %v555 = vmax.f32 %v513, 0.0
    %v556 = vmax.f32 %v518, 0.0
    %v557 = vmax.f32 %v521, 0.0
    %v558 = vmax.f32 %v526, 0.0
    %v559 = vmax.f32 %v529, 0.0
    %v560 = vmax.f32 %v534, 0.0
    %v561 = vmax.f32 %v537, 0.0
    %v562 = vmax.f32 %v542, 0.0
    %v563 = vmax.f32 %v545, 0.0
    %v564 = vpack.c.bf16 %v549, %v548
    %v565 = vpack.c.bf16 %v551, %v550
    %v566 = vpack.c.bf16 %v553, %v552
    %v567 = vpack.c.bf16 %v555, %v554
    %v568 = vpack.c.bf16 %v557, %v556
    %v569 = vpack.c.bf16 %v559, %v558
    %v570 = vpack.c.bf16 %v561, %v560
    %v571 = vpack.c.bf16 %v563, %v562
    %v580 = vunpack.c.l.b16 %v564
    %v581 = vunpack.c.h.b16 %v564
    %v582 = vunpack.c.l.b16 %v565
    %v583 = vunpack.c.h.b16 %v565
    %v584 = vunpack.c.l.b16 %v566
    %v585 = vunpack.c.h.b16 %v566
    %v586 = vunpack.c.l.b16 %v567
    %v587 = vunpack.c.h.b16 %v567
    %v588 = vunpack.c.l.b16 %v568
    %v589 = vunpack.c.h.b16 %v568
    %v590 = vunpack.c.l.b16 %v569
    %v591 = vunpack.c.h.b16 %v569
    %v592 = vunpack.c.l.b16 %v570
    %v593 = vunpack.c.h.b16 %v570
    %v594 = vunpack.c.l.b16 %v571
    %v595 = vunpack.c.h.b16 %v571
    %v596 = vpack.c.b16 %v580, %v580
    %v597 = vpack.c.b16 %v581, %v581
    %v598 = vpack.c.b16 %v582, %v582
    %v599 = vpack.c.b16 %v583, %v583
    %v600 = vpack.c.b16 %v584, %v584
    %v601 = vpack.c.b16 %v585, %v585
    %v602 = vpack.c.b16 %v586, %v586
    %v603 = vpack.c.b16 %v587, %v587
    %v604 = vpack.c.b16 %v588, %v588
    %v605 = vpack.c.b16 %v589, %v589
    %v606 = vpack.c.b16 %v590, %v590
    %v607 = vpack.c.b16 %v591, %v591
    %v608 = vpack.c.b16 %v592, %v592
    %v609 = vpack.c.b16 %v593, %v593
    %v610 = vpack.c.b16 %v594, %v594
    %v611 = vpack.c.b16 %v595, %v595
    %vm628 = vcmask 781312
    %629 = vst.msk [vmem:[%s5] sm:$0xf] %vm628, %v596
    %630 = vst.msk [vmem:[%s5 + $0x4] sm:$0xf] %vm628, %v597
    %631 = vst.msk [vmem:[%s5 + $0x8] sm:$0xf] %vm628, %v598
    %632 = vst.msk [vmem:[%s5 + $0xc] sm:$0xf] %vm628, %v599
    %633 = vst.msk [vmem:[%s5 + $0x10] sm:$0xf] %vm628, %v600
    %634 = vst.msk [vmem:[%s5 + $0x14] sm:$0xf] %vm628, %v601
    %635 = vst.msk [vmem:[%s5 + $0x18] sm:$0xf] %vm628, %v602
    %636 = vst.msk [vmem:[%s5 + $0x1c] sm:$0xf] %vm628, %v603
    %637 = vst.msk [vmem:[%s5 + $0x20] sm:$0xf] %vm628, %v604
    %638 = vst.msk [vmem:[%s5 + $0x24] sm:$0xf] %vm628, %v605
    %639 = vst.msk [vmem:[%s5 + $0x28] sm:$0xf] %vm628, %v606
    %640 = vst.msk [vmem:[%s5 + $0x2c] sm:$0xf] %vm628, %v607
    %641 = vst.msk [vmem:[%s5 + $0x30] sm:$0xf] %vm628, %v608
    %642 = vst.msk [vmem:[%s5 + $0x34] sm:$0xf] %vm628, %v609
    %643 = vst.msk [vmem:[%s5 + $0x38] sm:$0xf] %vm628, %v610
    %644 = vst.msk [vmem:[%s5 + $0x3c] sm:$0xf] %vm628, %v611
    // Predicated region
    $region26: #{forward.3} parent=1 // pred_check
      _
    $region27: #{forward.3} parent=1 // pred_check_branch
      %646 = sbr.rel (0) target = $region29
    $region28: #{forward.3} parent=1 // pred_region
      _
    $region29: #{forward.3} parent=1 // pred_fallthru
      _
    // Predicated region
    $region30: #{forward.3} parent=1 // pred_check
      _
    $region31: #{forward.3} parent=1 // pred_check_branch
      %648 = sbr.rel (0) target = $region33
    $region32: #{forward.3} parent=1 // pred_region
      _
    $region33: #{forward.3} parent=1 // pred_fallthru
      _
    %649 = vsyncpa [#allocation3], 1

// kernel: tile.23
$region0: #{tile.23}
  #allocation0 [shape = 's32[1]{0}', space=sflag, size = 0x4, scoped, tag = 'scoped memory for tile.23']
  %s0 = inlined_call_operand.vmem [shape: f32[48], index: 0, kind: input, shape index: {}]
  %s1 = inlined_call_operand.vmem [shape: f32[16,48], index: 1, kind: output, shape index: {}]
  // Predicated region
  $region2: #{tile.23} parent=0 // pred_check
    _
  $region3: #{tile.23} parent=0 // pred_check_branch
    %3 = sbr.rel (0) target = $region5
  $region4: #{tile.23} parent=0 // pred_region
    _
  $region5: #{tile.23} parent=0 // pred_fallthru
    _
  %v4 = vld [vmem:[%s0] ss:$0 sm:$0xff]
  %5 = vst [vmem:[%s1] sm:$0xff] %v4
  %s6 = scalar_lea.vmem %s1, 8
  %7 = vst [vmem:[%s6] sm:$0xff] %v4

// kernel: tile.24
$region0: #{tile.24}
  %s0 = inlined_call_operand.vmem [shape: f32[16,48], index: 0, kind: input, shape index: {}]
  %s1 = inlined_call_operand.vmem [shape: f32[1,768], index: 1, kind: output, shape index: {}]
  $region1: #{tile.24} parent=0
    #allocation0 [shape = 'u8[24576]{0}', space=vmem, size = 0x6000, scoped, tag = 'scoped mem for output reshape']
    %s2 = smov 3
    %v3 = vld [vmem:[%s0] ss:$8 sm:%s2]
    %vm4 = vcmask 392192
    %5 = vst.msk [vmem:[#allocation0] ss:$24 sm:$0x3] %vm4, %v3
    %s6 = scalar_lea.vmem %s0, 13
    %s7 = smov 3
    %v8 = vld [vmem:[%s6] ss:$-8 sm:%s7]
    %s9 = scalar_lea.vmem %s0, 13
    %s10 = smov 3
    %v11 = vld [vmem:[%s9] ss:$-8 sm:%s10]
    %vm12 = vcmask 130048
    %v13 = vsel %vm12, %v11, %v8
    %14 = vrot.lane.b32.xlu0 %v13, 112
    %v15 = vpop.permute.xlu0 %14
    %vm16 = vcmask 261120
    %s17 = scalar_lea.vmem [#allocation0], 40
    %18 = vst.msk [vmem:[%s17] ss:$-24 sm:$0x3] %vm16, %v15
    %vm19 = vcmask 1048448
    %s20 = scalar_lea.vmem [#allocation0], 32
    %21 = vst.msk [vmem:[%s20] ss:$-24 sm:$0x3] %vm19, %v15
    %s22 = scalar_lea.vmem %s0, 10
    %s23 = smov 3
    %v24 = vld [vmem:[%s22] ss:$-8 sm:%s23]
    %s25 = scalar_lea.vmem %s0, 2
    %s26 = smov 3
    %v27 = vld [vmem:[%s25] ss:$8 sm:%s26]
    %vm28 = vcmask 261120
    %v29 = vsel %vm28, %v27, %v24
    %30 = vrot.lane.b32.xlu0 %v29, 96
    %v31 = vpop.permute.xlu0 %30
    %vm32 = vcmask 130048
    %s33 = scalar_lea.vmem [#allocation0], 32
    %34 = vst.msk [vmem:[%s33] ss:$-24 sm:$0x3] %vm32, %v31
    %vm35 = vcmask 1048320
    %36 = vst.msk [vmem:[#allocation0] ss:$24 sm:$0x3] %vm35, %v31
    %s37 = scalar_lea.vmem %s0, 15
    %s38 = smov 3
    %v39 = vld [vmem:[%s37] ss:$-8 sm:%s38]
    %40 = vrot.lane.b32.xlu0 %v39, 80
    %v41 = vpop.permute.xlu0 %40
    %vm42 = vcmask 1048192
    %s43 = scalar_lea.vmem [#allocation0], 40
    %44 = vst.msk [vmem:[%s43] ss:$-24 sm:$0x3] %vm42, %v41
    %s45 = scalar_lea.vmem %s0, 12
    %s46 = smov 3
    %v47 = vld [vmem:[%s45] ss:$-8 sm:%s46]
    %48 = vrot.lane.b32.xlu0 %v47, 64
    %v49 = vpop.permute.xlu0 %48
    %vm50 = vcmask 916992
    %s51 = scalar_lea.vmem [#allocation0], 32
    %52 = vst.msk [vmem:[%s51] ss:$-24 sm:$0x3] %vm50, %v49
    %s53 = scalar_lea.vmem %s0, 1
    %s54 = smov 3
    %v55 = vld [vmem:[%s53] ss:$8 sm:%s54]
    %56 = vrot.lane.b32.xlu0 %v55, 48
    %v57 = vpop.permute.xlu0 %56
    %vm58 = vcmask 785792
    %59 = vst.msk [vmem:[#allocation0] ss:$24 sm:$0x3] %vm58, %v57
    %s60 = scalar_lea.vmem %s0, 14
    %s61 = smov 3
    %v62 = vld [vmem:[%s60] ss:$-8 sm:%s61]
    %63 = vrot.lane.b32.xlu0 %v62, 32
    %v64 = vpop.permute.xlu0 %63
    %vm65 = vcmask 654592
    %s66 = scalar_lea.vmem [#allocation0], 40
    %67 = vst.msk [vmem:[%s66] ss:$-24 sm:$0x3] %vm65, %v64
    %s68 = scalar_lea.vmem %s0, 11
    %s69 = smov 3
    %v70 = vld [vmem:[%s68] ss:$-8 sm:%s69]
    %71 = vrot.lane.b32.xlu0 %v70, 16
    %v72 = vpop.permute.xlu0 %71
    %vm73 = vcmask 523392
    %s74 = scalar_lea.vmem [#allocation0], 32
    %75 = vst.msk [vmem:[%s74] ss:$-24 sm:$0x3] %vm73, %v72
    %s77 = sshllo.u32 0, 1
    %v79 = vld [vmem:[#allocation0] sm:%s77]
    %s80 = sshllo.u32 0, 1
    %81 = vst [vmem:[%s1] sm:%s80] %v79
    %s82 = scalar_lea.vmem [#allocation0], 8
    %v83 = vld [vmem:[%s82] sm:%s77]
    %s84 = sshllo.u32 0, 1
    %s85 = scalar_lea.vmem %s1, 1
    %86 = vst [vmem:[%s85] sm:%s84] %v83
    %s87 = scalar_lea.vmem [#allocation0], 16
    %v88 = vld [vmem:[%s87] sm:%s77]
    %s89 = sshllo.u32 0, 1
    %s90 = smul.addr 1, 2
    %s91 = scalar_lea.vmem %s1, %s90
    %92 = vst [vmem:[%s91] sm:%s89] %v88
    %s93 = scalar_lea.vmem [#allocation0], 24
    %v94 = vld [vmem:[%s93] sm:%s77]
    %s95 = sshllo.u32 0, 1
    %s96 = smul.addr 1, 3
    %s97 = scalar_lea.vmem %s1, %s96
    %98 = vst [vmem:[%s97] sm:%s95] %v94
    %s99 = scalar_lea.vmem [#allocation0], 32
    %v100 = vld [vmem:[%s99] sm:%s77]
    %s101 = sshllo.u32 0, 1
    %s102 = smul.addr 1, 4
    %s103 = scalar_lea.vmem %s1, %s102
    %104 = vst [vmem:[%s103] sm:%s101] %v100
    %s105 = scalar_lea.vmem [#allocation0], 40
    %v106 = vld [vmem:[%s105] sm:%s77]
    %s107 = sshllo.u32 0, 1
    %s108 = smul.addr 1, 5
    %s109 = scalar_lea.vmem %s1, %s108
    %110 = vst [vmem:[%s109] sm:%s107] %v106

// kernel: forward.4
$region0: #{forward.4}
  #allocation0 [shape = 'u32[]', space=smem, size = 0x4, offset = 0x4, fixed_abs, tag = 'smem constant byte address 0x4 - core index']
  #allocation1 [shape = 'u32[144,128]{1,0:T(1,128)}', space=vmem, size = 0x12000, scoped, tag = 'internal scratch']
  #allocation2 [shape = 'bf16[2,10,768]{2,1,0:T(8,128)(2,1)}', space=vmem, size = 0xc000, scoped, tag = 'scratch operand']
  %s0 = inlined_call_operand.vmem [shape: bf16[2,8,768], index: 0, kind: input, shape index: {}]
  %s1 = inlined_call_operand.vmem [shape: bf16[2,2,768,768], index: 1, kind: input, shape index: {}]
  %s2 = inlined_call_operand.vmem [shape: f32[1,768], index: 2, kind: input, shape index: {}]
  %s3 = inlined_call_operand.vmem [shape: bf16[2,8,2,768], index: 3, kind: output, shape index: {}]
  %s4 = sld [smem:[#allocation0]]
  $region22: #{forward.4} parent=0
    _
  %s6 = ssub.s32 1, %s4
  %s7 = scalar_select 0, %s6, %s4
  // Predicated region
  $region2: #{forward.4} parent=0 // pred_check
    _
  $region3: #{forward.4} parent=0 // pred_check_branch
    %9 = sbr.rel (0) target = $region5
  $region4: #{forward.4} parent=0 // pred_region
    _
  $region5: #{forward.4} parent=0 // pred_fallthru
    _
  // Predicated region
  $region6: #{forward.4} parent=0 // pred_check
    _
  $region7: #{forward.4} parent=0 // pred_check_branch
    %11 = sbr.rel (0) target = $region9
  $region8: #{forward.4} parent=0 // pred_region
    _
  $region9: #{forward.4} parent=0 // pred_fallthru
    _
  // Predicated region
  $region10: #{forward.4} parent=0 // pred_check
    _
  $region11: #{forward.4} parent=0 // pred_check_branch
    %13 = sbr.rel (0) target = $region13
  $region12: #{forward.4} parent=0 // pred_region
    _
  $region13: #{forward.4} parent=0 // pred_fallthru
    _
  %vm15 = vcmask 1040384
  %vm16 = vsmask.f32 256
  %vm17 = vmand %vm15, %vm16
  %vm18 = vcmask 1044484
  %vm19 = vsmask.f32 4352
  %vm20 = vmand %vm18, %vm19
  %vm21 = vmor %vm20, %vm17
  %v22 = vld [vmem:[#allocation2] sm:$0x11]
  %v23 = vsel %vm21, 0, %v22
  %24 = vst [vmem:[#allocation2] sm:$0x11] %v23
  %v25 = vld [vmem:[#allocation2 + $0x8] sm:$0x11]
  %v26 = vsel %vm21, 0, %v25
  %27 = vst [vmem:[#allocation2 + $0x8] sm:$0x11] %v26
  %v28 = vld [vmem:[#allocation2 + $0x10] sm:$0x11]
  %v29 = vsel %vm21, 0, %v28
  %30 = vst [vmem:[#allocation2 + $0x10] sm:$0x11] %v29
  %v31 = vld [vmem:[#allocation2 + $0x30] sm:$0x11]
  %v32 = vsel %vm21, 0, %v31
  %33 = vst [vmem:[#allocation2 + $0x30] sm:$0x11] %v32
  %v34 = vld [vmem:[#allocation2 + $0x38] sm:$0x11]
  %v35 = vsel %vm21, 0, %v34
  %36 = vst [vmem:[#allocation2 + $0x38] sm:$0x11] %v35
  %v37 = vld [vmem:[#allocation2 + $0x40] sm:$0x11]
  %v38 = vsel %vm21, 0, %v37
  %39 = vst [vmem:[#allocation2 + $0x40] sm:$0x11] %v38
  %vm40 = vsmask.f32 7938
  %vm41 = vmand %vm15, %vm40
  %vm42 = vsmask.f32 7954
  %vm43 = vmand %vm18, %vm42
  %vm44 = vmor %vm43, %vm41
  %v45 = vld [vmem:[#allocation2 + $0x18] sm:$0x11]
  %v46 = vsel %vm44, 0, %v45
  %47 = vst [vmem:[#allocation2 + $0x18] sm:$0x11] %v46
  %v48 = vld [vmem:[#allocation2 + $0x20] sm:$0x11]
  %v49 = vsel %vm44, 0, %v48
  %50 = vst [vmem:[#allocation2 + $0x20] sm:$0x11] %v49
  %v51 = vld [vmem:[#allocation2 + $0x28] sm:$0x11]
  %v52 = vsel %vm44, 0, %v51
  %53 = vst [vmem:[#allocation2 + $0x28] sm:$0x11] %v52
  %v54 = vld [vmem:[#allocation2 + $0x48] sm:$0x11]
  %v55 = vsel %vm44, 0, %v54
  %56 = vst [vmem:[#allocation2 + $0x48] sm:$0x11] %v55
  %v57 = vld [vmem:[#allocation2 + $0x50] sm:$0x11]
  %v58 = vsel %vm44, 0, %v57
  %59 = vst [vmem:[#allocation2 + $0x50] sm:$0x11] %v58
  %v60 = vld [vmem:[#allocation2 + $0x58] sm:$0x11]
  %v61 = vsel %vm44, 0, %v60
  %62 = vst [vmem:[#allocation2 + $0x58] sm:$0x11] %v61
  %v63 = vld [vmem:[%s0] sm:$0xff]
  %v64 = vld [vmem:[%s0 + $0x8] sm:$0xff]
  %v65 = vld [vmem:[%s0 + $0x10] sm:$0xff]
  %v66 = vld [vmem:[%s0 + $0x18] sm:$0xff]
  %v67 = vld [vmem:[%s0 + $0x20] sm:$0xff]
  %v68 = vld [vmem:[%s0 + $0x28] sm:$0xff]
  %v70 = vshrl.u32 %v63, 16
  %v72 = vrot.slane %v70, 7
  %v73 = vshll.u32 %v63, 16
  %v75 = vor.u32 %v72, %v73
  %v77 = vshrl.u32 %v64, 16
  %v79 = vrot.slane %v77, 7
  %v80 = vshll.u32 %v64, 16
  %v82 = vor.u32 %v79, %v80
  %v84 = vshrl.u32 %v65, 16
  %v86 = vrot.slane %v84, 7
  %v87 = vshll.u32 %v65, 16
  %v89 = vor.u32 %v86, %v87
  %v90 = vrot.slane %v72, 4
  %v91 = vrot.slane %v79, 4
  %v92 = vrot.slane %v86, 4
  %v94 = vshrl.u32 %v66, 16
  %v96 = vrot.slane %v94, 7
  %v97 = vshll.u32 %v66, 16
  %v99 = vor.u32 %v96, %v97
  %v101 = vshrl.u32 %v67, 16
  %v103 = vrot.slane %v101, 7
  %v104 = vshll.u32 %v67, 16
  %v106 = vor.u32 %v103, %v104
  %v108 = vshrl.u32 %v68, 16
  %v110 = vrot.slane %v108, 7
  %v111 = vshll.u32 %v68, 16
  %v113 = vor.u32 %v110, %v111
  %v114 = vrot.slane %v96, 4
  %v115 = vrot.slane %v103, 4
  %v116 = vrot.slane %v110, 4
  %vm129 = vcmask 1043456
  %vm130 = vmand %vm129, %vm40
  %vm131 = vcmask 1047556
  %vm132 = vmand %vm131, %vm42
  %vm133 = vmor %vm132, %vm130
  %v134 = vld [vmem:[#allocation2] sm:$0xff]
  %v135 = vsel %vm133, %v75, %v134
  %136 = vst [vmem:[#allocation2] sm:$0xff] %v135
  %v137 = vld [vmem:[#allocation2 + $0x8] sm:$0xff]
  %v138 = vsel %vm133, %v82, %v137
  %139 = vst [vmem:[#allocation2 + $0x8] sm:$0xff] %v138
  %v140 = vld [vmem:[#allocation2 + $0x10] sm:$0xff]
  %v141 = vsel %vm133, %v89, %v140
  %142 = vst [vmem:[#allocation2 + $0x10] sm:$0xff] %v141
  %v143 = vld [vmem:[#allocation2 + $0x18] sm:$0x11]
  %v144 = vsel %vm21, %v90, %v143
  %145 = vst [vmem:[#allocation2 + $0x18] sm:$0x11] %v144
  %v146 = vld [vmem:[#allocation2 + $0x20] sm:$0x11]
  %v147 = vsel %vm21, %v91, %v146
  %148 = vst [vmem:[#allocation2 + $0x20] sm:$0x11] %v147
  %v149 = vld [vmem:[#allocation2 + $0x28] sm:$0x11]
  %v150 = vsel %vm21, %v92, %v149
  %151 = vst [vmem:[#allocation2 + $0x28] sm:$0x11] %v150
  %v152 = vld [vmem:[#allocation2 + $0x30] sm:$0xff]
  %v153 = vsel %vm133, %v99, %v152
  %154 = vst [vmem:[#allocation2 + $0x30] sm:$0xff] %v153
  %v155 = vld [vmem:[#allocation2 + $0x38] sm:$0xff]
  %v156 = vsel %vm133, %v106, %v155
  %157 = vst [vmem:[#allocation2 + $0x38] sm:$0xff] %v156
  %v158 = vld [vmem:[#allocation2 + $0x40] sm:$0xff]
  %v159 = vsel %vm133, %v113, %v158
  %160 = vst [vmem:[#allocation2 + $0x40] sm:$0xff] %v159
  %v161 = vld [vmem:[#allocation2 + $0x48] sm:$0x11]
  %v162 = vsel %vm21, %v114, %v161
  %163 = vst [vmem:[#allocation2 + $0x48] sm:$0x11] %v162
  %v164 = vld [vmem:[#allocation2 + $0x50] sm:$0x11]
  %v165 = vsel %vm21, %v115, %v164
  %166 = vst [vmem:[#allocation2 + $0x50] sm:$0x11] %v165
  %v167 = vld [vmem:[#allocation2 + $0x58] sm:$0x11]
  %v168 = vsel %vm21, %v116, %v167
  %169 = vst [vmem:[#allocation2 + $0x58] sm:$0x11] %v168
  %v170 = vld [vmem:[%s2] sm:$0x3f]
  %v171 = vld [vmem:[#allocation2] sm:$0xff]
  %v172 = vld [vmem:[#allocation2 + $0x8] sm:$0xff]
  %v173 = vld [vmem:[#allocation2 + $0x10] sm:$0xff]
  %v174 = vld [vmem:[#allocation2 + $0x30] sm:$0xff]
  %v175 = vld [vmem:[#allocation2 + $0x38] sm:$0xff]
  %v176 = vld [vmem:[#allocation2 + $0x40] sm:$0xff]
  %v177 = vld [vmem:[%s1] sm:$0xff]
  %v178 = vld [vmem:[%s1 + $0x8] sm:$0xff]
  %v179 = vld [vmem:[%s1 + $0x10] sm:$0xff]
  %v180 = vld [vmem:[%s1 + $0x18] sm:$0xff]
  %v181 = vld [vmem:[%s1 + $0x20] sm:$0xff]
  %v182 = vld [vmem:[%s1 + $0x28] sm:$0xff]
  %v183 = vld [vmem:[%s1 + $0x30] sm:$0xff]
  %v184 = vld [vmem:[%s1 + $0x38] sm:$0xff]
  %v185 = vld [vmem:[%s1 + $0x40] sm:$0xff]
  %v186 = vld [vmem:[%s1 + $0x48] sm:$0xff]
  %v187 = vld [vmem:[%s1 + $0x50] sm:$0xff]
  %v188 = vld [vmem:[%s1 + $0x58] sm:$0xff]
  %v189 = vld [vmem:[%s1 + $0x60] sm:$0xff]
  %v190 = vld [vmem:[%s1 + $0x68] sm:$0xff]
  %v191 = vld [vmem:[%s1 + $0x70] sm:$0xff]
  %v192 = vld [vmem:[%s1 + $0x78] sm:$0xff]
  %v193 = vld [vmem:[%s1 + $0x80] sm:$0xff]
  %v194 = vld [vmem:[%s1 + $0x88] sm:$0xff]
  %v195 = vld [vmem:[%s1 + $0x90] sm:$0xff]
  %v196 = vld [vmem:[%s1 + $0x98] sm:$0xff]
  %v197 = vld [vmem:[%s1 + $0xa0] sm:$0xff]
  %v198 = vld [vmem:[%s1 + $0xa8] sm:$0xff]
  %v199 = vld [vmem:[%s1 + $0xb0] sm:$0xff]
  %v200 = vld [vmem:[%s1 + $0xb8] sm:$0xff]
  %v201 = vld [vmem:[%s1 + $0xc0] sm:$0xff]
  %v202 = vld [vmem:[%s1 + $0xc8] sm:$0xff]
  %v203 = vld [vmem:[%s1 + $0xd0] sm:$0xff]
  %v204 = vld [vmem:[%s1 + $0xd8] sm:$0xff]
  %v205 = vld [vmem:[%s1 + $0xe0] sm:$0xff]
  %v206 = vld [vmem:[%s1 + $0xe8] sm:$0xff]
  %v207 = vld [vmem:[%s1 + $0xf0] sm:$0xff]
  %v208 = vld [vmem:[%s1 + $0xf8] sm:$0xff]
  %v209 = vld [vmem:[%s1 + $0x100] sm:$0xff]
  %v210 = vld [vmem:[%s1 + $0x108] sm:$0xff]
  %v211 = vld [vmem:[%s1 + $0x110] sm:$0xff]
  %v212 = vld [vmem:[%s1 + $0x118] sm:$0xff]
  %v213 = vld [vmem:[%s1 + $0x120] sm:$0xff]
  %v214 = vld [vmem:[%s1 + $0x128] sm:$0xff]
  %v215 = vld [vmem:[%s1 + $0x130] sm:$0xff]
  %v216 = vld [vmem:[%s1 + $0x138] sm:$0xff]
  %v217 = vld [vmem:[%s1 + $0x140] sm:$0xff]
  %v218 = vld [vmem:[%s1 + $0x148] sm:$0xff]
  %v219 = vld [vmem:[%s1 + $0x150] sm:$0xff]
  %v220 = vld [vmem:[%s1 + $0x158] sm:$0xff]
  %v221 = vld [vmem:[%s1 + $0x160] sm:$0xff]
  %v222 = vld [vmem:[%s1 + $0x168] sm:$0xff]
  %v223 = vld [vmem:[%s1 + $0x170] sm:$0xff]
  %v224 = vld [vmem:[%s1 + $0x178] sm:$0xff]
  %v225 = vld [vmem:[%s1 + $0x180] sm:$0xff]
  %v226 = vld [vmem:[%s1 + $0x188] sm:$0xff]
  %v227 = vld [vmem:[%s1 + $0x190] sm:$0xff]
  %v228 = vld [vmem:[%s1 + $0x198] sm:$0xff]
  %v229 = vld [vmem:[%s1 + $0x1a0] sm:$0xff]
  %v230 = vld [vmem:[%s1 + $0x1a8] sm:$0xff]
  %v231 = vld [vmem:[%s1 + $0x1b0] sm:$0xff]
  %v232 = vld [vmem:[%s1 + $0x1b8] sm:$0xff]
  %v233 = vld [vmem:[%s1 + $0x1c0] sm:$0xff]
  %v234 = vld [vmem:[%s1 + $0x1c8] sm:$0xff]
  %v235 = vld [vmem:[%s1 + $0x1d0] sm:$0xff]
  %v236 = vld [vmem:[%s1 + $0x1d8] sm:$0xff]
  %v237 = vld [vmem:[%s1 + $0x1e0] sm:$0xff]
  %v238 = vld [vmem:[%s1 + $0x1e8] sm:$0xff]
  %v239 = vld [vmem:[%s1 + $0x1f0] sm:$0xff]
  %v240 = vld [vmem:[%s1 + $0x1f8] sm:$0xff]
  %v241 = vld [vmem:[%s1 + $0x200] sm:$0xff]
  %v242 = vld [vmem:[%s1 + $0x208] sm:$0xff]
  %v243 = vld [vmem:[%s1 + $0x210] sm:$0xff]
  %v244 = vld [vmem:[%s1 + $0x218] sm:$0xff]
  %v245 = vld [vmem:[%s1 + $0x220] sm:$0xff]
  %v246 = vld [vmem:[%s1 + $0x228] sm:$0xff]
  %v247 = vld [vmem:[%s1 + $0x230] sm:$0xff]
  %v248 = vld [vmem:[%s1 + $0x238] sm:$0xff]
  %v249 = vld [vmem:[%s1 + $0x240] sm:$0xff]
  %v250 = vld [vmem:[%s1 + $0x248] sm:$0xff]
  %v251 = vld [vmem:[%s1 + $0x250] sm:$0xff]
  %v252 = vld [vmem:[%s1 + $0x258] sm:$0xff]
  %v253 = vld [vmem:[%s1 + $0x260] sm:$0xff]
  %v254 = vld [vmem:[%s1 + $0x268] sm:$0xff]
  %v255 = vld [vmem:[%s1 + $0x270] sm:$0xff]
  %v256 = vld [vmem:[%s1 + $0x278] sm:$0xff]
  %v257 = vld [vmem:[%s1 + $0x280] sm:$0xff]
  %v258 = vld [vmem:[%s1 + $0x288] sm:$0xff]
  %v259 = vld [vmem:[%s1 + $0x290] sm:$0xff]
  %v260 = vld [vmem:[%s1 + $0x298] sm:$0xff]
  %v261 = vld [vmem:[%s1 + $0x2a0] sm:$0xff]
  %v262 = vld [vmem:[%s1 + $0x2a8] sm:$0xff]
  %v263 = vld [vmem:[%s1 + $0x2b0] sm:$0xff]
  %v264 = vld [vmem:[%s1 + $0x2b8] sm:$0xff]
  %v265 = vld [vmem:[%s1 + $0x2c0] sm:$0xff]
  %v266 = vld [vmem:[%s1 + $0x2c8] sm:$0xff]
  %v267 = vld [vmem:[%s1 + $0x2d0] sm:$0xff]
  %v268 = vld [vmem:[%s1 + $0x2d8] sm:$0xff]
  %v269 = vld [vmem:[%s1 + $0x2e0] sm:$0xff]
  %v270 = vld [vmem:[%s1 + $0x2e8] sm:$0xff]
  %v271 = vld [vmem:[%s1 + $0x2f0] sm:$0xff]
  %v272 = vld [vmem:[%s1 + $0x2f8] sm:$0xff]
  %v273 = vld [vmem:[%s1 + $0x300] sm:$0xff]
  %v274 = vld [vmem:[%s1 + $0x308] sm:$0xff]
  %v275 = vld [vmem:[%s1 + $0x310] sm:$0xff]
  %v276 = vld [vmem:[%s1 + $0x318] sm:$0xff]
  %v277 = vld [vmem:[%s1 + $0x320] sm:$0xff]
  %v278 = vld [vmem:[%s1 + $0x328] sm:$0xff]
  %v279 = vld [vmem:[%s1 + $0x330] sm:$0xff]
  %v280 = vld [vmem:[%s1 + $0x338] sm:$0xff]
  %v281 = vld [vmem:[%s1 + $0x340] sm:$0xff]
  %v282 = vld [vmem:[%s1 + $0x348] sm:$0xff]
  %v283 = vld [vmem:[%s1 + $0x350] sm:$0xff]
  %v284 = vld [vmem:[%s1 + $0x358] sm:$0xff]
  %v285 = vld [vmem:[%s1 + $0x360] sm:$0xff]
  %v286 = vld [vmem:[%s1 + $0x368] sm:$0xff]
  %v287 = vld [vmem:[%s1 + $0x370] sm:$0xff]
  %v288 = vld [vmem:[%s1 + $0x378] sm:$0xff]
  %v289 = vld [vmem:[%s1 + $0x380] sm:$0xff]
  %v290 = vld [vmem:[%s1 + $0x388] sm:$0xff]
  %v291 = vld [vmem:[%s1 + $0x390] sm:$0xff]
  %v292 = vld [vmem:[%s1 + $0x398] sm:$0xff]
  %v293 = vld [vmem:[%s1 + $0x3a0] sm:$0xff]
  %v294 = vld [vmem:[%s1 + $0x3a8] sm:$0xff]
  %v295 = vld [vmem:[%s1 + $0x3b0] sm:$0xff]
  %v296 = vld [vmem:[%s1 + $0x3b8] sm:$0xff]
  %v297 = vld [vmem:[%s1 + $0x3c0] sm:$0xff]
  %v298 = vld [vmem:[%s1 + $0x3c8] sm:$0xff]
  %v299 = vld [vmem:[%s1 + $0x3d0] sm:$0xff]
  %v300 = vld [vmem:[%s1 + $0x3d8] sm:$0xff]
  %v301 = vld [vmem:[%s1 + $0x3e0] sm:$0xff]
  %v302 = vld [vmem:[%s1 + $0x3e8] sm:$0xff]
  %v303 = vld [vmem:[%s1 + $0x3f0] sm:$0xff]
  %v304 = vld [vmem:[%s1 + $0x3f8] sm:$0xff]
  %v305 = vld [vmem:[%s1 + $0x400] sm:$0xff]
  %v306 = vld [vmem:[%s1 + $0x408] sm:$0xff]
  %v307 = vld [vmem:[%s1 + $0x410] sm:$0xff]
  %v308 = vld [vmem:[%s1 + $0x418] sm:$0xff]
  %v309 = vld [vmem:[%s1 + $0x420] sm:$0xff]
  %v310 = vld [vmem:[%s1 + $0x428] sm:$0xff]
  %v311 = vld [vmem:[%s1 + $0x430] sm:$0xff]
  %v312 = vld [vmem:[%s1 + $0x438] sm:$0xff]
  %v313 = vld [vmem:[%s1 + $0x440] sm:$0xff]
  %v314 = vld [vmem:[%s1 + $0x448] sm:$0xff]
  %v315 = vld [vmem:[%s1 + $0x450] sm:$0xff]
  %v316 = vld [vmem:[%s1 + $0x458] sm:$0xff]
  %v317 = vld [vmem:[%s1 + $0x460] sm:$0xff]
  %v318 = vld [vmem:[%s1 + $0x468] sm:$0xff]
  %v319 = vld [vmem:[%s1 + $0x470] sm:$0xff]
  %v320 = vld [vmem:[%s1 + $0x478] sm:$0xff]
  %v321 = vld [vmem:[%s1 + $0x480] sm:$0xff]
  %v322 = vld [vmem:[%s1 + $0x488] sm:$0xff]
  %v323 = vld [vmem:[%s1 + $0x490] sm:$0xff]
  %v324 = vld [vmem:[%s1 + $0x498] sm:$0xff]
  %v325 = vld [vmem:[%s1 + $0x4a0] sm:$0xff]
  %v326 = vld [vmem:[%s1 + $0x4a8] sm:$0xff]
  %v327 = vld [vmem:[%s1 + $0x4b0] sm:$0xff]
  %v328 = vld [vmem:[%s1 + $0x4b8] sm:$0xff]
  %v329 = vld [vmem:[%s1 + $0x4c0] sm:$0xff]
  %v330 = vld [vmem:[%s1 + $0x4c8] sm:$0xff]
  %v331 = vld [vmem:[%s1 + $0x4d0] sm:$0xff]
  %v332 = vld [vmem:[%s1 + $0x4d8] sm:$0xff]
  %v333 = vld [vmem:[%s1 + $0x4e0] sm:$0xff]
  %v334 = vld [vmem:[%s1 + $0x4e8] sm:$0xff]
  %v335 = vld [vmem:[%s1 + $0x4f0] sm:$0xff]
  %v336 = vld [vmem:[%s1 + $0x4f8] sm:$0xff]
  %v337 = vld [vmem:[%s1 + $0x500] sm:$0xff]
  %v338 = vld [vmem:[%s1 + $0x508] sm:$0xff]
  %v339 = vld [vmem:[%s1 + $0x510] sm:$0xff]
  %v340 = vld [vmem:[%s1 + $0x518] sm:$0xff]
  %v341 = vld [vmem:[%s1 + $0x520] sm:$0xff]
  %v342 = vld [vmem:[%s1 + $0x528] sm:$0xff]
  %v343 = vld [vmem:[%s1 + $0x530] sm:$0xff]
  %v344 = vld [vmem:[%s1 + $0x538] sm:$0xff]
  %v345 = vld [vmem:[%s1 + $0x540] sm:$0xff]
  %v346 = vld [vmem:[%s1 + $0x548] sm:$0xff]
  %v347 = vld [vmem:[%s1 + $0x550] sm:$0xff]
  %v348 = vld [vmem:[%s1 + $0x558] sm:$0xff]
  %v349 = vld [vmem:[%s1 + $0x560] sm:$0xff]
  %v350 = vld [vmem:[%s1 + $0x568] sm:$0xff]
  %v351 = vld [vmem:[%s1 + $0x570] sm:$0xff]
  %v352 = vld [vmem:[%s1 + $0x578] sm:$0xff]
  %v353 = vld [vmem:[%s1 + $0x580] sm:$0xff]
  %v354 = vld [vmem:[%s1 + $0x588] sm:$0xff]
  %v355 = vld [vmem:[%s1 + $0x590] sm:$0xff]
  %v356 = vld [vmem:[%s1 + $0x598] sm:$0xff]
  %v357 = vld [vmem:[%s1 + $0x5a0] sm:$0xff]
  %v358 = vld [vmem:[%s1 + $0x5a8] sm:$0xff]
  %v359 = vld [vmem:[%s1 + $0x5b0] sm:$0xff]
  %v360 = vld [vmem:[%s1 + $0x5b8] sm:$0xff]
  %v361 = vld [vmem:[%s1 + $0x5c0] sm:$0xff]
  %v362 = vld [vmem:[%s1 + $0x5c8] sm:$0xff]
  %v363 = vld [vmem:[%s1 + $0x5d0] sm:$0xff]
  %v364 = vld [vmem:[%s1 + $0x5d8] sm:$0xff]
  %v365 = vld [vmem:[%s1 + $0x5e0] sm:$0xff]
  %v366 = vld [vmem:[%s1 + $0x5e8] sm:$0xff]
  %v367 = vld [vmem:[%s1 + $0x5f0] sm:$0xff]
  %v368 = vld [vmem:[%s1 + $0x5f8] sm:$0xff]
  %v369 = vld [vmem:[%s1 + $0x600] sm:$0xff]
  %v370 = vld [vmem:[%s1 + $0x608] sm:$0xff]
  %v371 = vld [vmem:[%s1 + $0x610] sm:$0xff]
  %v372 = vld [vmem:[%s1 + $0x618] sm:$0xff]
  %v373 = vld [vmem:[%s1 + $0x620] sm:$0xff]
  %v374 = vld [vmem:[%s1 + $0x628] sm:$0xff]
  %v375 = vld [vmem:[%s1 + $0x630] sm:$0xff]
  %v376 = vld [vmem:[%s1 + $0x638] sm:$0xff]
  %v377 = vld [vmem:[%s1 + $0x640] sm:$0xff]
  %v378 = vld [vmem:[%s1 + $0x648] sm:$0xff]
  %v379 = vld [vmem:[%s1 + $0x650] sm:$0xff]
  %v380 = vld [vmem:[%s1 + $0x658] sm:$0xff]
  %v381 = vld [vmem:[%s1 + $0x660] sm:$0xff]
  %v382 = vld [vmem:[%s1 + $0x668] sm:$0xff]
  %v383 = vld [vmem:[%s1 + $0x670] sm:$0xff]
  %v384 = vld [vmem:[%s1 + $0x678] sm:$0xff]
  %v385 = vld [vmem:[%s1 + $0x680] sm:$0xff]
  %v386 = vld [vmem:[%s1 + $0x688] sm:$0xff]
  %v387 = vld [vmem:[%s1 + $0x690] sm:$0xff]
  %v388 = vld [vmem:[%s1 + $0x698] sm:$0xff]
  %v389 = vld [vmem:[%s1 + $0x6a0] sm:$0xff]
  %v390 = vld [vmem:[%s1 + $0x6a8] sm:$0xff]
  %v391 = vld [vmem:[%s1 + $0x6b0] sm:$0xff]
  %v392 = vld [vmem:[%s1 + $0x6b8] sm:$0xff]
  %v393 = vld [vmem:[%s1 + $0x6c0] sm:$0xff]
  %v394 = vld [vmem:[%s1 + $0x6c8] sm:$0xff]
  %v395 = vld [vmem:[%s1 + $0x6d0] sm:$0xff]
  %v396 = vld [vmem:[%s1 + $0x6d8] sm:$0xff]
  %v397 = vld [vmem:[%s1 + $0x6e0] sm:$0xff]
  %v398 = vld [vmem:[%s1 + $0x6e8] sm:$0xff]
  %v399 = vld [vmem:[%s1 + $0x6f0] sm:$0xff]
  %v400 = vld [vmem:[%s1 + $0x6f8] sm:$0xff]
  %v401 = vld [vmem:[%s1 + $0x700] sm:$0xff]
  %v402 = vld [vmem:[%s1 + $0x708] sm:$0xff]
  %v403 = vld [vmem:[%s1 + $0x710] sm:$0xff]
  %v404 = vld [vmem:[%s1 + $0x718] sm:$0xff]
  %v405 = vld [vmem:[%s1 + $0x720] sm:$0xff]
  %v406 = vld [vmem:[%s1 + $0x728] sm:$0xff]
  %v407 = vld [vmem:[%s1 + $0x730] sm:$0xff]
  %v408 = vld [vmem:[%s1 + $0x738] sm:$0xff]
  %v409 = vld [vmem:[%s1 + $0x740] sm:$0xff]
  %v410 = vld [vmem:[%s1 + $0x748] sm:$0xff]
  %v411 = vld [vmem:[%s1 + $0x750] sm:$0xff]
  %v412 = vld [vmem:[%s1 + $0x758] sm:$0xff]
  %v413 = vld [vmem:[%s1 + $0x760] sm:$0xff]
  %v414 = vld [vmem:[%s1 + $0x768] sm:$0xff]
  %v415 = vld [vmem:[%s1 + $0x770] sm:$0xff]
  %v416 = vld [vmem:[%s1 + $0x778] sm:$0xff]
  %v417 = vld [vmem:[%s1 + $0x780] sm:$0xff]
  %v418 = vld [vmem:[%s1 + $0x788] sm:$0xff]
  %v419 = vld [vmem:[%s1 + $0x790] sm:$0xff]
  %v420 = vld [vmem:[%s1 + $0x798] sm:$0xff]
  %v421 = vld [vmem:[%s1 + $0x7a0] sm:$0xff]
  %v422 = vld [vmem:[%s1 + $0x7a8] sm:$0xff]
  %v423 = vld [vmem:[%s1 + $0x7b0] sm:$0xff]
  %v424 = vld [vmem:[%s1 + $0x7b8] sm:$0xff]
  %v425 = vld [vmem:[%s1 + $0x7c0] sm:$0xff]
  %v426 = vld [vmem:[%s1 + $0x7c8] sm:$0xff]
  %v427 = vld [vmem:[%s1 + $0x7d0] sm:$0xff]
  %v428 = vld [vmem:[%s1 + $0x7d8] sm:$0xff]
  %v429 = vld [vmem:[%s1 + $0x7e0] sm:$0xff]
  %v430 = vld [vmem:[%s1 + $0x7e8] sm:$0xff]
  %v431 = vld [vmem:[%s1 + $0x7f0] sm:$0xff]
  %v432 = vld [vmem:[%s1 + $0x7f8] sm:$0xff]
  %v433 = vld [vmem:[%s1 + $0x800] sm:$0xff]
  %v434 = vld [vmem:[%s1 + $0x808] sm:$0xff]
  %v435 = vld [vmem:[%s1 + $0x810] sm:$0xff]
  %v436 = vld [vmem:[%s1 + $0x818] sm:$0xff]
  %v437 = vld [vmem:[%s1 + $0x820] sm:$0xff]
  %v438 = vld [vmem:[%s1 + $0x828] sm:$0xff]
  %v439 = vld [vmem:[%s1 + $0x830] sm:$0xff]
  %v440 = vld [vmem:[%s1 + $0x838] sm:$0xff]
  %v441 = vld [vmem:[%s1 + $0x840] sm:$0xff]
  %v442 = vld [vmem:[%s1 + $0x848] sm:$0xff]
  %v443 = vld [vmem:[%s1 + $0x850] sm:$0xff]
  %v444 = vld [vmem:[%s1 + $0x858] sm:$0xff]
  %v445 = vld [vmem:[%s1 + $0x860] sm:$0xff]
  %v446 = vld [vmem:[%s1 + $0x868] sm:$0xff]
  %v447 = vld [vmem:[%s1 + $0x870] sm:$0xff]
  %v448 = vld [vmem:[%s1 + $0x878] sm:$0xff]
  %v449 = vld [vmem:[%s1 + $0x880] sm:$0xff]
  %v450 = vld [vmem:[%s1 + $0x888] sm:$0xff]
  %v451 = vld [vmem:[%s1 + $0x890] sm:$0xff]
  %v452 = vld [vmem:[%s1 + $0x898] sm:$0xff]
  %v453 = vld [vmem:[%s1 + $0x8a0] sm:$0xff]
  %v454 = vld [vmem:[%s1 + $0x8a8] sm:$0xff]
  %v455 = vld [vmem:[%s1 + $0x8b0] sm:$0xff]
  %v456 = vld [vmem:[%s1 + $0x8b8] sm:$0xff]
  %v457 = vld [vmem:[%s1 + $0x8c0] sm:$0xff]
  %v458 = vld [vmem:[%s1 + $0x8c8] sm:$0xff]
  %v459 = vld [vmem:[%s1 + $0x8d0] sm:$0xff]
  %v460 = vld [vmem:[%s1 + $0x8d8] sm:$0xff]
  %v461 = vld [vmem:[%s1 + $0x8e0] sm:$0xff]
  %v462 = vld [vmem:[%s1 + $0x8e8] sm:$0xff]
  %v463 = vld [vmem:[%s1 + $0x8f0] sm:$0xff]
  %v464 = vld [vmem:[%s1 + $0x8f8] sm:$0xff]
  %v465 = vld [vmem:[#allocation2 + $0x18] sm:$0x11]
  %v466 = vld [vmem:[#allocation2 + $0x20] sm:$0x11]
  %v467 = vld [vmem:[#allocation2 + $0x28] sm:$0x11]
  %v468 = vld [vmem:[#allocation2 + $0x48] sm:$0x11]
  %v469 = vld [vmem:[#allocation2 + $0x50] sm:$0x11]
  %v470 = vld [vmem:[#allocation2 + $0x58] sm:$0x11]
  %vm471 = vsmask.f32 3328
  %vm472 = vsmask.f32 7440
  %vm473 = vmor %vm471, %vm472
  %v475 = vshrl.u32 %v171, 16
  %v477 = vrot.slane %v475, 4
  %v478 = vshll.u32 %v171, 16
  %v480 = vrot.slane %v478, 5
  %v481 = vor.u32 %v477, %v480
  %v482 = vrot.slane %v481, 4
  %v484 = vshll.u32 %v465, 16
  %v486 = vrot.slane %v484, 5
  %v487 = vsel %vm473, %v482, %v486
  %v489 = vshrl.u32 %v172, 16
  %v491 = vrot.slane %v489, 4
  %v492 = vshll.u32 %v172, 16
  %v494 = vrot.slane %v492, 5
  %v495 = vor.u32 %v491, %v494
  %v496 = vrot.slane %v495, 4
  %v498 = vshll.u32 %v466, 16
  %v500 = vrot.slane %v498, 5
  %v501 = vsel %vm473, %v496, %v500
  %v503 = vshrl.u32 %v173, 16
  %v505 = vrot.slane %v503, 4
  %v506 = vshll.u32 %v173, 16
  %v508 = vrot.slane %v506, 5
  %v509 = vor.u32 %v505, %v508
  %v510 = vrot.slane %v509, 4
  %v512 = vshll.u32 %v467, 16
  %v514 = vrot.slane %v512, 5
  %v515 = vsel %vm473, %v510, %v514
  %v517 = vshrl.u32 %v174, 16
  %v519 = vrot.slane %v517, 4
  %v520 = vshll.u32 %v174, 16
  %v522 = vrot.slane %v520, 5
  %v523 = vor.u32 %v519, %v522
  %v524 = vrot.slane %v523, 4
  %v526 = vshll.u32 %v468, 16
  %v528 = vrot.slane %v526, 5
  %v529 = vsel %vm473, %v524, %v528
  %v531 = vshrl.u32 %v175, 16
  %v533 = vrot.slane %v531, 4
  %v534 = vshll.u32 %v175, 16
  %v536 = vrot.slane %v534, 5
  %v537 = vor.u32 %v533, %v536
  %v538 = vrot.slane %v537, 4
  %v540 = vshll.u32 %v469, 16
  %v542 = vrot.slane %v540, 5
  %v543 = vsel %vm473, %v538, %v542
  %v545 = vshrl.u32 %v176, 16
  %v547 = vrot.slane %v545, 4
  %v548 = vshll.u32 %v176, 16
  %v550 = vrot.slane %v548, 5
  %v551 = vor.u32 %v547, %v550
  %v552 = vrot.slane %v551, 4
  %v554 = vshll.u32 %v470, 16
  %v556 = vrot.slane %v554, 5
  %v557 = vsel %vm473, %v552, %v556
  %s558 = scalar_lea.vmem %s1, 2304
  %v559 = vld [vmem:[%s558] sm:$0xff]
  %v560 = vld [vmem:[%s558 + $0x8] sm:$0xff]
  %v561 = vld [vmem:[%s558 + $0x10] sm:$0xff]
  %v562 = vld [vmem:[%s558 + $0x18] sm:$0xff]
  %v563 = vld [vmem:[%s558 + $0x20] sm:$0xff]
  %v564 = vld [vmem:[%s558 + $0x28] sm:$0xff]
  %v565 = vld [vmem:[%s558 + $0x30] sm:$0xff]
  %v566 = vld [vmem:[%s558 + $0x38] sm:$0xff]
  %v567 = vld [vmem:[%s558 + $0x40] sm:$0xff]
  %v568 = vld [vmem:[%s558 + $0x48] sm:$0xff]
  %v569 = vld [vmem:[%s558 + $0x50] sm:$0xff]
  %v570 = vld [vmem:[%s558 + $0x58] sm:$0xff]
  %v571 = vld [vmem:[%s558 + $0x60] sm:$0xff]
  %v572 = vld [vmem:[%s558 + $0x68] sm:$0xff]
  %v573 = vld [vmem:[%s558 + $0x70] sm:$0xff]
  %v574 = vld [vmem:[%s558 + $0x78] sm:$0xff]
  %v575 = vld [vmem:[%s558 + $0x80] sm:$0xff]
  %v576 = vld [vmem:[%s558 + $0x88] sm:$0xff]
  %v577 = vld [vmem:[%s558 + $0x90] sm:$0xff]
  %v578 = vld [vmem:[%s558 + $0x98] sm:$0xff]
  %v579 = vld [vmem:[%s558 + $0xa0] sm:$0xff]
  %v580 = vld [vmem:[%s558 + $0xa8] sm:$0xff]
  %v581 = vld [vmem:[%s558 + $0xb0] sm:$0xff]
  %v582 = vld [vmem:[%s558 + $0xb8] sm:$0xff]
  %v583 = vld [vmem:[%s558 + $0xc0] sm:$0xff]
  %v584 = vld [vmem:[%s558 + $0xc8] sm:$0xff]
  %v585 = vld [vmem:[%s558 + $0xd0] sm:$0xff]
  %v586 = vld [vmem:[%s558 + $0xd8] sm:$0xff]
  %v587 = vld [vmem:[%s558 + $0xe0] sm:$0xff]
  %v588 = vld [vmem:[%s558 + $0xe8] sm:$0xff]
  %v589 = vld [vmem:[%s558 + $0xf0] sm:$0xff]
  %v590 = vld [vmem:[%s558 + $0xf8] sm:$0xff]
  %v591 = vld [vmem:[%s558 + $0x100] sm:$0xff]
  %v592 = vld [vmem:[%s558 + $0x108] sm:$0xff]
  %v593 = vld [vmem:[%s558 + $0x110] sm:$0xff]
  %v594 = vld [vmem:[%s558 + $0x118] sm:$0xff]
  %v595 = vld [vmem:[%s558 + $0x120] sm:$0xff]
  %v596 = vld [vmem:[%s558 + $0x128] sm:$0xff]
  %v597 = vld [vmem:[%s558 + $0x130] sm:$0xff]
  %v598 = vld [vmem:[%s558 + $0x138] sm:$0xff]
  %v599 = vld [vmem:[%s558 + $0x140] sm:$0xff]
  %v600 = vld [vmem:[%s558 + $0x148] sm:$0xff]
  %v601 = vld [vmem:[%s558 + $0x150] sm:$0xff]
  %v602 = vld [vmem:[%s558 + $0x158] sm:$0xff]
  %v603 = vld [vmem:[%s558 + $0x160] sm:$0xff]
  %v604 = vld [vmem:[%s558 + $0x168] sm:$0xff]
  %v605 = vld [vmem:[%s558 + $0x170] sm:$0xff]
  %v606 = vld [vmem:[%s558 + $0x178] sm:$0xff]
  %v607 = vld [vmem:[%s558 + $0x180] sm:$0xff]
  %v608 = vld [vmem:[%s558 + $0x188] sm:$0xff]
  %v609 = vld [vmem:[%s558 + $0x190] sm:$0xff]
  %v610 = vld [vmem:[%s558 + $0x198] sm:$0xff]
  %v611 = vld [vmem:[%s558 + $0x1a0] sm:$0xff]
  %v612 = vld [vmem:[%s558 + $0x1a8] sm:$0xff]
  %v613 = vld [vmem:[%s558 + $0x1b0] sm:$0xff]
  %v614 = vld [vmem:[%s558 + $0x1b8] sm:$0xff]
  %v615 = vld [vmem:[%s558 + $0x1c0] sm:$0xff]
  %v616 = vld [vmem:[%s558 + $0x1c8] sm:$0xff]
  %v617 = vld [vmem:[%s558 + $0x1d0] sm:$0xff]
  %v618 = vld [vmem:[%s558 + $0x1d8] sm:$0xff]
  %v619 = vld [vmem:[%s558 + $0x1e0] sm:$0xff]
  %v620 = vld [vmem:[%s558 + $0x1e8] sm:$0xff]
  %v621 = vld [vmem:[%s558 + $0x1f0] sm:$0xff]
  %v622 = vld [vmem:[%s558 + $0x1f8] sm:$0xff]
  %v623 = vld [vmem:[%s558 + $0x200] sm:$0xff]
  %v624 = vld [vmem:[%s558 + $0x208] sm:$0xff]
  %v625 = vld [vmem:[%s558 + $0x210] sm:$0xff]
  %v626 = vld [vmem:[%s558 + $0x218] sm:$0xff]
  %v627 = vld [vmem:[%s558 + $0x220] sm:$0xff]
  %v628 = vld [vmem:[%s558 + $0x228] sm:$0xff]
  %v629 = vld [vmem:[%s558 + $0x230] sm:$0xff]
  %v630 = vld [vmem:[%s558 + $0x238] sm:$0xff]
  %v631 = vld [vmem:[%s558 + $0x240] sm:$0xff]
  %v632 = vld [vmem:[%s558 + $0x248] sm:$0xff]
  %v633 = vld [vmem:[%s558 + $0x250] sm:$0xff]
  %v634 = vld [vmem:[%s558 + $0x258] sm:$0xff]
  %v635 = vld [vmem:[%s558 + $0x260] sm:$0xff]
  %v636 = vld [vmem:[%s558 + $0x268] sm:$0xff]
  %v637 = vld [vmem:[%s558 + $0x270] sm:$0xff]
  %v638 = vld [vmem:[%s558 + $0x278] sm:$0xff]
  %v639 = vld [vmem:[%s558 + $0x280] sm:$0xff]
  %v640 = vld [vmem:[%s558 + $0x288] sm:$0xff]
  %v641 = vld [vmem:[%s558 + $0x290] sm:$0xff]
  %v642 = vld [vmem:[%s558 + $0x298] sm:$0xff]
  %v643 = vld [vmem:[%s558 + $0x2a0] sm:$0xff]
  %v644 = vld [vmem:[%s558 + $0x2a8] sm:$0xff]
  %v645 = vld [vmem:[%s558 + $0x2b0] sm:$0xff]
  %v646 = vld [vmem:[%s558 + $0x2b8] sm:$0xff]
  %v647 = vld [vmem:[%s558 + $0x2c0] sm:$0xff]
  %v648 = vld [vmem:[%s558 + $0x2c8] sm:$0xff]
  %v649 = vld [vmem:[%s558 + $0x2d0] sm:$0xff]
  %v650 = vld [vmem:[%s558 + $0x2d8] sm:$0xff]
  %v651 = vld [vmem:[%s558 + $0x2e0] sm:$0xff]
  %v652 = vld [vmem:[%s558 + $0x2e8] sm:$0xff]
  %v653 = vld [vmem:[%s558 + $0x2f0] sm:$0xff]
  %v654 = vld [vmem:[%s558 + $0x2f8] sm:$0xff]
  %v655 = vld [vmem:[%s558 + $0x300] sm:$0xff]
  %v656 = vld [vmem:[%s558 + $0x308] sm:$0xff]
  %v657 = vld [vmem:[%s558 + $0x310] sm:$0xff]
  %v658 = vld [vmem:[%s558 + $0x318] sm:$0xff]
  %v659 = vld [vmem:[%s558 + $0x320] sm:$0xff]
  %v660 = vld [vmem:[%s558 + $0x328] sm:$0xff]
  %v661 = vld [vmem:[%s558 + $0x330] sm:$0xff]
  %v662 = vld [vmem:[%s558 + $0x338] sm:$0xff]
  %v663 = vld [vmem:[%s558 + $0x340] sm:$0xff]
  %v664 = vld [vmem:[%s558 + $0x348] sm:$0xff]
  %v665 = vld [vmem:[%s558 + $0x350] sm:$0xff]
  %v666 = vld [vmem:[%s558 + $0x358] sm:$0xff]
  %v667 = vld [vmem:[%s558 + $0x360] sm:$0xff]
  %v668 = vld [vmem:[%s558 + $0x368] sm:$0xff]
  %v669 = vld [vmem:[%s558 + $0x370] sm:$0xff]
  %v670 = vld [vmem:[%s558 + $0x378] sm:$0xff]
  %v671 = vld [vmem:[%s558 + $0x380] sm:$0xff]
  %v672 = vld [vmem:[%s558 + $0x388] sm:$0xff]
  %v673 = vld [vmem:[%s558 + $0x390] sm:$0xff]
  %v674 = vld [vmem:[%s558 + $0x398] sm:$0xff]
  %v675 = vld [vmem:[%s558 + $0x3a0] sm:$0xff]
  %v676 = vld [vmem:[%s558 + $0x3a8] sm:$0xff]
  %v677 = vld [vmem:[%s558 + $0x3b0] sm:$0xff]
  %v678 = vld [vmem:[%s558 + $0x3b8] sm:$0xff]
  %v679 = vld [vmem:[%s558 + $0x3c0] sm:$0xff]
  %v680 = vld [vmem:[%s558 + $0x3c8] sm:$0xff]
  %v681 = vld [vmem:[%s558 + $0x3d0] sm:$0xff]
  %v682 = vld [vmem:[%s558 + $0x3d8] sm:$0xff]
  %v683 = vld [vmem:[%s558 + $0x3e0] sm:$0xff]
  %v684 = vld [vmem:[%s558 + $0x3e8] sm:$0xff]
  %v685 = vld [vmem:[%s558 + $0x3f0] sm:$0xff]
  %v686 = vld [vmem:[%s558 + $0x3f8] sm:$0xff]
  %v687 = vld [vmem:[%s558 + $0x400] sm:$0xff]
  %v688 = vld [vmem:[%s558 + $0x408] sm:$0xff]
  %v689 = vld [vmem:[%s558 + $0x410] sm:$0xff]
  %v690 = vld [vmem:[%s558 + $0x418] sm:$0xff]
  %v691 = vld [vmem:[%s558 + $0x420] sm:$0xff]
  %v692 = vld [vmem:[%s558 + $0x428] sm:$0xff]
  %v693 = vld [vmem:[%s558 + $0x430] sm:$0xff]
  %v694 = vld [vmem:[%s558 + $0x438] sm:$0xff]
  %v695 = vld [vmem:[%s558 + $0x440] sm:$0xff]
  %v696 = vld [vmem:[%s558 + $0x448] sm:$0xff]
  %v697 = vld [vmem:[%s558 + $0x450] sm:$0xff]
  %v698 = vld [vmem:[%s558 + $0x458] sm:$0xff]
  %v699 = vld [vmem:[%s558 + $0x460] sm:$0xff]
  %v700 = vld [vmem:[%s558 + $0x468] sm:$0xff]
  %v701 = vld [vmem:[%s558 + $0x470] sm:$0xff]
  %v702 = vld [vmem:[%s558 + $0x478] sm:$0xff]
  %v703 = vld [vmem:[%s558 + $0x480] sm:$0xff]
  %v704 = vld [vmem:[%s558 + $0x488] sm:$0xff]
  %v705 = vld [vmem:[%s558 + $0x490] sm:$0xff]
  %v706 = vld [vmem:[%s558 + $0x498] sm:$0xff]
  %v707 = vld [vmem:[%s558 + $0x4a0] sm:$0xff]
  %v708 = vld [vmem:[%s558 + $0x4a8] sm:$0xff]
  %v709 = vld [vmem:[%s558 + $0x4b0] sm:$0xff]
  %v710 = vld [vmem:[%s558 + $0x4b8] sm:$0xff]
  %v711 = vld [vmem:[%s558 + $0x4c0] sm:$0xff]
  %v712 = vld [vmem:[%s558 + $0x4c8] sm:$0xff]
  %v713 = vld [vmem:[%s558 + $0x4d0] sm:$0xff]
  %v714 = vld [vmem:[%s558 + $0x4d8] sm:$0xff]
  %v715 = vld [vmem:[%s558 + $0x4e0] sm:$0xff]
  %v716 = vld [vmem:[%s558 + $0x4e8] sm:$0xff]
  %v717 = vld [vmem:[%s558 + $0x4f0] sm:$0xff]
  %v718 = vld [vmem:[%s558 + $0x4f8] sm:$0xff]
  %v719 = vld [vmem:[%s558 + $0x500] sm:$0xff]
  %v720 = vld [vmem:[%s558 + $0x508] sm:$0xff]
  %v721 = vld [vmem:[%s558 + $0x510] sm:$0xff]
  %v722 = vld [vmem:[%s558 + $0x518] sm:$0xff]
  %v723 = vld [vmem:[%s558 + $0x520] sm:$0xff]
  %v724 = vld [vmem:[%s558 + $0x528] sm:$0xff]
  %v725 = vld [vmem:[%s558 + $0x530] sm:$0xff]
  %v726 = vld [vmem:[%s558 + $0x538] sm:$0xff]
  %v727 = vld [vmem:[%s558 + $0x540] sm:$0xff]
  %v728 = vld [vmem:[%s558 + $0x548] sm:$0xff]
  %v729 = vld [vmem:[%s558 + $0x550] sm:$0xff]
  %v730 = vld [vmem:[%s558 + $0x558] sm:$0xff]
  %v731 = vld [vmem:[%s558 + $0x560] sm:$0xff]
  %v732 = vld [vmem:[%s558 + $0x568] sm:$0xff]
  %v733 = vld [vmem:[%s558 + $0x570] sm:$0xff]
  %v734 = vld [vmem:[%s558 + $0x578] sm:$0xff]
  %v735 = vld [vmem:[%s558 + $0x580] sm:$0xff]
  %v736 = vld [vmem:[%s558 + $0x588] sm:$0xff]
  %v737 = vld [vmem:[%s558 + $0x590] sm:$0xff]
  %v738 = vld [vmem:[%s558 + $0x598] sm:$0xff]
  %v739 = vld [vmem:[%s558 + $0x5a0] sm:$0xff]
  %v740 = vld [vmem:[%s558 + $0x5a8] sm:$0xff]
  %v741 = vld [vmem:[%s558 + $0x5b0] sm:$0xff]
  %v742 = vld [vmem:[%s558 + $0x5b8] sm:$0xff]
  %v743 = vld [vmem:[%s558 + $0x5c0] sm:$0xff]
  %v744 = vld [vmem:[%s558 + $0x5c8] sm:$0xff]
  %v745 = vld [vmem:[%s558 + $0x5d0] sm:$0xff]
  %v746 = vld [vmem:[%s558 + $0x5d8] sm:$0xff]
  %v747 = vld [vmem:[%s558 + $0x5e0] sm:$0xff]
  %v748 = vld [vmem:[%s558 + $0x5e8] sm:$0xff]
  %v749 = vld [vmem:[%s558 + $0x5f0] sm:$0xff]
  %v750 = vld [vmem:[%s558 + $0x5f8] sm:$0xff]
  %v751 = vld [vmem:[%s558 + $0x600] sm:$0xff]
  %v752 = vld [vmem:[%s558 + $0x608] sm:$0xff]
  %v753 = vld [vmem:[%s558 + $0x610] sm:$0xff]
  %v754 = vld [vmem:[%s558 + $0x618] sm:$0xff]
  %v755 = vld [vmem:[%s558 + $0x620] sm:$0xff]
  %v756 = vld [vmem:[%s558 + $0x628] sm:$0xff]
  %v757 = vld [vmem:[%s558 + $0x630] sm:$0xff]
  %v758 = vld [vmem:[%s558 + $0x638] sm:$0xff]
  %v759 = vld [vmem:[%s558 + $0x640] sm:$0xff]
  %v760 = vld [vmem:[%s558 + $0x648] sm:$0xff]
  %v761 = vld [vmem:[%s558 + $0x650] sm:$0xff]
  %v762 = vld [vmem:[%s558 + $0x658] sm:$0xff]
  %v763 = vld [vmem:[%s558 + $0x660] sm:$0xff]
  %v764 = vld [vmem:[%s558 + $0x668] sm:$0xff]
  %v765 = vld [vmem:[%s558 + $0x670] sm:$0xff]
  %v766 = vld [vmem:[%s558 + $0x678] sm:$0xff]
  %v767 = vld [vmem:[%s558 + $0x680] sm:$0xff]
  %v768 = vld [vmem:[%s558 + $0x688] sm:$0xff]
  %v769 = vld [vmem:[%s558 + $0x690] sm:$0xff]
  %v770 = vld [vmem:[%s558 + $0x698] sm:$0xff]
  %v771 = vld [vmem:[%s558 + $0x6a0] sm:$0xff]
  %v772 = vld [vmem:[%s558 + $0x6a8] sm:$0xff]
  %v773 = vld [vmem:[%s558 + $0x6b0] sm:$0xff]
  %v774 = vld [vmem:[%s558 + $0x6b8] sm:$0xff]
  %v775 = vld [vmem:[%s558 + $0x6c0] sm:$0xff]
  %v776 = vld [vmem:[%s558 + $0x6c8] sm:$0xff]
  %v777 = vld [vmem:[%s558 + $0x6d0] sm:$0xff]
  %v778 = vld [vmem:[%s558 + $0x6d8] sm:$0xff]
  %v779 = vld [vmem:[%s558 + $0x6e0] sm:$0xff]
  %v780 = vld [vmem:[%s558 + $0x6e8] sm:$0xff]
  %v781 = vld [vmem:[%s558 + $0x6f0] sm:$0xff]
  %v782 = vld [vmem:[%s558 + $0x6f8] sm:$0xff]
  %v783 = vld [vmem:[%s558 + $0x700] sm:$0xff]
  %v784 = vld [vmem:[%s558 + $0x708] sm:$0xff]
  %v785 = vld [vmem:[%s558 + $0x710] sm:$0xff]
  %v786 = vld [vmem:[%s558 + $0x718] sm:$0xff]
  %v787 = vld [vmem:[%s558 + $0x720] sm:$0xff]
  %v788 = vld [vmem:[%s558 + $0x728] sm:$0xff]
  %v789 = vld [vmem:[%s558 + $0x730] sm:$0xff]
  %v790 = vld [vmem:[%s558 + $0x738] sm:$0xff]
  %v791 = vld [vmem:[%s558 + $0x740] sm:$0xff]
  %v792 = vld [vmem:[%s558 + $0x748] sm:$0xff]
  %v793 = vld [vmem:[%s558 + $0x750] sm:$0xff]
  %v794 = vld [vmem:[%s558 + $0x758] sm:$0xff]
  %v795 = vld [vmem:[%s558 + $0x760] sm:$0xff]
  %v796 = vld [vmem:[%s558 + $0x768] sm:$0xff]
  %v797 = vld [vmem:[%s558 + $0x770] sm:$0xff]
  %v798 = vld [vmem:[%s558 + $0x778] sm:$0xff]
  %v799 = vld [vmem:[%s558 + $0x780] sm:$0xff]
  %v800 = vld [vmem:[%s558 + $0x788] sm:$0xff]
  %v801 = vld [vmem:[%s558 + $0x790] sm:$0xff]
  %v802 = vld [vmem:[%s558 + $0x798] sm:$0xff]
  %v803 = vld [vmem:[%s558 + $0x7a0] sm:$0xff]
  %v804 = vld [vmem:[%s558 + $0x7a8] sm:$0xff]
  %v805 = vld [vmem:[%s558 + $0x7b0] sm:$0xff]
  %v806 = vld [vmem:[%s558 + $0x7b8] sm:$0xff]
  %v807 = vld [vmem:[%s558 + $0x7c0] sm:$0xff]
  %v808 = vld [vmem:[%s558 + $0x7c8] sm:$0xff]
  %v809 = vld [vmem:[%s558 + $0x7d0] sm:$0xff]
  %v810 = vld [vmem:[%s558 + $0x7d8] sm:$0xff]
  %v811 = vld [vmem:[%s558 + $0x7e0] sm:$0xff]
  %v812 = vld [vmem:[%s558 + $0x7e8] sm:$0xff]
  %v813 = vld [vmem:[%s558 + $0x7f0] sm:$0xff]
  %v814 = vld [vmem:[%s558 + $0x7f8] sm:$0xff]
  %v815 = vld [vmem:[%s558 + $0x800] sm:$0xff]
  %v816 = vld [vmem:[%s558 + $0x808] sm:$0xff]
  %v817 = vld [vmem:[%s558 + $0x810] sm:$0xff]
  %v818 = vld [vmem:[%s558 + $0x818] sm:$0xff]
  %v819 = vld [vmem:[%s558 + $0x820] sm:$0xff]
  %v820 = vld [vmem:[%s558 + $0x828] sm:$0xff]
  %v821 = vld [vmem:[%s558 + $0x830] sm:$0xff]
  %v822 = vld [vmem:[%s558 + $0x838] sm:$0xff]
  %v823 = vld [vmem:[%s558 + $0x840] sm:$0xff]
  %v824 = vld [vmem:[%s558 + $0x848] sm:$0xff]
  %v825 = vld [vmem:[%s558 + $0x850] sm:$0xff]
  %v826 = vld [vmem:[%s558 + $0x858] sm:$0xff]
  %v827 = vld [vmem:[%s558 + $0x860] sm:$0xff]
  %v828 = vld [vmem:[%s558 + $0x868] sm:$0xff]
  %v829 = vld [vmem:[%s558 + $0x870] sm:$0xff]
  %v830 = vld [vmem:[%s558 + $0x878] sm:$0xff]
  %v831 = vld [vmem:[%s558 + $0x880] sm:$0xff]
  %v832 = vld [vmem:[%s558 + $0x888] sm:$0xff]
  %v833 = vld [vmem:[%s558 + $0x890] sm:$0xff]
  %v834 = vld [vmem:[%s558 + $0x898] sm:$0xff]
  %v835 = vld [vmem:[%s558 + $0x8a0] sm:$0xff]
  %v836 = vld [vmem:[%s558 + $0x8a8] sm:$0xff]
  %v837 = vld [vmem:[%s558 + $0x8b0] sm:$0xff]
  %v838 = vld [vmem:[%s558 + $0x8b8] sm:$0xff]
  %v839 = vld [vmem:[%s558 + $0x8c0] sm:$0xff]
  %v840 = vld [vmem:[%s558 + $0x8c8] sm:$0xff]
  %v841 = vld [vmem:[%s558 + $0x8d0] sm:$0xff]
  %v842 = vld [vmem:[%s558 + $0x8d8] sm:$0xff]
  %v843 = vld [vmem:[%s558 + $0x8e0] sm:$0xff]
  %v844 = vld [vmem:[%s558 + $0x8e8] sm:$0xff]
  %v845 = vld [vmem:[%s558 + $0x8f0] sm:$0xff]
  %v846 = vld [vmem:[%s558 + $0x8f8] sm:$0xff]
  %v847 = vunpack.c.l.b16 %v487
  %v848 = vunpack.c.h.b16 %v487
  %v849 = vunpack.c.l.b16 %v501
  %v850 = vunpack.c.h.b16 %v501
  %v851 = vunpack.c.l.b16 %v515
  %v852 = vunpack.c.h.b16 %v515
  %v853 = vunpack.c.l.b16 %v529
  %v854 = vunpack.c.h.b16 %v529
  %v855 = vunpack.c.l.b16 %v543
  %v856 = vunpack.c.h.b16 %v543
  %v857 = vunpack.c.l.b16 %v557
  %v858 = vunpack.c.h.b16 %v557
  %v859 = vpack.c.b16 %v853, %v847
  %v860 = vpack.c.b16 %v854, %v848
  %v861 = vpack.c.b16 %v855, %v849
  %v862 = vpack.c.b16 %v856, %v850
  %v863 = vpack.c.b16 %v857, %v851
  %v864 = vpack.c.b16 %v858, %v852
  %v1159 = vunpack.c.l.b16 %v559
  %v1160 = vunpack.c.h.b16 %v559
  %v1161 = vunpack.c.l.b16 %v560
  %v1162 = vunpack.c.h.b16 %v560
  %v1163 = vunpack.c.l.b16 %v561
  %v1164 = vunpack.c.h.b16 %v561
  %v1165 = vunpack.c.l.b16 %v562
  %v1166 = vunpack.c.h.b16 %v562
  %v1167 = vunpack.c.l.b16 %v563
  %v1168 = vunpack.c.h.b16 %v563
  %v1169 = vunpack.c.l.b16 %v564
  %v1170 = vunpack.c.h.b16 %v564
  %v1171 = vunpack.c.l.b16 %v565
  %v1172 = vunpack.c.h.b16 %v565
  %v1173 = vunpack.c.l.b16 %v566
  %v1174 = vunpack.c.h.b16 %v566
  %v1175 = vunpack.c.l.b16 %v567
  %v1176 = vunpack.c.h.b16 %v567
  %v1177 = vunpack.c.l.b16 %v568
  %v1178 = vunpack.c.h.b16 %v568
  %v1179 = vunpack.c.l.b16 %v569
  %v1180 = vunpack.c.h.b16 %v569
  %v1181 = vunpack.c.l.b16 %v570
  %v1182 = vunpack.c.h.b16 %v570
  %v1183 = vunpack.c.l.b16 %v571
  %v1184 = vunpack.c.h.b16 %v571
  %v1185 = vunpack.c.l.b16 %v572
  %v1186 = vunpack.c.h.b16 %v572
  %v1187 = vunpack.c.l.b16 %v573
  %v1188 = vunpack.c.h.b16 %v573
  %v1189 = vunpack.c.l.b16 %v574
  %v1190 = vunpack.c.h.b16 %v574
  %v1191 = vunpack.c.l.b16 %v575
  %v1192 = vunpack.c.h.b16 %v575
  %v1193 = vunpack.c.l.b16 %v576
  %v1194 = vunpack.c.h.b16 %v576
  %v1195 = vunpack.c.l.b16 %v577
  %v1196 = vunpack.c.h.b16 %v577
  %v1197 = vunpack.c.l.b16 %v578
  %v1198 = vunpack.c.h.b16 %v578
  %v1199 = vunpack.c.l.b16 %v579
  %v1200 = vunpack.c.h.b16 %v579
  %v1201 = vunpack.c.l.b16 %v580
  %v1202 = vunpack.c.h.b16 %v580
  %v1203 = vunpack.c.l.b16 %v581
  %v1204 = vunpack.c.h.b16 %v581
  %v1205 = vunpack.c.l.b16 %v582
  %v1206 = vunpack.c.h.b16 %v582
  %v1207 = vunpack.c.l.b16 %v583
  %v1208 = vunpack.c.h.b16 %v583
  %v1209 = vunpack.c.l.b16 %v584
  %v1210 = vunpack.c.h.b16 %v584
  %v1211 = vunpack.c.l.b16 %v585
  %v1212 = vunpack.c.h.b16 %v585
  %v1213 = vunpack.c.l.b16 %v586
  %v1214 = vunpack.c.h.b16 %v586
  %v1215 = vunpack.c.l.b16 %v587
  %v1216 = vunpack.c.h.b16 %v587
  %v1217 = vunpack.c.l.b16 %v588
  %v1218 = vunpack.c.h.b16 %v588
  %v1219 = vunpack.c.l.b16 %v589
  %v1220 = vunpack.c.h.b16 %v589
  %v1221 = vunpack.c.l.b16 %v590
  %v1222 = vunpack.c.h.b16 %v590
  %v1223 = vunpack.c.l.b16 %v591
  %v1224 = vunpack.c.h.b16 %v591
  %v1225 = vunpack.c.l.b16 %v592
  %v1226 = vunpack.c.h.b16 %v592
  %v1227 = vunpack.c.l.b16 %v593
  %v1228 = vunpack.c.h.b16 %v593
  %v1229 = vunpack.c.l.b16 %v594
  %v1230 = vunpack.c.h.b16 %v594
  %v1231 = vunpack.c.l.b16 %v595
  %v1232 = vunpack.c.h.b16 %v595
  %v1233 = vunpack.c.l.b16 %v596
  %v1234 = vunpack.c.h.b16 %v596
  %v1235 = vunpack.c.l.b16 %v597
  %v1236 = vunpack.c.h.b16 %v597
  %v1237 = vunpack.c.l.b16 %v598
  %v1238 = vunpack.c.h.b16 %v598
  %v1239 = vunpack.c.l.b16 %v599
  %v1240 = vunpack.c.h.b16 %v599
  %v1241 = vunpack.c.l.b16 %v600
  %v1242 = vunpack.c.h.b16 %v600
  %v1243 = vunpack.c.l.b16 %v601
  %v1244 = vunpack.c.h.b16 %v601
  %v1245 = vunpack.c.l.b16 %v602
  %v1246 = vunpack.c.h.b16 %v602
  %v1247 = vunpack.c.l.b16 %v603
  %v1248 = vunpack.c.h.b16 %v603
  %v1249 = vunpack.c.l.b16 %v604
  %v1250 = vunpack.c.h.b16 %v604
  %v1251 = vunpack.c.l.b16 %v605
  %v1252 = vunpack.c.h.b16 %v605
  %v1253 = vunpack.c.l.b16 %v606
  %v1254 = vunpack.c.h.b16 %v606
  %v1255 = vunpack.c.l.b16 %v607
  %v1256 = vunpack.c.h.b16 %v607
  %v1257 = vunpack.c.l.b16 %v608
  %v1258 = vunpack.c.h.b16 %v608
  %v1259 = vunpack.c.l.b16 %v609
  %v1260 = vunpack.c.h.b16 %v609
  %v1261 = vunpack.c.l.b16 %v610
  %v1262 = vunpack.c.h.b16 %v610
  %v1263 = vunpack.c.l.b16 %v611
  %v1264 = vunpack.c.h.b16 %v611
  %v1265 = vunpack.c.l.b16 %v612
  %v1266 = vunpack.c.h.b16 %v612
  %v1267 = vunpack.c.l.b16 %v613
  %v1268 = vunpack.c.h.b16 %v613
  %v1269 = vunpack.c.l.b16 %v614
  %v1270 = vunpack.c.h.b16 %v614
  %v1271 = vunpack.c.l.b16 %v615
  %v1272 = vunpack.c.h.b16 %v615
  %v1273 = vunpack.c.l.b16 %v616
  %v1274 = vunpack.c.h.b16 %v616
  %v1275 = vunpack.c.l.b16 %v617
  %v1276 = vunpack.c.h.b16 %v617
  %v1277 = vunpack.c.l.b16 %v618
  %v1278 = vunpack.c.h.b16 %v618
  %v1279 = vunpack.c.l.b16 %v619
  %v1280 = vunpack.c.h.b16 %v619
  %v1281 = vunpack.c.l.b16 %v620
  %v1282 = vunpack.c.h.b16 %v620
  %v1283 = vunpack.c.l.b16 %v621
  %v1284 = vunpack.c.h.b16 %v621
  %v1285 = vunpack.c.l.b16 %v622
  %v1286 = vunpack.c.h.b16 %v622
  %v1287 = vunpack.c.l.b16 %v623
  %v1288 = vunpack.c.h.b16 %v623
  %v1289 = vunpack.c.l.b16 %v624
  %v1290 = vunpack.c.h.b16 %v624
  %v1291 = vunpack.c.l.b16 %v625
  %v1292 = vunpack.c.h.b16 %v625
  %v1293 = vunpack.c.l.b16 %v626
  %v1294 = vunpack.c.h.b16 %v626
  %v1295 = vunpack.c.l.b16 %v627
  %v1296 = vunpack.c.h.b16 %v627
  %v1297 = vunpack.c.l.b16 %v628
  %v1298 = vunpack.c.h.b16 %v628
  %v1299 = vunpack.c.l.b16 %v629
  %v1300 = vunpack.c.h.b16 %v629
  %v1301 = vunpack.c.l.b16 %v630
  %v1302 = vunpack.c.h.b16 %v630
  %v1303 = vunpack.c.l.b16 %v631
  %v1304 = vunpack.c.h.b16 %v631
  %v1305 = vunpack.c.l.b16 %v632
  %v1306 = vunpack.c.h.b16 %v632
  %v1307 = vunpack.c.l.b16 %v633
  %v1308 = vunpack.c.h.b16 %v633
  %v1309 = vunpack.c.l.b16 %v634
  %v1310 = vunpack.c.h.b16 %v634
  %v1311 = vunpack.c.l.b16 %v635
  %v1312 = vunpack.c.h.b16 %v635
  %v1313 = vunpack.c.l.b16 %v636
  %v1314 = vunpack.c.h.b16 %v636
  %v1315 = vunpack.c.l.b16 %v637
  %v1316 = vunpack.c.h.b16 %v637
  %v1317 = vunpack.c.l.b16 %v638
  %v1318 = vunpack.c.h.b16 %v638
  %v1319 = vunpack.c.l.b16 %v639
  %v1320 = vunpack.c.h.b16 %v639
  %v1321 = vunpack.c.l.b16 %v640
  %v1322 = vunpack.c.h.b16 %v640
  %v1323 = vunpack.c.l.b16 %v641
  %v1324 = vunpack.c.h.b16 %v641
  %v1325 = vunpack.c.l.b16 %v642
  %v1326 = vunpack.c.h.b16 %v642
  %v1327 = vunpack.c.l.b16 %v643
  %v1328 = vunpack.c.h.b16 %v643
  %v1329 = vunpack.c.l.b16 %v644
  %v1330 = vunpack.c.h.b16 %v644
  %v1331 = vunpack.c.l.b16 %v645
  %v1332 = vunpack.c.h.b16 %v645
  %v1333 = vunpack.c.l.b16 %v646
  %v1334 = vunpack.c.h.b16 %v646
  %v1335 = vunpack.c.l.b16 %v647
  %v1336 = vunpack.c.h.b16 %v647
  %v1337 = vunpack.c.l.b16 %v648
  %v1338 = vunpack.c.h.b16 %v648
  %v1339 = vunpack.c.l.b16 %v649
  %v1340 = vunpack.c.h.b16 %v649
  %v1341 = vunpack.c.l.b16 %v650
  %v1342 = vunpack.c.h.b16 %v650
  %v1343 = vunpack.c.l.b16 %v651
  %v1344 = vunpack.c.h.b16 %v651
  %v1345 = vunpack.c.l.b16 %v652
  %v1346 = vunpack.c.h.b16 %v652
  %v1347 = vunpack.c.l.b16 %v653
  %v1348 = vunpack.c.h.b16 %v653
  %v1349 = vunpack.c.l.b16 %v654
  %v1350 = vunpack.c.h.b16 %v654
  %v1351 = vunpack.c.l.b16 %v655
  %v1352 = vunpack.c.h.b16 %v655
  %v1353 = vunpack.c.l.b16 %v656
  %v1354 = vunpack.c.h.b16 %v656
  %v1355 = vunpack.c.l.b16 %v657
  %v1356 = vunpack.c.h.b16 %v657
  %v1357 = vunpack.c.l.b16 %v658
  %v1358 = vunpack.c.h.b16 %v658
  %v1359 = vunpack.c.l.b16 %v659
  %v1360 = vunpack.c.h.b16 %v659
  %v1361 = vunpack.c.l.b16 %v660
  %v1362 = vunpack.c.h.b16 %v660
  %v1363 = vunpack.c.l.b16 %v661
  %v1364 = vunpack.c.h.b16 %v661
  %v1365 = vunpack.c.l.b16 %v662
  %v1366 = vunpack.c.h.b16 %v662
  %v1367 = vunpack.c.l.b16 %v663
  %v1368 = vunpack.c.h.b16 %v663
  %v1369 = vunpack.c.l.b16 %v664
  %v1370 = vunpack.c.h.b16 %v664
  %v1371 = vunpack.c.l.b16 %v665
  %v1372 = vunpack.c.h.b16 %v665
  %v1373 = vunpack.c.l.b16 %v666
  %v1374 = vunpack.c.h.b16 %v666
  %v1375 = vunpack.c.l.b16 %v667
  %v1376 = vunpack.c.h.b16 %v667
  %v1377 = vunpack.c.l.b16 %v668
  %v1378 = vunpack.c.h.b16 %v668
  %v1379 = vunpack.c.l.b16 %v669
  %v1380 = vunpack.c.h.b16 %v669
  %v1381 = vunpack.c.l.b16 %v670
  %v1382 = vunpack.c.h.b16 %v670
  %v1383 = vunpack.c.l.b16 %v671
  %v1384 = vunpack.c.h.b16 %v671
  %v1385 = vunpack.c.l.b16 %v672
  %v1386 = vunpack.c.h.b16 %v672
  %v1387 = vunpack.c.l.b16 %v673
  %v1388 = vunpack.c.h.b16 %v673
  %v1389 = vunpack.c.l.b16 %v674
  %v1390 = vunpack.c.h.b16 %v674
  %v1391 = vunpack.c.l.b16 %v675
  %v1392 = vunpack.c.h.b16 %v675
  %v1393 = vunpack.c.l.b16 %v676
  %v1394 = vunpack.c.h.b16 %v676
  %v1395 = vunpack.c.l.b16 %v677
  %v1396 = vunpack.c.h.b16 %v677
  %v1397 = vunpack.c.l.b16 %v678
  %v1398 = vunpack.c.h.b16 %v678
  %v1399 = vunpack.c.l.b16 %v679
  %v1400 = vunpack.c.h.b16 %v679
  %v1401 = vunpack.c.l.b16 %v680
  %v1402 = vunpack.c.h.b16 %v680
  %v1403 = vunpack.c.l.b16 %v681
  %v1404 = vunpack.c.h.b16 %v681
  %v1405 = vunpack.c.l.b16 %v682
  %v1406 = vunpack.c.h.b16 %v682
  %v1407 = vunpack.c.l.b16 %v683
  %v1408 = vunpack.c.h.b16 %v683
  %v1409 = vunpack.c.l.b16 %v684
  %v1410 = vunpack.c.h.b16 %v684
  %v1411 = vunpack.c.l.b16 %v685
  %v1412 = vunpack.c.h.b16 %v685
  %v1413 = vunpack.c.l.b16 %v686
  %v1414 = vunpack.c.h.b16 %v686
  %v1415 = vunpack.c.l.b16 %v687
  %v1416 = vunpack.c.h.b16 %v687
  %v1417 = vunpack.c.l.b16 %v688
  %v1418 = vunpack.c.h.b16 %v688
  %v1419 = vunpack.c.l.b16 %v689
  %v1420 = vunpack.c.h.b16 %v689
  %v1421 = vunpack.c.l.b16 %v690
  %v1422 = vunpack.c.h.b16 %v690
  %v1423 = vunpack.c.l.b16 %v691
  %v1424 = vunpack.c.h.b16 %v691
  %v1425 = vunpack.c.l.b16 %v692
  %v1426 = vunpack.c.h.b16 %v692
  %v1427 = vunpack.c.l.b16 %v693
  %v1428 = vunpack.c.h.b16 %v693
  %v1429 = vunpack.c.l.b16 %v694
  %v1430 = vunpack.c.h.b16 %v694
  %v1431 = vunpack.c.l.b16 %v695
  %v1432 = vunpack.c.h.b16 %v695
  %v1433 = vunpack.c.l.b16 %v696
  %v1434 = vunpack.c.h.b16 %v696
  %v1435 = vunpack.c.l.b16 %v697
  %v1436 = vunpack.c.h.b16 %v697
  %v1437 = vunpack.c.l.b16 %v698
  %v1438 = vunpack.c.h.b16 %v698
  %v1439 = vunpack.c.l.b16 %v699
  %v1440 = vunpack.c.h.b16 %v699
  %v1441 = vunpack.c.l.b16 %v700
  %v1442 = vunpack.c.h.b16 %v700
  %v1443 = vunpack.c.l.b16 %v701
  %v1444 = vunpack.c.h.b16 %v701
  %v1445 = vunpack.c.l.b16 %v702
  %v1446 = vunpack.c.h.b16 %v702
  %v1447 = vunpack.c.l.b16 %v703
  %v1448 = vunpack.c.h.b16 %v703
  %v1449 = vunpack.c.l.b16 %v704
  %v1450 = vunpack.c.h.b16 %v704
  %v1451 = vunpack.c.l.b16 %v705
  %v1452 = vunpack.c.h.b16 %v705
  %v1453 = vunpack.c.l.b16 %v706
  %v1454 = vunpack.c.h.b16 %v706
  %v1455 = vunpack.c.l.b16 %v707
  %v1456 = vunpack.c.h.b16 %v707
  %v1457 = vunpack.c.l.b16 %v708
  %v1458 = vunpack.c.h.b16 %v708
  %v1459 = vunpack.c.l.b16 %v709
  %v1460 = vunpack.c.h.b16 %v709
  %v1461 = vunpack.c.l.b16 %v710
  %v1462 = vunpack.c.h.b16 %v710
  %v1463 = vunpack.c.l.b16 %v711
  %v1464 = vunpack.c.h.b16 %v711
  %v1465 = vunpack.c.l.b16 %v712
  %v1466 = vunpack.c.h.b16 %v712
  %v1467 = vunpack.c.l.b16 %v713
  %v1468 = vunpack.c.h.b16 %v713
  %v1469 = vunpack.c.l.b16 %v714
  %v1470 = vunpack.c.h.b16 %v714
  %v1471 = vunpack.c.l.b16 %v715
  %v1472 = vunpack.c.h.b16 %v715
  %v1473 = vunpack.c.l.b16 %v716
  %v1474 = vunpack.c.h.b16 %v716
  %v1475 = vunpack.c.l.b16 %v717
  %v1476 = vunpack.c.h.b16 %v717
  %v1477 = vunpack.c.l.b16 %v718
  %v1478 = vunpack.c.h.b16 %v718
  %v1479 = vunpack.c.l.b16 %v719
  %v1480 = vunpack.c.h.b16 %v719
  %v1481 = vunpack.c.l.b16 %v720
  %v1482 = vunpack.c.h.b16 %v720
  %v1483 = vunpack.c.l.b16 %v721
  %v1484 = vunpack.c.h.b16 %v721
  %v1485 = vunpack.c.l.b16 %v722
  %v1486 = vunpack.c.h.b16 %v722
  %v1487 = vunpack.c.l.b16 %v723
  %v1488 = vunpack.c.h.b16 %v723
  %v1489 = vunpack.c.l.b16 %v724
  %v1490 = vunpack.c.h.b16 %v724
  %v1491 = vunpack.c.l.b16 %v725
  %v1492 = vunpack.c.h.b16 %v725
  %v1493 = vunpack.c.l.b16 %v726
  %v1494 = vunpack.c.h.b16 %v726
  %v1495 = vunpack.c.l.b16 %v727
  %v1496 = vunpack.c.h.b16 %v727
  %v1497 = vunpack.c.l.b16 %v728
  %v1498 = vunpack.c.h.b16 %v728
  %v1499 = vunpack.c.l.b16 %v729
  %v1500 = vunpack.c.h.b16 %v729
  %v1501 = vunpack.c.l.b16 %v730
  %v1502 = vunpack.c.h.b16 %v730
  %v1503 = vunpack.c.l.b16 %v731
  %v1504 = vunpack.c.h.b16 %v731
  %v1505 = vunpack.c.l.b16 %v732
  %v1506 = vunpack.c.h.b16 %v732
  %v1507 = vunpack.c.l.b16 %v733
  %v1508 = vunpack.c.h.b16 %v733
  %v1509 = vunpack.c.l.b16 %v734
  %v1510 = vunpack.c.h.b16 %v734
  %v1511 = vunpack.c.l.b16 %v735
  %v1512 = vunpack.c.h.b16 %v735
  %v1513 = vunpack.c.l.b16 %v736
  %v1514 = vunpack.c.h.b16 %v736
  %v1515 = vunpack.c.l.b16 %v737
  %v1516 = vunpack.c.h.b16 %v737
  %v1517 = vunpack.c.l.b16 %v738
  %v1518 = vunpack.c.h.b16 %v738
  %v1519 = vunpack.c.l.b16 %v739
  %v1520 = vunpack.c.h.b16 %v739
  %v1521 = vunpack.c.l.b16 %v740
  %v1522 = vunpack.c.h.b16 %v740
  %v1523 = vunpack.c.l.b16 %v741
  %v1524 = vunpack.c.h.b16 %v741
  %v1525 = vunpack.c.l.b16 %v742
  %v1526 = vunpack.c.h.b16 %v742
  %v1527 = vunpack.c.l.b16 %v743
  %v1528 = vunpack.c.h.b16 %v743
  %v1529 = vunpack.c.l.b16 %v744
  %v1530 = vunpack.c.h.b16 %v744
  %v1531 = vunpack.c.l.b16 %v745
  %v1532 = vunpack.c.h.b16 %v745
  %v1533 = vunpack.c.l.b16 %v746
  %v1534 = vunpack.c.h.b16 %v746
  %v1535 = vunpack.c.l.b16 %v747
  %v1536 = vunpack.c.h.b16 %v747
  %v1537 = vunpack.c.l.b16 %v748
  %v1538 = vunpack.c.h.b16 %v748
  %v1539 = vunpack.c.l.b16 %v749
  %v1540 = vunpack.c.h.b16 %v749
  %v1541 = vunpack.c.l.b16 %v750
  %v1542 = vunpack.c.h.b16 %v750
  %v1543 = vunpack.c.l.b16 %v751
  %v1544 = vunpack.c.h.b16 %v751
  %v1545 = vunpack.c.l.b16 %v752
  %v1546 = vunpack.c.h.b16 %v752
  %v1547 = vunpack.c.l.b16 %v753
  %v1548 = vunpack.c.h.b16 %v753
  %v1549 = vunpack.c.l.b16 %v754
  %v1550 = vunpack.c.h.b16 %v754
  %v1551 = vunpack.c.l.b16 %v755
  %v1552 = vunpack.c.h.b16 %v755
  %v1553 = vunpack.c.l.b16 %v756
  %v1554 = vunpack.c.h.b16 %v756
  %v1555 = vunpack.c.l.b16 %v757
  %v1556 = vunpack.c.h.b16 %v757
  %v1557 = vunpack.c.l.b16 %v758
  %v1558 = vunpack.c.h.b16 %v758
  %v1559 = vunpack.c.l.b16 %v759
  %v1560 = vunpack.c.h.b16 %v759
  %v1561 = vunpack.c.l.b16 %v760
  %v1562 = vunpack.c.h.b16 %v760
  %v1563 = vunpack.c.l.b16 %v761
  %v1564 = vunpack.c.h.b16 %v761
  %v1565 = vunpack.c.l.b16 %v762
  %v1566 = vunpack.c.h.b16 %v762
  %v1567 = vunpack.c.l.b16 %v763
  %v1568 = vunpack.c.h.b16 %v763
  %v1569 = vunpack.c.l.b16 %v764
  %v1570 = vunpack.c.h.b16 %v764
  %v1571 = vunpack.c.l.b16 %v765
  %v1572 = vunpack.c.h.b16 %v765
  %v1573 = vunpack.c.l.b16 %v766
  %v1574 = vunpack.c.h.b16 %v766
  %v1575 = vunpack.c.l.b16 %v767
  %v1576 = vunpack.c.h.b16 %v767
  %v1577 = vunpack.c.l.b16 %v768
  %v1578 = vunpack.c.h.b16 %v768
  %v1579 = vunpack.c.l.b16 %v769
  %v1580 = vunpack.c.h.b16 %v769
  %v1581 = vunpack.c.l.b16 %v770
  %v1582 = vunpack.c.h.b16 %v770
  %v1583 = vunpack.c.l.b16 %v771
  %v1584 = vunpack.c.h.b16 %v771
  %v1585 = vunpack.c.l.b16 %v772
  %v1586 = vunpack.c.h.b16 %v772
  %v1587 = vunpack.c.l.b16 %v773
  %v1588 = vunpack.c.h.b16 %v773
  %v1589 = vunpack.c.l.b16 %v774
  %v1590 = vunpack.c.h.b16 %v774
  %v1591 = vunpack.c.l.b16 %v775
  %v1592 = vunpack.c.h.b16 %v775
  %v1593 = vunpack.c.l.b16 %v776
  %v1594 = vunpack.c.h.b16 %v776
  %v1595 = vunpack.c.l.b16 %v777
  %v1596 = vunpack.c.h.b16 %v777
  %v1597 = vunpack.c.l.b16 %v778
  %v1598 = vunpack.c.h.b16 %v778
  %v1599 = vunpack.c.l.b16 %v779
  %v1600 = vunpack.c.h.b16 %v779
  %v1601 = vunpack.c.l.b16 %v780
  %v1602 = vunpack.c.h.b16 %v780
  %v1603 = vunpack.c.l.b16 %v781
  %v1604 = vunpack.c.h.b16 %v781
  %v1605 = vunpack.c.l.b16 %v782
  %v1606 = vunpack.c.h.b16 %v782
  %v1607 = vunpack.c.l.b16 %v783
  %v1608 = vunpack.c.h.b16 %v783
  %v1609 = vunpack.c.l.b16 %v784
  %v1610 = vunpack.c.h.b16 %v784
  %v1611 = vunpack.c.l.b16 %v785
  %v1612 = vunpack.c.h.b16 %v785
  %v1613 = vunpack.c.l.b16 %v786
  %v1614 = vunpack.c.h.b16 %v786
  %v1615 = vunpack.c.l.b16 %v787
  %v1616 = vunpack.c.h.b16 %v787
  %v1617 = vunpack.c.l.b16 %v788
  %v1618 = vunpack.c.h.b16 %v788
  %v1619 = vunpack.c.l.b16 %v789
  %v1620 = vunpack.c.h.b16 %v789
  %v1621 = vunpack.c.l.b16 %v790
  %v1622 = vunpack.c.h.b16 %v790
  %v1623 = vunpack.c.l.b16 %v791
  %v1624 = vunpack.c.h.b16 %v791
  %v1625 = vunpack.c.l.b16 %v792
  %v1626 = vunpack.c.h.b16 %v792
  %v1627 = vunpack.c.l.b16 %v793
  %v1628 = vunpack.c.h.b16 %v793
  %v1629 = vunpack.c.l.b16 %v794
  %v1630 = vunpack.c.h.b16 %v794
  %v1631 = vunpack.c.l.b16 %v795
  %v1632 = vunpack.c.h.b16 %v795
  %v1633 = vunpack.c.l.b16 %v796
  %v1634 = vunpack.c.h.b16 %v796
  %v1635 = vunpack.c.l.b16 %v797
  %v1636 = vunpack.c.h.b16 %v797
  %v1637 = vunpack.c.l.b16 %v798
  %v1638 = vunpack.c.h.b16 %v798
  %v1639 = vunpack.c.l.b16 %v799
  %v1640 = vunpack.c.h.b16 %v799
  %v1641 = vunpack.c.l.b16 %v800
  %v1642 = vunpack.c.h.b16 %v800
  %v1643 = vunpack.c.l.b16 %v801
  %v1644 = vunpack.c.h.b16 %v801
  %v1645 = vunpack.c.l.b16 %v802
  %v1646 = vunpack.c.h.b16 %v802
  %v1647 = vunpack.c.l.b16 %v803
  %v1648 = vunpack.c.h.b16 %v803
  %v1649 = vunpack.c.l.b16 %v804
  %v1650 = vunpack.c.h.b16 %v804
  %v1651 = vunpack.c.l.b16 %v805
  %v1652 = vunpack.c.h.b16 %v805
  %v1653 = vunpack.c.l.b16 %v806
  %v1654 = vunpack.c.h.b16 %v806
  %v1655 = vunpack.c.l.b16 %v807
  %v1656 = vunpack.c.h.b16 %v807
  %v1657 = vunpack.c.l.b16 %v808
  %v1658 = vunpack.c.h.b16 %v808
  %v1659 = vunpack.c.l.b16 %v809
  %v1660 = vunpack.c.h.b16 %v809
  %v1661 = vunpack.c.l.b16 %v810
  %v1662 = vunpack.c.h.b16 %v810
  %v1663 = vunpack.c.l.b16 %v811
  %v1664 = vunpack.c.h.b16 %v811
  %v1665 = vunpack.c.l.b16 %v812
  %v1666 = vunpack.c.h.b16 %v812
  %v1667 = vunpack.c.l.b16 %v813
  %v1668 = vunpack.c.h.b16 %v813
  %v1669 = vunpack.c.l.b16 %v814
  %v1670 = vunpack.c.h.b16 %v814
  %v1671 = vunpack.c.l.b16 %v815
  %v1672 = vunpack.c.h.b16 %v815
  %v1673 = vunpack.c.l.b16 %v816
  %v1674 = vunpack.c.h.b16 %v816
  %v1675 = vunpack.c.l.b16 %v817
  %v1676 = vunpack.c.h.b16 %v817
  %v1677 = vunpack.c.l.b16 %v818
  %v1678 = vunpack.c.h.b16 %v818
  %v1679 = vunpack.c.l.b16 %v819
  %v1680 = vunpack.c.h.b16 %v819
  %v1681 = vunpack.c.l.b16 %v820
  %v1682 = vunpack.c.h.b16 %v820
  %v1683 = vunpack.c.l.b16 %v821
  %v1684 = vunpack.c.h.b16 %v821
  %v1685 = vunpack.c.l.b16 %v822
  %v1686 = vunpack.c.h.b16 %v822
  %v1687 = vunpack.c.l.b16 %v823
  %v1688 = vunpack.c.h.b16 %v823
  %v1689 = vunpack.c.l.b16 %v824
  %v1690 = vunpack.c.h.b16 %v824
  %v1691 = vunpack.c.l.b16 %v825
  %v1692 = vunpack.c.h.b16 %v825
  %v1693 = vunpack.c.l.b16 %v826
  %v1694 = vunpack.c.h.b16 %v826
  %v1695 = vunpack.c.l.b16 %v827
  %v1696 = vunpack.c.h.b16 %v827
  %v1697 = vunpack.c.l.b16 %v828
  %v1698 = vunpack.c.h.b16 %v828
  %v1699 = vunpack.c.l.b16 %v829
  %v1700 = vunpack.c.h.b16 %v829
  %v1701 = vunpack.c.l.b16 %v830
  %v1702 = vunpack.c.h.b16 %v830
  %v1703 = vunpack.c.l.b16 %v831
  %v1704 = vunpack.c.h.b16 %v831
  %v1705 = vunpack.c.l.b16 %v832
  %v1706 = vunpack.c.h.b16 %v832
  %v1707 = vunpack.c.l.b16 %v833
  %v1708 = vunpack.c.h.b16 %v833
  %v1709 = vunpack.c.l.b16 %v834
  %v1710 = vunpack.c.h.b16 %v834
  %v1711 = vunpack.c.l.b16 %v835
  %v1712 = vunpack.c.h.b16 %v835
  %v1713 = vunpack.c.l.b16 %v836
  %v1714 = vunpack.c.h.b16 %v836
  %v1715 = vunpack.c.l.b16 %v837
  %v1716 = vunpack.c.h.b16 %v837
  %v1717 = vunpack.c.l.b16 %v838
  %v1718 = vunpack.c.h.b16 %v838
  %v1719 = vunpack.c.l.b16 %v839
  %v1720 = vunpack.c.h.b16 %v839
  %v1721 = vunpack.c.l.b16 %v840
  %v1722 = vunpack.c.h.b16 %v840
  %v1723 = vunpack.c.l.b16 %v841
  %v1724 = vunpack.c.h.b16 %v841
  %v1725 = vunpack.c.l.b16 %v842
  %v1726 = vunpack.c.h.b16 %v842
  %v1727 = vunpack.c.l.b16 %v843
  %v1728 = vunpack.c.h.b16 %v843
  %v1729 = vunpack.c.l.b16 %v844
  %v1730 = vunpack.c.h.b16 %v844
  %v1731 = vunpack.c.l.b16 %v845
  %v1732 = vunpack.c.h.b16 %v845
  %v1733 = vunpack.c.l.b16 %v846
  %v1734 = vunpack.c.h.b16 %v846
  %v1735 = vpack.c.b16 %v1165, %v1159
  %v1736 = vpack.c.b16 %v1166, %v1160
  %v1737 = vpack.c.b16 %v1167, %v1161
  %v1738 = vpack.c.b16 %v1168, %v1162
  %v1739 = vpack.c.b16 %v1169, %v1163
  %v1740 = vpack.c.b16 %v1170, %v1164
  %v1741 = vpack.c.b16 %v1177, %v1171
  %v1742 = vpack.c.b16 %v1178, %v1172
  %v1743 = vpack.c.b16 %v1179, %v1173
  %v1744 = vpack.c.b16 %v1180, %v1174
  %v1745 = vpack.c.b16 %v1181, %v1175
  %v1746 = vpack.c.b16 %v1182, %v1176
  %v1747 = vpack.c.b16 %v1189, %v1183
  %v1748 = vpack.c.b16 %v1190, %v1184
  %v1749 = vpack.c.b16 %v1191, %v1185
  %v1750 = vpack.c.b16 %v1192, %v1186
  %v1751 = vpack.c.b16 %v1193, %v1187
  %v1752 = vpack.c.b16 %v1194, %v1188
  %v1753 = vpack.c.b16 %v1201, %v1195
  %v1754 = vpack.c.b16 %v1202, %v1196
  %v1755 = vpack.c.b16 %v1203, %v1197
  %v1756 = vpack.c.b16 %v1204, %v1198
  %v1757 = vpack.c.b16 %v1205, %v1199
  %v1758 = vpack.c.b16 %v1206, %v1200
  %v1759 = vpack.c.b16 %v1213, %v1207
  %v1760 = vpack.c.b16 %v1214, %v1208
  %v1761 = vpack.c.b16 %v1215, %v1209
  %v1762 = vpack.c.b16 %v1216, %v1210
  %v1763 = vpack.c.b16 %v1217, %v1211
  %v1764 = vpack.c.b16 %v1218, %v1212
  %v1765 = vpack.c.b16 %v1225, %v1219
  %v1766 = vpack.c.b16 %v1226, %v1220
  %v1767 = vpack.c.b16 %v1227, %v1221
  %v1768 = vpack.c.b16 %v1228, %v1222
  %v1769 = vpack.c.b16 %v1229, %v1223
  %v1770 = vpack.c.b16 %v1230, %v1224
  %v1771 = vpack.c.b16 %v1237, %v1231
  %v1772 = vpack.c.b16 %v1238, %v1232
  %v1773 = vpack.c.b16 %v1239, %v1233
  %v1774 = vpack.c.b16 %v1240, %v1234
  %v1775 = vpack.c.b16 %v1241, %v1235
  %v1776 = vpack.c.b16 %v1242, %v1236
  %v1777 = vpack.c.b16 %v1249, %v1243
  %v1778 = vpack.c.b16 %v1250, %v1244
  %v1779 = vpack.c.b16 %v1251, %v1245
  %v1780 = vpack.c.b16 %v1252, %v1246
  %v1781 = vpack.c.b16 %v1253, %v1247
  %v1782 = vpack.c.b16 %v1254, %v1248
  %v1783 = vpack.c.b16 %v1261, %v1255
  %v1784 = vpack.c.b16 %v1262, %v1256
  %v1785 = vpack.c.b16 %v1263, %v1257
  %v1786 = vpack.c.b16 %v1264, %v1258
  %v1787 = vpack.c.b16 %v1265, %v1259
  %v1788 = vpack.c.b16 %v1266, %v1260
  %v1789 = vpack.c.b16 %v1273, %v1267
  %v1790 = vpack.c.b16 %v1274, %v1268
  %v1791 = vpack.c.b16 %v1275, %v1269
  %v1792 = vpack.c.b16 %v1276, %v1270
  %v1793 = vpack.c.b16 %v1277, %v1271
  %v1794 = vpack.c.b16 %v1278, %v1272
  %v1795 = vpack.c.b16 %v1285, %v1279
  %v1796 = vpack.c.b16 %v1286, %v1280
  %v1797 = vpack.c.b16 %v1287, %v1281
  %v1798 = vpack.c.b16 %v1288, %v1282
  %v1799 = vpack.c.b16 %v1289, %v1283
  %v1800 = vpack.c.b16 %v1290, %v1284
  %v1801 = vpack.c.b16 %v1297, %v1291
  %v1802 = vpack.c.b16 %v1298, %v1292
  %v1803 = vpack.c.b16 %v1299, %v1293
  %v1804 = vpack.c.b16 %v1300, %v1294
  %v1805 = vpack.c.b16 %v1301, %v1295
  %v1806 = vpack.c.b16 %v1302, %v1296
  %v1807 = vpack.c.b16 %v1309, %v1303
  %v1808 = vpack.c.b16 %v1310, %v1304
  %v1809 = vpack.c.b16 %v1311, %v1305
  %v1810 = vpack.c.b16 %v1312, %v1306
  %v1811 = vpack.c.b16 %v1313, %v1307
  %v1812 = vpack.c.b16 %v1314, %v1308
  %v1813 = vpack.c.b16 %v1321, %v1315
  %v1814 = vpack.c.b16 %v1322, %v1316
  %v1815 = vpack.c.b16 %v1323, %v1317
  %v1816 = vpack.c.b16 %v1324, %v1318
  %v1817 = vpack.c.b16 %v1325, %v1319
  %v1818 = vpack.c.b16 %v1326, %v1320
  %v1819 = vpack.c.b16 %v1333, %v1327
  %v1820 = vpack.c.b16 %v1334, %v1328
  %v1821 = vpack.c.b16 %v1335, %v1329
  %v1822 = vpack.c.b16 %v1336, %v1330
  %v1823 = vpack.c.b16 %v1337, %v1331
  %v1824 = vpack.c.b16 %v1338, %v1332
  %v1825 = vpack.c.b16 %v1345, %v1339
  %v1826 = vpack.c.b16 %v1346, %v1340
  %v1827 = vpack.c.b16 %v1347, %v1341
  %v1828 = vpack.c.b16 %v1348, %v1342
  %v1829 = vpack.c.b16 %v1349, %v1343
  %v1830 = vpack.c.b16 %v1350, %v1344
  %v1831 = vpack.c.b16 %v1357, %v1351
  %v1832 = vpack.c.b16 %v1358, %v1352
  %v1833 = vpack.c.b16 %v1359, %v1353
  %v1834 = vpack.c.b16 %v1360, %v1354
  %v1835 = vpack.c.b16 %v1361, %v1355
  %v1836 = vpack.c.b16 %v1362, %v1356
  %v1837 = vpack.c.b16 %v1369, %v1363
  %v1838 = vpack.c.b16 %v1370, %v1364
  %v1839 = vpack.c.b16 %v1371, %v1365
  %v1840 = vpack.c.b16 %v1372, %v1366
  %v1841 = vpack.c.b16 %v1373, %v1367
  %v1842 = vpack.c.b16 %v1374, %v1368
  %v1843 = vpack.c.b16 %v1381, %v1375
  %v1844 = vpack.c.b16 %v1382, %v1376
  %v1845 = vpack.c.b16 %v1383, %v1377
  %v1846 = vpack.c.b16 %v1384, %v1378
  %v1847 = vpack.c.b16 %v1385, %v1379
  %v1848 = vpack.c.b16 %v1386, %v1380
  %v1849 = vpack.c.b16 %v1393, %v1387
  %v1850 = vpack.c.b16 %v1394, %v1388
  %v1851 = vpack.c.b16 %v1395, %v1389
  %v1852 = vpack.c.b16 %v1396, %v1390
  %v1853 = vpack.c.b16 %v1397, %v1391
  %v1854 = vpack.c.b16 %v1398, %v1392
  %v1855 = vpack.c.b16 %v1405, %v1399
  %v1856 = vpack.c.b16 %v1406, %v1400
  %v1857 = vpack.c.b16 %v1407, %v1401
  %v1858 = vpack.c.b16 %v1408, %v1402
  %v1859 = vpack.c.b16 %v1409, %v1403
  %v1860 = vpack.c.b16 %v1410, %v1404
  %v1861 = vpack.c.b16 %v1417, %v1411
  %v1862 = vpack.c.b16 %v1418, %v1412
  %v1863 = vpack.c.b16 %v1419, %v1413
  %v1864 = vpack.c.b16 %v1420, %v1414
  %v1865 = vpack.c.b16 %v1421, %v1415
  %v1866 = vpack.c.b16 %v1422, %v1416
  %v1867 = vpack.c.b16 %v1429, %v1423
  %v1868 = vpack.c.b16 %v1430, %v1424
  %v1869 = vpack.c.b16 %v1431, %v1425
  %v1870 = vpack.c.b16 %v1432, %v1426
  %v1871 = vpack.c.b16 %v1433, %v1427
  %v1872 = vpack.c.b16 %v1434, %v1428
  %v1873 = vpack.c.b16 %v1441, %v1435
  %v1874 = vpack.c.b16 %v1442, %v1436
  %v1875 = vpack.c.b16 %v1443, %v1437
  %v1876 = vpack.c.b16 %v1444, %v1438
  %v1877 = vpack.c.b16 %v1445, %v1439
  %v1878 = vpack.c.b16 %v1446, %v1440
  %v1879 = vpack.c.b16 %v1453, %v1447
  %v1880 = vpack.c.b16 %v1454, %v1448
  %v1881 = vpack.c.b16 %v1455, %v1449
  %v1882 = vpack.c.b16 %v1456, %v1450
  %v1883 = vpack.c.b16 %v1457, %v1451
  %v1884 = vpack.c.b16 %v1458, %v1452
  %v1885 = vpack.c.b16 %v1465, %v1459
  %v1886 = vpack.c.b16 %v1466, %v1460
  %v1887 = vpack.c.b16 %v1467, %v1461
  %v1888 = vpack.c.b16 %v1468, %v1462
  %v1889 = vpack.c.b16 %v1469, %v1463
  %v1890 = vpack.c.b16 %v1470, %v1464
  %v1891 = vpack.c.b16 %v1477, %v1471
  %v1892 = vpack.c.b16 %v1478, %v1472
  %v1893 = vpack.c.b16 %v1479, %v1473
  %v1894 = vpack.c.b16 %v1480, %v1474
  %v1895 = vpack.c.b16 %v1481, %v1475
  %v1896 = vpack.c.b16 %v1482, %v1476
  %v1897 = vpack.c.b16 %v1489, %v1483
  %v1898 = vpack.c.b16 %v1490, %v1484
  %v1899 = vpack.c.b16 %v1491, %v1485
  %v1900 = vpack.c.b16 %v1492, %v1486
  %v1901 = vpack.c.b16 %v1493, %v1487
  %v1902 = vpack.c.b16 %v1494, %v1488
  %v1903 = vpack.c.b16 %v1501, %v1495
  %v1904 = vpack.c.b16 %v1502, %v1496
  %v1905 = vpack.c.b16 %v1503, %v1497
  %v1906 = vpack.c.b16 %v1504, %v1498
  %v1907 = vpack.c.b16 %v1505, %v1499
  %v1908 = vpack.c.b16 %v1506, %v1500
  %v1909 = vpack.c.b16 %v1513, %v1507
  %v1910 = vpack.c.b16 %v1514, %v1508
  %v1911 = vpack.c.b16 %v1515, %v1509
  %v1912 = vpack.c.b16 %v1516, %v1510
  %v1913 = vpack.c.b16 %v1517, %v1511
  %v1914 = vpack.c.b16 %v1518, %v1512
  %v1915 = vpack.c.b16 %v1525, %v1519
  %v1916 = vpack.c.b16 %v1526, %v1520
  %v1917 = vpack.c.b16 %v1527, %v1521
  %v1918 = vpack.c.b16 %v1528, %v1522
  %v1919 = vpack.c.b16 %v1529, %v1523
  %v1920 = vpack.c.b16 %v1530, %v1524
  %v1921 = vpack.c.b16 %v1537, %v1531
  %v1922 = vpack.c.b16 %v1538, %v1532
  %v1923 = vpack.c.b16 %v1539, %v1533
  %v1924 = vpack.c.b16 %v1540, %v1534
  %v1925 = vpack.c.b16 %v1541, %v1535
  %v1926 = vpack.c.b16 %v1542, %v1536
  %v1927 = vpack.c.b16 %v1549, %v1543
  %v1928 = vpack.c.b16 %v1550, %v1544
  %v1929 = vpack.c.b16 %v1551, %v1545
  %v1930 = vpack.c.b16 %v1552, %v1546
  %v1931 = vpack.c.b16 %v1553, %v1547
  %v1932 = vpack.c.b16 %v1554, %v1548
  %v1933 = vpack.c.b16 %v1561, %v1555
  %v1934 = vpack.c.b16 %v1562, %v1556
  %v1935 = vpack.c.b16 %v1563, %v1557
  %v1936 = vpack.c.b16 %v1564, %v1558
  %v1937 = vpack.c.b16 %v1565, %v1559
  %v1938 = vpack.c.b16 %v1566, %v1560
  %v1939 = vpack.c.b16 %v1573, %v1567
  %v1940 = vpack.c.b16 %v1574, %v1568
  %v1941 = vpack.c.b16 %v1575, %v1569
  %v1942 = vpack.c.b16 %v1576, %v1570
  %v1943 = vpack.c.b16 %v1577, %v1571
  %v1944 = vpack.c.b16 %v1578, %v1572
  %v1945 = vpack.c.b16 %v1585, %v1579
  %v1946 = vpack.c.b16 %v1586, %v1580
  %v1947 = vpack.c.b16 %v1587, %v1581
  %v1948 = vpack.c.b16 %v1588, %v1582
  %v1949 = vpack.c.b16 %v1589, %v1583
  %v1950 = vpack.c.b16 %v1590, %v1584
  %v1951 = vpack.c.b16 %v1597, %v1591
  %v1952 = vpack.c.b16 %v1598, %v1592
  %v1953 = vpack.c.b16 %v1599, %v1593
  %v1954 = vpack.c.b16 %v1600, %v1594
  %v1955 = vpack.c.b16 %v1601, %v1595
  %v1956 = vpack.c.b16 %v1602, %v1596
  %v1957 = vpack.c.b16 %v1609, %v1603
  %v1958 = vpack.c.b16 %v1610, %v1604
  %v1959 = vpack.c.b16 %v1611, %v1605
  %v1960 = vpack.c.b16 %v1612, %v1606
  %v1961 = vpack.c.b16 %v1613, %v1607
  %v1962 = vpack.c.b16 %v1614, %v1608
  %v1963 = vpack.c.b16 %v1621, %v1615
  %v1964 = vpack.c.b16 %v1622, %v1616
  %v1965 = vpack.c.b16 %v1623, %v1617
  %v1966 = vpack.c.b16 %v1624, %v1618
  %v1967 = vpack.c.b16 %v1625, %v1619
  %v1968 = vpack.c.b16 %v1626, %v1620
  %v1969 = vpack.c.b16 %v1633, %v1627
  %v1970 = vpack.c.b16 %v1634, %v1628
  %v1971 = vpack.c.b16 %v1635, %v1629
  %v1972 = vpack.c.b16 %v1636, %v1630
  %v1973 = vpack.c.b16 %v1637, %v1631
  %v1974 = vpack.c.b16 %v1638, %v1632
  %v1975 = vpack.c.b16 %v1645, %v1639
  %v1976 = vpack.c.b16 %v1646, %v1640
  %v1977 = vpack.c.b16 %v1647, %v1641
  %v1978 = vpack.c.b16 %v1648, %v1642
  %v1979 = vpack.c.b16 %v1649, %v1643
  %v1980 = vpack.c.b16 %v1650, %v1644
  %v1981 = vpack.c.b16 %v1657, %v1651
  %v1982 = vpack.c.b16 %v1658, %v1652
  %v1983 = vpack.c.b16 %v1659, %v1653
  %v1984 = vpack.c.b16 %v1660, %v1654
  %v1985 = vpack.c.b16 %v1661, %v1655
  %v1986 = vpack.c.b16 %v1662, %v1656
  %v1987 = vpack.c.b16 %v1669, %v1663
  %v1988 = vpack.c.b16 %v1670, %v1664
  %v1989 = vpack.c.b16 %v1671, %v1665
  %v1990 = vpack.c.b16 %v1672, %v1666
  %v1991 = vpack.c.b16 %v1673, %v1667
  %v1992 = vpack.c.b16 %v1674, %v1668
  %v1993 = vpack.c.b16 %v1681, %v1675
  %v1994 = vpack.c.b16 %v1682, %v1676
  %v1995 = vpack.c.b16 %v1683, %v1677
  %v1996 = vpack.c.b16 %v1684, %v1678
  %v1997 = vpack.c.b16 %v1685, %v1679
  %v1998 = vpack.c.b16 %v1686, %v1680
  %v1999 = vpack.c.b16 %v1693, %v1687
  %v2000 = vpack.c.b16 %v1694, %v1688
  %v2001 = vpack.c.b16 %v1695, %v1689
  %v2002 = vpack.c.b16 %v1696, %v1690
  %v2003 = vpack.c.b16 %v1697, %v1691
  %v2004 = vpack.c.b16 %v1698, %v1692
  %v2005 = vpack.c.b16 %v1705, %v1699
  %v2006 = vpack.c.b16 %v1706, %v1700
  %v2007 = vpack.c.b16 %v1707, %v1701
  %v2008 = vpack.c.b16 %v1708, %v1702
  %v2009 = vpack.c.b16 %v1709, %v1703
  %v2010 = vpack.c.b16 %v1710, %v1704
  %v2011 = vpack.c.b16 %v1717, %v1711
  %v2012 = vpack.c.b16 %v1718, %v1712
  %v2013 = vpack.c.b16 %v1719, %v1713
  %v2014 = vpack.c.b16 %v1720, %v1714
  %v2015 = vpack.c.b16 %v1721, %v1715
  %v2016 = vpack.c.b16 %v1722, %v1716
  %v2017 = vpack.c.b16 %v1729, %v1723
  %v2018 = vpack.c.b16 %v1730, %v1724
  %v2019 = vpack.c.b16 %v1731, %v1725
  %v2020 = vpack.c.b16 %v1732, %v1726
  %v2021 = vpack.c.b16 %v1733, %v1727
  %v2022 = vpack.c.b16 %v1734, %v1728
  %2311 = vmatprep.subr.bf16.mxu0 %v1736
  %2312 = vmatpush1.bf16.msra.mxu0 %v1735
  %2313 = vmatprep.subr.bf16.mxu0 %v1742
  %2314 = vmatpush1.bf16.msra.mxu0 %v1741
  %2315 = vmatprep.subr.bf16.mxu0 %v1748
  %2316 = vmatpush1.bf16.msra.mxu0 %v1747
  %2317 = vmatprep.subr.bf16.mxu0 %v1754
  %2318 = vmatpush1.bf16.msra.mxu0 %v1753
  %2319 = vmatprep.subr.bf16.mxu0 %v1760
  %2320 = vmatpush1.bf16.msra.mxu0 %v1759
  %2321 = vmatprep.subr.bf16.mxu0 %v1766
  %2322 = vmatpush1.bf16.msra.mxu0 %v1765
  %2323 = vmatprep.subr.bf16.mxu0 %v1772
  %2324 = vmatpush1.bf16.msra.mxu0 %v1771
  %2325 = vmatprep.subr.bf16.mxu0 %v1778
  %2326 = vmatpush1.bf16.msra.mxu0 %v1777
  %2327 = vmatprep.subr.bf16.mxu0 %v1784
  %2328 = vmatpush1.bf16.msra.mxu0 %v1783
  %2329 = vmatprep.subr.bf16.mxu0 %v1790
  %2330 = vmatpush1.bf16.msra.mxu0 %v1789
  %2331 = vmatprep.subr.bf16.mxu0 %v1796
  %2332 = vmatpush1.bf16.msra.mxu0 %v1795
  %2333 = vmatprep.subr.bf16.mxu0 %v1802
  %2334 = vmatpush1.bf16.msra.mxu0 %v1801
  %2335 = vmatprep.subr.bf16.mxu0 %v1808
  %2336 = vmatpush1.bf16.msra.mxu0 %v1807
  %2337 = vmatprep.subr.bf16.mxu0 %v1814
  %2338 = vmatpush1.bf16.msra.mxu0 %v1813
  %2339 = vmatprep.subr.bf16.mxu0 %v1820
  %2340 = vmatpush1.bf16.msra.mxu0 %v1819
  %2341 = vmatprep.subr.bf16.mxu0 %v1826
  %2342 = vmatpush1.bf16.msra.mxu0 %v1825
  %2343 = vmatprep.mubr.bf16.mxu0 %v860
  %2344 = vmatmul.mubr.bf16.gmra.mrb[0].mxu0 %v859
  %v2345 = vpop.f32.mrb[0].mxu0
  %v2346 = vadd.f32 0.0, %v2345
  %v2347 = vpop.f32.mrb[0].mxu0
  %v2348 = vadd.f32 0.0, %v2347
  %v2349 = vpop.f32.mrb[0].mxu0
  %v2350 = vadd.f32 0.0, %v2349
  %v2351 = vpop.f32.mrb[0].mxu0
  %v2352 = vadd.f32 0.0, %v2351
  %2353 = vdwg.mxu0
  %2354 = vmatprep.subr.bf16.mxu0 %v1832
  %2355 = vmatpush1.bf16.msra.mxu0 %v1831
  %2356 = vmatprep.subr.bf16.mxu0 %v1838
  %2357 = vmatpush1.bf16.msra.mxu0 %v1837
  %2358 = vmatprep.subr.bf16.mxu0 %v1844
  %2359 = vmatpush1.bf16.msra.mxu0 %v1843
  %2360 = vmatprep.subr.bf16.mxu0 %v1850
  %2361 = vmatpush1.bf16.msra.mxu0 %v1849
  %2362 = vmatprep.subr.bf16.mxu0 %v1856
  %2363 = vmatpush1.bf16.msra.mxu0 %v1855
  %2364 = vmatprep.subr.bf16.mxu0 %v1862
  %2365 = vmatpush1.bf16.msra.mxu0 %v1861
  %2366 = vmatprep.subr.bf16.mxu0 %v1868
  %2367 = vmatpush1.bf16.msra.mxu0 %v1867
  %2368 = vmatprep.subr.bf16.mxu0 %v1874
  %2369 = vmatpush1.bf16.msra.mxu0 %v1873
  %2370 = vmatprep.subr.bf16.mxu0 %v1880
  %2371 = vmatpush1.bf16.msra.mxu0 %v1879
  %2372 = vmatprep.subr.bf16.mxu0 %v1886
  %2373 = vmatpush1.bf16.msra.mxu0 %v1885
  %2374 = vmatprep.subr.bf16.mxu0 %v1892
  %2375 = vmatpush1.bf16.msra.mxu0 %v1891
  %2376 = vmatprep.subr.bf16.mxu0 %v1898
  %2377 = vmatpush1.bf16.msra.mxu0 %v1897
  %2378 = vmatprep.subr.bf16.mxu0 %v1904
  %2379 = vmatpush1.bf16.msra.mxu0 %v1903
  %2380 = vmatprep.subr.bf16.mxu0 %v1910
  %2381 = vmatpush1.bf16.msra.mxu0 %v1909
  %2382 = vmatprep.subr.bf16.mxu0 %v1916
  %2383 = vmatpush1.bf16.msra.mxu0 %v1915
  %2384 = vmatprep.subr.bf16.mxu0 %v1922
  %2385 = vmatpush1.bf16.msra.mxu0 %v1921
  %2386 = vmatprep.mubr.bf16.mxu0 %v862
  %2387 = vmatmul.mubr.bf16.gmra.mrb[0].mxu0 %v861
  %v2388 = vpop.f32.mrb[0].mxu0
  %v2389 = vadd.f32 %v2346, %v2388
  %v2390 = vpop.f32.mrb[0].mxu0
  %v2391 = vadd.f32 %v2348, %v2390
  %v2392 = vpop.f32.mrb[0].mxu0
  %v2393 = vadd.f32 %v2350, %v2392
  %v2394 = vpop.f32.mrb[0].mxu0
  %v2395 = vadd.f32 %v2352, %v2394
  %2396 = vdwg.mxu0
  %2397 = vmatprep.subr.bf16.mxu0 %v1928
  %2398 = vmatpush1.bf16.msra.mxu0 %v1927
  %2399 = vmatprep.subr.bf16.mxu0 %v1934
  %2400 = vmatpush1.bf16.msra.mxu0 %v1933
  %2401 = vmatprep.subr.bf16.mxu0 %v1940
  %2402 = vmatpush1.bf16.msra.mxu0 %v1939
  %2403 = vmatprep.subr.bf16.mxu0 %v1946
  %2404 = vmatpush1.bf16.msra.mxu0 %v1945
  %2405 = vmatprep.subr.bf16.mxu0 %v1952
  %2406 = vmatpush1.bf16.msra.mxu0 %v1951
  %2407 = vmatprep.subr.bf16.mxu0 %v1958
  %2408 = vmatpush1.bf16.msra.mxu0 %v1957
  %2409 = vmatprep.subr.bf16.mxu0 %v1964
  %2410 = vmatpush1.bf16.msra.mxu0 %v1963
  %2411 = vmatprep.subr.bf16.mxu0 %v1970
  %2412 = vmatpush1.bf16.msra.mxu0 %v1969
  %2413 = vmatprep.subr.bf16.mxu0 %v1976
  %2414 = vmatpush1.bf16.msra.mxu0 %v1975
  %2415 = vmatprep.subr.bf16.mxu0 %v1982
  %2416 = vmatpush1.bf16.msra.mxu0 %v1981
  %2417 = vmatprep.subr.bf16.mxu0 %v1988
  %2418 = vmatpush1.bf16.msra.mxu0 %v1987
  %2419 = vmatprep.subr.bf16.mxu0 %v1994
  %2420 = vmatpush1.bf16.msra.mxu0 %v1993
  %2421 = vmatprep.subr.bf16.mxu0 %v2000
  %2422 = vmatpush1.bf16.msra.mxu0 %v1999
  %2423 = vmatprep.subr.bf16.mxu0 %v2006
  %2424 = vmatpush1.bf16.msra.mxu0 %v2005
  %2425 = vmatprep.subr.bf16.mxu0 %v2012
  %2426 = vmatpush1.bf16.msra.mxu0 %v2011
  %2427 = vmatprep.subr.bf16.mxu0 %v2018
  %2428 = vmatpush1.bf16.msra.mxu0 %v2017
  %2429 = vmatprep.mubr.bf16.mxu0 %v864
  %2430 = vmatmul.mubr.bf16.gmra.mrb[0].mxu0 %v863
  %v2431 = vpop.f32.mrb[0].mxu0
  %v2432 = vadd.f32 %v2389, %v2431
  %v2433 = vpop.f32.mrb[0].mxu0
  %v2434 = vadd.f32 %v2391, %v2433
  %v2435 = vpop.f32.mrb[0].mxu0
  %v2436 = vadd.f32 %v2393, %v2435
  %v2437 = vpop.f32.mrb[0].mxu0
  %v2438 = vadd.f32 %v2395, %v2437
  %2439 = vdwg.mxu0
  %2440 = vmatprep.subr.bf16.mxu0 %v1738
  %2441 = vmatpush1.bf16.msra.mxu0 %v1737
  %2442 = vmatprep.subr.bf16.mxu0 %v1744
  %2443 = vmatpush1.bf16.msra.mxu0 %v1743
  %2444 = vmatprep.subr.bf16.mxu0 %v1750
  %2445 = vmatpush1.bf16.msra.mxu0 %v1749
  %2446 = vmatprep.subr.bf16.mxu0 %v1756
  %2447 = vmatpush1.bf16.msra.mxu0 %v1755
  %2448 = vmatprep.subr.bf16.mxu0 %v1762
  %2449 = vmatpush1.bf16.msra.mxu0 %v1761
  %2450 = vmatprep.subr.bf16.mxu0 %v1768
  %2451 = vmatpush1.bf16.msra.mxu0 %v1767
  %2452 = vmatprep.subr.bf16.mxu0 %v1774
  %2453 = vmatpush1.bf16.msra.mxu0 %v1773
  %2454 = vmatprep.subr.bf16.mxu0 %v1780
  %2455 = vmatpush1.bf16.msra.mxu0 %v1779
  %2456 = vmatprep.subr.bf16.mxu0 %v1786
  %2457 = vmatpush1.bf16.msra.mxu0 %v1785
  %2458 = vmatprep.subr.bf16.mxu0 %v1792
  %2459 = vmatpush1.bf16.msra.mxu0 %v1791
  %2460 = vmatprep.subr.bf16.mxu0 %v1798
  %2461 = vmatpush1.bf16.msra.mxu0 %v1797
  %2462 = vmatprep.subr.bf16.mxu0 %v1804
  %2463 = vmatpush1.bf16.msra.mxu0 %v1803
  %2464 = vmatprep.subr.bf16.mxu0 %v1810
  %2465 = vmatpush1.bf16.msra.mxu0 %v1809
  %2466 = vmatprep.subr.bf16.mxu0 %v1816
  %2467 = vmatpush1.bf16.msra.mxu0 %v1815
  %2468 = vmatprep.subr.bf16.mxu0 %v1822
  %2469 = vmatpush1.bf16.msra.mxu0 %v1821
  %2470 = vmatprep.subr.bf16.mxu0 %v1828
  %2471 = vmatpush1.bf16.msra.mxu0 %v1827
  %2472 = vmatprep.mubr.bf16.mxu0 %v860
  %2473 = vmatmul.mubr.bf16.gmra.mrb[0].mxu0 %v859
  %v2474 = vpop.f32.mrb[0].mxu0
  %v2475 = vadd.f32 0.0, %v2474
  %v2476 = vpop.f32.mrb[0].mxu0
  %v2477 = vadd.f32 0.0, %v2476
  %v2478 = vpop.f32.mrb[0].mxu0
  %v2479 = vadd.f32 0.0, %v2478
  %v2480 = vpop.f32.mrb[0].mxu0
  %v2481 = vadd.f32 0.0, %v2480
  %2482 = vdwg.mxu0
  %2483 = vmatprep.subr.bf16.mxu0 %v1834
  %2484 = vmatpush1.bf16.msra.mxu0 %v1833
  %2485 = vmatprep.subr.bf16.mxu0 %v1840
  %2486 = vmatpush1.bf16.msra.mxu0 %v1839
  %2487 = vmatprep.subr.bf16.mxu0 %v1846
  %2488 = vmatpush1.bf16.msra.mxu0 %v1845
  %2489 = vmatprep.subr.bf16.mxu0 %v1852
  %2490 = vmatpush1.bf16.msra.mxu0 %v1851
  %2491 = vmatprep.subr.bf16.mxu0 %v1858
  %2492 = vmatpush1.bf16.msra.mxu0 %v1857
  %2493 = vmatprep.subr.bf16.mxu0 %v1864
  %2494 = vmatpush1.bf16.msra.mxu0 %v1863
  %2495 = vmatprep.subr.bf16.mxu0 %v1870
  %2496 = vmatpush1.bf16.msra.mxu0 %v1869
  %2497 = vmatprep.subr.bf16.mxu0 %v1876
  %2498 = vmatpush1.bf16.msra.mxu0 %v1875
  %2499 = vmatprep.subr.bf16.mxu0 %v1882
  %2500 = vmatpush1.bf16.msra.mxu0 %v1881
  %2501 = vmatprep.subr.bf16.mxu0 %v1888
  %2502 = vmatpush1.bf16.msra.mxu0 %v1887
  %2503 = vmatprep.subr.bf16.mxu0 %v1894
  %2504 = vmatpush1.bf16.msra.mxu0 %v1893
  %2505 = vmatprep.subr.bf16.mxu0 %v1900
  %2506 = vmatpush1.bf16.msra.mxu0 %v1899
  %2507 = vmatprep.subr.bf16.mxu0 %v1906
  %2508 = vmatpush1.bf16.msra.mxu0 %v1905
  %2509 = vmatprep.subr.bf16.mxu0 %v1912
  %2510 = vmatpush1.bf16.msra.mxu0 %v1911
  %2511 = vmatprep.subr.bf16.mxu0 %v1918
  %2512 = vmatpush1.bf16.msra.mxu0 %v1917
  %2513 = vmatprep.subr.bf16.mxu0 %v1924
  %2514 = vmatpush1.bf16.msra.mxu0 %v1923
  %2515 = vmatprep.mubr.bf16.mxu0 %v862
  %2516 = vmatmul.mubr.bf16.gmra.mrb[0].mxu0 %v861
  %v2517 = vpop.f32.mrb[0].mxu0
  %v2518 = vadd.f32 %v2475, %v2517
  %v2519 = vpop.f32.mrb[0].mxu0
  %v2520 = vadd.f32 %v2477, %v2519
  %v2521 = vpop.f32.mrb[0].mxu0
  %v2522 = vadd.f32 %v2479, %v2521
  %v2523 = vpop.f32.mrb[0].mxu0
  %v2524 = vadd.f32 %v2481, %v2523
  %2525 = vdwg.mxu0
  %2526 = vmatprep.subr.bf16.mxu0 %v1930
  %2527 = vmatpush1.bf16.msra.mxu0 %v1929
  %2528 = vmatprep.subr.bf16.mxu0 %v1936
  %2529 = vmatpush1.bf16.msra.mxu0 %v1935
  %2530 = vmatprep.subr.bf16.mxu0 %v1942
  %2531 = vmatpush1.bf16.msra.mxu0 %v1941
  %2532 = vmatprep.subr.bf16.mxu0 %v1948
  %2533 = vmatpush1.bf16.msra.mxu0 %v1947
  %2534 = vmatprep.subr.bf16.mxu0 %v1954
  %2535 = vmatpush1.bf16.msra.mxu0 %v1953
  %2536 = vmatprep.subr.bf16.mxu0 %v1960
  %2537 = vmatpush1.bf16.msra.mxu0 %v1959
  %2538 = vmatprep.subr.bf16.mxu0 %v1966
  %2539 = vmatpush1.bf16.msra.mxu0 %v1965
  %2540 = vmatprep.subr.bf16.mxu0 %v1972
  %2541 = vmatpush1.bf16.msra.mxu0 %v1971
  %2542 = vmatprep.subr.bf16.mxu0 %v1978
  %2543 = vmatpush1.bf16.msra.mxu0 %v1977
  %2544 = vmatprep.subr.bf16.mxu0 %v1984
  %2545 = vmatpush1.bf16.msra.mxu0 %v1983
  %2546 = vmatprep.subr.bf16.mxu0 %v1990
  %2547 = vmatpush1.bf16.msra.mxu0 %v1989
  %2548 = vmatprep.subr.bf16.mxu0 %v1996
  %2549 = vmatpush1.bf16.msra.mxu0 %v1995
  %2550 = vmatprep.subr.bf16.mxu0 %v2002
  %2551 = vmatpush1.bf16.msra.mxu0 %v2001
  %2552 = vmatprep.subr.bf16.mxu0 %v2008
  %2553 = vmatpush1.bf16.msra.mxu0 %v2007
  %2554 = vmatprep.subr.bf16.mxu0 %v2014
  %2555 = vmatpush1.bf16.msra.mxu0 %v2013
  %2556 = vmatprep.subr.bf16.mxu0 %v2020
  %2557 = vmatpush1.bf16.msra.mxu0 %v2019
  %2558 = vmatprep.mubr.bf16.mxu0 %v864
  %2559 = vmatmul.mubr.bf16.gmra.mrb[0].mxu0 %v863
  %v2560 = vpop.f32.mrb[0].mxu0
  %v2561 = vadd.f32 %v2518, %v2560
  %v2562 = vpop.f32.mrb[0].mxu0
  %v2563 = vadd.f32 %v2520, %v2562
  %v2564 = vpop.f32.mrb[0].mxu0
  %v2565 = vadd.f32 %v2522, %v2564
  %v2566 = vpop.f32.mrb[0].mxu0
  %v2567 = vadd.f32 %v2524, %v2566
  %2568 = vdwg.mxu0
  %2569 = vmatprep.subr.bf16.mxu0 %v1740
  %2570 = vmatpush1.bf16.msra.mxu0 %v1739
  %2571 = vmatprep.subr.bf16.mxu0 %v1746
  %2572 = vmatpush1.bf16.msra.mxu0 %v1745
  %2573 = vmatprep.subr.bf16.mxu0 %v1752
  %2574 = vmatpush1.bf16.msra.mxu0 %v1751
  %2575 = vmatprep.subr.bf16.mxu0 %v1758
  %2576 = vmatpush1.bf16.msra.mxu0 %v1757
  %2577 = vmatprep.subr.bf16.mxu0 %v1764
  %2578 = vmatpush1.bf16.msra.mxu0 %v1763
  %2579 = vmatprep.subr.bf16.mxu0 %v1770
  %2580 = vmatpush1.bf16.msra.mxu0 %v1769
  %2581 = vmatprep.subr.bf16.mxu0 %v1776
  %2582 = vmatpush1.bf16.msra.mxu0 %v1775
  %2583 = vmatprep.subr.bf16.mxu0 %v1782
  %2584 = vmatpush1.bf16.msra.mxu0 %v1781
  %2585 = vmatprep.subr.bf16.mxu0 %v1788
  %2586 = vmatpush1.bf16.msra.mxu0 %v1787
  %2587 = vmatprep.subr.bf16.mxu0 %v1794
  %2588 = vmatpush1.bf16.msra.mxu0 %v1793
  %2589 = vmatprep.subr.bf16.mxu0 %v1800
  %2590 = vmatpush1.bf16.msra.mxu0 %v1799
  %2591 = vmatprep.subr.bf16.mxu0 %v1806
  %2592 = vmatpush1.bf16.msra.mxu0 %v1805
  %2593 = vmatprep.subr.bf16.mxu0 %v1812
  %2594 = vmatpush1.bf16.msra.mxu0 %v1811
  %2595 = vmatprep.subr.bf16.mxu0 %v1818
  %2596 = vmatpush1.bf16.msra.mxu0 %v1817
  %2597 = vmatprep.subr.bf16.mxu0 %v1824
  %2598 = vmatpush1.bf16.msra.mxu0 %v1823
  %2599 = vmatprep.subr.bf16.mxu0 %v1830
  %2600 = vmatpush1.bf16.msra.mxu0 %v1829
  %2601 = vmatprep.mubr.bf16.mxu0 %v860
  %2602 = vmatmul.mubr.bf16.gmra.mrb[0].mxu0 %v859
  %v2603 = vpop.f32.mrb[0].mxu0
  %v2604 = vadd.f32 0.0, %v2603
  %v2605 = vpop.f32.mrb[0].mxu0
  %v2606 = vadd.f32 0.0, %v2605
  %v2607 = vpop.f32.mrb[0].mxu0
  %v2608 = vadd.f32 0.0, %v2607
  %v2609 = vpop.f32.mrb[0].mxu0
  %v2610 = vadd.f32 0.0, %v2609
  %2611 = vdwg.mxu0
  %2612 = vmatprep.subr.bf16.mxu0 %v1836
  %2613 = vmatpush1.bf16.msra.mxu0 %v1835
  %2614 = vmatprep.subr.bf16.mxu0 %v1842
  %2615 = vmatpush1.bf16.msra.mxu0 %v1841
  %2616 = vmatprep.subr.bf16.mxu0 %v1848
  %2617 = vmatpush1.bf16.msra.mxu0 %v1847
  %2618 = vmatprep.subr.bf16.mxu0 %v1854
  %2619 = vmatpush1.bf16.msra.mxu0 %v1853
  %2620 = vmatprep.subr.bf16.mxu0 %v1860
  %2621 = vmatpush1.bf16.msra.mxu0 %v1859
  %2622 = vmatprep.subr.bf16.mxu0 %v1866
  %2623 = vmatpush1.bf16.msra.mxu0 %v1865
  %2624 = vmatprep.subr.bf16.mxu0 %v1872
  %2625 = vmatpush1.bf16.msra.mxu0 %v1871
  %2626 = vmatprep.subr.bf16.mxu0 %v1878
  %2627 = vmatpush1.bf16.msra.mxu0 %v1877
  %2628 = vmatprep.subr.bf16.mxu0 %v1884
  %2629 = vmatpush1.bf16.msra.mxu0 %v1883
  %2630 = vmatprep.subr.bf16.mxu0 %v1890
  %2631 = vmatpush1.bf16.msra.mxu0 %v1889
  %2632 = vmatprep.subr.bf16.mxu0 %v1896
  %2633 = vmatpush1.bf16.msra.mxu0 %v1895
  %2634 = vmatprep.subr.bf16.mxu0 %v1902
  %2635 = vmatpush1.bf16.msra.mxu0 %v1901
  %2636 = vmatprep.subr.bf16.mxu0 %v1908
  %2637 = vmatpush1.bf16.msra.mxu0 %v1907
  %2638 = vmatprep.subr.bf16.mxu0 %v1914
  %2639 = vmatpush1.bf16.msra.mxu0 %v1913
  %2640 = vmatprep.subr.bf16.mxu0 %v1920
  %2641 = vmatpush1.bf16.msra.mxu0 %v1919
  %2642 = vmatprep.subr.bf16.mxu0 %v1926
  %2643 = vmatpush1.bf16.msra.mxu0 %v1925
  %2644 = vmatprep.mubr.bf16.mxu0 %v862
  %2645 = vmatmul.mubr.bf16.gmra.mrb[0].mxu0 %v861
  %v2646 = vpop.f32.mrb[0].mxu0
  %v2647 = vadd.f32 %v2604, %v2646
  %v2648 = vpop.f32.mrb[0].mxu0
  %v2649 = vadd.f32 %v2606, %v2648
  %v2650 = vpop.f32.mrb[0].mxu0
  %v2651 = vadd.f32 %v2608, %v2650
  %v2652 = vpop.f32.mrb[0].mxu0
  %v2653 = vadd.f32 %v2610, %v2652
  %2654 = vdwg.mxu0
  %2655 = vmatprep.subr.bf16.mxu0 %v1932
  %2656 = vmatpush1.bf16.msra.mxu0 %v1931
  %2657 = vmatprep.subr.bf16.mxu0 %v1938
  %2658 = vmatpush1.bf16.msra.mxu0 %v1937
  %2659 = vmatprep.subr.bf16.mxu0 %v1944
  %2660 = vmatpush1.bf16.msra.mxu0 %v1943
  %2661 = vmatprep.subr.bf16.mxu0 %v1950
  %2662 = vmatpush1.bf16.msra.mxu0 %v1949
  %2663 = vmatprep.subr.bf16.mxu0 %v1956
  %2664 = vmatpush1.bf16.msra.mxu0 %v1955
  %2665 = vmatprep.subr.bf16.mxu0 %v1962
  %2666 = vmatpush1.bf16.msra.mxu0 %v1961
  %2667 = vmatprep.subr.bf16.mxu0 %v1968
  %2668 = vmatpush1.bf16.msra.mxu0 %v1967
  %2669 = vmatprep.subr.bf16.mxu0 %v1974
  %2670 = vmatpush1.bf16.msra.mxu0 %v1973
  %2671 = vmatprep.subr.bf16.mxu0 %v1980
  %2672 = vmatpush1.bf16.msra.mxu0 %v1979
  %2673 = vmatprep.subr.bf16.mxu0 %v1986
  %2674 = vmatpush1.bf16.msra.mxu0 %v1985
  %2675 = vmatprep.subr.bf16.mxu0 %v1992
  %2676 = vmatpush1.bf16.msra.mxu0 %v1991
  %2677 = vmatprep.subr.bf16.mxu0 %v1998
  %2678 = vmatpush1.bf16.msra.mxu0 %v1997
  %2679 = vmatprep.subr.bf16.mxu0 %v2004
  %2680 = vmatpush1.bf16.msra.mxu0 %v2003
  %2681 = vmatprep.subr.bf16.mxu0 %v2010
  %2682 = vmatpush1.bf16.msra.mxu0 %v2009
  %2683 = vmatprep.subr.bf16.mxu0 %v2016
  %2684 = vmatpush1.bf16.msra.mxu0 %v2015
  %2685 = vmatprep.subr.bf16.mxu0 %v2022
  %2686 = vmatpush1.bf16.msra.mxu0 %v2021
  %2687 = vmatprep.mubr.bf16.mxu0 %v864
  %2688 = vmatmul.mubr.bf16.gmra.mrb[0].mxu0 %v863
  %v2689 = vpop.f32.mrb[0].mxu0
  %v2690 = vadd.f32 %v2647, %v2689
  %v2691 = vpop.f32.mrb[0].mxu0
  %v2692 = vadd.f32 %v2649, %v2691
  %v2693 = vpop.f32.mrb[0].mxu0
  %v2694 = vadd.f32 %v2651, %v2693
  %v2695 = vpop.f32.mrb[0].mxu0
  %v2696 = vadd.f32 %v2653, %v2695
  %2697 = vdwg.mxu0
  %v2704 = vunpack.c.l.b16 %v171
  %v2705 = vunpack.c.h.b16 %v171
  %v2706 = vunpack.c.l.b16 %v172
  %v2707 = vunpack.c.h.b16 %v172
  %v2708 = vunpack.c.l.b16 %v173
  %v2709 = vunpack.c.h.b16 %v173
  %v2710 = vunpack.c.l.b16 %v174
  %v2711 = vunpack.c.h.b16 %v174
  %v2712 = vunpack.c.l.b16 %v175
  %v2713 = vunpack.c.h.b16 %v175
  %v2714 = vunpack.c.l.b16 %v176
  %v2715 = vunpack.c.h.b16 %v176
  %v2716 = vpack.c.b16 %v2710, %v2704
  %v2717 = vpack.c.b16 %v2711, %v2705
  %v2718 = vpack.c.b16 %v2712, %v2706
  %v2719 = vpack.c.b16 %v2713, %v2707
  %v2720 = vpack.c.b16 %v2714, %v2708
  %v2721 = vpack.c.b16 %v2715, %v2709
  %v3016 = vunpack.c.l.b16 %v177
  %v3017 = vunpack.c.h.b16 %v177
  %v3018 = vunpack.c.l.b16 %v178
  %v3019 = vunpack.c.h.b16 %v178
  %v3020 = vunpack.c.l.b16 %v179
  %v3021 = vunpack.c.h.b16 %v179
  %v3022 = vunpack.c.l.b16 %v180
  %v3023 = vunpack.c.h.b16 %v180
  %v3024 = vunpack.c.l.b16 %v181
  %v3025 = vunpack.c.h.b16 %v181
  %v3026 = vunpack.c.l.b16 %v182
  %v3027 = vunpack.c.h.b16 %v182
  %v3028 = vunpack.c.l.b16 %v183
  %v3029 = vunpack.c.h.b16 %v183
  %v3030 = vunpack.c.l.b16 %v184
  %v3031 = vunpack.c.h.b16 %v184
  %v3032 = vunpack.c.l.b16 %v185
  %v3033 = vunpack.c.h.b16 %v185
  %v3034 = vunpack.c.l.b16 %v186
  %v3035 = vunpack.c.h.b16 %v186
  %v3036 = vunpack.c.l.b16 %v187
  %v3037 = vunpack.c.h.b16 %v187
  %v3038 = vunpack.c.l.b16 %v188
  %v3039 = vunpack.c.h.b16 %v188
  %v3040 = vunpack.c.l.b16 %v189
  %v3041 = vunpack.c.h.b16 %v189
  %v3042 = vunpack.c.l.b16 %v190
  %v3043 = vunpack.c.h.b16 %v190
  %v3044 = vunpack.c.l.b16 %v191
  %v3045 = vunpack.c.h.b16 %v191
  %v3046 = vunpack.c.l.b16 %v192
  %v3047 = vunpack.c.h.b16 %v192
  %v3048 = vunpack.c.l.b16 %v193
  %v3049 = vunpack.c.h.b16 %v193
  %v3050 = vunpack.c.l.b16 %v194
  %v3051 = vunpack.c.h.b16 %v194
  %v3052 = vunpack.c.l.b16 %v195
  %v3053 = vunpack.c.h.b16 %v195
  %v3054 = vunpack.c.l.b16 %v196
  %v3055 = vunpack.c.h.b16 %v196
  %v3056 = vunpack.c.l.b16 %v197
  %v3057 = vunpack.c.h.b16 %v197
  %v3058 = vunpack.c.l.b16 %v198
  %v3059 = vunpack.c.h.b16 %v198
  %v3060 = vunpack.c.l.b16 %v199
  %v3061 = vunpack.c.h.b16 %v199
  %v3062 = vunpack.c.l.b16 %v200
  %v3063 = vunpack.c.h.b16 %v200
  %v3064 = vunpack.c.l.b16 %v201
  %v3065 = vunpack.c.h.b16 %v201
  %v3066 = vunpack.c.l.b16 %v202
  %v3067 = vunpack.c.h.b16 %v202
  %v3068 = vunpack.c.l.b16 %v203
  %v3069 = vunpack.c.h.b16 %v203
  %v3070 = vunpack.c.l.b16 %v204
  %v3071 = vunpack.c.h.b16 %v204
  %v3072 = vunpack.c.l.b16 %v205
  %v3073 = vunpack.c.h.b16 %v205
  %v3074 = vunpack.c.l.b16 %v206
  %v3075 = vunpack.c.h.b16 %v206
  %v3076 = vunpack.c.l.b16 %v207
  %v3077 = vunpack.c.h.b16 %v207
  %v3078 = vunpack.c.l.b16 %v208
  %v3079 = vunpack.c.h.b16 %v208
  %v3080 = vunpack.c.l.b16 %v209
  %v3081 = vunpack.c.h.b16 %v209
  %v3082 = vunpack.c.l.b16 %v210
  %v3083 = vunpack.c.h.b16 %v210
  %v3084 = vunpack.c.l.b16 %v211
  %v3085 = vunpack.c.h.b16 %v211
  %v3086 = vunpack.c.l.b16 %v212
  %v3087 = vunpack.c.h.b16 %v212
  %v3088 = vunpack.c.l.b16 %v213
  %v3089 = vunpack.c.h.b16 %v213
  %v3090 = vunpack.c.l.b16 %v214
  %v3091 = vunpack.c.h.b16 %v214
  %v3092 = vunpack.c.l.b16 %v215
  %v3093 = vunpack.c.h.b16 %v215
  %v3094 = vunpack.c.l.b16 %v216
  %v3095 = vunpack.c.h.b16 %v216
  %v3096 = vunpack.c.l.b16 %v217
  %v3097 = vunpack.c.h.b16 %v217
  %v3098 = vunpack.c.l.b16 %v218
  %v3099 = vunpack.c.h.b16 %v218
  %v3100 = vunpack.c.l.b16 %v219
  %v3101 = vunpack.c.h.b16 %v219
  %v3102 = vunpack.c.l.b16 %v220
  %v3103 = vunpack.c.h.b16 %v220
  %v3104 = vunpack.c.l.b16 %v221
  %v3105 = vunpack.c.h.b16 %v221
  %v3106 = vunpack.c.l.b16 %v222
  %v3107 = vunpack.c.h.b16 %v222
  %v3108 = vunpack.c.l.b16 %v223
  %v3109 = vunpack.c.h.b16 %v223
  %v3110 = vunpack.c.l.b16 %v224
  %v3111 = vunpack.c.h.b16 %v224
  %v3112 = vunpack.c.l.b16 %v225
  %v3113 = vunpack.c.h.b16 %v225
  %v3114 = vunpack.c.l.b16 %v226
  %v3115 = vunpack.c.h.b16 %v226
  %v3116 = vunpack.c.l.b16 %v227
  %v3117 = vunpack.c.h.b16 %v227
  %v3118 = vunpack.c.l.b16 %v228
  %v3119 = vunpack.c.h.b16 %v228
  %v3120 = vunpack.c.l.b16 %v229
  %v3121 = vunpack.c.h.b16 %v229
  %v3122 = vunpack.c.l.b16 %v230
  %v3123 = vunpack.c.h.b16 %v230
  %v3124 = vunpack.c.l.b16 %v231
  %v3125 = vunpack.c.h.b16 %v231
  %v3126 = vunpack.c.l.b16 %v232
  %v3127 = vunpack.c.h.b16 %v232
  %v3128 = vunpack.c.l.b16 %v233
  %v3129 = vunpack.c.h.b16 %v233
  %v3130 = vunpack.c.l.b16 %v234
  %v3131 = vunpack.c.h.b16 %v234
  %v3132 = vunpack.c.l.b16 %v235
  %v3133 = vunpack.c.h.b16 %v235
  %v3134 = vunpack.c.l.b16 %v236
  %v3135 = vunpack.c.h.b16 %v236
  %v3136 = vunpack.c.l.b16 %v237
  %v3137 = vunpack.c.h.b16 %v237
  %v3138 = vunpack.c.l.b16 %v238
  %v3139 = vunpack.c.h.b16 %v238
  %v3140 = vunpack.c.l.b16 %v239
  %v3141 = vunpack.c.h.b16 %v239
  %v3142 = vunpack.c.l.b16 %v240
  %v3143 = vunpack.c.h.b16 %v240
  %v3144 = vunpack.c.l.b16 %v241
  %v3145 = vunpack.c.h.b16 %v241
  %v3146 = vunpack.c.l.b16 %v242
  %v3147 = vunpack.c.h.b16 %v242
  %v3148 = vunpack.c.l.b16 %v243
  %v3149 = vunpack.c.h.b16 %v243
  %v3150 = vunpack.c.l.b16 %v244
  %v3151 = vunpack.c.h.b16 %v244
  %v3152 = vunpack.c.l.b16 %v245
  %v3153 = vunpack.c.h.b16 %v245
  %v3154 = vunpack.c.l.b16 %v246
  %v3155 = vunpack.c.h.b16 %v246
  %v3156 = vunpack.c.l.b16 %v247
  %v3157 = vunpack.c.h.b16 %v247
  %v3158 = vunpack.c.l.b16 %v248
  %v3159 = vunpack.c.h.b16 %v248
  %v3160 = vunpack.c.l.b16 %v249
  %v3161 = vunpack.c.h.b16 %v249
  %v3162 = vunpack.c.l.b16 %v250
  %v3163 = vunpack.c.h.b16 %v250
  %v3164 = vunpack.c.l.b16 %v251
  %v3165 = vunpack.c.h.b16 %v251
  %v3166 = vunpack.c.l.b16 %v252
  %v3167 = vunpack.c.h.b16 %v252
  %v3168 = vunpack.c.l.b16 %v253
  %v3169 = vunpack.c.h.b16 %v253
  %v3170 = vunpack.c.l.b16 %v254
  %v3171 = vunpack.c.h.b16 %v254
  %v3172 = vunpack.c.l.b16 %v255
  %v3173 = vunpack.c.h.b16 %v255
  %v3174 = vunpack.c.l.b16 %v256
  %v3175 = vunpack.c.h.b16 %v256
  %v3176 = vunpack.c.l.b16 %v257
  %v3177 = vunpack.c.h.b16 %v257
  %v3178 = vunpack.c.l.b16 %v258
  %v3179 = vunpack.c.h.b16 %v258
  %v3180 = vunpack.c.l.b16 %v259
  %v3181 = vunpack.c.h.b16 %v259
  %v3182 = vunpack.c.l.b16 %v260
  %v3183 = vunpack.c.h.b16 %v260
  %v3184 = vunpack.c.l.b16 %v261
  %v3185 = vunpack.c.h.b16 %v261
  %v3186 = vunpack.c.l.b16 %v262
  %v3187 = vunpack.c.h.b16 %v262
  %v3188 = vunpack.c.l.b16 %v263
  %v3189 = vunpack.c.h.b16 %v263
  %v3190 = vunpack.c.l.b16 %v264
  %v3191 = vunpack.c.h.b16 %v264
  %v3192 = vunpack.c.l.b16 %v265
  %v3193 = vunpack.c.h.b16 %v265
  %v3194 = vunpack.c.l.b16 %v266
  %v3195 = vunpack.c.h.b16 %v266
  %v3196 = vunpack.c.l.b16 %v267
  %v3197 = vunpack.c.h.b16 %v267
  %v3198 = vunpack.c.l.b16 %v268
  %v3199 = vunpack.c.h.b16 %v268
  %v3200 = vunpack.c.l.b16 %v269
  %v3201 = vunpack.c.h.b16 %v269
  %v3202 = vunpack.c.l.b16 %v270
  %v3203 = vunpack.c.h.b16 %v270
  %v3204 = vunpack.c.l.b16 %v271
  %v3205 = vunpack.c.h.b16 %v271
  %v3206 = vunpack.c.l.b16 %v272
  %v3207 = vunpack.c.h.b16 %v272
  %v3208 = vunpack.c.l.b16 %v273
  %v3209 = vunpack.c.h.b16 %v273
  %v3210 = vunpack.c.l.b16 %v274
  %v3211 = vunpack.c.h.b16 %v274
  %v3212 = vunpack.c.l.b16 %v275
  %v3213 = vunpack.c.h.b16 %v275
  %v3214 = vunpack.c.l.b16 %v276
  %v3215 = vunpack.c.h.b16 %v276
  %v3216 = vunpack.c.l.b16 %v277
  %v3217 = vunpack.c.h.b16 %v277
  %v3218 = vunpack.c.l.b16 %v278
  %v3219 = vunpack.c.h.b16 %v278
  %v3220 = vunpack.c.l.b16 %v279
  %v3221 = vunpack.c.h.b16 %v279
  %v3222 = vunpack.c.l.b16 %v280
  %v3223 = vunpack.c.h.b16 %v280
  %v3224 = vunpack.c.l.b16 %v281
  %v3225 = vunpack.c.h.b16 %v281
  %v3226 = vunpack.c.l.b16 %v282
  %v3227 = vunpack.c.h.b16 %v282
  %v3228 = vunpack.c.l.b16 %v283
  %v3229 = vunpack.c.h.b16 %v283
  %v3230 = vunpack.c.l.b16 %v284
  %v3231 = vunpack.c.h.b16 %v284
  %v3232 = vunpack.c.l.b16 %v285
  %v3233 = vunpack.c.h.b16 %v285
  %v3234 = vunpack.c.l.b16 %v286
  %v3235 = vunpack.c.h.b16 %v286
  %v3236 = vunpack.c.l.b16 %v287
  %v3237 = vunpack.c.h.b16 %v287
  %v3238 = vunpack.c.l.b16 %v288
  %v3239 = vunpack.c.h.b16 %v288
  %v3240 = vunpack.c.l.b16 %v289
  %v3241 = vunpack.c.h.b16 %v289
  %v3242 = vunpack.c.l.b16 %v290
  %v3243 = vunpack.c.h.b16 %v290
  %v3244 = vunpack.c.l.b16 %v291
  %v3245 = vunpack.c.h.b16 %v291
  %v3246 = vunpack.c.l.b16 %v292
  %v3247 = vunpack.c.h.b16 %v292
  %v3248 = vunpack.c.l.b16 %v293
  %v3249 = vunpack.c.h.b16 %v293
  %v3250 = vunpack.c.l.b16 %v294
  %v3251 = vunpack.c.h.b16 %v294
  %v3252 = vunpack.c.l.b16 %v295
  %v3253 = vunpack.c.h.b16 %v295
  %v3254 = vunpack.c.l.b16 %v296
  %v3255 = vunpack.c.h.b16 %v296
  %v3256 = vunpack.c.l.b16 %v297
  %v3257 = vunpack.c.h.b16 %v297
  %v3258 = vunpack.c.l.b16 %v298
  %v3259 = vunpack.c.h.b16 %v298
  %v3260 = vunpack.c.l.b16 %v299
  %v3261 = vunpack.c.h.b16 %v299
  %v3262 = vunpack.c.l.b16 %v300
  %v3263 = vunpack.c.h.b16 %v300
  %v3264 = vunpack.c.l.b16 %v301
  %v3265 = vunpack.c.h.b16 %v301
  %v3266 = vunpack.c.l.b16 %v302
  %v3267 = vunpack.c.h.b16 %v302
  %v3268 = vunpack.c.l.b16 %v303
  %v3269 = vunpack.c.h.b16 %v303
  %v3270 = vunpack.c.l.b16 %v304
  %v3271 = vunpack.c.h.b16 %v304
  %v3272 = vunpack.c.l.b16 %v305
  %v3273 = vunpack.c.h.b16 %v305
  %v3274 = vunpack.c.l.b16 %v306
  %v3275 = vunpack.c.h.b16 %v306
  %v3276 = vunpack.c.l.b16 %v307
  %v3277 = vunpack.c.h.b16 %v307
  %v3278 = vunpack.c.l.b16 %v308
  %v3279 = vunpack.c.h.b16 %v308
  %v3280 = vunpack.c.l.b16 %v309
  %v3281 = vunpack.c.h.b16 %v309
  %v3282 = vunpack.c.l.b16 %v310
  %v3283 = vunpack.c.h.b16 %v310
  %v3284 = vunpack.c.l.b16 %v311
  %v3285 = vunpack.c.h.b16 %v311
  %v3286 = vunpack.c.l.b16 %v312
  %v3287 = vunpack.c.h.b16 %v312
  %v3288 = vunpack.c.l.b16 %v313
  %v3289 = vunpack.c.h.b16 %v313
  %v3290 = vunpack.c.l.b16 %v314
  %v3291 = vunpack.c.h.b16 %v314
  %v3292 = vunpack.c.l.b16 %v315
  %v3293 = vunpack.c.h.b16 %v315
  %v3294 = vunpack.c.l.b16 %v316
  %v3295 = vunpack.c.h.b16 %v316
  %v3296 = vunpack.c.l.b16 %v317
  %v3297 = vunpack.c.h.b16 %v317
  %v3298 = vunpack.c.l.b16 %v318
  %v3299 = vunpack.c.h.b16 %v318
  %v3300 = vunpack.c.l.b16 %v319
  %v3301 = vunpack.c.h.b16 %v319
  %v3302 = vunpack.c.l.b16 %v320
  %v3303 = vunpack.c.h.b16 %v320
  %v3304 = vunpack.c.l.b16 %v321
  %v3305 = vunpack.c.h.b16 %v321
  %v3306 = vunpack.c.l.b16 %v322
  %v3307 = vunpack.c.h.b16 %v322
  %v3308 = vunpack.c.l.b16 %v323
  %v3309 = vunpack.c.h.b16 %v323
  %v3310 = vunpack.c.l.b16 %v324
  %v3311 = vunpack.c.h.b16 %v324
  %v3312 = vunpack.c.l.b16 %v325
  %v3313 = vunpack.c.h.b16 %v325
  %v3314 = vunpack.c.l.b16 %v326
  %v3315 = vunpack.c.h.b16 %v326
  %v3316 = vunpack.c.l.b16 %v327
  %v3317 = vunpack.c.h.b16 %v327
  %v3318 = vunpack.c.l.b16 %v328
  %v3319 = vunpack.c.h.b16 %v328
  %v3320 = vunpack.c.l.b16 %v329
  %v3321 = vunpack.c.h.b16 %v329
  %v3322 = vunpack.c.l.b16 %v330
  %v3323 = vunpack.c.h.b16 %v330
  %v3324 = vunpack.c.l.b16 %v331
  %v3325 = vunpack.c.h.b16 %v331
  %v3326 = vunpack.c.l.b16 %v332
  %v3327 = vunpack.c.h.b16 %v332
  %v3328 = vunpack.c.l.b16 %v333
  %v3329 = vunpack.c.h.b16 %v333
  %v3330 = vunpack.c.l.b16 %v334
  %v3331 = vunpack.c.h.b16 %v334
  %v3332 = vunpack.c.l.b16 %v335
  %v3333 = vunpack.c.h.b16 %v335
  %v3334 = vunpack.c.l.b16 %v336
  %v3335 = vunpack.c.h.b16 %v336
  %v3336 = vunpack.c.l.b16 %v337
  %v3337 = vunpack.c.h.b16 %v337
  %v3338 = vunpack.c.l.b16 %v338
  %v3339 = vunpack.c.h.b16 %v338
  %v3340 = vunpack.c.l.b16 %v339
  %v3341 = vunpack.c.h.b16 %v339
  %v3342 = vunpack.c.l.b16 %v340
  %v3343 = vunpack.c.h.b16 %v340
  %v3344 = vunpack.c.l.b16 %v341
  %v3345 = vunpack.c.h.b16 %v341
  %v3346 = vunpack.c.l.b16 %v342
  %v3347 = vunpack.c.h.b16 %v342
  %v3348 = vunpack.c.l.b16 %v343
  %v3349 = vunpack.c.h.b16 %v343
  %v3350 = vunpack.c.l.b16 %v344
  %v3351 = vunpack.c.h.b16 %v344
  %v3352 = vunpack.c.l.b16 %v345
  %v3353 = vunpack.c.h.b16 %v345
  %v3354 = vunpack.c.l.b16 %v346
  %v3355 = vunpack.c.h.b16 %v346
  %v3356 = vunpack.c.l.b16 %v347
  %v3357 = vunpack.c.h.b16 %v347
  %v3358 = vunpack.c.l.b16 %v348
  %v3359 = vunpack.c.h.b16 %v348
  %v3360 = vunpack.c.l.b16 %v349
  %v3361 = vunpack.c.h.b16 %v349
  %v3362 = vunpack.c.l.b16 %v350
  %v3363 = vunpack.c.h.b16 %v350
  %v3364 = vunpack.c.l.b16 %v351
  %v3365 = vunpack.c.h.b16 %v351
  %v3366 = vunpack.c.l.b16 %v352
  %v3367 = vunpack.c.h.b16 %v352
  %v3368 = vunpack.c.l.b16 %v353
  %v3369 = vunpack.c.h.b16 %v353
  %v3370 = vunpack.c.l.b16 %v354
  %v3371 = vunpack.c.h.b16 %v354
  %v3372 = vunpack.c.l.b16 %v355
  %v3373 = vunpack.c.h.b16 %v355
  %v3374 = vunpack.c.l.b16 %v356
  %v3375 = vunpack.c.h.b16 %v356
  %v3376 = vunpack.c.l.b16 %v357
  %v3377 = vunpack.c.h.b16 %v357
  %v3378 = vunpack.c.l.b16 %v358
  %v3379 = vunpack.c.h.b16 %v358
  %v3380 = vunpack.c.l.b16 %v359
  %v3381 = vunpack.c.h.b16 %v359
  %v3382 = vunpack.c.l.b16 %v360
  %v3383 = vunpack.c.h.b16 %v360
  %v3384 = vunpack.c.l.b16 %v361
  %v3385 = vunpack.c.h.b16 %v361
  %v3386 = vunpack.c.l.b16 %v362
  %v3387 = vunpack.c.h.b16 %v362
  %v3388 = vunpack.c.l.b16 %v363
  %v3389 = vunpack.c.h.b16 %v363
  %v3390 = vunpack.c.l.b16 %v364
  %v3391 = vunpack.c.h.b16 %v364
  %v3392 = vunpack.c.l.b16 %v365
  %v3393 = vunpack.c.h.b16 %v365
  %v3394 = vunpack.c.l.b16 %v366
  %v3395 = vunpack.c.h.b16 %v366
  %v3396 = vunpack.c.l.b16 %v367
  %v3397 = vunpack.c.h.b16 %v367
  %v3398 = vunpack.c.l.b16 %v368
  %v3399 = vunpack.c.h.b16 %v368
  %v3400 = vunpack.c.l.b16 %v369
  %v3401 = vunpack.c.h.b16 %v369
  %v3402 = vunpack.c.l.b16 %v370
  %v3403 = vunpack.c.h.b16 %v370
  %v3404 = vunpack.c.l.b16 %v371
  %v3405 = vunpack.c.h.b16 %v371
  %v3406 = vunpack.c.l.b16 %v372
  %v3407 = vunpack.c.h.b16 %v372
  %v3408 = vunpack.c.l.b16 %v373
  %v3409 = vunpack.c.h.b16 %v373
  %v3410 = vunpack.c.l.b16 %v374
  %v3411 = vunpack.c.h.b16 %v374
  %v3412 = vunpack.c.l.b16 %v375
  %v3413 = vunpack.c.h.b16 %v375
  %v3414 = vunpack.c.l.b16 %v376
  %v3415 = vunpack.c.h.b16 %v376
  %v3416 = vunpack.c.l.b16 %v377
  %v3417 = vunpack.c.h.b16 %v377
  %v3418 = vunpack.c.l.b16 %v378
  %v3419 = vunpack.c.h.b16 %v378
  %v3420 = vunpack.c.l.b16 %v379
  %v3421 = vunpack.c.h.b16 %v379
  %v3422 = vunpack.c.l.b16 %v380
  %v3423 = vunpack.c.h.b16 %v380
  %v3424 = vunpack.c.l.b16 %v381
  %v3425 = vunpack.c.h.b16 %v381
  %v3426 = vunpack.c.l.b16 %v382
  %v3427 = vunpack.c.h.b16 %v382
  %v3428 = vunpack.c.l.b16 %v383
  %v3429 = vunpack.c.h.b16 %v383
  %v3430 = vunpack.c.l.b16 %v384
  %v3431 = vunpack.c.h.b16 %v384
  %v3432 = vunpack.c.l.b16 %v385
  %v3433 = vunpack.c.h.b16 %v385
  %v3434 = vunpack.c.l.b16 %v386
  %v3435 = vunpack.c.h.b16 %v386
  %v3436 = vunpack.c.l.b16 %v387
  %v3437 = vunpack.c.h.b16 %v387
  %v3438 = vunpack.c.l.b16 %v388
  %v3439 = vunpack.c.h.b16 %v388
  %v3440 = vunpack.c.l.b16 %v389
  %v3441 = vunpack.c.h.b16 %v389
  %v3442 = vunpack.c.l.b16 %v390
  %v3443 = vunpack.c.h.b16 %v390
  %v3444 = vunpack.c.l.b16 %v391
  %v3445 = vunpack.c.h.b16 %v391
  %v3446 = vunpack.c.l.b16 %v392
  %v3447 = vunpack.c.h.b16 %v392
  %v3448 = vunpack.c.l.b16 %v393
  %v3449 = vunpack.c.h.b16 %v393
  %v3450 = vunpack.c.l.b16 %v394
  %v3451 = vunpack.c.h.b16 %v394
  %v3452 = vunpack.c.l.b16 %v395
  %v3453 = vunpack.c.h.b16 %v395
  %v3454 = vunpack.c.l.b16 %v396
  %v3455 = vunpack.c.h.b16 %v396
  %v3456 = vunpack.c.l.b16 %v397
  %v3457 = vunpack.c.h.b16 %v397
  %v3458 = vunpack.c.l.b16 %v398
  %v3459 = vunpack.c.h.b16 %v398
  %v3460 = vunpack.c.l.b16 %v399
  %v3461 = vunpack.c.h.b16 %v399
  %v3462 = vunpack.c.l.b16 %v400
  %v3463 = vunpack.c.h.b16 %v400
  %v3464 = vunpack.c.l.b16 %v401
  %v3465 = vunpack.c.h.b16 %v401
  %v3466 = vunpack.c.l.b16 %v402
  %v3467 = vunpack.c.h.b16 %v402
  %v3468 = vunpack.c.l.b16 %v403
  %v3469 = vunpack.c.h.b16 %v403
  %v3470 = vunpack.c.l.b16 %v404
  %v3471 = vunpack.c.h.b16 %v404
  %v3472 = vunpack.c.l.b16 %v405
  %v3473 = vunpack.c.h.b16 %v405
  %v3474 = vunpack.c.l.b16 %v406
  %v3475 = vunpack.c.h.b16 %v406
  %v3476 = vunpack.c.l.b16 %v407
  %v3477 = vunpack.c.h.b16 %v407
  %v3478 = vunpack.c.l.b16 %v408
  %v3479 = vunpack.c.h.b16 %v408
  %v3480 = vunpack.c.l.b16 %v409
  %v3481 = vunpack.c.h.b16 %v409
  %v3482 = vunpack.c.l.b16 %v410
  %v3483 = vunpack.c.h.b16 %v410
  %v3484 = vunpack.c.l.b16 %v411
  %v3485 = vunpack.c.h.b16 %v411
  %v3486 = vunpack.c.l.b16 %v412
  %v3487 = vunpack.c.h.b16 %v412
  %v3488 = vunpack.c.l.b16 %v413
  %v3489 = vunpack.c.h.b16 %v413
  %v3490 = vunpack.c.l.b16 %v414
  %v3491 = vunpack.c.h.b16 %v414
  %v3492 = vunpack.c.l.b16 %v415
  %v3493 = vunpack.c.h.b16 %v415
  %v3494 = vunpack.c.l.b16 %v416
  %v3495 = vunpack.c.h.b16 %v416
  %v3496 = vunpack.c.l.b16 %v417
  %v3497 = vunpack.c.h.b16 %v417
  %v3498 = vunpack.c.l.b16 %v418
  %v3499 = vunpack.c.h.b16 %v418
  %v3500 = vunpack.c.l.b16 %v419
  %v3501 = vunpack.c.h.b16 %v419
  %v3502 = vunpack.c.l.b16 %v420
  %v3503 = vunpack.c.h.b16 %v420
  %v3504 = vunpack.c.l.b16 %v421
  %v3505 = vunpack.c.h.b16 %v421
  %v3506 = vunpack.c.l.b16 %v422
  %v3507 = vunpack.c.h.b16 %v422
  %v3508 = vunpack.c.l.b16 %v423
  %v3509 = vunpack.c.h.b16 %v423
  %v3510 = vunpack.c.l.b16 %v424
  %v3511 = vunpack.c.h.b16 %v424
  %v3512 = vunpack.c.l.b16 %v425
  %v3513 = vunpack.c.h.b16 %v425
  %v3514 = vunpack.c.l.b16 %v426
  %v3515 = vunpack.c.h.b16 %v426
  %v3516 = vunpack.c.l.b16 %v427
  %v3517 = vunpack.c.h.b16 %v427
  %v3518 = vunpack.c.l.b16 %v428
  %v3519 = vunpack.c.h.b16 %v428
  %v3520 = vunpack.c.l.b16 %v429
  %v3521 = vunpack.c.h.b16 %v429
  %v3522 = vunpack.c.l.b16 %v430
  %v3523 = vunpack.c.h.b16 %v430
  %v3524 = vunpack.c.l.b16 %v431
  %v3525 = vunpack.c.h.b16 %v431
  %v3526 = vunpack.c.l.b16 %v432
  %v3527 = vunpack.c.h.b16 %v432
  %v3528 = vunpack.c.l.b16 %v433
  %v3529 = vunpack.c.h.b16 %v433
  %v3530 = vunpack.c.l.b16 %v434
  %v3531 = vunpack.c.h.b16 %v434
  %v3532 = vunpack.c.l.b16 %v435
  %v3533 = vunpack.c.h.b16 %v435
  %v3534 = vunpack.c.l.b16 %v436
  %v3535 = vunpack.c.h.b16 %v436
  %v3536 = vunpack.c.l.b16 %v437
  %v3537 = vunpack.c.h.b16 %v437
  %v3538 = vunpack.c.l.b16 %v438
  %v3539 = vunpack.c.h.b16 %v438
  %v3540 = vunpack.c.l.b16 %v439
  %v3541 = vunpack.c.h.b16 %v439
  %v3542 = vunpack.c.l.b16 %v440
  %v3543 = vunpack.c.h.b16 %v440
  %v3544 = vunpack.c.l.b16 %v441
  %v3545 = vunpack.c.h.b16 %v441
  %v3546 = vunpack.c.l.b16 %v442
  %v3547 = vunpack.c.h.b16 %v442
  %v3548 = vunpack.c.l.b16 %v443
  %v3549 = vunpack.c.h.b16 %v443
  %v3550 = vunpack.c.l.b16 %v444
  %v3551 = vunpack.c.h.b16 %v444
  %v3552 = vunpack.c.l.b16 %v445
  %v3553 = vunpack.c.h.b16 %v445
  %v3554 = vunpack.c.l.b16 %v446
  %v3555 = vunpack.c.h.b16 %v446
  %v3556 = vunpack.c.l.b16 %v447
  %v3557 = vunpack.c.h.b16 %v447
  %v3558 = vunpack.c.l.b16 %v448
  %v3559 = vunpack.c.h.b16 %v448
  %v3560 = vunpack.c.l.b16 %v449
  %v3561 = vunpack.c.h.b16 %v449
  %v3562 = vunpack.c.l.b16 %v450
  %v3563 = vunpack.c.h.b16 %v450
  %v3564 = vunpack.c.l.b16 %v451
  %v3565 = vunpack.c.h.b16 %v451
  %v3566 = vunpack.c.l.b16 %v452
  %v3567 = vunpack.c.h.b16 %v452
  %v3568 = vunpack.c.l.b16 %v453
  %v3569 = vunpack.c.h.b16 %v453
  %v3570 = vunpack.c.l.b16 %v454
  %v3571 = vunpack.c.h.b16 %v454
  %v3572 = vunpack.c.l.b16 %v455
  %v3573 = vunpack.c.h.b16 %v455
  %v3574 = vunpack.c.l.b16 %v456
  %v3575 = vunpack.c.h.b16 %v456
  %v3576 = vunpack.c.l.b16 %v457
  %v3577 = vunpack.c.h.b16 %v457
  %v3578 = vunpack.c.l.b16 %v458
  %v3579 = vunpack.c.h.b16 %v458
  %v3580 = vunpack.c.l.b16 %v459
  %v3581 = vunpack.c.h.b16 %v459
  %v3582 = vunpack.c.l.b16 %v460
  %v3583 = vunpack.c.h.b16 %v460
  %v3584 = vunpack.c.l.b16 %v461
  %v3585 = vunpack.c.h.b16 %v461
  %v3586 = vunpack.c.l.b16 %v462
  %v3587 = vunpack.c.h.b16 %v462
  %v3588 = vunpack.c.l.b16 %v463
  %v3589 = vunpack.c.h.b16 %v463
  %v3590 = vunpack.c.l.b16 %v464
  %v3591 = vunpack.c.h.b16 %v464
  %v3592 = vpack.c.b16 %v3022, %v3016
  %v3593 = vpack.c.b16 %v3023, %v3017
  %v3594 = vpack.c.b16 %v3024, %v3018
  %v3595 = vpack.c.b16 %v3025, %v3019
  %v3596 = vpack.c.b16 %v3026, %v3020
  %v3597 = vpack.c.b16 %v3027, %v3021
  %v3598 = vpack.c.b16 %v3034, %v3028
  %v3599 = vpack.c.b16 %v3035, %v3029
  %v3600 = vpack.c.b16 %v3036, %v3030
  %v3601 = vpack.c.b16 %v3037, %v3031
  %v3602 = vpack.c.b16 %v3038, %v3032
  %v3603 = vpack.c.b16 %v3039, %v3033
  %v3604 = vpack.c.b16 %v3046, %v3040
  %v3605 = vpack.c.b16 %v3047, %v3041
  %v3606 = vpack.c.b16 %v3048, %v3042
  %v3607 = vpack.c.b16 %v3049, %v3043
  %v3608 = vpack.c.b16 %v3050, %v3044
  %v3609 = vpack.c.b16 %v3051, %v3045
  %v3610 = vpack.c.b16 %v3058, %v3052
  %v3611 = vpack.c.b16 %v3059, %v3053
  %v3612 = vpack.c.b16 %v3060, %v3054
  %v3613 = vpack.c.b16 %v3061, %v3055
  %v3614 = vpack.c.b16 %v3062, %v3056
  %v3615 = vpack.c.b16 %v3063, %v3057
  %v3616 = vpack.c.b16 %v3070, %v3064
  %v3617 = vpack.c.b16 %v3071, %v3065
  %v3618 = vpack.c.b16 %v3072, %v3066
  %v3619 = vpack.c.b16 %v3073, %v3067
  %v3620 = vpack.c.b16 %v3074, %v3068
  %v3621 = vpack.c.b16 %v3075, %v3069
  %v3622 = vpack.c.b16 %v3082, %v3076
  %v3623 = vpack.c.b16 %v3083, %v3077
  %v3624 = vpack.c.b16 %v3084, %v3078
  %v3625 = vpack.c.b16 %v3085, %v3079
  %v3626 = vpack.c.b16 %v3086, %v3080
  %v3627 = vpack.c.b16 %v3087, %v3081
  %v3628 = vpack.c.b16 %v3094, %v3088
  %v3629 = vpack.c.b16 %v3095, %v3089
  %v3630 = vpack.c.b16 %v3096, %v3090
  %v3631 = vpack.c.b16 %v3097, %v3091
  %v3632 = vpack.c.b16 %v3098, %v3092
  %v3633 = vpack.c.b16 %v3099, %v3093
  %v3634 = vpack.c.b16 %v3106, %v3100
  %v3635 = vpack.c.b16 %v3107, %v3101
  %v3636 = vpack.c.b16 %v3108, %v3102
  %v3637 = vpack.c.b16 %v3109, %v3103
  %v3638 = vpack.c.b16 %v3110, %v3104
  %v3639 = vpack.c.b16 %v3111, %v3105
  %v3640 = vpack.c.b16 %v3118, %v3112
  %v3641 = vpack.c.b16 %v3119, %v3113
  %v3642 = vpack.c.b16 %v3120, %v3114
  %v3643 = vpack.c.b16 %v3121, %v3115
  %v3644 = vpack.c.b16 %v3122, %v3116
  %v3645 = vpack.c.b16 %v3123, %v3117
  %v3646 = vpack.c.b16 %v3130, %v3124
  %v3647 = vpack.c.b16 %v3131, %v3125
  %v3648 = vpack.c.b16 %v3132, %v3126
  %v3649 = vpack.c.b16 %v3133, %v3127
  %v3650 = vpack.c.b16 %v3134, %v3128
  %v3651 = vpack.c.b16 %v3135, %v3129
  %v3652 = vpack.c.b16 %v3142, %v3136
  %v3653 = vpack.c.b16 %v3143, %v3137
  %v3654 = vpack.c.b16 %v3144, %v3138
  %v3655 = vpack.c.b16 %v3145, %v3139
  %v3656 = vpack.c.b16 %v3146, %v3140
  %v3657 = vpack.c.b16 %v3147, %v3141
  %v3658 = vpack.c.b16 %v3154, %v3148
  %v3659 = vpack.c.b16 %v3155, %v3149
  %v3660 = vpack.c.b16 %v3156, %v3150
  %v3661 = vpack.c.b16 %v3157, %v3151
  %v3662 = vpack.c.b16 %v3158, %v3152
  %v3663 = vpack.c.b16 %v3159, %v3153
  %v3664 = vpack.c.b16 %v3166, %v3160
  %v3665 = vpack.c.b16 %v3167, %v3161
  %v3666 = vpack.c.b16 %v3168, %v3162
  %v3667 = vpack.c.b16 %v3169, %v3163
  %v3668 = vpack.c.b16 %v3170, %v3164
  %v3669 = vpack.c.b16 %v3171, %v3165
  %v3670 = vpack.c.b16 %v3178, %v3172
  %v3671 = vpack.c.b16 %v3179, %v3173
  %v3672 = vpack.c.b16 %v3180, %v3174
  %v3673 = vpack.c.b16 %v3181, %v3175
  %v3674 = vpack.c.b16 %v3182, %v3176
  %v3675 = vpack.c.b16 %v3183, %v3177
  %v3676 = vpack.c.b16 %v3190, %v3184
  %v3677 = vpack.c.b16 %v3191, %v3185
  %v3678 = vpack.c.b16 %v3192, %v3186
  %v3679 = vpack.c.b16 %v3193, %v3187
  %v3680 = vpack.c.b16 %v3194, %v3188
  %v3681 = vpack.c.b16 %v3195, %v3189
  %v3682 = vpack.c.b16 %v3202, %v3196
  %v3683 = vpack.c.b16 %v3203, %v3197
  %v3684 = vpack.c.b16 %v3204, %v3198
  %v3685 = vpack.c.b16 %v3205, %v3199
  %v3686 = vpack.c.b16 %v3206, %v3200
  %v3687 = vpack.c.b16 %v3207, %v3201
  %v3688 = vpack.c.b16 %v3214, %v3208
  %v3689 = vpack.c.b16 %v3215, %v3209
  %v3690 = vpack.c.b16 %v3216, %v3210
  %v3691 = vpack.c.b16 %v3217, %v3211
  %v3692 = vpack.c.b16 %v3218, %v3212
  %v3693 = vpack.c.b16 %v3219, %v3213
  %v3694 = vpack.c.b16 %v3226, %v3220
  %v3695 = vpack.c.b16 %v3227, %v3221
  %v3696 = vpack.c.b16 %v3228, %v3222
  %v3697 = vpack.c.b16 %v3229, %v3223
  %v3698 = vpack.c.b16 %v3230, %v3224
  %v3699 = vpack.c.b16 %v3231, %v3225
  %v3700 = vpack.c.b16 %v3238, %v3232
  %v3701 = vpack.c.b16 %v3239, %v3233
  %v3702 = vpack.c.b16 %v3240, %v3234
  %v3703 = vpack.c.b16 %v3241, %v3235
  %v3704 = vpack.c.b16 %v3242, %v3236
  %v3705 = vpack.c.b16 %v3243, %v3237
  %v3706 = vpack.c.b16 %v3250, %v3244
  %v3707 = vpack.c.b16 %v3251, %v3245
  %v3708 = vpack.c.b16 %v3252, %v3246
  %v3709 = vpack.c.b16 %v3253, %v3247
  %v3710 = vpack.c.b16 %v3254, %v3248
  %v3711 = vpack.c.b16 %v3255, %v3249
  %v3712 = vpack.c.b16 %v3262, %v3256
  %v3713 = vpack.c.b16 %v3263, %v3257
  %v3714 = vpack.c.b16 %v3264, %v3258
  %v3715 = vpack.c.b16 %v3265, %v3259
  %v3716 = vpack.c.b16 %v3266, %v3260
  %v3717 = vpack.c.b16 %v3267, %v3261
  %v3718 = vpack.c.b16 %v3274, %v3268
  %v3719 = vpack.c.b16 %v3275, %v3269
  %v3720 = vpack.c.b16 %v3276, %v3270
  %v3721 = vpack.c.b16 %v3277, %v3271
  %v3722 = vpack.c.b16 %v3278, %v3272
  %v3723 = vpack.c.b16 %v3279, %v3273
  %v3724 = vpack.c.b16 %v3286, %v3280
  %v3725 = vpack.c.b16 %v3287, %v3281
  %v3726 = vpack.c.b16 %v3288, %v3282
  %v3727 = vpack.c.b16 %v3289, %v3283
  %v3728 = vpack.c.b16 %v3290, %v3284
  %v3729 = vpack.c.b16 %v3291, %v3285
  %v3730 = vpack.c.b16 %v3298, %v3292
  %v3731 = vpack.c.b16 %v3299, %v3293
  %v3732 = vpack.c.b16 %v3300, %v3294
  %v3733 = vpack.c.b16 %v3301, %v3295
  %v3734 = vpack.c.b16 %v3302, %v3296
  %v3735 = vpack.c.b16 %v3303, %v3297
  %v3736 = vpack.c.b16 %v3310, %v3304
  %v3737 = vpack.c.b16 %v3311, %v3305
  %v3738 = vpack.c.b16 %v3312, %v3306
  %v3739 = vpack.c.b16 %v3313, %v3307
  %v3740 = vpack.c.b16 %v3314, %v3308
  %v3741 = vpack.c.b16 %v3315, %v3309
  %v3742 = vpack.c.b16 %v3322, %v3316
  %v3743 = vpack.c.b16 %v3323, %v3317
  %v3744 = vpack.c.b16 %v3324, %v3318
  %v3745 = vpack.c.b16 %v3325, %v3319
  %v3746 = vpack.c.b16 %v3326, %v3320
  %v3747 = vpack.c.b16 %v3327, %v3321
  %v3748 = vpack.c.b16 %v3334, %v3328
  %v3749 = vpack.c.b16 %v3335, %v3329
  %v3750 = vpack.c.b16 %v3336, %v3330
  %v3751 = vpack.c.b16 %v3337, %v3331
  %v3752 = vpack.c.b16 %v3338, %v3332
  %v3753 = vpack.c.b16 %v3339, %v3333
  %v3754 = vpack.c.b16 %v3346, %v3340
  %v3755 = vpack.c.b16 %v3347, %v3341
  %v3756 = vpack.c.b16 %v3348, %v3342
  %v3757 = vpack.c.b16 %v3349, %v3343
  %v3758 = vpack.c.b16 %v3350, %v3344
  %v3759 = vpack.c.b16 %v3351, %v3345
  %v3760 = vpack.c.b16 %v3358, %v3352
  %v3761 = vpack.c.b16 %v3359, %v3353
  %v3762 = vpack.c.b16 %v3360, %v3354
  %v3763 = vpack.c.b16 %v3361, %v3355
  %v3764 = vpack.c.b16 %v3362, %v3356
  %v3765 = vpack.c.b16 %v3363, %v3357
  %v3766 = vpack.c.b16 %v3370, %v3364
  %v3767 = vpack.c.b16 %v3371, %v3365
  %v3768 = vpack.c.b16 %v3372, %v3366
  %v3769 = vpack.c.b16 %v3373, %v3367
  %v3770 = vpack.c.b16 %v3374, %v3368
  %v3771 = vpack.c.b16 %v3375, %v3369
  %v3772 = vpack.c.b16 %v3382, %v3376
  %v3773 = vpack.c.b16 %v3383, %v3377
  %v3774 = vpack.c.b16 %v3384, %v3378
  %v3775 = vpack.c.b16 %v3385, %v3379
  %v3776 = vpack.c.b16 %v3386, %v3380
  %v3777 = vpack.c.b16 %v3387, %v3381
  %v3778 = vpack.c.b16 %v3394, %v3388
  %v3779 = vpack.c.b16 %v3395, %v3389
  %v3780 = vpack.c.b16 %v3396, %v3390
  %v3781 = vpack.c.b16 %v3397, %v3391
  %v3782 = vpack.c.b16 %v3398, %v3392
  %v3783 = vpack.c.b16 %v3399, %v3393
  %v3784 = vpack.c.b16 %v3406, %v3400
  %v3785 = vpack.c.b16 %v3407, %v3401
  %v3786 = vpack.c.b16 %v3408, %v3402
  %v3787 = vpack.c.b16 %v3409, %v3403
  %v3788 = vpack.c.b16 %v3410, %v3404
  %v3789 = vpack.c.b16 %v3411, %v3405
  %v3790 = vpack.c.b16 %v3418, %v3412
  %v3791 = vpack.c.b16 %v3419, %v3413
  %v3792 = vpack.c.b16 %v3420, %v3414
  %v3793 = vpack.c.b16 %v3421, %v3415
  %v3794 = vpack.c.b16 %v3422, %v3416
  %v3795 = vpack.c.b16 %v3423, %v3417
  %v3796 = vpack.c.b16 %v3430, %v3424
  %v3797 = vpack.c.b16 %v3431, %v3425
  %v3798 = vpack.c.b16 %v3432, %v3426
  %v3799 = vpack.c.b16 %v3433, %v3427
  %v3800 = vpack.c.b16 %v3434, %v3428
  %v3801 = vpack.c.b16 %v3435, %v3429
  %v3802 = vpack.c.b16 %v3442, %v3436
  %v3803 = vpack.c.b16 %v3443, %v3437
  %v3804 = vpack.c.b16 %v3444, %v3438
  %v3805 = vpack.c.b16 %v3445, %v3439
  %v3806 = vpack.c.b16 %v3446, %v3440
  %v3807 = vpack.c.b16 %v3447, %v3441
  %v3808 = vpack.c.b16 %v3454, %v3448
  %v3809 = vpack.c.b16 %v3455, %v3449
  %v3810 = vpack.c.b16 %v3456, %v3450
  %v3811 = vpack.c.b16 %v3457, %v3451
  %v3812 = vpack.c.b16 %v3458, %v3452
  %v3813 = vpack.c.b16 %v3459, %v3453
  %v3814 = vpack.c.b16 %v3466, %v3460
  %v3815 = vpack.c.b16 %v3467, %v3461
  %v3816 = vpack.c.b16 %v3468, %v3462
  %v3817 = vpack.c.b16 %v3469, %v3463
  %v3818 = vpack.c.b16 %v3470, %v3464
  %v3819 = vpack.c.b16 %v3471, %v3465
  %v3820 = vpack.c.b16 %v3478, %v3472
  %v3821 = vpack.c.b16 %v3479, %v3473
  %v3822 = vpack.c.b16 %v3480, %v3474
  %v3823 = vpack.c.b16 %v3481, %v3475
  %v3824 = vpack.c.b16 %v3482, %v3476
  %v3825 = vpack.c.b16 %v3483, %v3477
  %v3826 = vpack.c.b16 %v3490, %v3484
  %v3827 = vpack.c.b16 %v3491, %v3485
  %v3828 = vpack.c.b16 %v3492, %v3486
  %v3829 = vpack.c.b16 %v3493, %v3487
  %v3830 = vpack.c.b16 %v3494, %v3488
  %v3831 = vpack.c.b16 %v3495, %v3489
  %v3832 = vpack.c.b16 %v3502, %v3496
  %v3833 = vpack.c.b16 %v3503, %v3497
  %v3834 = vpack.c.b16 %v3504, %v3498
  %v3835 = vpack.c.b16 %v3505, %v3499
  %v3836 = vpack.c.b16 %v3506, %v3500
  %v3837 = vpack.c.b16 %v3507, %v3501
  %v3838 = vpack.c.b16 %v3514, %v3508
  %v3839 = vpack.c.b16 %v3515, %v3509
  %v3840 = vpack.c.b16 %v3516, %v3510
  %v3841 = vpack.c.b16 %v3517, %v3511
  %v3842 = vpack.c.b16 %v3518, %v3512
  %v3843 = vpack.c.b16 %v3519, %v3513
  %v3844 = vpack.c.b16 %v3526, %v3520
  %v3845 = vpack.c.b16 %v3527, %v3521
  %v3846 = vpack.c.b16 %v3528, %v3522
  %v3847 = vpack.c.b16 %v3529, %v3523
  %v3848 = vpack.c.b16 %v3530, %v3524
  %v3849 = vpack.c.b16 %v3531, %v3525
  %v3850 = vpack.c.b16 %v3538, %v3532
  %v3851 = vpack.c.b16 %v3539, %v3533
  %v3852 = vpack.c.b16 %v3540, %v3534
  %v3853 = vpack.c.b16 %v3541, %v3535
  %v3854 = vpack.c.b16 %v3542, %v3536
  %v3855 = vpack.c.b16 %v3543, %v3537
  %v3856 = vpack.c.b16 %v3550, %v3544
  %v3857 = vpack.c.b16 %v3551, %v3545
  %v3858 = vpack.c.b16 %v3552, %v3546
  %v3859 = vpack.c.b16 %v3553, %v3547
  %v3860 = vpack.c.b16 %v3554, %v3548
  %v3861 = vpack.c.b16 %v3555, %v3549
  %v3862 = vpack.c.b16 %v3562, %v3556
  %v3863 = vpack.c.b16 %v3563, %v3557
  %v3864 = vpack.c.b16 %v3564, %v3558
  %v3865 = vpack.c.b16 %v3565, %v3559
  %v3866 = vpack.c.b16 %v3566, %v3560
  %v3867 = vpack.c.b16 %v3567, %v3561
  %v3868 = vpack.c.b16 %v3574, %v3568
  %v3869 = vpack.c.b16 %v3575, %v3569
  %v3870 = vpack.c.b16 %v3576, %v3570
  %v3871 = vpack.c.b16 %v3577, %v3571
  %v3872 = vpack.c.b16 %v3578, %v3572
  %v3873 = vpack.c.b16 %v3579, %v3573
  %v3874 = vpack.c.b16 %v3586, %v3580
  %v3875 = vpack.c.b16 %v3587, %v3581
  %v3876 = vpack.c.b16 %v3588, %v3582
  %v3877 = vpack.c.b16 %v3589, %v3583
  %v3878 = vpack.c.b16 %v3590, %v3584
  %v3879 = vpack.c.b16 %v3591, %v3585
  %4168 = vmatprep.subr.bf16.mxu0 %v3593
  %4169 = vmatpush1.bf16.msra.mxu0 %v3592
  %4170 = vmatprep.subr.bf16.mxu0 %v3599
  %4171 = vmatpush1.bf16.msra.mxu0 %v3598
  %4172 = vmatprep.subr.bf16.mxu0 %v3605
  %4173 = vmatpush1.bf16.msra.mxu0 %v3604
  %4174 = vmatprep.subr.bf16.mxu0 %v3611
  %4175 = vmatpush1.bf16.msra.mxu0 %v3610
  %4176 = vmatprep.subr.bf16.mxu0 %v3617
  %4177 = vmatpush1.bf16.msra.mxu0 %v3616
  %4178 = vmatprep.subr.bf16.mxu0 %v3623
  %4179 = vmatpush1.bf16.msra.mxu0 %v3622
  %4180 = vmatprep.subr.bf16.mxu0 %v3629
  %4181 = vmatpush1.bf16.msra.mxu0 %v3628
  %4182 = vmatprep.subr.bf16.mxu0 %v3635
  %4183 = vmatpush1.bf16.msra.mxu0 %v3634
  %4184 = vmatprep.subr.bf16.mxu0 %v3641
  %4185 = vmatpush1.bf16.msra.mxu0 %v3640
  %4186 = vmatprep.subr.bf16.mxu0 %v3647
  %4187 = vmatpush1.bf16.msra.mxu0 %v3646
  %4188 = vmatprep.subr.bf16.mxu0 %v3653
  %4189 = vmatpush1.bf16.msra.mxu0 %v3652
  %4190 = vmatprep.subr.bf16.mxu0 %v3659
  %4191 = vmatpush1.bf16.msra.mxu0 %v3658
  %4192 = vmatprep.subr.bf16.mxu0 %v3665
  %4193 = vmatpush1.bf16.msra.mxu0 %v3664
  %4194 = vmatprep.subr.bf16.mxu0 %v3671
  %4195 = vmatpush1.bf16.msra.mxu0 %v3670
  %4196 = vmatprep.subr.bf16.mxu0 %v3677
  %4197 = vmatpush1.bf16.msra.mxu0 %v3676
  %4198 = vmatprep.subr.bf16.mxu0 %v3683
  %4199 = vmatpush1.bf16.msra.mxu0 %v3682
  %4200 = vmatprep.mubr.bf16.mxu0 %v2717
  %4201 = vmatmul.mubr.bf16.gmra.mrb[0].mxu0 %v2716
  %v4202 = vpop.f32.mrb[0].mxu0
  %v4203 = vadd.f32 %v2432, %v4202
  %v4204 = vpop.f32.mrb[0].mxu0
  %v4205 = vadd.f32 %v2434, %v4204
  %v4206 = vpop.f32.mrb[0].mxu0
  %v4207 = vadd.f32 %v2436, %v4206
  %v4208 = vpop.f32.mrb[0].mxu0
  %v4209 = vadd.f32 %v2438, %v4208
  %4210 = vdwg.mxu0
  %4211 = vmatprep.subr.bf16.mxu0 %v3689
  %4212 = vmatpush1.bf16.msra.mxu0 %v3688
  %4213 = vmatprep.subr.bf16.mxu0 %v3695
  %4214 = vmatpush1.bf16.msra.mxu0 %v3694
  %4215 = vmatprep.subr.bf16.mxu0 %v3701
  %4216 = vmatpush1.bf16.msra.mxu0 %v3700
  %4217 = vmatprep.subr.bf16.mxu0 %v3707
  %4218 = vmatpush1.bf16.msra.mxu0 %v3706
  %4219 = vmatprep.subr.bf16.mxu0 %v3713
  %4220 = vmatpush1.bf16.msra.mxu0 %v3712
  %4221 = vmatprep.subr.bf16.mxu0 %v3719
  %4222 = vmatpush1.bf16.msra.mxu0 %v3718
  %4223 = vmatprep.subr.bf16.mxu0 %v3725
  %4224 = vmatpush1.bf16.msra.mxu0 %v3724
  %4225 = vmatprep.subr.bf16.mxu0 %v3731
  %4226 = vmatpush1.bf16.msra.mxu0 %v3730
  %4227 = vmatprep.subr.bf16.mxu0 %v3737
  %4228 = vmatpush1.bf16.msra.mxu0 %v3736
  %4229 = vmatprep.subr.bf16.mxu0 %v3743
  %4230 = vmatpush1.bf16.msra.mxu0 %v3742
  %4231 = vmatprep.subr.bf16.mxu0 %v3749
  %4232 = vmatpush1.bf16.msra.mxu0 %v3748
  %4233 = vmatprep.subr.bf16.mxu0 %v3755
  %4234 = vmatpush1.bf16.msra.mxu0 %v3754
  %4235 = vmatprep.subr.bf16.mxu0 %v3761
  %4236 = vmatpush1.bf16.msra.mxu0 %v3760
  %4237 = vmatprep.subr.bf16.mxu0 %v3767
  %4238 = vmatpush1.bf16.msra.mxu0 %v3766
  %4239 = vmatprep.subr.bf16.mxu0 %v3773
  %4240 = vmatpush1.bf16.msra.mxu0 %v3772
  %4241 = vmatprep.subr.bf16.mxu0 %v3779
  %4242 = vmatpush1.bf16.msra.mxu0 %v3778
  %4243 = vmatprep.mubr.bf16.mxu0 %v2719
  %4244 = vmatmul.mubr.bf16.gmra.mrb[0].mxu0 %v2718
  %v4245 = vpop.f32.mrb[0].mxu0
  %v4246 = vadd.f32 %v4203, %v4245
  %v4247 = vpop.f32.mrb[0].mxu0
  %v4248 = vadd.f32 %v4205, %v4247
  %v4249 = vpop.f32.mrb[0].mxu0
  %v4250 = vadd.f32 %v4207, %v4249
  %v4251 = vpop.f32.mrb[0].mxu0
  %v4252 = vadd.f32 %v4209, %v4251
  %4253 = vdwg.mxu0
  %4254 = vmatprep.subr.bf16.mxu0 %v3785
  %4255 = vmatpush1.bf16.msra.mxu0 %v3784
  %4256 = vmatprep.subr.bf16.mxu0 %v3791
  %4257 = vmatpush1.bf16.msra.mxu0 %v3790
  %4258 = vmatprep.subr.bf16.mxu0 %v3797
  %4259 = vmatpush1.bf16.msra.mxu0 %v3796
  %4260 = vmatprep.subr.bf16.mxu0 %v3803
  %4261 = vmatpush1.bf16.msra.mxu0 %v3802
  %4262 = vmatprep.subr.bf16.mxu0 %v3809
  %4263 = vmatpush1.bf16.msra.mxu0 %v3808
  %4264 = vmatprep.subr.bf16.mxu0 %v3815
  %4265 = vmatpush1.bf16.msra.mxu0 %v3814
  %4266 = vmatprep.subr.bf16.mxu0 %v3821
  %4267 = vmatpush1.bf16.msra.mxu0 %v3820
  %4268 = vmatprep.subr.bf16.mxu0 %v3827
  %4269 = vmatpush1.bf16.msra.mxu0 %v3826
  %4270 = vmatprep.subr.bf16.mxu0 %v3833
  %4271 = vmatpush1.bf16.msra.mxu0 %v3832
  %4272 = vmatprep.subr.bf16.mxu0 %v3839
  %4273 = vmatpush1.bf16.msra.mxu0 %v3838
  %4274 = vmatprep.subr.bf16.mxu0 %v3845
  %4275 = vmatpush1.bf16.msra.mxu0 %v3844
  %4276 = vmatprep.subr.bf16.mxu0 %v3851
  %4277 = vmatpush1.bf16.msra.mxu0 %v3850
  %4278 = vmatprep.subr.bf16.mxu0 %v3857
  %4279 = vmatpush1.bf16.msra.mxu0 %v3856
  %4280 = vmatprep.subr.bf16.mxu0 %v3863
  %4281 = vmatpush1.bf16.msra.mxu0 %v3862
  %4282 = vmatprep.subr.bf16.mxu0 %v3869
  %4283 = vmatpush1.bf16.msra.mxu0 %v3868
  %4284 = vmatprep.subr.bf16.mxu0 %v3875
  %4285 = vmatpush1.bf16.msra.mxu0 %v3874
  %4286 = vmatprep.mubr.bf16.mxu0 %v2721
  %4287 = vmatmul.mubr.bf16.gmra.mrb[0].mxu0 %v2720
  %v4288 = vpop.f32.mrb[0].mxu0
  %v4289 = vadd.f32 %v4246, %v4288
  %v4290 = vpop.f32.mrb[0].mxu0
  %v4291 = vadd.f32 %v4248, %v4290
  %v4292 = vpop.f32.mrb[0].mxu0
  %v4293 = vadd.f32 %v4250, %v4292
  %v4294 = vpop.f32.mrb[0].mxu0
  %v4295 = vadd.f32 %v4252, %v4294
  %4296 = vdwg.mxu0
  %4297 = vmatprep.subr.bf16.mxu0 %v3595
  %4298 = vmatpush1.bf16.msra.mxu0 %v3594
  %4299 = vmatprep.subr.bf16.mxu0 %v3601
  %4300 = vmatpush1.bf16.msra.mxu0 %v3600
  %4301 = vmatprep.subr.bf16.mxu0 %v3607
  %4302 = vmatpush1.bf16.msra.mxu0 %v3606
  %4303 = vmatprep.subr.bf16.mxu0 %v3613
  %4304 = vmatpush1.bf16.msra.mxu0 %v3612
  %4305 = vmatprep.subr.bf16.mxu0 %v3619
  %4306 = vmatpush1.bf16.msra.mxu0 %v3618
  %4307 = vmatprep.subr.bf16.mxu0 %v3625
  %4308 = vmatpush1.bf16.msra.mxu0 %v3624
  %4309 = vmatprep.subr.bf16.mxu0 %v3631
  %4310 = vmatpush1.bf16.msra.mxu0 %v3630
  %4311 = vmatprep.subr.bf16.mxu0 %v3637
  %4312 = vmatpush1.bf16.msra.mxu0 %v3636
  %4313 = vmatprep.subr.bf16.mxu0 %v3643
  %4314 = vmatpush1.bf16.msra.mxu0 %v3642
  %4315 = vmatprep.subr.bf16.mxu0 %v3649
  %4316 = vmatpush1.bf16.msra.mxu0 %v3648
  %4317 = vmatprep.subr.bf16.mxu0 %v3655
  %4318 = vmatpush1.bf16.msra.mxu0 %v3654
  %4319 = vmatprep.subr.bf16.mxu0 %v3661
  %4320 = vmatpush1.bf16.msra.mxu0 %v3660
  %4321 = vmatprep.subr.bf16.mxu0 %v3667
  %4322 = vmatpush1.bf16.msra.mxu0 %v3666
  %4323 = vmatprep.subr.bf16.mxu0 %v3673
  %4324 = vmatpush1.bf16.msra.mxu0 %v3672
  %4325 = vmatprep.subr.bf16.mxu0 %v3679
  %4326 = vmatpush1.bf16.msra.mxu0 %v3678
  %4327 = vmatprep.subr.bf16.mxu0 %v3685
  %4328 = vmatpush1.bf16.msra.mxu0 %v3684
  %4329 = vmatprep.mubr.bf16.mxu0 %v2717
  %4330 = vmatmul.mubr.bf16.gmra.mrb[0].mxu0 %v2716
  %v4331 = vpop.f32.mrb[0].mxu0
  %v4332 = vadd.f32 %v2561, %v4331
  %v4333 = vpop.f32.mrb[0].mxu0
  %v4334 = vadd.f32 %v2563, %v4333
  %v4335 = vpop.f32.mrb[0].mxu0
  %v4336 = vadd.f32 %v2565, %v4335
  %v4337 = vpop.f32.mrb[0].mxu0
  %v4338 = vadd.f32 %v2567, %v4337
  %4339 = vdwg.mxu0
  %4340 = vmatprep.subr.bf16.mxu0 %v3691
  %4341 = vmatpush1.bf16.msra.mxu0 %v3690
  %4342 = vmatprep.subr.bf16.mxu0 %v3697
  %4343 = vmatpush1.bf16.msra.mxu0 %v3696
  %4344 = vmatprep.subr.bf16.mxu0 %v3703
  %4345 = vmatpush1.bf16.msra.mxu0 %v3702
  %4346 = vmatprep.subr.bf16.mxu0 %v3709
  %4347 = vmatpush1.bf16.msra.mxu0 %v3708
  %4348 = vmatprep.subr.bf16.mxu0 %v3715
  %4349 = vmatpush1.bf16.msra.mxu0 %v3714
  %4350 = vmatprep.subr.bf16.mxu0 %v3721
  %4351 = vmatpush1.bf16.msra.mxu0 %v3720
  %4352 = vmatprep.subr.bf16.mxu0 %v3727
  %4353 = vmatpush1.bf16.msra.mxu0 %v3726
  %4354 = vmatprep.subr.bf16.mxu0 %v3733
  %4355 = vmatpush1.bf16.msra.mxu0 %v3732
  %4356 = vmatprep.subr.bf16.mxu0 %v3739
  %4357 = vmatpush1.bf16.msra.mxu0 %v3738
  %4358 = vmatprep.subr.bf16.mxu0 %v3745
  %4359 = vmatpush1.bf16.msra.mxu0 %v3744
  %4360 = vmatprep.subr.bf16.mxu0 %v3751
  %4361 = vmatpush1.bf16.msra.mxu0 %v3750
  %4362 = vmatprep.subr.bf16.mxu0 %v3757
  %4363 = vmatpush1.bf16.msra.mxu0 %v3756
  %4364 = vmatprep.subr.bf16.mxu0 %v3763
  %4365 = vmatpush1.bf16.msra.mxu0 %v3762
  %4366 = vmatprep.subr.bf16.mxu0 %v3769
  %4367 = vmatpush1.bf16.msra.mxu0 %v3768
  %4368 = vmatprep.subr.bf16.mxu0 %v3775
  %4369 = vmatpush1.bf16.msra.mxu0 %v3774
  %4370 = vmatprep.subr.bf16.mxu0 %v3781
  %4371 = vmatpush1.bf16.msra.mxu0 %v3780
  %4372 = vmatprep.mubr.bf16.mxu0 %v2719
  %4373 = vmatmul.mubr.bf16.gmra.mrb[0].mxu0 %v2718
  %v4374 = vpop.f32.mrb[0].mxu0
  %v4375 = vadd.f32 %v4332, %v4374
  %v4376 = vpop.f32.mrb[0].mxu0
  %v4377 = vadd.f32 %v4334, %v4376
  %v4378 = vpop.f32.mrb[0].mxu0
  %v4379 = vadd.f32 %v4336, %v4378
  %v4380 = vpop.f32.mrb[0].mxu0
  %v4381 = vadd.f32 %v4338, %v4380
  %4382 = vdwg.mxu0
  %4383 = vmatprep.subr.bf16.mxu0 %v3787
  %4384 = vmatpush1.bf16.msra.mxu0 %v3786
  %4385 = vmatprep.subr.bf16.mxu0 %v3793
  %4386 = vmatpush1.bf16.msra.mxu0 %v3792
  %4387 = vmatprep.subr.bf16.mxu0 %v3799
  %4388 = vmatpush1.bf16.msra.mxu0 %v3798
  %4389 = vmatprep.subr.bf16.mxu0 %v3805
  %4390 = vmatpush1.bf16.msra.mxu0 %v3804
  %4391 = vmatprep.subr.bf16.mxu0 %v3811
  %4392 = vmatpush1.bf16.msra.mxu0 %v3810
  %4393 = vmatprep.subr.bf16.mxu0 %v3817
  %4394 = vmatpush1.bf16.msra.mxu0 %v3816
  %4395 = vmatprep.subr.bf16.mxu0 %v3823
  %4396 = vmatpush1.bf16.msra.mxu0 %v3822
  %4397 = vmatprep.subr.bf16.mxu0 %v3829
  %4398 = vmatpush1.bf16.msra.mxu0 %v3828
  %4399 = vmatprep.subr.bf16.mxu0 %v3835
  %4400 = vmatpush1.bf16.msra.mxu0 %v3834
  %4401 = vmatprep.subr.bf16.mxu0 %v3841
  %4402 = vmatpush1.bf16.msra.mxu0 %v3840
  %4403 = vmatprep.subr.bf16.mxu0 %v3847
  %4404 = vmatpush1.bf16.msra.mxu0 %v3846
  %4405 = vmatprep.subr.bf16.mxu0 %v3853
  %4406 = vmatpush1.bf16.msra.mxu0 %v3852
  %4407 = vmatprep.subr.bf16.mxu0 %v3859
  %4408 = vmatpush1.bf16.msra.mxu0 %v3858
  %4409 = vmatprep.subr.bf16.mxu0 %v3865
  %4410 = vmatpush1.bf16.msra.mxu0 %v3864
  %4411 = vmatprep.subr.bf16.mxu0 %v3871
  %4412 = vmatpush1.bf16.msra.mxu0 %v3870
  %4413 = vmatprep.subr.bf16.mxu0 %v3877
  %4414 = vmatpush1.bf16.msra.mxu0 %v3876
  %4415 = vmatprep.mubr.bf16.mxu0 %v2721
  %4416 = vmatmul.mubr.bf16.gmra.mrb[0].mxu0 %v2720
  %v4417 = vpop.f32.mrb[0].mxu0
  %v4418 = vadd.f32 %v4375, %v4417
  %v4419 = vpop.f32.mrb[0].mxu0
  %v4420 = vadd.f32 %v4377, %v4419
  %v4421 = vpop.f32.mrb[0].mxu0
  %v4422 = vadd.f32 %v4379, %v4421
  %v4423 = vpop.f32.mrb[0].mxu0
  %v4424 = vadd.f32 %v4381, %v4423
  %4425 = vdwg.mxu0
  %4426 = vmatprep.subr.bf16.mxu0 %v3597
  %4427 = vmatpush1.bf16.msra.mxu0 %v3596
  %4428 = vmatprep.subr.bf16.mxu0 %v3603
  %4429 = vmatpush1.bf16.msra.mxu0 %v3602
  %4430 = vmatprep.subr.bf16.mxu0 %v3609
  %4431 = vmatpush1.bf16.msra.mxu0 %v3608
  %4432 = vmatprep.subr.bf16.mxu0 %v3615
  %4433 = vmatpush1.bf16.msra.mxu0 %v3614
  %4434 = vmatprep.subr.bf16.mxu0 %v3621
  %4435 = vmatpush1.bf16.msra.mxu0 %v3620
  %4436 = vmatprep.subr.bf16.mxu0 %v3627
  %4437 = vmatpush1.bf16.msra.mxu0 %v3626
  %4438 = vmatprep.subr.bf16.mxu0 %v3633
  %4439 = vmatpush1.bf16.msra.mxu0 %v3632
  %4440 = vmatprep.subr.bf16.mxu0 %v3639
  %4441 = vmatpush1.bf16.msra.mxu0 %v3638
  %4442 = vmatprep.subr.bf16.mxu0 %v3645
  %4443 = vmatpush1.bf16.msra.mxu0 %v3644
  %4444 = vmatprep.subr.bf16.mxu0 %v3651
  %4445 = vmatpush1.bf16.msra.mxu0 %v3650
  %4446 = vmatprep.subr.bf16.mxu0 %v3657
  %4447 = vmatpush1.bf16.msra.mxu0 %v3656
  %4448 = vmatprep.subr.bf16.mxu0 %v3663
  %4449 = vmatpush1.bf16.msra.mxu0 %v3662
  %4450 = vmatprep.subr.bf16.mxu0 %v3669
  %4451 = vmatpush1.bf16.msra.mxu0 %v3668
  %4452 = vmatprep.subr.bf16.mxu0 %v3675
  %4453 = vmatpush1.bf16.msra.mxu0 %v3674
  %4454 = vmatprep.subr.bf16.mxu0 %v3681
  %4455 = vmatpush1.bf16.msra.mxu0 %v3680
  %4456 = vmatprep.subr.bf16.mxu0 %v3687
  %4457 = vmatpush1.bf16.msra.mxu0 %v3686
  %4458 = vmatprep.mubr.bf16.mxu0 %v2717
  %4459 = vmatmul.mubr.bf16.gmra.mrb[0].mxu0 %v2716
  %v4460 = vpop.f32.mrb[0].mxu0
  %v4461 = vadd.f32 %v2690, %v4460
  %v4462 = vpop.f32.mrb[0].mxu0
  %v4463 = vadd.f32 %v2692, %v4462
  %v4464 = vpop.f32.mrb[0].mxu0
  %v4465 = vadd.f32 %v2694, %v4464
  %v4466 = vpop.f32.mrb[0].mxu0
  %v4467 = vadd.f32 %v2696, %v4466
  %4468 = vdwg.mxu0
  %4469 = vmatprep.subr.bf16.mxu0 %v3693
  %4470 = vmatpush1.bf16.msra.mxu0 %v3692
  %4471 = vmatprep.subr.bf16.mxu0 %v3699
  %4472 = vmatpush1.bf16.msra.mxu0 %v3698
  %4473 = vmatprep.subr.bf16.mxu0 %v3705
  %4474 = vmatpush1.bf16.msra.mxu0 %v3704
  %4475 = vmatprep.subr.bf16.mxu0 %v3711
  %4476 = vmatpush1.bf16.msra.mxu0 %v3710
  %4477 = vmatprep.subr.bf16.mxu0 %v3717
  %4478 = vmatpush1.bf16.msra.mxu0 %v3716
  %4479 = vmatprep.subr.bf16.mxu0 %v3723
  %4480 = vmatpush1.bf16.msra.mxu0 %v3722
  %4481 = vmatprep.subr.bf16.mxu0 %v3729
  %4482 = vmatpush1.bf16.msra.mxu0 %v3728
  %4483 = vmatprep.subr.bf16.mxu0 %v3735
  %4484 = vmatpush1.bf16.msra.mxu0 %v3734
  %4485 = vmatprep.subr.bf16.mxu0 %v3741
  %4486 = vmatpush1.bf16.msra.mxu0 %v3740
  %4487 = vmatprep.subr.bf16.mxu0 %v3747
  %4488 = vmatpush1.bf16.msra.mxu0 %v3746
  %4489 = vmatprep.subr.bf16.mxu0 %v3753
  %4490 = vmatpush1.bf16.msra.mxu0 %v3752
  %4491 = vmatprep.subr.bf16.mxu0 %v3759
  %4492 = vmatpush1.bf16.msra.mxu0 %v3758
  %4493 = vmatprep.subr.bf16.mxu0 %v3765
  %4494 = vmatpush1.bf16.msra.mxu0 %v3764
  %4495 = vmatprep.subr.bf16.mxu0 %v3771
  %4496 = vmatpush1.bf16.msra.mxu0 %v3770
  %4497 = vmatprep.subr.bf16.mxu0 %v3777
  %4498 = vmatpush1.bf16.msra.mxu0 %v3776
  %4499 = vmatprep.subr.bf16.mxu0 %v3783
  %4500 = vmatpush1.bf16.msra.mxu0 %v3782
  %4501 = vmatprep.mubr.bf16.mxu0 %v2719
  %4502 = vmatmul.mubr.bf16.gmra.mrb[0].mxu0 %v2718
  %v4503 = vpop.f32.mrb[0].mxu0
  %v4504 = vadd.f32 %v4461, %v4503
  %v4505 = vpop.f32.mrb[0].mxu0
  %v4506 = vadd.f32 %v4463, %v4505
  %v4507 = vpop.f32.mrb[0].mxu0
  %v4508 = vadd.f32 %v4465, %v4507
  %v4509 = vpop.f32.mrb[0].mxu0
  %v4510 = vadd.f32 %v4467, %v4509
  %4511 = vdwg.mxu0
  %4512 = vmatprep.subr.bf16.mxu0 %v3789
  %4513 = vmatpush1.bf16.msra.mxu0 %v3788
  %4514 = vmatprep.subr.bf16.mxu0 %v3795
  %4515 = vmatpush1.bf16.msra.mxu0 %v3794
  %4516 = vmatprep.subr.bf16.mxu0 %v3801
  %4517 = vmatpush1.bf16.msra.mxu0 %v3800
  %4518 = vmatprep.subr.bf16.mxu0 %v3807
  %4519 = vmatpush1.bf16.msra.mxu0 %v3806
  %4520 = vmatprep.subr.bf16.mxu0 %v3813
  %4521 = vmatpush1.bf16.msra.mxu0 %v3812
  %4522 = vmatprep.subr.bf16.mxu0 %v3819
  %4523 = vmatpush1.bf16.msra.mxu0 %v3818
  %4524 = vmatprep.subr.bf16.mxu0 %v3825
  %4525 = vmatpush1.bf16.msra.mxu0 %v3824
  %4526 = vmatprep.subr.bf16.mxu0 %v3831
  %4527 = vmatpush1.bf16.msra.mxu0 %v3830
  %4528 = vmatprep.subr.bf16.mxu0 %v3837
  %4529 = vmatpush1.bf16.msra.mxu0 %v3836
  %4530 = vmatprep.subr.bf16.mxu0 %v3843
  %4531 = vmatpush1.bf16.msra.mxu0 %v3842
  %4532 = vmatprep.subr.bf16.mxu0 %v3849
  %4533 = vmatpush1.bf16.msra.mxu0 %v3848
  %4534 = vmatprep.subr.bf16.mxu0 %v3855
  %4535 = vmatpush1.bf16.msra.mxu0 %v3854
  %4536 = vmatprep.subr.bf16.mxu0 %v3861
  %4537 = vmatpush1.bf16.msra.mxu0 %v3860
  %4538 = vmatprep.subr.bf16.mxu0 %v3867
  %4539 = vmatpush1.bf16.msra.mxu0 %v3866
  %4540 = vmatprep.subr.bf16.mxu0 %v3873
  %4541 = vmatpush1.bf16.msra.mxu0 %v3872
  %4542 = vmatprep.subr.bf16.mxu0 %v3879
  %4543 = vmatpush1.bf16.msra.mxu0 %v3878
  %4544 = vmatprep.mubr.bf16.mxu0 %v2721
  %4545 = vmatmul.mubr.bf16.gmra.mrb[0].mxu0 %v2720
  %v4546 = vpop.f32.mrb[0].mxu0
  %v4547 = vadd.f32 %v4504, %v4546
  %v4548 = vpop.f32.mrb[0].mxu0
  %v4549 = vadd.f32 %v4506, %v4548
  %v4550 = vpop.f32.mrb[0].mxu0
  %v4551 = vadd.f32 %v4508, %v4550
  %v4552 = vpop.f32.mrb[0].mxu0
  %v4553 = vadd.f32 %v4510, %v4552
  %4554 = vdwg.mxu0
  %v4556 = vlaneseq
  %v4557 = vshrl.u32 %v4556, 7
  %v4558 = vsub.s32 0, %v4557
  %v4559 = vrot.slane %v170, %v4558
  %v4560 = vlaneseq
  %v4561 = vshrl.u32 %v4560, 7
  %v4562 = vsub.s32 1, %v4561
  %v4563 = vrot.slane %v170, %v4562
  %v4564 = vlaneseq
  %v4565 = vshrl.u32 %v4564, 7
  %v4566 = vsub.s32 2, %v4565
  %v4567 = vrot.slane %v170, %v4566
  %v4568 = vlaneseq
  %v4569 = vshrl.u32 %v4568, 7
  %v4570 = vsub.s32 3, %v4569
  %v4571 = vrot.slane %v170, %v4570
  %v4572 = vlaneseq
  %v4573 = vshrl.u32 %v4572, 7
  %v4574 = vsub.s32 4, %v4573
  %v4575 = vrot.slane %v170, %v4574
  %v4576 = vlaneseq
  %v4577 = vshrl.u32 %v4576, 7
  %v4578 = vsub.s32 5, %v4577
  %v4579 = vrot.slane %v170, %v4578
  %v4586 = vadd.f32 %v4289, %v4559
  %v4587 = vadd.f32 %v4291, %v4563
  %v4588 = vadd.f32 %v4418, %v4567
  %v4589 = vadd.f32 %v4420, %v4571
  %v4590 = vadd.f32 %v4547, %v4575
  %v4591 = vadd.f32 %v4549, %v4579
  %v4592 = vadd.f32 %v4293, %v4559
  %v4593 = vadd.f32 %v4295, %v4563
  %v4594 = vadd.f32 %v4422, %v4567
  %v4595 = vadd.f32 %v4424, %v4571
  %v4596 = vadd.f32 %v4551, %v4575
  %v4597 = vadd.f32 %v4553, %v4579
  %v4598 = vmax.f32 %v4586, 0.0
  %v4599 = vmax.f32 %v4587, 0.0
  %v4600 = vmax.f32 %v4588, 0.0
  %v4601 = vmax.f32 %v4589, 0.0
  %v4602 = vmax.f32 %v4590, 0.0
  %v4603 = vmax.f32 %v4591, 0.0
  %v4604 = vmax.f32 %v4592, 0.0
  %v4605 = vmax.f32 %v4593, 0.0
  %v4606 = vmax.f32 %v4594, 0.0
  %v4607 = vmax.f32 %v4595, 0.0
  %v4608 = vmax.f32 %v4596, 0.0
  %v4609 = vmax.f32 %v4597, 0.0
  %v4610 = vpack.c.bf16 %v4604, %v4598
  %v4611 = vpack.c.bf16 %v4605, %v4599
  %v4612 = vpack.c.bf16 %v4606, %v4600
  %v4613 = vpack.c.bf16 %v4607, %v4601
  %v4614 = vpack.c.bf16 %v4608, %v4602
  %v4615 = vpack.c.bf16 %v4609, %v4603
  %v4622 = vcombine.low %v4610, %v4611
  %v4623 = vcombine.high %v4610, %v4611
  %v4624 = vcombine.low %v4612, %v4613
  %v4625 = vcombine.high %v4612, %v4613
  %v4626 = vcombine.low %v4614, %v4615
  %v4627 = vcombine.high %v4614, %v4615
  %v4629 = vunpack.c.l.s4 1966171168
  %v4630 = vunpack.c.0.s8 %v4629
  %v4631 = vlaneseq
  %v4632 = vshrl.u32 %v4631, 7
  %v4633 = vsub.s32 %v4630, %v4632
  %v4634 = vrot.slane %v4622, %v4633
  %v4636 = vunpack.c.l.s4 1966171168
  %v4637 = vunpack.c.0.s8 %v4636
  %v4638 = vlaneseq
  %v4639 = vshrl.u32 %v4638, 7
  %v4640 = vsub.s32 %v4637, %v4639
  %v4641 = vrot.slane %v4623, %v4640
  %v4643 = vunpack.c.l.s4 1966171168
  %v4644 = vunpack.c.0.s8 %v4643
  %v4645 = vlaneseq
  %v4646 = vshrl.u32 %v4645, 7
  %v4647 = vsub.s32 %v4644, %v4646
  %v4648 = vrot.slane %v4624, %v4647
  %v4650 = vunpack.c.l.s4 1966171168
  %v4651 = vunpack.c.0.s8 %v4650
  %v4652 = vlaneseq
  %v4653 = vshrl.u32 %v4652, 7
  %v4654 = vsub.s32 %v4651, %v4653
  %v4655 = vrot.slane %v4625, %v4654
  %v4657 = vunpack.c.l.s4 1966171168
  %v4658 = vunpack.c.0.s8 %v4657
  %v4659 = vlaneseq
  %v4660 = vshrl.u32 %v4659, 7
  %v4661 = vsub.s32 %v4658, %v4660
  %v4662 = vrot.slane %v4626, %v4661
  %v4664 = vunpack.c.l.s4 1966171168
  %v4665 = vunpack.c.0.s8 %v4664
  %v4666 = vlaneseq
  %v4667 = vshrl.u32 %v4666, 7
  %v4668 = vsub.s32 %v4665, %v4667
  %v4669 = vrot.slane %v4627, %v4668
  %v4670 = vcombine.low %v4634, %v4648
  %v4671 = vcombine.high %v4634, %v4648
  %v4672 = vcombine.low %v4641, %v4655
  %v4673 = vcombine.high %v4641, %v4655
  %v4674 = vcombine.high %v4662, %v4662
  %v4675 = vcombine.high %v4669, %v4669
  %v4677 = vunpack.c.l.s4 1966171168
  %v4678 = vunpack.c.0.s8 %v4677
  %v4679 = vlaneseq
  %v4680 = vshrl.u32 %v4679, 7
  %v4681 = vsub.s32 %v4678, %v4680
  %v4682 = vrot.slane %v4670, %v4681
  %v4684 = vunpack.c.l.s4 1966171168
  %v4685 = vunpack.c.0.s8 %v4684
  %v4686 = vlaneseq
  %v4687 = vshrl.u32 %v4686, 7
  %v4688 = vsub.s32 %v4685, %v4687
  %v4689 = vrot.slane %v4672, %v4688
  %v4691 = vunpack.c.l.s4 1966171168
  %v4692 = vunpack.c.0.s8 %v4691
  %v4693 = vlaneseq
  %v4694 = vshrl.u32 %v4693, 7
  %v4695 = vsub.s32 %v4692, %v4694
  %v4696 = vrot.slane %v4671, %v4695
  %v4698 = vunpack.c.l.s4 1966171168
  %v4699 = vunpack.c.0.s8 %v4698
  %v4700 = vlaneseq
  %v4701 = vshrl.u32 %v4700, 7
  %v4702 = vsub.s32 %v4699, %v4701
  %v4703 = vrot.slane %v4673, %v4702
  %v4705 = vunpack.c.l.s4 1966171168
  %v4706 = vunpack.c.0.s8 %v4705
  %v4707 = vlaneseq
  %v4708 = vshrl.u32 %v4707, 7
  %v4709 = vsub.s32 %v4706, %v4708
  %v4710 = vrot.slane %v4662, %v4709
  %v4712 = vunpack.c.l.s4 1966171168
  %v4713 = vunpack.c.0.s8 %v4712
  %v4714 = vlaneseq
  %v4715 = vshrl.u32 %v4714, 7
  %v4716 = vsub.s32 %v4713, %v4715
  %v4717 = vrot.slane %v4669, %v4716
  %v4719 = vunpack.c.l.s4 1966171168
  %v4720 = vunpack.c.0.s8 %v4719
  %v4721 = vlaneseq
  %v4722 = vshrl.u32 %v4721, 7
  %v4723 = vsub.s32 %v4720, %v4722
  %v4724 = vrot.slane %v4674, %v4723
  %v4726 = vunpack.c.l.s4 1966171168
  %v4727 = vunpack.c.0.s8 %v4726
  %v4728 = vlaneseq
  %v4729 = vshrl.u32 %v4728, 7
  %v4730 = vsub.s32 %v4727, %v4729
  %v4731 = vrot.slane %v4675, %v4730
  %v4732 = vcombine.low %v4682, %v4710
  %v4733 = vcombine.high %v4682, %v4710
  %v4734 = vcombine.low %v4689, %v4717
  %v4735 = vcombine.high %v4689, %v4717
  %v4736 = vcombine.low %v4696, %v4724
  %v4737 = vcombine.high %v4696, %v4724
  %v4738 = vcombine.low %v4703, %v4731
  %v4739 = vcombine.high %v4703, %v4731
  %v4740 = vunpack.i.l.s16 %v4732
  %v4741 = vunpack.i.h.s16 %v4732
  %v4742 = vunpack.i.l.s16 %v4736
  %v4743 = vunpack.i.h.s16 %v4736
  %v4744 = vunpack.i.l.s16 %v4733
  %v4745 = vunpack.i.h.s16 %v4733
  %v4746 = vunpack.i.l.s16 %v4737
  %v4747 = vunpack.i.h.s16 %v4737
  %v4748 = vunpack.i.l.s16 %v4734
  %v4749 = vunpack.i.h.s16 %v4734
  %v4750 = vunpack.i.l.s16 %v4738
  %v4751 = vunpack.i.h.s16 %v4738
  %v4752 = vunpack.i.l.s16 %v4735
  %v4753 = vunpack.i.h.s16 %v4735
  %v4754 = vunpack.i.l.s16 %v4739
  %v4755 = vunpack.i.h.s16 %v4739
  %v4756 = vpack.i.b16 %v4740, %v4740
  %v4757 = vpack.i.b16 %v4741, %v4741
  %v4758 = vpack.i.b16 %v4742, %v4742
  %v4759 = vpack.i.b16 %v4743, %v4743
  %v4760 = vpack.i.b16 %v4744, %v4744
  %v4761 = vpack.i.b16 %v4745, %v4745
  %v4762 = vpack.i.b16 %v4746, %v4746
  %v4763 = vpack.i.b16 %v4747, %v4747
  %v4764 = vpack.i.b16 %v4748, %v4748
  %v4765 = vpack.i.b16 %v4749, %v4749
  %v4766 = vpack.i.b16 %v4750, %v4750
  %v4767 = vpack.i.b16 %v4751, %v4751
  %v4768 = vpack.i.b16 %v4752, %v4752
  %v4769 = vpack.i.b16 %v4753, %v4753
  %v4770 = vpack.i.b16 %v4754, %v4754
  %v4771 = vpack.i.b16 %v4755, %v4755
  %vm4788 = vcmask 1041409
  %vm4789 = vsmask.f32 1280
  %vm4790 = vmand %vm4788, %vm4789
  %vm4791 = vmor %vm4790, %vm17
  %vm4792 = vcmask 1042434
  %vm4793 = vsmask.f32 2304
  %vm4794 = vmand %vm4792, %vm4793
  %vm4795 = vmor %vm4794, %vm4791
  %vm4796 = vcmask 1043459
  %vm4797 = vmand %vm4796, %vm471
  %vm4798 = vmor %vm4797, %vm4795
  %vm4799 = vmor %vm20, %vm4798
  %vm4800 = vcmask 1045509
  %vm4801 = vsmask.f32 5376
  %vm4802 = vmand %vm4800, %vm4801
  %vm4803 = vmor %vm4802, %vm4799
  %v4804 = vld [vmem:[%s3] sm:$0x3f]
  %v4805 = vsel %vm4803, %v4756, %v4804
  %4806 = vst [vmem:[%s3] sm:$0x3f] %v4805
  %v4807 = vld [vmem:[%s3 + $0x6] sm:$0x3f]
  %v4808 = vsel %vm4803, %v4757, %v4807
  %4809 = vst [vmem:[%s3 + $0x6] sm:$0x3f] %v4808
  %v4810 = vld [vmem:[%s3 + $0xc] sm:$0x3f]
  %v4811 = vsel %vm4803, %v4758, %v4810
  %4812 = vst [vmem:[%s3 + $0xc] sm:$0x3f] %v4811
  %v4813 = vld [vmem:[%s3 + $0x12] sm:$0x3f]
  %v4814 = vsel %vm4803, %v4759, %v4813
  %4815 = vst [vmem:[%s3 + $0x12] sm:$0x3f] %v4814
  %v4816 = vld [vmem:[%s3 + $0x18] sm:$0x3f]
  %v4817 = vsel %vm4803, %v4760, %v4816
  %4818 = vst [vmem:[%s3 + $0x18] sm:$0x3f] %v4817
  %v4819 = vld [vmem:[%s3 + $0x1e] sm:$0x3f]
  %v4820 = vsel %vm4803, %v4761, %v4819
  %4821 = vst [vmem:[%s3 + $0x1e] sm:$0x3f] %v4820
  %v4822 = vld [vmem:[%s3 + $0x24] sm:$0x3f]
  %v4823 = vsel %vm4803, %v4762, %v4822
  %4824 = vst [vmem:[%s3 + $0x24] sm:$0x3f] %v4823
  %v4825 = vld [vmem:[%s3 + $0x2a] sm:$0x3f]
  %v4826 = vsel %vm4803, %v4763, %v4825
  %4827 = vst [vmem:[%s3 + $0x2a] sm:$0x3f] %v4826
  %v4828 = vld [vmem:[%s3 + $0x30] sm:$0x3f]
  %v4829 = vsel %vm4803, %v4764, %v4828
  %4830 = vst [vmem:[%s3 + $0x30] sm:$0x3f] %v4829
  %v4831 = vld [vmem:[%s3 + $0x36] sm:$0x3f]
  %v4832 = vsel %vm4803, %v4765, %v4831
  %4833 = vst [vmem:[%s3 + $0x36] sm:$0x3f] %v4832
  %v4834 = vld [vmem:[%s3 + $0x3c] sm:$0x3f]
  %v4835 = vsel %vm4803, %v4766, %v4834
  %4836 = vst [vmem:[%s3 + $0x3c] sm:$0x3f] %v4835
  %v4837 = vld [vmem:[%s3 + $0x42] sm:$0x3f]
  %v4838 = vsel %vm4803, %v4767, %v4837
  %4839 = vst [vmem:[%s3 + $0x42] sm:$0x3f] %v4838
  %v4840 = vld [vmem:[%s3 + $0x48] sm:$0x3f]
  %v4841 = vsel %vm4803, %v4768, %v4840
  %4842 = vst [vmem:[%s3 + $0x48] sm:$0x3f] %v4841
  %v4843 = vld [vmem:[%s3 + $0x4e] sm:$0x3f]
  %v4844 = vsel %vm4803, %v4769, %v4843
  %4845 = vst [vmem:[%s3 + $0x4e] sm:$0x3f] %v4844
  %v4846 = vld [vmem:[%s3 + $0x54] sm:$0x3f]
  %v4847 = vsel %vm4803, %v4770, %v4846
  %4848 = vst [vmem:[%s3 + $0x54] sm:$0x3f] %v4847
  %v4849 = vld [vmem:[%s3 + $0x5a] sm:$0x3f]
  %v4850 = vsel %vm4803, %v4771, %v4849
  %4851 = vst [vmem:[%s3 + $0x5a] sm:$0x3f] %v4850
  %v4852 = vld [vmem:[#allocation2] sm:$0xff]
  %v4853 = vld [vmem:[#allocation2 + $0x8] sm:$0xff]
  %v4854 = vld [vmem:[#allocation2 + $0x10] sm:$0xff]
  %v4855 = vld [vmem:[#allocation2 + $0x18] sm:$0x11]
  %v4856 = vld [vmem:[#allocation2 + $0x20] sm:$0x11]
  %v4857 = vld [vmem:[#allocation2 + $0x28] sm:$0x11]
  %v4858 = vld [vmem:[#allocation2 + $0x30] sm:$0xff]
  %v4859 = vld [vmem:[#allocation2 + $0x38] sm:$0xff]
  %v4860 = vld [vmem:[#allocation2 + $0x40] sm:$0xff]
  %v4861 = vld [vmem:[#allocation2 + $0x48] sm:$0x11]
  %v4862 = vld [vmem:[#allocation2 + $0x50] sm:$0x11]
  %v4863 = vld [vmem:[#allocation2 + $0x58] sm:$0x11]
  %v4865 = vshrl.u32 %v4852, 16
  %v4867 = vrot.slane %v4865, 4
  %v4868 = vshll.u32 %v4852, 16
  %v4870 = vrot.slane %v4868, 5
  %v4871 = vor.u32 %v4867, %v4870
  %v4872 = vrot.slane %v4871, 4
  %v4874 = vshll.u32 %v4855, 16
  %v4876 = vrot.slane %v4874, 5
  %v4877 = vsel %vm473, %v4872, %v4876
  %v4879 = vshrl.u32 %v4853, 16
  %v4881 = vrot.slane %v4879, 4
  %v4882 = vshll.u32 %v4853, 16
  %v4884 = vrot.slane %v4882, 5
  %v4885 = vor.u32 %v4881, %v4884
  %v4886 = vrot.slane %v4885, 4
  %v4888 = vshll.u32 %v4856, 16
  %v4890 = vrot.slane %v4888, 5
  %v4891 = vsel %vm473, %v4886, %v4890
  %v4893 = vshrl.u32 %v4854, 16
  %v4895 = vrot.slane %v4893, 4
  %v4896 = vshll.u32 %v4854, 16
  %v4898 = vrot.slane %v4896, 5
  %v4899 = vor.u32 %v4895, %v4898
  %v4900 = vrot.slane %v4899, 4
  %v4902 = vshll.u32 %v4857, 16
  %v4904 = vrot.slane %v4902, 5
  %v4905 = vsel %vm473, %v4900, %v4904
  %v4907 = vshrl.u32 %v4858, 16
  %v4909 = vrot.slane %v4907, 4
  %v4910 = vshll.u32 %v4858, 16
  %v4912 = vrot.slane %v4910, 5
  %v4913 = vor.u32 %v4909, %v4912
  %v4914 = vrot.slane %v4913, 4
  %v4916 = vshll.u32 %v4861, 16
  %v4918 = vrot.slane %v4916, 5
  %v4919 = vsel %vm473, %v4914, %v4918
  %v4921 = vshrl.u32 %v4859, 16
  %v4923 = vrot.slane %v4921, 4
  %v4924 = vshll.u32 %v4859, 16
  %v4926 = vrot.slane %v4924, 5
  %v4927 = vor.u32 %v4923, %v4926
  %v4928 = vrot.slane %v4927, 4
  %v4930 = vshll.u32 %v4862, 16
  %v4932 = vrot.slane %v4930, 5
  %v4933 = vsel %vm473, %v4928, %v4932
  %v4935 = vshrl.u32 %v4860, 16
  %v4937 = vrot.slane %v4935, 4
  %v4938 = vshll.u32 %v4860, 16
  %v4940 = vrot.slane %v4938, 5
  %v4941 = vor.u32 %v4937, %v4940
  %v4942 = vrot.slane %v4941, 4
  %v4944 = vshll.u32 %v4863, 16
  %v4946 = vrot.slane %v4944, 5
  %v4947 = vsel %vm473, %v4942, %v4946
  %s4948 = scalar_lea.vmem %s1, 4608
  %v4949 = vld [vmem:[%s4948] sm:$0xff]
  %v4950 = vld [vmem:[%s4948 + $0x8] sm:$0xff]
  %v4951 = vld [vmem:[%s4948 + $0x10] sm:$0xff]
  %v4952 = vld [vmem:[%s4948 + $0x18] sm:$0xff]
  %v4953 = vld [vmem:[%s4948 + $0x20] sm:$0xff]
  %v4954 = vld [vmem:[%s4948 + $0x28] sm:$0xff]
  %v4955 = vld [vmem:[%s4948 + $0x30] sm:$0xff]
  %v4956 = vld [vmem:[%s4948 + $0x38] sm:$0xff]
  %v4957 = vld [vmem:[%s4948 + $0x40] sm:$0xff]
  %v4958 = vld [vmem:[%s4948 + $0x48] sm:$0xff]
  %v4959 = vld [vmem:[%s4948 + $0x50] sm:$0xff]
  %v4960 = vld [vmem:[%s4948 + $0x58] sm:$0xff]
  %v4961 = vld [vmem:[%s4948 + $0x60] sm:$0xff]
  %v4962 = vld [vmem:[%s4948 + $0x68] sm:$0xff]
  %v4963 = vld [vmem:[%s4948 + $0x70] sm:$0xff]
  %v4964 = vld [vmem:[%s4948 + $0x78] sm:$0xff]
  %v4965 = vld [vmem:[%s4948 + $0x80] sm:$0xff]
  %v4966 = vld [vmem:[%s4948 + $0x88] sm:$0xff]
  %v4967 = vld [vmem:[%s4948 + $0x90] sm:$0xff]
  %v4968 = vld [vmem:[%s4948 + $0x98] sm:$0xff]
  %v4969 = vld [vmem:[%s4948 + $0xa0] sm:$0xff]
  %v4970 = vld [vmem:[%s4948 + $0xa8] sm:$0xff]
  %v4971 = vld [vmem:[%s4948 + $0xb0] sm:$0xff]
  %v4972 = vld [vmem:[%s4948 + $0xb8] sm:$0xff]
  %v4973 = vld [vmem:[%s4948 + $0xc0] sm:$0xff]
  %v4974 = vld [vmem:[%s4948 + $0xc8] sm:$0xff]
  %v4975 = vld [vmem:[%s4948 + $0xd0] sm:$0xff]
  %v4976 = vld [vmem:[%s4948 + $0xd8] sm:$0xff]
  %v4977 = vld [vmem:[%s4948 + $0xe0] sm:$0xff]
  %v4978 = vld [vmem:[%s4948 + $0xe8] sm:$0xff]
  %v4979 = vld [vmem:[%s4948 + $0xf0] sm:$0xff]
  %v4980 = vld [vmem:[%s4948 + $0xf8] sm:$0xff]
  %v4981 = vld [vmem:[%s4948 + $0x100] sm:$0xff]
  %v4982 = vld [vmem:[%s4948 + $0x108] sm:$0xff]
  %v4983 = vld [vmem:[%s4948 + $0x110] sm:$0xff]
  %v4984 = vld [vmem:[%s4948 + $0x118] sm:$0xff]
  %v4985 = vld [vmem:[%s4948 + $0x120] sm:$0xff]
  %v4986 = vld [vmem:[%s4948 + $0x128] sm:$0xff]
  %v4987 = vld [vmem:[%s4948 + $0x130] sm:$0xff]
  %v4988 = vld [vmem:[%s4948 + $0x138] sm:$0xff]
  %v4989 = vld [vmem:[%s4948 + $0x140] sm:$0xff]
  %v4990 = vld [vmem:[%s4948 + $0x148] sm:$0xff]
  %v4991 = vld [vmem:[%s4948 + $0x150] sm:$0xff]
  %v4992 = vld [vmem:[%s4948 + $0x158] sm:$0xff]
  %v4993 = vld [vmem:[%s4948 + $0x160] sm:$0xff]
  %v4994 = vld [vmem:[%s4948 + $0x168] sm:$0xff]
  %v4995 = vld [vmem:[%s4948 + $0x170] sm:$0xff]
  %v4996 = vld [vmem:[%s4948 + $0x178] sm:$0xff]
  %v4997 = vld [vmem:[%s4948 + $0x180] sm:$0xff]
  %v4998 = vld [vmem:[%s4948 + $0x188] sm:$0xff]
  %v4999 = vld [vmem:[%s4948 + $0x190] sm:$0xff]
  %v5000 = vld [vmem:[%s4948 + $0x198] sm:$0xff]
  %v5001 = vld [vmem:[%s4948 + $0x1a0] sm:$0xff]
  %v5002 = vld [vmem:[%s4948 + $0x1a8] sm:$0xff]
  %v5003 = vld [vmem:[%s4948 + $0x1b0] sm:$0xff]
  %v5004 = vld [vmem:[%s4948 + $0x1b8] sm:$0xff]
  %v5005 = vld [vmem:[%s4948 + $0x1c0] sm:$0xff]
  %v5006 = vld [vmem:[%s4948 + $0x1c8] sm:$0xff]
  %v5007 = vld [vmem:[%s4948 + $0x1d0] sm:$0xff]
  %v5008 = vld [vmem:[%s4948 + $0x1d8] sm:$0xff]
  %v5009 = vld [vmem:[%s4948 + $0x1e0] sm:$0xff]
  %v5010 = vld [vmem:[%s4948 + $0x1e8] sm:$0xff]
  %v5011 = vld [vmem:[%s4948 + $0x1f0] sm:$0xff]
  %v5012 = vld [vmem:[%s4948 + $0x1f8] sm:$0xff]
  %v5013 = vld [vmem:[%s4948 + $0x200] sm:$0xff]
  %v5014 = vld [vmem:[%s4948 + $0x208] sm:$0xff]
  %v5015 = vld [vmem:[%s4948 + $0x210] sm:$0xff]
  %v5016 = vld [vmem:[%s4948 + $0x218] sm:$0xff]
  %v5017 = vld [vmem:[%s4948 + $0x220] sm:$0xff]
  %v5018 = vld [vmem:[%s4948 + $0x228] sm:$0xff]
  %v5019 = vld [vmem:[%s4948 + $0x230] sm:$0xff]
  %v5020 = vld [vmem:[%s4948 + $0x238] sm:$0xff]
  %v5021 = vld [vmem:[%s4948 + $0x240] sm:$0xff]
  %v5022 = vld [vmem:[%s4948 + $0x248] sm:$0xff]
  %v5023 = vld [vmem:[%s4948 + $0x250] sm:$0xff]
  %v5024 = vld [vmem:[%s4948 + $0x258] sm:$0xff]
  %v5025 = vld [vmem:[%s4948 + $0x260] sm:$0xff]
  %v5026 = vld [vmem:[%s4948 + $0x268] sm:$0xff]
  %v5027 = vld [vmem:[%s4948 + $0x270] sm:$0xff]
  %v5028 = vld [vmem:[%s4948 + $0x278] sm:$0xff]
  %v5029 = vld [vmem:[%s4948 + $0x280] sm:$0xff]
  %v5030 = vld [vmem:[%s4948 + $0x288] sm:$0xff]
  %v5031 = vld [vmem:[%s4948 + $0x290] sm:$0xff]
  %v5032 = vld [vmem:[%s4948 + $0x298] sm:$0xff]
  %v5033 = vld [vmem:[%s4948 + $0x2a0] sm:$0xff]
  %v5034 = vld [vmem:[%s4948 + $0x2a8] sm:$0xff]
  %v5035 = vld [vmem:[%s4948 + $0x2b0] sm:$0xff]
  %v5036 = vld [vmem:[%s4948 + $0x2b8] sm:$0xff]
  %v5037 = vld [vmem:[%s4948 + $0x2c0] sm:$0xff]
  %v5038 = vld [vmem:[%s4948 + $0x2c8] sm:$0xff]
  %v5039 = vld [vmem:[%s4948 + $0x2d0] sm:$0xff]
  %v5040 = vld [vmem:[%s4948 + $0x2d8] sm:$0xff]
  %v5041 = vld [vmem:[%s4948 + $0x2e0] sm:$0xff]
  %v5042 = vld [vmem:[%s4948 + $0x2e8] sm:$0xff]
  %v5043 = vld [vmem:[%s4948 + $0x2f0] sm:$0xff]
  %v5044 = vld [vmem:[%s4948 + $0x2f8] sm:$0xff]
  %v5045 = vld [vmem:[%s4948 + $0x300] sm:$0xff]
  %v5046 = vld [vmem:[%s4948 + $0x308] sm:$0xff]
  %v5047 = vld [vmem:[%s4948 + $0x310] sm:$0xff]
  %v5048 = vld [vmem:[%s4948 + $0x318] sm:$0xff]
  %v5049 = vld [vmem:[%s4948 + $0x320] sm:$0xff]
  %v5050 = vld [vmem:[%s4948 + $0x328] sm:$0xff]
  %v5051 = vld [vmem:[%s4948 + $0x330] sm:$0xff]
  %v5052 = vld [vmem:[%s4948 + $0x338] sm:$0xff]
  %v5053 = vld [vmem:[%s4948 + $0x340] sm:$0xff]
  %v5054 = vld [vmem:[%s4948 + $0x348] sm:$0xff]
  %v5055 = vld [vmem:[%s4948 + $0x350] sm:$0xff]
  %v5056 = vld [vmem:[%s4948 + $0x358] sm:$0xff]
  %v5057 = vld [vmem:[%s4948 + $0x360] sm:$0xff]
  %v5058 = vld [vmem:[%s4948 + $0x368] sm:$0xff]
  %v5059 = vld [vmem:[%s4948 + $0x370] sm:$0xff]
  %v5060 = vld [vmem:[%s4948 + $0x378] sm:$0xff]
  %v5061 = vld [vmem:[%s4948 + $0x380] sm:$0xff]
  %v5062 = vld [vmem:[%s4948 + $0x388] sm:$0xff]
  %v5063 = vld [vmem:[%s4948 + $0x390] sm:$0xff]
  %v5064 = vld [vmem:[%s4948 + $0x398] sm:$0xff]
  %v5065 = vld [vmem:[%s4948 + $0x3a0] sm:$0xff]
  %v5066 = vld [vmem:[%s4948 + $0x3a8] sm:$0xff]
  %v5067 = vld [vmem:[%s4948 + $0x3b0] sm:$0xff]
  %v5068 = vld [vmem:[%s4948 + $0x3b8] sm:$0xff]
  %v5069 = vld [vmem:[%s4948 + $0x3c0] sm:$0xff]
  %v5070 = vld [vmem:[%s4948 + $0x3c8] sm:$0xff]
  %v5071 = vld [vmem:[%s4948 + $0x3d0] sm:$0xff]
  %v5072 = vld [vmem:[%s4948 + $0x3d8] sm:$0xff]
  %v5073 = vld [vmem:[%s4948 + $0x3e0] sm:$0xff]
  %v5074 = vld [vmem:[%s4948 + $0x3e8] sm:$0xff]
  %v5075 = vld [vmem:[%s4948 + $0x3f0] sm:$0xff]
  %v5076 = vld [vmem:[%s4948 + $0x3f8] sm:$0xff]
  %v5077 = vld [vmem:[%s4948 + $0x400] sm:$0xff]
  %v5078 = vld [vmem:[%s4948 + $0x408] sm:$0xff]
  %v5079 = vld [vmem:[%s4948 + $0x410] sm:$0xff]
  %v5080 = vld [vmem:[%s4948 + $0x418] sm:$0xff]
  %v5081 = vld [vmem:[%s4948 + $0x420] sm:$0xff]
  %v5082 = vld [vmem:[%s4948 + $0x428] sm:$0xff]
  %v5083 = vld [vmem:[%s4948 + $0x430] sm:$0xff]
  %v5084 = vld [vmem:[%s4948 + $0x438] sm:$0xff]
  %v5085 = vld [vmem:[%s4948 + $0x440] sm:$0xff]
  %v5086 = vld [vmem:[%s4948 + $0x448] sm:$0xff]
  %v5087 = vld [vmem:[%s4948 + $0x450] sm:$0xff]
  %v5088 = vld [vmem:[%s4948 + $0x458] sm:$0xff]
  %v5089 = vld [vmem:[%s4948 + $0x460] sm:$0xff]
  %v5090 = vld [vmem:[%s4948 + $0x468] sm:$0xff]
  %v5091 = vld [vmem:[%s4948 + $0x470] sm:$0xff]
  %v5092 = vld [vmem:[%s4948 + $0x478] sm:$0xff]
  %v5093 = vld [vmem:[%s4948 + $0x480] sm:$0xff]
  %v5094 = vld [vmem:[%s4948 + $0x488] sm:$0xff]
  %v5095 = vld [vmem:[%s4948 + $0x490] sm:$0xff]
  %v5096 = vld [vmem:[%s4948 + $0x498] sm:$0xff]
  %v5097 = vld [vmem:[%s4948 + $0x4a0] sm:$0xff]
  %v5098 = vld [vmem:[%s4948 + $0x4a8] sm:$0xff]
  %v5099 = vld [vmem:[%s4948 + $0x4b0] sm:$0xff]
  %v5100 = vld [vmem:[%s4948 + $0x4b8] sm:$0xff]
  %v5101 = vld [vmem:[%s4948 + $0x4c0] sm:$0xff]
  %v5102 = vld [vmem:[%s4948 + $0x4c8] sm:$0xff]
  %v5103 = vld [vmem:[%s4948 + $0x4d0] sm:$0xff]
  %v5104 = vld [vmem:[%s4948 + $0x4d8] sm:$0xff]
  %v5105 = vld [vmem:[%s4948 + $0x4e0] sm:$0xff]
  %v5106 = vld [vmem:[%s4948 + $0x4e8] sm:$0xff]
  %v5107 = vld [vmem:[%s4948 + $0x4f0] sm:$0xff]
  %v5108 = vld [vmem:[%s4948 + $0x4f8] sm:$0xff]
  %v5109 = vld [vmem:[%s4948 + $0x500] sm:$0xff]
  %v5110 = vld [vmem:[%s4948 + $0x508] sm:$0xff]
  %v5111 = vld [vmem:[%s4948 + $0x510] sm:$0xff]
  %v5112 = vld [vmem:[%s4948 + $0x518] sm:$0xff]
  %v5113 = vld [vmem:[%s4948 + $0x520] sm:$0xff]
  %v5114 = vld [vmem:[%s4948 + $0x528] sm:$0xff]
  %v5115 = vld [vmem:[%s4948 + $0x530] sm:$0xff]
  %v5116 = vld [vmem:[%s4948 + $0x538] sm:$0xff]
  %v5117 = vld [vmem:[%s4948 + $0x540] sm:$0xff]
  %v5118 = vld [vmem:[%s4948 + $0x548] sm:$0xff]
  %v5119 = vld [vmem:[%s4948 + $0x550] sm:$0xff]
  %v5120 = vld [vmem:[%s4948 + $0x558] sm:$0xff]
  %v5121 = vld [vmem:[%s4948 + $0x560] sm:$0xff]
  %v5122 = vld [vmem:[%s4948 + $0x568] sm:$0xff]
  %v5123 = vld [vmem:[%s4948 + $0x570] sm:$0xff]
  %v5124 = vld [vmem:[%s4948 + $0x578] sm:$0xff]
  %v5125 = vld [vmem:[%s4948 + $0x580] sm:$0xff]
  %v5126 = vld [vmem:[%s4948 + $0x588] sm:$0xff]
  %v5127 = vld [vmem:[%s4948 + $0x590] sm:$0xff]
  %v5128 = vld [vmem:[%s4948 + $0x598] sm:$0xff]
  %v5129 = vld [vmem:[%s4948 + $0x5a0] sm:$0xff]
  %v5130 = vld [vmem:[%s4948 + $0x5a8] sm:$0xff]
  %v5131 = vld [vmem:[%s4948 + $0x5b0] sm:$0xff]
  %v5132 = vld [vmem:[%s4948 + $0x5b8] sm:$0xff]
  %v5133 = vld [vmem:[%s4948 + $0x5c0] sm:$0xff]
  %v5134 = vld [vmem:[%s4948 + $0x5c8] sm:$0xff]
  %v5135 = vld [vmem:[%s4948 + $0x5d0] sm:$0xff]
  %v5136 = vld [vmem:[%s4948 + $0x5d8] sm:$0xff]
  %v5137 = vld [vmem:[%s4948 + $0x5e0] sm:$0xff]
  %v5138 = vld [vmem:[%s4948 + $0x5e8] sm:$0xff]
  %v5139 = vld [vmem:[%s4948 + $0x5f0] sm:$0xff]
  %v5140 = vld [vmem:[%s4948 + $0x5f8] sm:$0xff]
  %v5141 = vld [vmem:[%s4948 + $0x600] sm:$0xff]
  %v5142 = vld [vmem:[%s4948 + $0x608] sm:$0xff]
  %v5143 = vld [vmem:[%s4948 + $0x610] sm:$0xff]
  %v5144 = vld [vmem:[%s4948 + $0x618] sm:$0xff]
  %v5145 = vld [vmem:[%s4948 + $0x620] sm:$0xff]
  %v5146 = vld [vmem:[%s4948 + $0x628] sm:$0xff]
  %v5147 = vld [vmem:[%s4948 + $0x630] sm:$0xff]
  %v5148 = vld [vmem:[%s4948 + $0x638] sm:$0xff]
  %v5149 = vld [vmem:[%s4948 + $0x640] sm:$0xff]
  %v5150 = vld [vmem:[%s4948 + $0x648] sm:$0xff]
  %v5151 = vld [vmem:[%s4948 + $0x650] sm:$0xff]
  %v5152 = vld [vmem:[%s4948 + $0x658] sm:$0xff]
  %v5153 = vld [vmem:[%s4948 + $0x660] sm:$0xff]
  %v5154 = vld [vmem:[%s4948 + $0x668] sm:$0xff]
  %v5155 = vld [vmem:[%s4948 + $0x670] sm:$0xff]
  %v5156 = vld [vmem:[%s4948 + $0x678] sm:$0xff]
  %v5157 = vld [vmem:[%s4948 + $0x680] sm:$0xff]
  %v5158 = vld [vmem:[%s4948 + $0x688] sm:$0xff]
  %v5159 = vld [vmem:[%s4948 + $0x690] sm:$0xff]
  %v5160 = vld [vmem:[%s4948 + $0x698] sm:$0xff]
  %v5161 = vld [vmem:[%s4948 + $0x6a0] sm:$0xff]
  %v5162 = vld [vmem:[%s4948 + $0x6a8] sm:$0xff]
  %v5163 = vld [vmem:[%s4948 + $0x6b0] sm:$0xff]
  %v5164 = vld [vmem:[%s4948 + $0x6b8] sm:$0xff]
  %v5165 = vld [vmem:[%s4948 + $0x6c0] sm:$0xff]
  %v5166 = vld [vmem:[%s4948 + $0x6c8] sm:$0xff]
  %v5167 = vld [vmem:[%s4948 + $0x6d0] sm:$0xff]
  %v5168 = vld [vmem:[%s4948 + $0x6d8] sm:$0xff]
  %v5169 = vld [vmem:[%s4948 + $0x6e0] sm:$0xff]
  %v5170 = vld [vmem:[%s4948 + $0x6e8] sm:$0xff]
  %v5171 = vld [vmem:[%s4948 + $0x6f0] sm:$0xff]
  %v5172 = vld [vmem:[%s4948 + $0x6f8] sm:$0xff]
  %v5173 = vld [vmem:[%s4948 + $0x700] sm:$0xff]
  %v5174 = vld [vmem:[%s4948 + $0x708] sm:$0xff]
  %v5175 = vld [vmem:[%s4948 + $0x710] sm:$0xff]
  %v5176 = vld [vmem:[%s4948 + $0x718] sm:$0xff]
  %v5177 = vld [vmem:[%s4948 + $0x720] sm:$0xff]
  %v5178 = vld [vmem:[%s4948 + $0x728] sm:$0xff]
  %v5179 = vld [vmem:[%s4948 + $0x730] sm:$0xff]
  %v5180 = vld [vmem:[%s4948 + $0x738] sm:$0xff]
  %v5181 = vld [vmem:[%s4948 + $0x740] sm:$0xff]
  %v5182 = vld [vmem:[%s4948 + $0x748] sm:$0xff]
  %v5183 = vld [vmem:[%s4948 + $0x750] sm:$0xff]
  %v5184 = vld [vmem:[%s4948 + $0x758] sm:$0xff]
  %v5185 = vld [vmem:[%s4948 + $0x760] sm:$0xff]
  %v5186 = vld [vmem:[%s4948 + $0x768] sm:$0xff]
  %v5187 = vld [vmem:[%s4948 + $0x770] sm:$0xff]
  %v5188 = vld [vmem:[%s4948 + $0x778] sm:$0xff]
  %v5189 = vld [vmem:[%s4948 + $0x780] sm:$0xff]
  %v5190 = vld [vmem:[%s4948 + $0x788] sm:$0xff]
  %v5191 = vld [vmem:[%s4948 + $0x790] sm:$0xff]
  %v5192 = vld [vmem:[%s4948 + $0x798] sm:$0xff]
  %v5193 = vld [vmem:[%s4948 + $0x7a0] sm:$0xff]
  %v5194 = vld [vmem:[%s4948 + $0x7a8] sm:$0xff]
  %v5195 = vld [vmem:[%s4948 + $0x7b0] sm:$0xff]
  %v5196 = vld [vmem:[%s4948 + $0x7b8] sm:$0xff]
  %v5197 = vld [vmem:[%s4948 + $0x7c0] sm:$0xff]
  %v5198 = vld [vmem:[%s4948 + $0x7c8] sm:$0xff]
  %v5199 = vld [vmem:[%s4948 + $0x7d0] sm:$0xff]
  %v5200 = vld [vmem:[%s4948 + $0x7d8] sm:$0xff]
  %v5201 = vld [vmem:[%s4948 + $0x7e0] sm:$0xff]
  %v5202 = vld [vmem:[%s4948 + $0x7e8] sm:$0xff]
  %v5203 = vld [vmem:[%s4948 + $0x7f0] sm:$0xff]
  %v5204 = vld [vmem:[%s4948 + $0x7f8] sm:$0xff]
  %v5205 = vld [vmem:[%s4948 + $0x800] sm:$0xff]
  %v5206 = vld [vmem:[%s4948 + $0x808] sm:$0xff]
  %v5207 = vld [vmem:[%s4948 + $0x810] sm:$0xff]
  %v5208 = vld [vmem:[%s4948 + $0x818] sm:$0xff]
  %v5209 = vld [vmem:[%s4948 + $0x820] sm:$0xff]
  %v5210 = vld [vmem:[%s4948 + $0x828] sm:$0xff]
  %v5211 = vld [vmem:[%s4948 + $0x830] sm:$0xff]
  %v5212 = vld [vmem:[%s4948 + $0x838] sm:$0xff]
  %v5213 = vld [vmem:[%s4948 + $0x840] sm:$0xff]
  %v5214 = vld [vmem:[%s4948 + $0x848] sm:$0xff]
  %v5215 = vld [vmem:[%s4948 + $0x850] sm:$0xff]
  %v5216 = vld [vmem:[%s4948 + $0x858] sm:$0xff]
  %v5217 = vld [vmem:[%s4948 + $0x860] sm:$0xff]
  %v5218 = vld [vmem:[%s4948 + $0x868] sm:$0xff]
  %v5219 = vld [vmem:[%s4948 + $0x870] sm:$0xff]
  %v5220 = vld [vmem:[%s4948 + $0x878] sm:$0xff]
  %v5221 = vld [vmem:[%s4948 + $0x880] sm:$0xff]
  %v5222 = vld [vmem:[%s4948 + $0x888] sm:$0xff]
  %v5223 = vld [vmem:[%s4948 + $0x890] sm:$0xff]
  %v5224 = vld [vmem:[%s4948 + $0x898] sm:$0xff]
  %v5225 = vld [vmem:[%s4948 + $0x8a0] sm:$0xff]
  %v5226 = vld [vmem:[%s4948 + $0x8a8] sm:$0xff]
  %v5227 = vld [vmem:[%s4948 + $0x8b0] sm:$0xff]
  %v5228 = vld [vmem:[%s4948 + $0x8b8] sm:$0xff]
  %v5229 = vld [vmem:[%s4948 + $0x8c0] sm:$0xff]
  %v5230 = vld [vmem:[%s4948 + $0x8c8] sm:$0xff]
  %v5231 = vld [vmem:[%s4948 + $0x8d0] sm:$0xff]
  %v5232 = vld [vmem:[%s4948 + $0x8d8] sm:$0xff]
  %v5233 = vld [vmem:[%s4948 + $0x8e0] sm:$0xff]
  %v5234 = vld [vmem:[%s4948 + $0x8e8] sm:$0xff]
  %v5235 = vld [vmem:[%s4948 + $0x8f0] sm:$0xff]
  %v5236 = vld [vmem:[%s4948 + $0x8f8] sm:$0xff]
  %v5237 = vld [vmem:[#allocation2] sm:$0xee]
  %v5238 = vld [vmem:[#allocation2 + $0x8] sm:$0xee]
  %v5239 = vld [vmem:[#allocation2 + $0x10] sm:$0xee]
  %v5240 = vld [vmem:[#allocation2 + $0x30] sm:$0xee]
  %v5241 = vld [vmem:[#allocation2 + $0x38] sm:$0xee]
  %v5242 = vld [vmem:[#allocation2 + $0x40] sm:$0xee]
  %vm5255 = vcmask 1042432
  %vm5256 = vcmask 1046532
  %vm5257 = vmor %vm5255, %vm5256
  %v5258 = vrot.slane %v5237, 5
  %v5259 = vrot.slane %v5258, 4
  %v5260 = vrot.slane %v4855, 5
  %v5261 = vsel %vm5257, %v5259, %v5260
  %v5262 = vrot.slane %v5238, 5
  %v5263 = vrot.slane %v5262, 4
  %v5264 = vrot.slane %v4856, 5
  %v5265 = vsel %vm5257, %v5263, %v5264
  %v5266 = vrot.slane %v5239, 5
  %v5267 = vrot.slane %v5266, 4
  %v5268 = vrot.slane %v4857, 5
  %v5269 = vsel %vm5257, %v5267, %v5268
  %v5270 = vrot.slane %v5240, 5
  %v5271 = vrot.slane %v5270, 4
  %v5272 = vrot.slane %v4861, 5
  %v5273 = vsel %vm5257, %v5271, %v5272
  %v5274 = vrot.slane %v5241, 5
  %v5275 = vrot.slane %v5274, 4
  %v5276 = vrot.slane %v4862, 5
  %v5277 = vsel %vm5257, %v5275, %v5276
  %v5278 = vrot.slane %v5242, 5
  %v5279 = vrot.slane %v5278, 4
  %v5280 = vrot.slane %v4863, 5
  %v5281 = vsel %vm5257, %v5279, %v5280
  %s5282 = scalar_lea.vmem %s1, 6912
  %v5283 = vld [vmem:[%s5282] sm:$0xff]
  %v5284 = vld [vmem:[%s5282 + $0x8] sm:$0xff]
  %v5285 = vld [vmem:[%s5282 + $0x10] sm:$0xff]
  %v5286 = vld [vmem:[%s5282 + $0x18] sm:$0xff]
  %v5287 = vld [vmem:[%s5282 + $0x20] sm:$0xff]
  %v5288 = vld [vmem:[%s5282 + $0x28] sm:$0xff]
  %v5289 = vld [vmem:[%s5282 + $0x30] sm:$0xff]
  %v5290 = vld [vmem:[%s5282 + $0x38] sm:$0xff]
  %v5291 = vld [vmem:[%s5282 + $0x40] sm:$0xff]
  %v5292 = vld [vmem:[%s5282 + $0x48] sm:$0xff]
  %v5293 = vld [vmem:[%s5282 + $0x50] sm:$0xff]
  %v5294 = vld [vmem:[%s5282 + $0x58] sm:$0xff]
  %v5295 = vld [vmem:[%s5282 + $0x60] sm:$0xff]
  %v5296 = vld [vmem:[%s5282 + $0x68] sm:$0xff]
  %v5297 = vld [vmem:[%s5282 + $0x70] sm:$0xff]
  %v5298 = vld [vmem:[%s5282 + $0x78] sm:$0xff]
  %v5299 = vld [vmem:[%s5282 + $0x80] sm:$0xff]
  %v5300 = vld [vmem:[%s5282 + $0x88] sm:$0xff]
  %v5301 = vld [vmem:[%s5282 + $0x90] sm:$0xff]
  %v5302 = vld [vmem:[%s5282 + $0x98] sm:$0xff]
  %v5303 = vld [vmem:[%s5282 + $0xa0] sm:$0xff]
  %v5304 = vld [vmem:[%s5282 + $0xa8] sm:$0xff]
  %v5305 = vld [vmem:[%s5282 + $0xb0] sm:$0xff]
  %v5306 = vld [vmem:[%s5282 + $0xb8] sm:$0xff]
  %v5307 = vld [vmem:[%s5282 + $0xc0] sm:$0xff]
  %v5308 = vld [vmem:[%s5282 + $0xc8] sm:$0xff]
  %v5309 = vld [vmem:[%s5282 + $0xd0] sm:$0xff]
  %v5310 = vld [vmem:[%s5282 + $0xd8] sm:$0xff]
  %v5311 = vld [vmem:[%s5282 + $0xe0] sm:$0xff]
  %v5312 = vld [vmem:[%s5282 + $0xe8] sm:$0xff]
  %v5313 = vld [vmem:[%s5282 + $0xf0] sm:$0xff]
  %v5314 = vld [vmem:[%s5282 + $0xf8] sm:$0xff]
  %v5315 = vld [vmem:[%s5282 + $0x100] sm:$0xff]
  %v5316 = vld [vmem:[%s5282 + $0x108] sm:$0xff]
  %v5317 = vld [vmem:[%s5282 + $0x110] sm:$0xff]
  %v5318 = vld [vmem:[%s5282 + $0x118] sm:$0xff]
  %v5319 = vld [vmem:[%s5282 + $0x120] sm:$0xff]
  %v5320 = vld [vmem:[%s5282 + $0x128] sm:$0xff]
  %v5321 = vld [vmem:[%s5282 + $0x130] sm:$0xff]
  %v5322 = vld [vmem:[%s5282 + $0x138] sm:$0xff]
  %v5323 = vld [vmem:[%s5282 + $0x140] sm:$0xff]
  %v5324 = vld [vmem:[%s5282 + $0x148] sm:$0xff]
  %v5325 = vld [vmem:[%s5282 + $0x150] sm:$0xff]
  %v5326 = vld [vmem:[%s5282 + $0x158] sm:$0xff]
  %v5327 = vld [vmem:[%s5282 + $0x160] sm:$0xff]
  %v5328 = vld [vmem:[%s5282 + $0x168] sm:$0xff]
  %v5329 = vld [vmem:[%s5282 + $0x170] sm:$0xff]
  %v5330 = vld [vmem:[%s5282 + $0x178] sm:$0xff]
  %v5331 = vld [vmem:[%s5282 + $0x180] sm:$0xff]
  %v5332 = vld [vmem:[%s5282 + $0x188] sm:$0xff]
  %v5333 = vld [vmem:[%s5282 + $0x190] sm:$0xff]
  %v5334 = vld [vmem:[%s5282 + $0x198] sm:$0xff]
  %v5335 = vld [vmem:[%s5282 + $0x1a0] sm:$0xff]
  %v5336 = vld [vmem:[%s5282 + $0x1a8] sm:$0xff]
  %v5337 = vld [vmem:[%s5282 + $0x1b0] sm:$0xff]
  %v5338 = vld [vmem:[%s5282 + $0x1b8] sm:$0xff]
  %v5339 = vld [vmem:[%s5282 + $0x1c0] sm:$0xff]
  %v5340 = vld [vmem:[%s5282 + $0x1c8] sm:$0xff]
  %v5341 = vld [vmem:[%s5282 + $0x1d0] sm:$0xff]
  %v5342 = vld [vmem:[%s5282 + $0x1d8] sm:$0xff]
  %v5343 = vld [vmem:[%s5282 + $0x1e0] sm:$0xff]
  %v5344 = vld [vmem:[%s5282 + $0x1e8] sm:$0xff]
  %v5345 = vld [vmem:[%s5282 + $0x1f0] sm:$0xff]
  %v5346 = vld [vmem:[%s5282 + $0x1f8] sm:$0xff]
  %v5347 = vld [vmem:[%s5282 + $0x200] sm:$0xff]
  %v5348 = vld [vmem:[%s5282 + $0x208] sm:$0xff]
  %v5349 = vld [vmem:[%s5282 + $0x210] sm:$0xff]
  %v5350 = vld [vmem:[%s5282 + $0x218] sm:$0xff]
  %v5351 = vld [vmem:[%s5282 + $0x220] sm:$0xff]
  %v5352 = vld [vmem:[%s5282 + $0x228] sm:$0xff]
  %v5353 = vld [vmem:[%s5282 + $0x230] sm:$0xff]
  %v5354 = vld [vmem:[%s5282 + $0x238] sm:$0xff]
  %v5355 = vld [vmem:[%s5282 + $0x240] sm:$0xff]
  %v5356 = vld [vmem:[%s5282 + $0x248] sm:$0xff]
  %v5357 = vld [vmem:[%s5282 + $0x250] sm:$0xff]
  %v5358 = vld [vmem:[%s5282 + $0x258] sm:$0xff]
  %v5359 = vld [vmem:[%s5282 + $0x260] sm:$0xff]
  %v5360 = vld [vmem:[%s5282 + $0x268] sm:$0xff]
  %v5361 = vld [vmem:[%s5282 + $0x270] sm:$0xff]
  %v5362 = vld [vmem:[%s5282 + $0x278] sm:$0xff]
  %v5363 = vld [vmem:[%s5282 + $0x280] sm:$0xff]
  %v5364 = vld [vmem:[%s5282 + $0x288] sm:$0xff]
  %v5365 = vld [vmem:[%s5282 + $0x290] sm:$0xff]
  %v5366 = vld [vmem:[%s5282 + $0x298] sm:$0xff]
  %v5367 = vld [vmem:[%s5282 + $0x2a0] sm:$0xff]
  %v5368 = vld [vmem:[%s5282 + $0x2a8] sm:$0xff]
  %v5369 = vld [vmem:[%s5282 + $0x2b0] sm:$0xff]
  %v5370 = vld [vmem:[%s5282 + $0x2b8] sm:$0xff]
  %v5371 = vld [vmem:[%s5282 + $0x2c0] sm:$0xff]
  %v5372 = vld [vmem:[%s5282 + $0x2c8] sm:$0xff]
  %v5373 = vld [vmem:[%s5282 + $0x2d0] sm:$0xff]
  %v5374 = vld [vmem:[%s5282 + $0x2d8] sm:$0xff]
  %v5375 = vld [vmem:[%s5282 + $0x2e0] sm:$0xff]
  %v5376 = vld [vmem:[%s5282 + $0x2e8] sm:$0xff]
  %v5377 = vld [vmem:[%s5282 + $0x2f0] sm:$0xff]
  %v5378 = vld [vmem:[%s5282 + $0x2f8] sm:$0xff]
  %v5379 = vld [vmem:[%s5282 + $0x300] sm:$0xff]
  %v5380 = vld [vmem:[%s5282 + $0x308] sm:$0xff]
  %v5381 = vld [vmem:[%s5282 + $0x310] sm:$0xff]
  %v5382 = vld [vmem:[%s5282 + $0x318] sm:$0xff]
  %v5383 = vld [vmem:[%s5282 + $0x320] sm:$0xff]
  %v5384 = vld [vmem:[%s5282 + $0x328] sm:$0xff]
  %v5385 = vld [vmem:[%s5282 + $0x330] sm:$0xff]
  %v5386 = vld [vmem:[%s5282 + $0x338] sm:$0xff]
  %v5387 = vld [vmem:[%s5282 + $0x340] sm:$0xff]
  %v5388 = vld [vmem:[%s5282 + $0x348] sm:$0xff]
  %v5389 = vld [vmem:[%s5282 + $0x350] sm:$0xff]
  %v5390 = vld [vmem:[%s5282 + $0x358] sm:$0xff]
  %v5391 = vld [vmem:[%s5282 + $0x360] sm:$0xff]
  %v5392 = vld [vmem:[%s5282 + $0x368] sm:$0xff]
  %v5393 = vld [vmem:[%s5282 + $0x370] sm:$0xff]
  %v5394 = vld [vmem:[%s5282 + $0x378] sm:$0xff]
  %v5395 = vld [vmem:[%s5282 + $0x380] sm:$0xff]
  %v5396 = vld [vmem:[%s5282 + $0x388] sm:$0xff]
  %v5397 = vld [vmem:[%s5282 + $0x390] sm:$0xff]
  %v5398 = vld [vmem:[%s5282 + $0x398] sm:$0xff]
  %v5399 = vld [vmem:[%s5282 + $0x3a0] sm:$0xff]
  %v5400 = vld [vmem:[%s5282 + $0x3a8] sm:$0xff]
  %v5401 = vld [vmem:[%s5282 + $0x3b0] sm:$0xff]
  %v5402 = vld [vmem:[%s5282 + $0x3b8] sm:$0xff]
  %v5403 = vld [vmem:[%s5282 + $0x3c0] sm:$0xff]
  %v5404 = vld [vmem:[%s5282 + $0x3c8] sm:$0xff]
  %v5405 = vld [vmem:[%s5282 + $0x3d0] sm:$0xff]
  %v5406 = vld [vmem:[%s5282 + $0x3d8] sm:$0xff]
  %v5407 = vld [vmem:[%s5282 + $0x3e0] sm:$0xff]
  %v5408 = vld [vmem:[%s5282 + $0x3e8] sm:$0xff]
  %v5409 = vld [vmem:[%s5282 + $0x3f0] sm:$0xff]
  %v5410 = vld [vmem:[%s5282 + $0x3f8] sm:$0xff]
  %v5411 = vld [vmem:[%s5282 + $0x400] sm:$0xff]
  %v5412 = vld [vmem:[%s5282 + $0x408] sm:$0xff]
  %v5413 = vld [vmem:[%s5282 + $0x410] sm:$0xff]
  %v5414 = vld [vmem:[%s5282 + $0x418] sm:$0xff]
  %v5415 = vld [vmem:[%s5282 + $0x420] sm:$0xff]
  %v5416 = vld [vmem:[%s5282 + $0x428] sm:$0xff]
  %v5417 = vld [vmem:[%s5282 + $0x430] sm:$0xff]
  %v5418 = vld [vmem:[%s5282 + $0x438] sm:$0xff]
  %v5419 = vld [vmem:[%s5282 + $0x440] sm:$0xff]
  %v5420 = vld [vmem:[%s5282 + $0x448] sm:$0xff]
  %v5421 = vld [vmem:[%s5282 + $0x450] sm:$0xff]
  %v5422 = vld [vmem:[%s5282 + $0x458] sm:$0xff]
  %v5423 = vld [vmem:[%s5282 + $0x460] sm:$0xff]
  %v5424 = vld [vmem:[%s5282 + $0x468] sm:$0xff]
  %v5425 = vld [vmem:[%s5282 + $0x470] sm:$0xff]
  %v5426 = vld [vmem:[%s5282 + $0x478] sm:$0xff]
  %v5427 = vld [vmem:[%s5282 + $0x480] sm:$0xff]
  %v5428 = vld [vmem:[%s5282 + $0x488] sm:$0xff]
  %v5429 = vld [vmem:[%s5282 + $0x490] sm:$0xff]
  %v5430 = vld [vmem:[%s5282 + $0x498] sm:$0xff]
  %v5431 = vld [vmem:[%s5282 + $0x4a0] sm:$0xff]
  %v5432 = vld [vmem:[%s5282 + $0x4a8] sm:$0xff]
  %v5433 = vld [vmem:[%s5282 + $0x4b0] sm:$0xff]
  %v5434 = vld [vmem:[%s5282 + $0x4b8] sm:$0xff]
  %v5435 = vld [vmem:[%s5282 + $0x4c0] sm:$0xff]
  %v5436 = vld [vmem:[%s5282 + $0x4c8] sm:$0xff]
  %v5437 = vld [vmem:[%s5282 + $0x4d0] sm:$0xff]
  %v5438 = vld [vmem:[%s5282 + $0x4d8] sm:$0xff]
  %v5439 = vld [vmem:[%s5282 + $0x4e0] sm:$0xff]
  %v5440 = vld [vmem:[%s5282 + $0x4e8] sm:$0xff]
  %v5441 = vld [vmem:[%s5282 + $0x4f0] sm:$0xff]
  %v5442 = vld [vmem:[%s5282 + $0x4f8] sm:$0xff]
  %v5443 = vld [vmem:[%s5282 + $0x500] sm:$0xff]
  %v5444 = vld [vmem:[%s5282 + $0x508] sm:$0xff]
  %v5445 = vld [vmem:[%s5282 + $0x510] sm:$0xff]
  %v5446 = vld [vmem:[%s5282 + $0x518] sm:$0xff]
  %v5447 = vld [vmem:[%s5282 + $0x520] sm:$0xff]
  %v5448 = vld [vmem:[%s5282 + $0x528] sm:$0xff]
  %v5449 = vld [vmem:[%s5282 + $0x530] sm:$0xff]
  %v5450 = vld [vmem:[%s5282 + $0x538] sm:$0xff]
  %v5451 = vld [vmem:[%s5282 + $0x540] sm:$0xff]
  %v5452 = vld [vmem:[%s5282 + $0x548] sm:$0xff]
  %v5453 = vld [vmem:[%s5282 + $0x550] sm:$0xff]
  %v5454 = vld [vmem:[%s5282 + $0x558] sm:$0xff]
  %v5455 = vld [vmem:[%s5282 + $0x560] sm:$0xff]
  %v5456 = vld [vmem:[%s5282 + $0x568] sm:$0xff]
  %v5457 = vld [vmem:[%s5282 + $0x570] sm:$0xff]
  %v5458 = vld [vmem:[%s5282 + $0x578] sm:$0xff]
  %v5459 = vld [vmem:[%s5282 + $0x580] sm:$0xff]
  %v5460 = vld [vmem:[%s5282 + $0x588] sm:$0xff]
  %v5461 = vld [vmem:[%s5282 + $0x590] sm:$0xff]
  %v5462 = vld [vmem:[%s5282 + $0x598] sm:$0xff]
  %v5463 = vld [vmem:[%s5282 + $0x5a0] sm:$0xff]
  %v5464 = vld [vmem:[%s5282 + $0x5a8] sm:$0xff]
  %v5465 = vld [vmem:[%s5282 + $0x5b0] sm:$0xff]
  %v5466 = vld [vmem:[%s5282 + $0x5b8] sm:$0xff]
  %v5467 = vld [vmem:[%s5282 + $0x5c0] sm:$0xff]
  %v5468 = vld [vmem:[%s5282 + $0x5c8] sm:$0xff]
  %v5469 = vld [vmem:[%s5282 + $0x5d0] sm:$0xff]
  %v5470 = vld [vmem:[%s5282 + $0x5d8] sm:$0xff]
  %v5471 = vld [vmem:[%s5282 + $0x5e0] sm:$0xff]
  %v5472 = vld [vmem:[%s5282 + $0x5e8] sm:$0xff]
  %v5473 = vld [vmem:[%s5282 + $0x5f0] sm:$0xff]
  %v5474 = vld [vmem:[%s5282 + $0x5f8] sm:$0xff]
  %v5475 = vld [vmem:[%s5282 + $0x600] sm:$0xff]
  %v5476 = vld [vmem:[%s5282 + $0x608] sm:$0xff]
  %v5477 = vld [vmem:[%s5282 + $0x610] sm:$0xff]
  %v5478 = vld [vmem:[%s5282 + $0x618] sm:$0xff]
  %v5479 = vld [vmem:[%s5282 + $0x620] sm:$0xff]
  %v5480 = vld [vmem:[%s5282 + $0x628] sm:$0xff]
  %v5481 = vld [vmem:[%s5282 + $0x630] sm:$0xff]
  %v5482 = vld [vmem:[%s5282 + $0x638] sm:$0xff]
  %v5483 = vld [vmem:[%s5282 + $0x640] sm:$0xff]
  %v5484 = vld [vmem:[%s5282 + $0x648] sm:$0xff]
  %v5485 = vld [vmem:[%s5282 + $0x650] sm:$0xff]
  %v5486 = vld [vmem:[%s5282 + $0x658] sm:$0xff]
  %v5487 = vld [vmem:[%s5282 + $0x660] sm:$0xff]
  %v5488 = vld [vmem:[%s5282 + $0x668] sm:$0xff]
  %v5489 = vld [vmem:[%s5282 + $0x670] sm:$0xff]
  %v5490 = vld [vmem:[%s5282 + $0x678] sm:$0xff]
  %v5491 = vld [vmem:[%s5282 + $0x680] sm:$0xff]
  %v5492 = vld [vmem:[%s5282 + $0x688] sm:$0xff]
  %v5493 = vld [vmem:[%s5282 + $0x690] sm:$0xff]
  %v5494 = vld [vmem:[%s5282 + $0x698] sm:$0xff]
  %v5495 = vld [vmem:[%s5282 + $0x6a0] sm:$0xff]
  %v5496 = vld [vmem:[%s5282 + $0x6a8] sm:$0xff]
  %v5497 = vld [vmem:[%s5282 + $0x6b0] sm:$0xff]
  %v5498 = vld [vmem:[%s5282 + $0x6b8] sm:$0xff]
  %v5499 = vld [vmem:[%s5282 + $0x6c0] sm:$0xff]
  %v5500 = vld [vmem:[%s5282 + $0x6c8] sm:$0xff]
  %v5501 = vld [vmem:[%s5282 + $0x6d0] sm:$0xff]
  %v5502 = vld [vmem:[%s5282 + $0x6d8] sm:$0xff]
  %v5503 = vld [vmem:[%s5282 + $0x6e0] sm:$0xff]
  %v5504 = vld [vmem:[%s5282 + $0x6e8] sm:$0xff]
  %v5505 = vld [vmem:[%s5282 + $0x6f0] sm:$0xff]
  %v5506 = vld [vmem:[%s5282 + $0x6f8] sm:$0xff]
  %v5507 = vld [vmem:[%s5282 + $0x700] sm:$0xff]
  %v5508 = vld [vmem:[%s5282 + $0x708] sm:$0xff]
  %v5509 = vld [vmem:[%s5282 + $0x710] sm:$0xff]
  %v5510 = vld [vmem:[%s5282 + $0x718] sm:$0xff]
  %v5511 = vld [vmem:[%s5282 + $0x720] sm:$0xff]
  %v5512 = vld [vmem:[%s5282 + $0x728] sm:$0xff]
  %v5513 = vld [vmem:[%s5282 + $0x730] sm:$0xff]
  %v5514 = vld [vmem:[%s5282 + $0x738] sm:$0xff]
  %v5515 = vld [vmem:[%s5282 + $0x740] sm:$0xff]
  %v5516 = vld [vmem:[%s5282 + $0x748] sm:$0xff]
  %v5517 = vld [vmem:[%s5282 + $0x750] sm:$0xff]
  %v5518 = vld [vmem:[%s5282 + $0x758] sm:$0xff]
  %v5519 = vld [vmem:[%s5282 + $0x760] sm:$0xff]
  %v5520 = vld [vmem:[%s5282 + $0x768] sm:$0xff]
  %v5521 = vld [vmem:[%s5282 + $0x770] sm:$0xff]
  %v5522 = vld [vmem:[%s5282 + $0x778] sm:$0xff]
  %v5523 = vld [vmem:[%s5282 + $0x780] sm:$0xff]
  %v5524 = vld [vmem:[%s5282 + $0x788] sm:$0xff]
  %v5525 = vld [vmem:[%s5282 + $0x790] sm:$0xff]
  %v5526 = vld [vmem:[%s5282 + $0x798] sm:$0xff]
  %v5527 = vld [vmem:[%s5282 + $0x7a0] sm:$0xff]
  %v5528 = vld [vmem:[%s5282 + $0x7a8] sm:$0xff]
  %v5529 = vld [vmem:[%s5282 + $0x7b0] sm:$0xff]
  %v5530 = vld [vmem:[%s5282 + $0x7b8] sm:$0xff]
  %v5531 = vld [vmem:[%s5282 + $0x7c0] sm:$0xff]
  %v5532 = vld [vmem:[%s5282 + $0x7c8] sm:$0xff]
  %v5533 = vld [vmem:[%s5282 + $0x7d0] sm:$0xff]
  %v5534 = vld [vmem:[%s5282 + $0x7d8] sm:$0xff]
  %v5535 = vld [vmem:[%s5282 + $0x7e0] sm:$0xff]
  %v5536 = vld [vmem:[%s5282 + $0x7e8] sm:$0xff]
  %v5537 = vld [vmem:[%s5282 + $0x7f0] sm:$0xff]
  %v5538 = vld [vmem:[%s5282 + $0x7f8] sm:$0xff]
  %v5539 = vld [vmem:[%s5282 + $0x800] sm:$0xff]
  %v5540 = vld [vmem:[%s5282 + $0x808] sm:$0xff]
  %v5541 = vld [vmem:[%s5282 + $0x810] sm:$0xff]
  %v5542 = vld [vmem:[%s5282 + $0x818] sm:$0xff]
  %v5543 = vld [vmem:[%s5282 + $0x820] sm:$0xff]
  %v5544 = vld [vmem:[%s5282 + $0x828] sm:$0xff]
  %v5545 = vld [vmem:[%s5282 + $0x830] sm:$0xff]
  %v5546 = vld [vmem:[%s5282 + $0x838] sm:$0xff]
  %v5547 = vld [vmem:[%s5282 + $0x840] sm:$0xff]
  %v5548 = vld [vmem:[%s5282 + $0x848] sm:$0xff]
  %v5549 = vld [vmem:[%s5282 + $0x850] sm:$0xff]
  %v5550 = vld [vmem:[%s5282 + $0x858] sm:$0xff]
  %v5551 = vld [vmem:[%s5282 + $0x860] sm:$0xff]
  %v5552 = vld [vmem:[%s5282 + $0x868] sm:$0xff]
  %v5553 = vld [vmem:[%s5282 + $0x870] sm:$0xff]
  %v5554 = vld [vmem:[%s5282 + $0x878] sm:$0xff]
  %v5555 = vld [vmem:[%s5282 + $0x880] sm:$0xff]
  %v5556 = vld [vmem:[%s5282 + $0x888] sm:$0xff]
  %v5557 = vld [vmem:[%s5282 + $0x890] sm:$0xff]
  %v5558 = vld [vmem:[%s5282 + $0x898] sm:$0xff]
  %v5559 = vld [vmem:[%s5282 + $0x8a0] sm:$0xff]
  %v5560 = vld [vmem:[%s5282 + $0x8a8] sm:$0xff]
  %v5561 = vld [vmem:[%s5282 + $0x8b0] sm:$0xff]
  %v5562 = vld [vmem:[%s5282 + $0x8b8] sm:$0xff]
  %v5563 = vld [vmem:[%s5282 + $0x8c0] sm:$0xff]
  %v5564 = vld [vmem:[%s5282 + $0x8c8] sm:$0xff]
  %v5565 = vld [vmem:[%s5282 + $0x8d0] sm:$0xff]
  %v5566 = vld [vmem:[%s5282 + $0x8d8] sm:$0xff]
  %v5567 = vld [vmem:[%s5282 + $0x8e0] sm:$0xff]
  %v5568 = vld [vmem:[%s5282 + $0x8e8] sm:$0xff]
  %v5569 = vld [vmem:[%s5282 + $0x8f0] sm:$0xff]
  %v5570 = vld [vmem:[%s5282 + $0x8f8] sm:$0xff]
  %v5571 = vunpack.c.l.b16 %v5261
  %v5572 = vunpack.c.h.b16 %v5261
  %v5573 = vunpack.c.l.b16 %v5265
  %v5574 = vunpack.c.h.b16 %v5265
  %v5575 = vunpack.c.l.b16 %v5269
  %v5576 = vunpack.c.h.b16 %v5269
  %v5577 = vunpack.c.l.b16 %v5273
  %v5578 = vunpack.c.h.b16 %v5273
  %v5579 = vunpack.c.l.b16 %v5277
  %v5580 = vunpack.c.h.b16 %v5277
  %v5581 = vunpack.c.l.b16 %v5281
  %v5582 = vunpack.c.h.b16 %v5281
  %v5583 = vpack.c.b16 %v5577, %v5571
  %v5584 = vpack.c.b16 %v5578, %v5572
  %v5585 = vpack.c.b16 %v5579, %v5573
  %v5586 = vpack.c.b16 %v5580, %v5574
  %v5587 = vpack.c.b16 %v5581, %v5575
  %v5588 = vpack.c.b16 %v5582, %v5576
  %v5883 = vunpack.c.l.b16 %v5283
  %v5884 = vunpack.c.h.b16 %v5283
  %v5885 = vunpack.c.l.b16 %v5284
  %v5886 = vunpack.c.h.b16 %v5284
  %v5887 = vunpack.c.l.b16 %v5285
  %v5888 = vunpack.c.h.b16 %v5285
  %v5889 = vunpack.c.l.b16 %v5286
  %v5890 = vunpack.c.h.b16 %v5286
  %v5891 = vunpack.c.l.b16 %v5287
  %v5892 = vunpack.c.h.b16 %v5287
  %v5893 = vunpack.c.l.b16 %v5288
  %v5894 = vunpack.c.h.b16 %v5288
  %v5895 = vunpack.c.l.b16 %v5289
  %v5896 = vunpack.c.h.b16 %v5289
  %v5897 = vunpack.c.l.b16 %v5290
  %v5898 = vunpack.c.h.b16 %v5290
  %v5899 = vunpack.c.l.b16 %v5291
  %v5900 = vunpack.c.h.b16 %v5291
  %v5901 = vunpack.c.l.b16 %v5292
  %v5902 = vunpack.c.h.b16 %v5292
  %v5903 = vunpack.c.l.b16 %v5293
  %v5904 = vunpack.c.h.b16 %v5293
  %v5905 = vunpack.c.l.b16 %v5294
  %v5906 = vunpack.c.h.b16 %v5294
  %v5907 = vunpack.c.l.b16 %v5295
  %v5908 = vunpack.c.h.b16 %v5295
  %v5909 = vunpack.c.l.b16 %v5296
  %v5910 = vunpack.c.h.b16 %v5296
  %v5911 = vunpack.c.l.b16 %v5297
  %v5912 = vunpack.c.h.b16 %v5297
  %v5913 = vunpack.c.l.b16 %v5298
  %v5914 = vunpack.c.h.b16 %v5298
  %v5915 = vunpack.c.l.b16 %v5299
  %v5916 = vunpack.c.h.b16 %v5299
  %v5917 = vunpack.c.l.b16 %v5300
  %v5918 = vunpack.c.h.b16 %v5300
  %v5919 = vunpack.c.l.b16 %v5301
  %v5920 = vunpack.c.h.b16 %v5301
  %v5921 = vunpack.c.l.b16 %v5302
  %v5922 = vunpack.c.h.b16 %v5302
  %v5923 = vunpack.c.l.b16 %v5303
  %v5924 = vunpack.c.h.b16 %v5303
  %v5925 = vunpack.c.l.b16 %v5304
  %v5926 = vunpack.c.h.b16 %v5304
  %v5927 = vunpack.c.l.b16 %v5305
  %v5928 = vunpack.c.h.b16 %v5305
  %v5929 = vunpack.c.l.b16 %v5306
  %v5930 = vunpack.c.h.b16 %v5306
  %v5931 = vunpack.c.l.b16 %v5307
  %v5932 = vunpack.c.h.b16 %v5307
  %v5933 = vunpack.c.l.b16 %v5308
  %v5934 = vunpack.c.h.b16 %v5308
  %v5935 = vunpack.c.l.b16 %v5309
  %v5936 = vunpack.c.h.b16 %v5309
  %v5937 = vunpack.c.l.b16 %v5310
  %v5938 = vunpack.c.h.b16 %v5310
  %v5939 = vunpack.c.l.b16 %v5311
  %v5940 = vunpack.c.h.b16 %v5311
  %v5941 = vunpack.c.l.b16 %v5312
  %v5942 = vunpack.c.h.b16 %v5312
  %v5943 = vunpack.c.l.b16 %v5313
  %v5944 = vunpack.c.h.b16 %v5313
  %v5945 = vunpack.c.l.b16 %v5314
  %v5946 = vunpack.c.h.b16 %v5314
  %v5947 = vunpack.c.l.b16 %v5315
  %v5948 = vunpack.c.h.b16 %v5315
  %v5949 = vunpack.c.l.b16 %v5316
  %v5950 = vunpack.c.h.b16 %v5316
  %v5951 = vunpack.c.l.b16 %v5317
  %v5952 = vunpack.c.h.b16 %v5317
  %v5953 = vunpack.c.l.b16 %v5318
  %v5954 = vunpack.c.h.b16 %v5318
  %v5955 = vunpack.c.l.b16 %v5319
  %v5956 = vunpack.c.h.b16 %v5319
  %v5957 = vunpack.c.l.b16 %v5320
  %v5958 = vunpack.c.h.b16 %v5320
  %v5959 = vunpack.c.l.b16 %v5321
  %v5960 = vunpack.c.h.b16 %v5321
  %v5961 = vunpack.c.l.b16 %v5322
  %v5962 = vunpack.c.h.b16 %v5322
  %v5963 = vunpack.c.l.b16 %v5323
  %v5964 = vunpack.c.h.b16 %v5323
  %v5965 = vunpack.c.l.b16 %v5324
  %v5966 = vunpack.c.h.b16 %v5324
  %v5967 = vunpack.c.l.b16 %v5325
  %v5968 = vunpack.c.h.b16 %v5325
  %v5969 = vunpack.c.l.b16 %v5326
  %v5970 = vunpack.c.h.b16 %v5326
  %v5971 = vunpack.c.l.b16 %v5327
  %v5972 = vunpack.c.h.b16 %v5327
  %v5973 = vunpack.c.l.b16 %v5328
  %v5974 = vunpack.c.h.b16 %v5328
  %v5975 = vunpack.c.l.b16 %v5329
  %v5976 = vunpack.c.h.b16 %v5329
  %v5977 = vunpack.c.l.b16 %v5330
  %v5978 = vunpack.c.h.b16 %v5330
  %v5979 = vunpack.c.l.b16 %v5331
  %v5980 = vunpack.c.h.b16 %v5331
  %v5981 = vunpack.c.l.b16 %v5332
  %v5982 = vunpack.c.h.b16 %v5332
  %v5983 = vunpack.c.l.b16 %v5333
  %v5984 = vunpack.c.h.b16 %v5333
  %v5985 = vunpack.c.l.b16 %v5334
  %v5986 = vunpack.c.h.b16 %v5334
  %v5987 = vunpack.c.l.b16 %v5335
  %v5988 = vunpack.c.h.b16 %v5335
  %v5989 = vunpack.c.l.b16 %v5336
  %v5990 = vunpack.c.h.b16 %v5336
  %v5991 = vunpack.c.l.b16 %v5337
  %v5992 = vunpack.c.h.b16 %v5337
  %v5993 = vunpack.c.l.b16 %v5338
  %v5994 = vunpack.c.h.b16 %v5338
  %v5995 = vunpack.c.l.b16 %v5339
  %v5996 = vunpack.c.h.b16 %v5339
  %v5997 = vunpack.c.l.b16 %v5340
  %v5998 = vunpack.c.h.b16 %v5340
  %v5999 = vunpack.c.l.b16 %v5341
  %v6000 = vunpack.c.h.b16 %v5341
  %v6001 = vunpack.c.l.b16 %v5342
  %v6002 = vunpack.c.h.b16 %v5342
  %v6003 = vunpack.c.l.b16 %v5343
  %v6004 = vunpack.c.h.b16 %v5343
  %v6005 = vunpack.c.l.b16 %v5344
  %v6006 = vunpack.c.h.b16 %v5344
  %v6007 = vunpack.c.l.b16 %v5345
  %v6008 = vunpack.c.h.b16 %v5345
  %v6009 = vunpack.c.l.b16 %v5346
  %v6010 = vunpack.c.h.b16 %v5346
  %v6011 = vunpack.c.l.b16 %v5347
  %v6012 = vunpack.c.h.b16 %v5347
  %v6013 = vunpack.c.l.b16 %v5348
  %v6014 = vunpack.c.h.b16 %v5348
  %v6015 = vunpack.c.l.b16 %v5349
  %v6016 = vunpack.c.h.b16 %v5349
  %v6017 = vunpack.c.l.b16 %v5350
  %v6018 = vunpack.c.h.b16 %v5350
  %v6019 = vunpack.c.l.b16 %v5351
  %v6020 = vunpack.c.h.b16 %v5351
  %v6021 = vunpack.c.l.b16 %v5352
  %v6022 = vunpack.c.h.b16 %v5352
  %v6023 = vunpack.c.l.b16 %v5353
  %v6024 = vunpack.c.h.b16 %v5353
  %v6025 = vunpack.c.l.b16 %v5354
  %v6026 = vunpack.c.h.b16 %v5354
  %v6027 = vunpack.c.l.b16 %v5355
  %v6028 = vunpack.c.h.b16 %v5355
  %v6029 = vunpack.c.l.b16 %v5356
  %v6030 = vunpack.c.h.b16 %v5356
  %v6031 = vunpack.c.l.b16 %v5357
  %v6032 = vunpack.c.h.b16 %v5357
  %v6033 = vunpack.c.l.b16 %v5358
  %v6034 = vunpack.c.h.b16 %v5358
  %v6035 = vunpack.c.l.b16 %v5359
  %v6036 = vunpack.c.h.b16 %v5359
  %v6037 = vunpack.c.l.b16 %v5360
  %v6038 = vunpack.c.h.b16 %v5360
  %v6039 = vunpack.c.l.b16 %v5361
  %v6040 = vunpack.c.h.b16 %v5361
  %v6041 = vunpack.c.l.b16 %v5362
  %v6042 = vunpack.c.h.b16 %v5362
  %v6043 = vunpack.c.l.b16 %v5363
  %v6044 = vunpack.c.h.b16 %v5363
  %v6045 = vunpack.c.l.b16 %v5364
  %v6046 = vunpack.c.h.b16 %v5364
  %v6047 = vunpack.c.l.b16 %v5365
  %v6048 = vunpack.c.h.b16 %v5365
  %v6049 = vunpack.c.l.b16 %v5366
  %v6050 = vunpack.c.h.b16 %v5366
  %v6051 = vunpack.c.l.b16 %v5367
  %v6052 = vunpack.c.h.b16 %v5367
  %v6053 = vunpack.c.l.b16 %v5368
  %v6054 = vunpack.c.h.b16 %v5368
  %v6055 = vunpack.c.l.b16 %v5369
  %v6056 = vunpack.c.h.b16 %v5369
  %v6057 = vunpack.c.l.b16 %v5370
  %v6058 = vunpack.c.h.b16 %v5370
  %v6059 = vunpack.c.l.b16 %v5371
  %v6060 = vunpack.c.h.b16 %v5371
  %v6061 = vunpack.c.l.b16 %v5372
  %v6062 = vunpack.c.h.b16 %v5372
  %v6063 = vunpack.c.l.b16 %v5373
  %v6064 = vunpack.c.h.b16 %v5373
  %v6065 = vunpack.c.l.b16 %v5374
  %v6066 = vunpack.c.h.b16 %v5374
  %v6067 = vunpack.c.l.b16 %v5375
  %v6068 = vunpack.c.h.b16 %v5375
  %v6069 = vunpack.c.l.b16 %v5376
  %v6070 = vunpack.c.h.b16 %v5376
  %v6071 = vunpack.c.l.b16 %v5377
  %v6072 = vunpack.c.h.b16 %v5377
  %v6073 = vunpack.c.l.b16 %v5378
  %v6074 = vunpack.c.h.b16 %v5378
  %v6075 = vunpack.c.l.b16 %v5379
  %v6076 = vunpack.c.h.b16 %v5379
  %v6077 = vunpack.c.l.b16 %v5380
  %v6078 = vunpack.c.h.b16 %v5380
  %v6079 = vunpack.c.l.b16 %v5381
  %v6080 = vunpack.c.h.b16 %v5381
  %v6081 = vunpack.c.l.b16 %v5382
  %v6082 = vunpack.c.h.b16 %v5382
  %v6083 = vunpack.c.l.b16 %v5383
  %v6084 = vunpack.c.h.b16 %v5383
  %v6085 = vunpack.c.l.b16 %v5384
  %v6086 = vunpack.c.h.b16 %v5384
  %v6087 = vunpack.c.l.b16 %v5385
  %v6088 = vunpack.c.h.b16 %v5385
  %v6089 = vunpack.c.l.b16 %v5386
  %v6090 = vunpack.c.h.b16 %v5386
  %v6091 = vunpack.c.l.b16 %v5387
  %v6092 = vunpack.c.h.b16 %v5387
  %v6093 = vunpack.c.l.b16 %v5388
  %v6094 = vunpack.c.h.b16 %v5388
  %v6095 = vunpack.c.l.b16 %v5389
  %v6096 = vunpack.c.h.b16 %v5389
  %v6097 = vunpack.c.l.b16 %v5390
  %v6098 = vunpack.c.h.b16 %v5390
  %v6099 = vunpack.c.l.b16 %v5391
  %v6100 = vunpack.c.h.b16 %v5391
  %v6101 = vunpack.c.l.b16 %v5392
  %v6102 = vunpack.c.h.b16 %v5392
  %v6103 = vunpack.c.l.b16 %v5393
  %v6104 = vunpack.c.h.b16 %v5393
  %v6105 = vunpack.c.l.b16 %v5394
  %v6106 = vunpack.c.h.b16 %v5394
  %v6107 = vunpack.c.l.b16 %v5395
  %v6108 = vunpack.c.h.b16 %v5395
  %v6109 = vunpack.c.l.b16 %v5396
  %v6110 = vunpack.c.h.b16 %v5396
  %v6111 = vunpack.c.l.b16 %v5397
  %v6112 = vunpack.c.h.b16 %v5397
  %v6113 = vunpack.c.l.b16 %v5398
  %v6114 = vunpack.c.h.b16 %v5398
  %v6115 = vunpack.c.l.b16 %v5399
  %v6116 = vunpack.c.h.b16 %v5399
  %v6117 = vunpack.c.l.b16 %v5400
  %v6118 = vunpack.c.h.b16 %v5400
  %v6119 = vunpack.c.l.b16 %v5401
  %v6120 = vunpack.c.h.b16 %v5401
  %v6121 = vunpack.c.l.b16 %v5402
  %v6122 = vunpack.c.h.b16 %v5402
  %v6123 = vunpack.c.l.b16 %v5403
  %v6124 = vunpack.c.h.b16 %v5403
  %v6125 = vunpack.c.l.b16 %v5404
  %v6126 = vunpack.c.h.b16 %v5404
  %v6127 = vunpack.c.l.b16 %v5405
  %v6128 = vunpack.c.h.b16 %v5405
  %v6129 = vunpack.c.l.b16 %v5406
  %v6130 = vunpack.c.h.b16 %v5406
  %v6131 = vunpack.c.l.b16 %v5407
  %v6132 = vunpack.c.h.b16 %v5407
  %v6133 = vunpack.c.l.b16 %v5408
  %v6134 = vunpack.c.h.b16 %v5408
  %v6135 = vunpack.c.l.b16 %v5409
  %v6136 = vunpack.c.h.b16 %v5409
  %v6137 = vunpack.c.l.b16 %v5410
  %v6138 = vunpack.c.h.b16 %v5410
  %v6139 = vunpack.c.l.b16 %v5411
  %v6140 = vunpack.c.h.b16 %v5411
  %v6141 = vunpack.c.l.b16 %v5412
  %v6142 = vunpack.c.h.b16 %v5412
  %v6143 = vunpack.c.l.b16 %v5413
  %v6144 = vunpack.c.h.b16 %v5413
  %v6145 = vunpack.c.l.b16 %v5414
  %v6146 = vunpack.c.h.b16 %v5414
  %v6147 = vunpack.c.l.b16 %v5415
  %v6148 = vunpack.c.h.b16 %v5415
  %v6149 = vunpack.c.l.b16 %v5416
  %v6150 = vunpack.c.h.b16 %v5416
  %v6151 = vunpack.c.l.b16 %v5417
  %v6152 = vunpack.c.h.b16 %v5417
  %v6153 = vunpack.c.l.b16 %v5418
  %v6154 = vunpack.c.h.b16 %v5418
  %v6155 = vunpack.c.l.b16 %v5419
  %v6156 = vunpack.c.h.b16 %v5419
  %v6157 = vunpack.c.l.b16 %v5420
  %v6158 = vunpack.c.h.b16 %v5420
  %v6159 = vunpack.c.l.b16 %v5421
  %v6160 = vunpack.c.h.b16 %v5421
  %v6161 = vunpack.c.l.b16 %v5422
  %v6162 = vunpack.c.h.b16 %v5422
  %v6163 = vunpack.c.l.b16 %v5423
  %v6164 = vunpack.c.h.b16 %v5423
  %v6165 = vunpack.c.l.b16 %v5424
  %v6166 = vunpack.c.h.b16 %v5424
  %v6167 = vunpack.c.l.b16 %v5425
  %v6168 = vunpack.c.h.b16 %v5425
  %v6169 = vunpack.c.l.b16 %v5426
  %v6170 = vunpack.c.h.b16 %v5426
  %v6171 = vunpack.c.l.b16 %v5427
  %v6172 = vunpack.c.h.b16 %v5427
  %v6173 = vunpack.c.l.b16 %v5428
  %v6174 = vunpack.c.h.b16 %v5428
  %v6175 = vunpack.c.l.b16 %v5429
  %v6176 = vunpack.c.h.b16 %v5429
  %v6177 = vunpack.c.l.b16 %v5430
  %v6178 = vunpack.c.h.b16 %v5430
  %v6179 = vunpack.c.l.b16 %v5431
  %v6180 = vunpack.c.h.b16 %v5431
  %v6181 = vunpack.c.l.b16 %v5432
  %v6182 = vunpack.c.h.b16 %v5432
  %v6183 = vunpack.c.l.b16 %v5433
  %v6184 = vunpack.c.h.b16 %v5433
  %v6185 = vunpack.c.l.b16 %v5434
  %v6186 = vunpack.c.h.b16 %v5434
  %v6187 = vunpack.c.l.b16 %v5435
  %v6188 = vunpack.c.h.b16 %v5435
  %v6189 = vunpack.c.l.b16 %v5436
  %v6190 = vunpack.c.h.b16 %v5436
  %v6191 = vunpack.c.l.b16 %v5437
  %v6192 = vunpack.c.h.b16 %v5437
  %v6193 = vunpack.c.l.b16 %v5438
  %v6194 = vunpack.c.h.b16 %v5438
  %v6195 = vunpack.c.l.b16 %v5439
  %v6196 = vunpack.c.h.b16 %v5439
  %v6197 = vunpack.c.l.b16 %v5440
  %v6198 = vunpack.c.h.b16 %v5440
  %v6199 = vunpack.c.l.b16 %v5441
  %v6200 = vunpack.c.h.b16 %v5441
  %v6201 = vunpack.c.l.b16 %v5442
  %v6202 = vunpack.c.h.b16 %v5442
  %v6203 = vunpack.c.l.b16 %v5443
  %v6204 = vunpack.c.h.b16 %v5443
  %v6205 = vunpack.c.l.b16 %v5444
  %v6206 = vunpack.c.h.b16 %v5444
  %v6207 = vunpack.c.l.b16 %v5445
  %v6208 = vunpack.c.h.b16 %v5445
  %v6209 = vunpack.c.l.b16 %v5446
  %v6210 = vunpack.c.h.b16 %v5446
  %v6211 = vunpack.c.l.b16 %v5447
  %v6212 = vunpack.c.h.b16 %v5447
  %v6213 = vunpack.c.l.b16 %v5448
  %v6214 = vunpack.c.h.b16 %v5448
  %v6215 = vunpack.c.l.b16 %v5449
  %v6216 = vunpack.c.h.b16 %v5449
  %v6217 = vunpack.c.l.b16 %v5450
  %v6218 = vunpack.c.h.b16 %v5450
  %v6219 = vunpack.c.l.b16 %v5451
  %v6220 = vunpack.c.h.b16 %v5451
  %v6221 = vunpack.c.l.b16 %v5452
  %v6222 = vunpack.c.h.b16 %v5452
  %v6223 = vunpack.c.l.b16 %v5453
  %v6224 = vunpack.c.h.b16 %v5453
  %v6225 = vunpack.c.l.b16 %v5454
  %v6226 = vunpack.c.h.b16 %v5454
  %v6227 = vunpack.c.l.b16 %v5455
  %v6228 = vunpack.c.h.b16 %v5455
  %v6229 = vunpack.c.l.b16 %v5456
  %v6230 = vunpack.c.h.b16 %v5456
  %v6231 = vunpack.c.l.b16 %v5457
  %v6232 = vunpack.c.h.b16 %v5457
  %v6233 = vunpack.c.l.b16 %v5458
  %v6234 = vunpack.c.h.b16 %v5458
  %v6235 = vunpack.c.l.b16 %v5459
  %v6236 = vunpack.c.h.b16 %v5459
  %v6237 = vunpack.c.l.b16 %v5460
  %v6238 = vunpack.c.h.b16 %v5460
  %v6239 = vunpack.c.l.b16 %v5461
  %v6240 = vunpack.c.h.b16 %v5461
  %v6241 = vunpack.c.l.b16 %v5462
  %v6242 = vunpack.c.h.b16 %v5462
  %v6243 = vunpack.c.l.b16 %v5463
  %v6244 = vunpack.c.h.b16 %v5463
  %v6245 = vunpack.c.l.b16 %v5464
  %v6246 = vunpack.c.h.b16 %v5464
  %v6247 = vunpack.c.l.b16 %v5465
  %v6248 = vunpack.c.h.b16 %v5465
  %v6249 = vunpack.c.l.b16 %v5466
  %v6250 = vunpack.c.h.b16 %v5466
  %v6251 = vunpack.c.l.b16 %v5467
  %v6252 = vunpack.c.h.b16 %v5467
  %v6253 = vunpack.c.l.b16 %v5468
  %v6254 = vunpack.c.h.b16 %v5468
  %v6255 = vunpack.c.l.b16 %v5469
  %v6256 = vunpack.c.h.b16 %v5469
  %v6257 = vunpack.c.l.b16 %v5470
  %v6258 = vunpack.c.h.b16 %v5470
  %v6259 = vunpack.c.l.b16 %v5471
  %v6260 = vunpack.c.h.b16 %v5471
  %v6261 = vunpack.c.l.b16 %v5472
  %v6262 = vunpack.c.h.b16 %v5472
  %v6263 = vunpack.c.l.b16 %v5473
  %v6264 = vunpack.c.h.b16 %v5473
  %v6265 = vunpack.c.l.b16 %v5474
  %v6266 = vunpack.c.h.b16 %v5474
  %v6267 = vunpack.c.l.b16 %v5475
  %v6268 = vunpack.c.h.b16 %v5475
  %v6269 = vunpack.c.l.b16 %v5476
  %v6270 = vunpack.c.h.b16 %v5476
  %v6271 = vunpack.c.l.b16 %v5477
  %v6272 = vunpack.c.h.b16 %v5477
  %v6273 = vunpack.c.l.b16 %v5478
  %v6274 = vunpack.c.h.b16 %v5478
  %v6275 = vunpack.c.l.b16 %v5479
  %v6276 = vunpack.c.h.b16 %v5479
  %v6277 = vunpack.c.l.b16 %v5480
  %v6278 = vunpack.c.h.b16 %v5480
  %v6279 = vunpack.c.l.b16 %v5481
  %v6280 = vunpack.c.h.b16 %v5481
  %v6281 = vunpack.c.l.b16 %v5482
  %v6282 = vunpack.c.h.b16 %v5482
  %v6283 = vunpack.c.l.b16 %v5483
  %v6284 = vunpack.c.h.b16 %v5483
  %v6285 = vunpack.c.l.b16 %v5484
  %v6286 = vunpack.c.h.b16 %v5484
  %v6287 = vunpack.c.l.b16 %v5485
  %v6288 = vunpack.c.h.b16 %v5485
  %v6289 = vunpack.c.l.b16 %v5486
  %v6290 = vunpack.c.h.b16 %v5486
  %v6291 = vunpack.c.l.b16 %v5487
  %v6292 = vunpack.c.h.b16 %v5487
  %v6293 = vunpack.c.l.b16 %v5488
  %v6294 = vunpack.c.h.b16 %v5488
  %v6295 = vunpack.c.l.b16 %v5489
  %v6296 = vunpack.c.h.b16 %v5489
  %v6297 = vunpack.c.l.b16 %v5490
  %v6298 = vunpack.c.h.b16 %v5490
  %v6299 = vunpack.c.l.b16 %v5491
  %v6300 = vunpack.c.h.b16 %v5491
  %v6301 = vunpack.c.l.b16 %v5492
  %v6302 = vunpack.c.h.b16 %v5492
  %v6303 = vunpack.c.l.b16 %v5493
  %v6304 = vunpack.c.h.b16 %v5493
  %v6305 = vunpack.c.l.b16 %v5494
  %v6306 = vunpack.c.h.b16 %v5494
  %v6307 = vunpack.c.l.b16 %v5495
  %v6308 = vunpack.c.h.b16 %v5495
  %v6309 = vunpack.c.l.b16 %v5496
  %v6310 = vunpack.c.h.b16 %v5496
  %v6311 = vunpack.c.l.b16 %v5497
  %v6312 = vunpack.c.h.b16 %v5497
  %v6313 = vunpack.c.l.b16 %v5498
  %v6314 = vunpack.c.h.b16 %v5498
  %v6315 = vunpack.c.l.b16 %v5499
  %v6316 = vunpack.c.h.b16 %v5499
  %v6317 = vunpack.c.l.b16 %v5500
  %v6318 = vunpack.c.h.b16 %v5500
  %v6319 = vunpack.c.l.b16 %v5501
  %v6320 = vunpack.c.h.b16 %v5501
  %v6321 = vunpack.c.l.b16 %v5502
  %v6322 = vunpack.c.h.b16 %v5502
  %v6323 = vunpack.c.l.b16 %v5503
  %v6324 = vunpack.c.h.b16 %v5503
  %v6325 = vunpack.c.l.b16 %v5504
  %v6326 = vunpack.c.h.b16 %v5504
  %v6327 = vunpack.c.l.b16 %v5505
  %v6328 = vunpack.c.h.b16 %v5505
  %v6329 = vunpack.c.l.b16 %v5506
  %v6330 = vunpack.c.h.b16 %v5506
  %v6331 = vunpack.c.l.b16 %v5507
  %v6332 = vunpack.c.h.b16 %v5507
  %v6333 = vunpack.c.l.b16 %v5508
  %v6334 = vunpack.c.h.b16 %v5508
  %v6335 = vunpack.c.l.b16 %v5509
  %v6336 = vunpack.c.h.b16 %v5509
  %v6337 = vunpack.c.l.b16 %v5510
  %v6338 = vunpack.c.h.b16 %v5510
  %v6339 = vunpack.c.l.b16 %v5511
  %v6340 = vunpack.c.h.b16 %v5511
  %v6341 = vunpack.c.l.b16 %v5512
  %v6342 = vunpack.c.h.b16 %v5512
  %v6343 = vunpack.c.l.b16 %v5513
  %v6344 = vunpack.c.h.b16 %v5513
  %v6345 = vunpack.c.l.b16 %v5514
  %v6346 = vunpack.c.h.b16 %v5514
  %v6347 = vunpack.c.l.b16 %v5515
  %v6348 = vunpack.c.h.b16 %v5515
  %v6349 = vunpack.c.l.b16 %v5516
  %v6350 = vunpack.c.h.b16 %v5516
  %v6351 = vunpack.c.l.b16 %v5517
  %v6352 = vunpack.c.h.b16 %v5517
  %v6353 = vunpack.c.l.b16 %v5518
  %v6354 = vunpack.c.h.b16 %v5518
  %v6355 = vunpack.c.l.b16 %v5519
  %v6356 = vunpack.c.h.b16 %v5519
  %v6357 = vunpack.c.l.b16 %v5520
  %v6358 = vunpack.c.h.b16 %v5520
  %v6359 = vunpack.c.l.b16 %v5521
  %v6360 = vunpack.c.h.b16 %v5521
  %v6361 = vunpack.c.l.b16 %v5522
  %v6362 = vunpack.c.h.b16 %v5522
  %v6363 = vunpack.c.l.b16 %v5523
  %v6364 = vunpack.c.h.b16 %v5523
  %v6365 = vunpack.c.l.b16 %v5524
  %v6366 = vunpack.c.h.b16 %v5524
  %v6367 = vunpack.c.l.b16 %v5525
  %v6368 = vunpack.c.h.b16 %v5525
  %v6369 = vunpack.c.l.b16 %v5526
  %v6370 = vunpack.c.h.b16 %v5526
  %v6371 = vunpack.c.l.b16 %v5527
  %v6372 = vunpack.c.h.b16 %v5527
  %v6373 = vunpack.c.l.b16 %v5528
  %v6374 = vunpack.c.h.b16 %v5528
  %v6375 = vunpack.c.l.b16 %v5529
  %v6376 = vunpack.c.h.b16 %v5529
  %v6377 = vunpack.c.l.b16 %v5530
  %v6378 = vunpack.c.h.b16 %v5530
  %v6379 = vunpack.c.l.b16 %v5531
  %v6380 = vunpack.c.h.b16 %v5531
  %v6381 = vunpack.c.l.b16 %v5532
  %v6382 = vunpack.c.h.b16 %v5532
  %v6383 = vunpack.c.l.b16 %v5533
  %v6384 = vunpack.c.h.b16 %v5533
  %v6385 = vunpack.c.l.b16 %v5534
  %v6386 = vunpack.c.h.b16 %v5534
  %v6387 = vunpack.c.l.b16 %v5535
  %v6388 = vunpack.c.h.b16 %v5535
  %v6389 = vunpack.c.l.b16 %v5536
  %v6390 = vunpack.c.h.b16 %v5536
  %v6391 = vunpack.c.l.b16 %v5537
  %v6392 = vunpack.c.h.b16 %v5537
  %v6393 = vunpack.c.l.b16 %v5538
  %v6394 = vunpack.c.h.b16 %v5538
  %v6395 = vunpack.c.l.b16 %v5539
  %v6396 = vunpack.c.h.b16 %v5539
  %v6397 = vunpack.c.l.b16 %v5540
  %v6398 = vunpack.c.h.b16 %v5540
  %v6399 = vunpack.c.l.b16 %v5541
  %v6400 = vunpack.c.h.b16 %v5541
  %v6401 = vunpack.c.l.b16 %v5542
  %v6402 = vunpack.c.h.b16 %v5542
  %v6403 = vunpack.c.l.b16 %v5543
  %v6404 = vunpack.c.h.b16 %v5543
  %v6405 = vunpack.c.l.b16 %v5544
  %v6406 = vunpack.c.h.b16 %v5544
  %v6407 = vunpack.c.l.b16 %v5545
  %v6408 = vunpack.c.h.b16 %v5545
  %v6409 = vunpack.c.l.b16 %v5546
  %v6410 = vunpack.c.h.b16 %v5546
  %v6411 = vunpack.c.l.b16 %v5547
  %v6412 = vunpack.c.h.b16 %v5547
  %v6413 = vunpack.c.l.b16 %v5548
  %v6414 = vunpack.c.h.b16 %v5548
  %v6415 = vunpack.c.l.b16 %v5549
  %v6416 = vunpack.c.h.b16 %v5549
  %v6417 = vunpack.c.l.b16 %v5550
  %v6418 = vunpack.c.h.b16 %v5550
  %v6419 = vunpack.c.l.b16 %v5551
  %v6420 = vunpack.c.h.b16 %v5551
  %v6421 = vunpack.c.l.b16 %v5552
  %v6422 = vunpack.c.h.b16 %v5552
  %v6423 = vunpack.c.l.b16 %v5553
  %v6424 = vunpack.c.h.b16 %v5553
  %v6425 = vunpack.c.l.b16 %v5554
  %v6426 = vunpack.c.h.b16 %v5554
  %v6427 = vunpack.c.l.b16 %v5555
  %v6428 = vunpack.c.h.b16 %v5555
  %v6429 = vunpack.c.l.b16 %v5556
  %v6430 = vunpack.c.h.b16 %v5556
  %v6431 = vunpack.c.l.b16 %v5557
  %v6432 = vunpack.c.h.b16 %v5557
  %v6433 = vunpack.c.l.b16 %v5558
  %v6434 = vunpack.c.h.b16 %v5558
  %v6435 = vunpack.c.l.b16 %v5559
  %v6436 = vunpack.c.h.b16 %v5559
  %v6437 = vunpack.c.l.b16 %v5560
  %v6438 = vunpack.c.h.b16 %v5560
  %v6439 = vunpack.c.l.b16 %v5561
  %v6440 = vunpack.c.h.b16 %v5561
  %v6441 = vunpack.c.l.b16 %v5562
  %v6442 = vunpack.c.h.b16 %v5562
  %v6443 = vunpack.c.l.b16 %v5563
  %v6444 = vunpack.c.h.b16 %v5563
  %v6445 = vunpack.c.l.b16 %v5564
  %v6446 = vunpack.c.h.b16 %v5564
  %v6447 = vunpack.c.l.b16 %v5565
  %v6448 = vunpack.c.h.b16 %v5565
  %v6449 = vunpack.c.l.b16 %v5566
  %v6450 = vunpack.c.h.b16 %v5566
  %v6451 = vunpack.c.l.b16 %v5567
  %v6452 = vunpack.c.h.b16 %v5567
  %v6453 = vunpack.c.l.b16 %v5568
  %v6454 = vunpack.c.h.b16 %v5568
  %v6455 = vunpack.c.l.b16 %v5569
  %v6456 = vunpack.c.h.b16 %v5569
  %v6457 = vunpack.c.l.b16 %v5570
  %v6458 = vunpack.c.h.b16 %v5570
  %v6459 = vpack.c.b16 %v5889, %v5883
  %v6460 = vpack.c.b16 %v5890, %v5884
  %v6461 = vpack.c.b16 %v5891, %v5885
  %v6462 = vpack.c.b16 %v5892, %v5886
  %v6463 = vpack.c.b16 %v5893, %v5887
  %v6464 = vpack.c.b16 %v5894, %v5888
  %v6465 = vpack.c.b16 %v5901, %v5895
  %v6466 = vpack.c.b16 %v5902, %v5896
  %v6467 = vpack.c.b16 %v5903, %v5897
  %v6468 = vpack.c.b16 %v5904, %v5898
  %v6469 = vpack.c.b16 %v5905, %v5899
  %v6470 = vpack.c.b16 %v5906, %v5900
  %v6471 = vpack.c.b16 %v5913, %v5907
  %v6472 = vpack.c.b16 %v5914, %v5908
  %v6473 = vpack.c.b16 %v5915, %v5909
  %v6474 = vpack.c.b16 %v5916, %v5910
  %v6475 = vpack.c.b16 %v5917, %v5911
  %v6476 = vpack.c.b16 %v5918, %v5912
  %v6477 = vpack.c.b16 %v5925, %v5919
  %v6478 = vpack.c.b16 %v5926, %v5920
  %v6479 = vpack.c.b16 %v5927, %v5921
  %v6480 = vpack.c.b16 %v5928, %v5922
  %v6481 = vpack.c.b16 %v5929, %v5923
  %v6482 = vpack.c.b16 %v5930, %v5924
  %v6483 = vpack.c.b16 %v5937, %v5931
  %v6484 = vpack.c.b16 %v5938, %v5932
  %v6485 = vpack.c.b16 %v5939, %v5933
  %v6486 = vpack.c.b16 %v5940, %v5934
  %v6487 = vpack.c.b16 %v5941, %v5935
  %v6488 = vpack.c.b16 %v5942, %v5936
  %v6489 = vpack.c.b16 %v5949, %v5943
  %v6490 = vpack.c.b16 %v5950, %v5944
  %v6491 = vpack.c.b16 %v5951, %v5945
  %v6492 = vpack.c.b16 %v5952, %v5946
  %v6493 = vpack.c.b16 %v5953, %v5947
  %v6494 = vpack.c.b16 %v5954, %v5948
  %v6495 = vpack.c.b16 %v5961, %v5955
  %v6496 = vpack.c.b16 %v5962, %v5956
  %v6497 = vpack.c.b16 %v5963, %v5957
  %v6498 = vpack.c.b16 %v5964, %v5958
  %v6499 = vpack.c.b16 %v5965, %v5959
  %v6500 = vpack.c.b16 %v5966, %v5960
  %v6501 = vpack.c.b16 %v5973, %v5967
  %v6502 = vpack.c.b16 %v5974, %v5968
  %v6503 = vpack.c.b16 %v5975, %v5969
  %v6504 = vpack.c.b16 %v5976, %v5970
  %v6505 = vpack.c.b16 %v5977, %v5971
  %v6506 = vpack.c.b16 %v5978, %v5972
  %v6507 = vpack.c.b16 %v5985, %v5979
  %v6508 = vpack.c.b16 %v5986, %v5980
  %v6509 = vpack.c.b16 %v5987, %v5981
  %v6510 = vpack.c.b16 %v5988, %v5982
  %v6511 = vpack.c.b16 %v5989, %v5983
  %v6512 = vpack.c.b16 %v5990, %v5984
  %v6513 = vpack.c.b16 %v5997, %v5991
  %v6514 = vpack.c.b16 %v5998, %v5992
  %v6515 = vpack.c.b16 %v5999, %v5993
  %v6516 = vpack.c.b16 %v6000, %v5994
  %v6517 = vpack.c.b16 %v6001, %v5995
  %v6518 = vpack.c.b16 %v6002, %v5996
  %v6519 = vpack.c.b16 %v6009, %v6003
  %v6520 = vpack.c.b16 %v6010, %v6004
  %v6521 = vpack.c.b16 %v6011, %v6005
  %v6522 = vpack.c.b16 %v6012, %v6006
  %v6523 = vpack.c.b16 %v6013, %v6007
  %v6524 = vpack.c.b16 %v6014, %v6008
  %v6525 = vpack.c.b16 %v6021, %v6015
  %v6526 = vpack.c.b16 %v6022, %v6016
  %v6527 = vpack.c.b16 %v6023, %v6017
  %v6528 = vpack.c.b16 %v6024, %v6018
  %v6529 = vpack.c.b16 %v6025, %v6019
  %v6530 = vpack.c.b16 %v6026, %v6020
  %v6531 = vpack.c.b16 %v6033, %v6027
  %v6532 = vpack.c.b16 %v6034, %v6028
  %v6533 = vpack.c.b16 %v6035, %v6029
  %v6534 = vpack.c.b16 %v6036, %v6030
  %v6535 = vpack.c.b16 %v6037, %v6031
  %v6536 = vpack.c.b16 %v6038, %v6032
  %v6537 = vpack.c.b16 %v6045, %v6039
  %v6538 = vpack.c.b16 %v6046, %v6040
  %v6539 = vpack.c.b16 %v6047, %v6041
  %v6540 = vpack.c.b16 %v6048, %v6042
  %v6541 = vpack.c.b16 %v6049, %v6043
  %v6542 = vpack.c.b16 %v6050, %v6044
  %v6543 = vpack.c.b16 %v6057, %v6051
  %v6544 = vpack.c.b16 %v6058, %v6052
  %v6545 = vpack.c.b16 %v6059, %v6053
  %v6546 = vpack.c.b16 %v6060, %v6054
  %v6547 = vpack.c.b16 %v6061, %v6055
  %v6548 = vpack.c.b16 %v6062, %v6056
  %v6549 = vpack.c.b16 %v6069, %v6063
  %v6550 = vpack.c.b16 %v6070, %v6064
  %v6551 = vpack.c.b16 %v6071, %v6065
  %v6552 = vpack.c.b16 %v6072, %v6066
  %v6553 = vpack.c.b16 %v6073, %v6067
  %v6554 = vpack.c.b16 %v6074, %v6068
  %v6555 = vpack.c.b16 %v6081, %v6075
  %v6556 = vpack.c.b16 %v6082, %v6076
  %v6557 = vpack.c.b16 %v6083, %v6077
  %v6558 = vpack.c.b16 %v6084, %v6078
  %v6559 = vpack.c.b16 %v6085, %v6079
  %v6560 = vpack.c.b16 %v6086, %v6080
  %v6561 = vpack.c.b16 %v6093, %v6087
  %v6562 = vpack.c.b16 %v6094, %v6088
  %v6563 = vpack.c.b16 %v6095, %v6089
  %v6564 = vpack.c.b16 %v6096, %v6090
  %v6565 = vpack.c.b16 %v6097, %v6091
  %v6566 = vpack.c.b16 %v6098, %v6092
  %v6567 = vpack.c.b16 %v6105, %v6099
  %v6568 = vpack.c.b16 %v6106, %v6100
  %v6569 = vpack.c.b16 %v6107, %v6101
  %v6570 = vpack.c.b16 %v6108, %v6102
  %v6571 = vpack.c.b16 %v6109, %v6103
  %v6572 = vpack.c.b16 %v6110, %v6104
  %v6573 = vpack.c.b16 %v6117, %v6111
  %v6574 = vpack.c.b16 %v6118, %v6112
  %v6575 = vpack.c.b16 %v6119, %v6113
  %v6576 = vpack.c.b16 %v6120, %v6114
  %v6577 = vpack.c.b16 %v6121, %v6115
  %v6578 = vpack.c.b16 %v6122, %v6116
  %v6579 = vpack.c.b16 %v6129, %v6123
  %v6580 = vpack.c.b16 %v6130, %v6124
  %v6581 = vpack.c.b16 %v6131, %v6125
  %v6582 = vpack.c.b16 %v6132, %v6126
  %v6583 = vpack.c.b16 %v6133, %v6127
  %v6584 = vpack.c.b16 %v6134, %v6128
  %v6585 = vpack.c.b16 %v6141, %v6135
  %v6586 = vpack.c.b16 %v6142, %v6136
  %v6587 = vpack.c.b16 %v6143, %v6137
  %v6588 = vpack.c.b16 %v6144, %v6138
  %v6589 = vpack.c.b16 %v6145, %v6139
  %v6590 = vpack.c.b16 %v6146, %v6140
  %v6591 = vpack.c.b16 %v6153, %v6147
  %v6592 = vpack.c.b16 %v6154, %v6148
  %v6593 = vpack.c.b16 %v6155, %v6149
  %v6594 = vpack.c.b16 %v6156, %v6150
  %v6595 = vpack.c.b16 %v6157, %v6151
  %v6596 = vpack.c.b16 %v6158, %v6152
  %v6597 = vpack.c.b16 %v6165, %v6159
  %v6598 = vpack.c.b16 %v6166, %v6160
  %v6599 = vpack.c.b16 %v6167, %v6161
  %v6600 = vpack.c.b16 %v6168, %v6162
  %v6601 = vpack.c.b16 %v6169, %v6163
  %v6602 = vpack.c.b16 %v6170, %v6164
  %v6603 = vpack.c.b16 %v6177, %v6171
  %v6604 = vpack.c.b16 %v6178, %v6172
  %v6605 = vpack.c.b16 %v6179, %v6173
  %v6606 = vpack.c.b16 %v6180, %v6174
  %v6607 = vpack.c.b16 %v6181, %v6175
  %v6608 = vpack.c.b16 %v6182, %v6176
  %v6609 = vpack.c.b16 %v6189, %v6183
  %v6610 = vpack.c.b16 %v6190, %v6184
  %v6611 = vpack.c.b16 %v6191, %v6185
  %v6612 = vpack.c.b16 %v6192, %v6186
  %v6613 = vpack.c.b16 %v6193, %v6187
  %v6614 = vpack.c.b16 %v6194, %v6188
  %v6615 = vpack.c.b16 %v6201, %v6195
  %v6616 = vpack.c.b16 %v6202, %v6196
  %v6617 = vpack.c.b16 %v6203, %v6197
  %v6618 = vpack.c.b16 %v6204, %v6198
  %v6619 = vpack.c.b16 %v6205, %v6199
  %v6620 = vpack.c.b16 %v6206, %v6200
  %v6621 = vpack.c.b16 %v6213, %v6207
  %v6622 = vpack.c.b16 %v6214, %v6208
  %v6623 = vpack.c.b16 %v6215, %v6209
  %v6624 = vpack.c.b16 %v6216, %v6210
  %v6625 = vpack.c.b16 %v6217, %v6211
  %v6626 = vpack.c.b16 %v6218, %v6212
  %v6627 = vpack.c.b16 %v6225, %v6219
  %v6628 = vpack.c.b16 %v6226, %v6220
  %v6629 = vpack.c.b16 %v6227, %v6221
  %v6630 = vpack.c.b16 %v6228, %v6222
  %v6631 = vpack.c.b16 %v6229, %v6223
  %v6632 = vpack.c.b16 %v6230, %v6224
  %v6633 = vpack.c.b16 %v6237, %v6231
  %v6634 = vpack.c.b16 %v6238, %v6232
  %v6635 = vpack.c.b16 %v6239, %v6233
  %v6636 = vpack.c.b16 %v6240, %v6234
  %v6637 = vpack.c.b16 %v6241, %v6235
  %v6638 = vpack.c.b16 %v6242, %v6236
  %v6639 = vpack.c.b16 %v6249, %v6243
  %v6640 = vpack.c.b16 %v6250, %v6244
  %v6641 = vpack.c.b16 %v6251, %v6245
  %v6642 = vpack.c.b16 %v6252, %v6246
  %v6643 = vpack.c.b16 %v6253, %v6247
  %v6644 = vpack.c.b16 %v6254, %v6248
  %v6645 = vpack.c.b16 %v6261, %v6255
  %v6646 = vpack.c.b16 %v6262, %v6256
  %v6647 = vpack.c.b16 %v6263, %v6257
  %v6648 = vpack.c.b16 %v6264, %v6258
  %v6649 = vpack.c.b16 %v6265, %v6259
  %v6650 = vpack.c.b16 %v6266, %v6260
  %v6651 = vpack.c.b16 %v6273, %v6267
  %v6652 = vpack.c.b16 %v6274, %v6268
  %v6653 = vpack.c.b16 %v6275, %v6269
  %v6654 = vpack.c.b16 %v6276, %v6270
  %v6655 = vpack.c.b16 %v6277, %v6271
  %v6656 = vpack.c.b16 %v6278, %v6272
  %v6657 = vpack.c.b16 %v6285, %v6279
  %v6658 = vpack.c.b16 %v6286, %v6280
  %v6659 = vpack.c.b16 %v6287, %v6281
  %v6660 = vpack.c.b16 %v6288, %v6282
  %v6661 = vpack.c.b16 %v6289, %v6283
  %v6662 = vpack.c.b16 %v6290, %v6284
  %v6663 = vpack.c.b16 %v6297, %v6291
  %v6664 = vpack.c.b16 %v6298, %v6292
  %v6665 = vpack.c.b16 %v6299, %v6293
  %v6666 = vpack.c.b16 %v6300, %v6294
  %v6667 = vpack.c.b16 %v6301, %v6295
  %v6668 = vpack.c.b16 %v6302, %v6296
  %v6669 = vpack.c.b16 %v6309, %v6303
  %v6670 = vpack.c.b16 %v6310, %v6304
  %v6671 = vpack.c.b16 %v6311, %v6305
  %v6672 = vpack.c.b16 %v6312, %v6306
  %v6673 = vpack.c.b16 %v6313, %v6307
  %v6674 = vpack.c.b16 %v6314, %v6308
  %v6675 = vpack.c.b16 %v6321, %v6315
  %v6676 = vpack.c.b16 %v6322, %v6316
  %v6677 = vpack.c.b16 %v6323, %v6317
  %v6678 = vpack.c.b16 %v6324, %v6318
  %v6679 = vpack.c.b16 %v6325, %v6319
  %v6680 = vpack.c.b16 %v6326, %v6320
  %v6681 = vpack.c.b16 %v6333, %v6327
  %v6682 = vpack.c.b16 %v6334, %v6328
  %v6683 = vpack.c.b16 %v6335, %v6329
  %v6684 = vpack.c.b16 %v6336, %v6330
  %v6685 = vpack.c.b16 %v6337, %v6331
  %v6686 = vpack.c.b16 %v6338, %v6332
  %v6687 = vpack.c.b16 %v6345, %v6339
  %v6688 = vpack.c.b16 %v6346, %v6340
  %v6689 = vpack.c.b16 %v6347, %v6341
  %v6690 = vpack.c.b16 %v6348, %v6342
  %v6691 = vpack.c.b16 %v6349, %v6343
  %v6692 = vpack.c.b16 %v6350, %v6344
  %v6693 = vpack.c.b16 %v6357, %v6351
  %v6694 = vpack.c.b16 %v6358, %v6352
  %v6695 = vpack.c.b16 %v6359, %v6353
  %v6696 = vpack.c.b16 %v6360, %v6354
  %v6697 = vpack.c.b16 %v6361, %v6355
  %v6698 = vpack.c.b16 %v6362, %v6356
  %v6699 = vpack.c.b16 %v6369, %v6363
  %v6700 = vpack.c.b16 %v6370, %v6364
  %v6701 = vpack.c.b16 %v6371, %v6365
  %v6702 = vpack.c.b16 %v6372, %v6366
  %v6703 = vpack.c.b16 %v6373, %v6367
  %v6704 = vpack.c.b16 %v6374, %v6368
  %v6705 = vpack.c.b16 %v6381, %v6375
  %v6706 = vpack.c.b16 %v6382, %v6376
  %v6707 = vpack.c.b16 %v6383, %v6377
  %v6708 = vpack.c.b16 %v6384, %v6378
  %v6709 = vpack.c.b16 %v6385, %v6379
  %v6710 = vpack.c.b16 %v6386, %v6380
  %v6711 = vpack.c.b16 %v6393, %v6387
  %v6712 = vpack.c.b16 %v6394, %v6388
  %v6713 = vpack.c.b16 %v6395, %v6389
  %v6714 = vpack.c.b16 %v6396, %v6390
  %v6715 = vpack.c.b16 %v6397, %v6391
  %v6716 = vpack.c.b16 %v6398, %v6392
  %v6717 = vpack.c.b16 %v6405, %v6399
  %v6718 = vpack.c.b16 %v6406, %v6400
  %v6719 = vpack.c.b16 %v6407, %v6401
  %v6720 = vpack.c.b16 %v6408, %v6402
  %v6721 = vpack.c.b16 %v6409, %v6403
  %v6722 = vpack.c.b16 %v6410, %v6404
  %v6723 = vpack.c.b16 %v6417, %v6411
  %v6724 = vpack.c.b16 %v6418, %v6412
  %v6725 = vpack.c.b16 %v6419, %v6413
  %v6726 = vpack.c.b16 %v6420, %v6414
  %v6727 = vpack.c.b16 %v6421, %v6415
  %v6728 = vpack.c.b16 %v6422, %v6416
  %v6729 = vpack.c.b16 %v6429, %v6423
  %v6730 = vpack.c.b16 %v6430, %v6424
  %v6731 = vpack.c.b16 %v6431, %v6425
  %v6732 = vpack.c.b16 %v6432, %v6426
  %v6733 = vpack.c.b16 %v6433, %v6427
  %v6734 = vpack.c.b16 %v6434, %v6428
  %v6735 = vpack.c.b16 %v6441, %v6435
  %v6736 = vpack.c.b16 %v6442, %v6436
  %v6737 = vpack.c.b16 %v6443, %v6437
  %v6738 = vpack.c.b16 %v6444, %v6438
  %v6739 = vpack.c.b16 %v6445, %v6439
  %v6740 = vpack.c.b16 %v6446, %v6440
  %v6741 = vpack.c.b16 %v6453, %v6447
  %v6742 = vpack.c.b16 %v6454, %v6448
  %v6743 = vpack.c.b16 %v6455, %v6449
  %v6744 = vpack.c.b16 %v6456, %v6450
  %v6745 = vpack.c.b16 %v6457, %v6451
  %v6746 = vpack.c.b16 %v6458, %v6452
  %7035 = vmatprep.subr.bf16.mxu0 %v6460
  %7036 = vmatpush1.bf16.msra.mxu0 %v6459
  %7037 = vmatprep.subr.bf16.mxu0 %v6466
  %7038 = vmatpush1.bf16.msra.mxu0 %v6465
  %7039 = vmatprep.subr.bf16.mxu0 %v6472
  %7040 = vmatpush1.bf16.msra.mxu0 %v6471
  %7041 = vmatprep.subr.bf16.mxu0 %v6478
  %7042 = vmatpush1.bf16.msra.mxu0 %v6477
  %7043 = vmatprep.subr.bf16.mxu0 %v6484
  %7044 = vmatpush1.bf16.msra.mxu0 %v6483
  %7045 = vmatprep.subr.bf16.mxu0 %v6490
  %7046 = vmatpush1.bf16.msra.mxu0 %v6489
  %7047 = vmatprep.subr.bf16.mxu0 %v6496
  %7048 = vmatpush1.bf16.msra.mxu0 %v6495
  %7049 = vmatprep.subr.bf16.mxu0 %v6502
  %7050 = vmatpush1.bf16.msra.mxu0 %v6501
  %7051 = vmatprep.subr.bf16.mxu0 %v6508
  %7052 = vmatpush1.bf16.msra.mxu0 %v6507
  %7053 = vmatprep.subr.bf16.mxu0 %v6514
  %7054 = vmatpush1.bf16.msra.mxu0 %v6513
  %7055 = vmatprep.subr.bf16.mxu0 %v6520
  %7056 = vmatpush1.bf16.msra.mxu0 %v6519
  %7057 = vmatprep.subr.bf16.mxu0 %v6526
  %7058 = vmatpush1.bf16.msra.mxu0 %v6525
  %7059 = vmatprep.subr.bf16.mxu0 %v6532
  %7060 = vmatpush1.bf16.msra.mxu0 %v6531
  %7061 = vmatprep.subr.bf16.mxu0 %v6538
  %7062 = vmatpush1.bf16.msra.mxu0 %v6537
  %7063 = vmatprep.subr.bf16.mxu0 %v6544
  %7064 = vmatpush1.bf16.msra.mxu0 %v6543
  %7065 = vmatprep.subr.bf16.mxu0 %v6550
  %7066 = vmatpush1.bf16.msra.mxu0 %v6549
  %7067 = vmatprep.mubr.bf16.mxu0 %v5584
  %7068 = vmatmul.mubr.bf16.gmra.mrb[0].mxu0 %v5583
  %v7069 = vpop.f32.mrb[0].mxu0
  %v7070 = vadd.f32 0.0, %v7069
  %v7071 = vpop.f32.mrb[0].mxu0
  %v7072 = vadd.f32 0.0, %v7071
  %v7073 = vpop.f32.mrb[0].mxu0
  %v7074 = vadd.f32 0.0, %v7073
  %v7075 = vpop.f32.mrb[0].mxu0
  %v7076 = vadd.f32 0.0, %v7075
  %7077 = vdwg.mxu0
  %7078 = vmatprep.subr.bf16.mxu0 %v6556
  %7079 = vmatpush1.bf16.msra.mxu0 %v6555
  %7080 = vmatprep.subr.bf16.mxu0 %v6562
  %7081 = vmatpush1.bf16.msra.mxu0 %v6561
  %7082 = vmatprep.subr.bf16.mxu0 %v6568
  %7083 = vmatpush1.bf16.msra.mxu0 %v6567
  %7084 = vmatprep.subr.bf16.mxu0 %v6574
  %7085 = vmatpush1.bf16.msra.mxu0 %v6573
  %7086 = vmatprep.subr.bf16.mxu0 %v6580
  %7087 = vmatpush1.bf16.msra.mxu0 %v6579
  %7088 = vmatprep.subr.bf16.mxu0 %v6586
  %7089 = vmatpush1.bf16.msra.mxu0 %v6585
  %7090 = vmatprep.subr.bf16.mxu0 %v6592
  %7091 = vmatpush1.bf16.msra.mxu0 %v6591
  %7092 = vmatprep.subr.bf16.mxu0 %v6598
  %7093 = vmatpush1.bf16.msra.mxu0 %v6597
  %7094 = vmatprep.subr.bf16.mxu0 %v6604
  %7095 = vmatpush1.bf16.msra.mxu0 %v6603
  %7096 = vmatprep.subr.bf16.mxu0 %v6610
  %7097 = vmatpush1.bf16.msra.mxu0 %v6609
  %7098 = vmatprep.subr.bf16.mxu0 %v6616
  %7099 = vmatpush1.bf16.msra.mxu0 %v6615
  %7100 = vmatprep.subr.bf16.mxu0 %v6622
  %7101 = vmatpush1.bf16.msra.mxu0 %v6621
  %7102 = vmatprep.subr.bf16.mxu0 %v6628
  %7103 = vmatpush1.bf16.msra.mxu0 %v6627
  %7104 = vmatprep.subr.bf16.mxu0 %v6634
  %7105 = vmatpush1.bf16.msra.mxu0 %v6633
  %7106 = vmatprep.subr.bf16.mxu0 %v6640
  %7107 = vmatpush1.bf16.msra.mxu0 %v6639
  %7108 = vmatprep.subr.bf16.mxu0 %v6646
  %7109 = vmatpush1.bf16.msra.mxu0 %v6645
  %7110 = vmatprep.mubr.bf16.mxu0 %v5586
  %7111 = vmatmul.mubr.bf16.gmra.mrb[0].mxu0 %v5585
  %v7112 = vpop.f32.mrb[0].mxu0
  %v7113 = vadd.f32 %v7070, %v7112
  %v7114 = vpop.f32.mrb[0].mxu0
  %v7115 = vadd.f32 %v7072, %v7114
  %v7116 = vpop.f32.mrb[0].mxu0
  %v7117 = vadd.f32 %v7074, %v7116
  %v7118 = vpop.f32.mrb[0].mxu0
  %v7119 = vadd.f32 %v7076, %v7118
  %7120 = vdwg.mxu0
  %7121 = vmatprep.subr.bf16.mxu0 %v6652
  %7122 = vmatpush1.bf16.msra.mxu0 %v6651
  %7123 = vmatprep.subr.bf16.mxu0 %v6658
  %7124 = vmatpush1.bf16.msra.mxu0 %v6657
  %7125 = vmatprep.subr.bf16.mxu0 %v6664
  %7126 = vmatpush1.bf16.msra.mxu0 %v6663
  %7127 = vmatprep.subr.bf16.mxu0 %v6670
  %7128 = vmatpush1.bf16.msra.mxu0 %v6669
  %7129 = vmatprep.subr.bf16.mxu0 %v6676
  %7130 = vmatpush1.bf16.msra.mxu0 %v6675
  %7131 = vmatprep.subr.bf16.mxu0 %v6682
  %7132 = vmatpush1.bf16.msra.mxu0 %v6681
  %7133 = vmatprep.subr.bf16.mxu0 %v6688
  %7134 = vmatpush1.bf16.msra.mxu0 %v6687
  %7135 = vmatprep.subr.bf16.mxu0 %v6694
  %7136 = vmatpush1.bf16.msra.mxu0 %v6693
  %7137 = vmatprep.subr.bf16.mxu0 %v6700
  %7138 = vmatpush1.bf16.msra.mxu0 %v6699
  %7139 = vmatprep.subr.bf16.mxu0 %v6706
  %7140 = vmatpush1.bf16.msra.mxu0 %v6705
  %7141 = vmatprep.subr.bf16.mxu0 %v6712
  %7142 = vmatpush1.bf16.msra.mxu0 %v6711
  %7143 = vmatprep.subr.bf16.mxu0 %v6718
  %7144 = vmatpush1.bf16.msra.mxu0 %v6717
  %7145 = vmatprep.subr.bf16.mxu0 %v6724
  %7146 = vmatpush1.bf16.msra.mxu0 %v6723
  %7147 = vmatprep.subr.bf16.mxu0 %v6730
  %7148 = vmatpush1.bf16.msra.mxu0 %v6729
  %7149 = vmatprep.subr.bf16.mxu0 %v6736
  %7150 = vmatpush1.bf16.msra.mxu0 %v6735
  %7151 = vmatprep.subr.bf16.mxu0 %v6742
  %7152 = vmatpush1.bf16.msra.mxu0 %v6741
  %7153 = vmatprep.mubr.bf16.mxu0 %v5588
  %7154 = vmatmul.mubr.bf16.gmra.mrb[0].mxu0 %v5587
  %v7155 = vpop.f32.mrb[0].mxu0
  %v7156 = vadd.f32 %v7113, %v7155
  %v7157 = vpop.f32.mrb[0].mxu0
  %v7158 = vadd.f32 %v7115, %v7157
  %v7159 = vpop.f32.mrb[0].mxu0
  %v7160 = vadd.f32 %v7117, %v7159
  %v7161 = vpop.f32.mrb[0].mxu0
  %v7162 = vadd.f32 %v7119, %v7161
  %7163 = vdwg.mxu0
  %7164 = vmatprep.subr.bf16.mxu0 %v6462
  %7165 = vmatpush1.bf16.msra.mxu0 %v6461
  %7166 = vmatprep.subr.bf16.mxu0 %v6468
  %7167 = vmatpush1.bf16.msra.mxu0 %v6467
  %7168 = vmatprep.subr.bf16.mxu0 %v6474
  %7169 = vmatpush1.bf16.msra.mxu0 %v6473
  %7170 = vmatprep.subr.bf16.mxu0 %v6480
  %7171 = vmatpush1.bf16.msra.mxu0 %v6479
  %7172 = vmatprep.subr.bf16.mxu0 %v6486
  %7173 = vmatpush1.bf16.msra.mxu0 %v6485
  %7174 = vmatprep.subr.bf16.mxu0 %v6492
  %7175 = vmatpush1.bf16.msra.mxu0 %v6491
  %7176 = vmatprep.subr.bf16.mxu0 %v6498
  %7177 = vmatpush1.bf16.msra.mxu0 %v6497
  %7178 = vmatprep.subr.bf16.mxu0 %v6504
  %7179 = vmatpush1.bf16.msra.mxu0 %v6503
  %7180 = vmatprep.subr.bf16.mxu0 %v6510
  %7181 = vmatpush1.bf16.msra.mxu0 %v6509
  %7182 = vmatprep.subr.bf16.mxu0 %v6516
  %7183 = vmatpush1.bf16.msra.mxu0 %v6515
  %7184 = vmatprep.subr.bf16.mxu0 %v6522
  %7185 = vmatpush1.bf16.msra.mxu0 %v6521
  %7186 = vmatprep.subr.bf16.mxu0 %v6528
  %7187 = vmatpush1.bf16.msra.mxu0 %v6527
  %7188 = vmatprep.subr.bf16.mxu0 %v6534
  %7189 = vmatpush1.bf16.msra.mxu0 %v6533
  %7190 = vmatprep.subr.bf16.mxu0 %v6540
  %7191 = vmatpush1.bf16.msra.mxu0 %v6539
  %7192 = vmatprep.subr.bf16.mxu0 %v6546
  %7193 = vmatpush1.bf16.msra.mxu0 %v6545
  %7194 = vmatprep.subr.bf16.mxu0 %v6552
  %7195 = vmatpush1.bf16.msra.mxu0 %v6551
  %7196 = vmatprep.mubr.bf16.mxu0 %v5584
  %7197 = vmatmul.mubr.bf16.gmra.mrb[0].mxu0 %v5583
  %v7198 = vpop.f32.mrb[0].mxu0
  %v7199 = vadd.f32 0.0, %v7198
  %v7200 = vpop.f32.mrb[0].mxu0
  %v7201 = vadd.f32 0.0, %v7200
  %v7202 = vpop.f32.mrb[0].mxu0
  %v7203 = vadd.f32 0.0, %v7202
  %v7204 = vpop.f32.mrb[0].mxu0
  %v7205 = vadd.f32 0.0, %v7204
  %7206 = vdwg.mxu0
  %7207 = vmatprep.subr.bf16.mxu0 %v6558
  %7208 = vmatpush1.bf16.msra.mxu0 %v6557
  %7209 = vmatprep.subr.bf16.mxu0 %v6564
  %7210 = vmatpush1.bf16.msra.mxu0 %v6563
  %7211 = vmatprep.subr.bf16.mxu0 %v6570
  %7212 = vmatpush1.bf16.msra.mxu0 %v6569
  %7213 = vmatprep.subr.bf16.mxu0 %v6576
  %7214 = vmatpush1.bf16.msra.mxu0 %v6575
  %7215 = vmatprep.subr.bf16.mxu0 %v6582
  %7216 = vmatpush1.bf16.msra.mxu0 %v6581
  %7217 = vmatprep.subr.bf16.mxu0 %v6588
  %7218 = vmatpush1.bf16.msra.mxu0 %v6587
  %7219 = vmatprep.subr.bf16.mxu0 %v6594
  %7220 = vmatpush1.bf16.msra.mxu0 %v6593
  %7221 = vmatprep.subr.bf16.mxu0 %v6600
  %7222 = vmatpush1.bf16.msra.mxu0 %v6599
  %7223 = vmatprep.subr.bf16.mxu0 %v6606
  %7224 = vmatpush1.bf16.msra.mxu0 %v6605
  %7225 = vmatprep.subr.bf16.mxu0 %v6612
  %7226 = vmatpush1.bf16.msra.mxu0 %v6611
  %7227 = vmatprep.subr.bf16.mxu0 %v6618
  %7228 = vmatpush1.bf16.msra.mxu0 %v6617
  %7229 = vmatprep.subr.bf16.mxu0 %v6624
  %7230 = vmatpush1.bf16.msra.mxu0 %v6623
  %7231 = vmatprep.subr.bf16.mxu0 %v6630
  %7232 = vmatpush1.bf16.msra.mxu0 %v6629
  %7233 = vmatprep.subr.bf16.mxu0 %v6636
  %7234 = vmatpush1.bf16.msra.mxu0 %v6635
  %7235 = vmatprep.subr.bf16.mxu0 %v6642
  %7236 = vmatpush1.bf16.msra.mxu0 %v6641
  %7237 = vmatprep.subr.bf16.mxu0 %v6648
  %7238 = vmatpush1.bf16.msra.mxu0 %v6647
  %7239 = vmatprep.mubr.bf16.mxu0 %v5586
  %7240 = vmatmul.mubr.bf16.gmra.mrb[0].mxu0 %v5585
  %v7241 = vpop.f32.mrb[0].mxu0
  %v7242 = vadd.f32 %v7199, %v7241
  %v7243 = vpop.f32.mrb[0].mxu0
  %v7244 = vadd.f32 %v7201, %v7243
  %v7245 = vpop.f32.mrb[0].mxu0
  %v7246 = vadd.f32 %v7203, %v7245
  %v7247 = vpop.f32.mrb[0].mxu0
  %v7248 = vadd.f32 %v7205, %v7247
  %7249 = vdwg.mxu0
  %7250 = vmatprep.subr.bf16.mxu0 %v6654
  %7251 = vmatpush1.bf16.msra.mxu0 %v6653
  %7252 = vmatprep.subr.bf16.mxu0 %v6660
  %7253 = vmatpush1.bf16.msra.mxu0 %v6659
  %7254 = vmatprep.subr.bf16.mxu0 %v6666
  %7255 = vmatpush1.bf16.msra.mxu0 %v6665
  %7256 = vmatprep.subr.bf16.mxu0 %v6672
  %7257 = vmatpush1.bf16.msra.mxu0 %v6671
  %7258 = vmatprep.subr.bf16.mxu0 %v6678
  %7259 = vmatpush1.bf16.msra.mxu0 %v6677
  %7260 = vmatprep.subr.bf16.mxu0 %v6684
  %7261 = vmatpush1.bf16.msra.mxu0 %v6683
  %7262 = vmatprep.subr.bf16.mxu0 %v6690
  %7263 = vmatpush1.bf16.msra.mxu0 %v6689
  %7264 = vmatprep.subr.bf16.mxu0 %v6696
  %7265 = vmatpush1.bf16.msra.mxu0 %v6695
  %7266 = vmatprep.subr.bf16.mxu0 %v6702
  %7267 = vmatpush1.bf16.msra.mxu0 %v6701
  %7268 = vmatprep.subr.bf16.mxu0 %v6708
  %7269 = vmatpush1.bf16.msra.mxu0 %v6707
  %7270 = vmatprep.subr.bf16.mxu0 %v6714
  %7271 = vmatpush1.bf16.msra.mxu0 %v6713
  %7272 = vmatprep.subr.bf16.mxu0 %v6720
  %7273 = vmatpush1.bf16.msra.mxu0 %v6719
  %7274 = vmatprep.subr.bf16.mxu0 %v6726
  %7275 = vmatpush1.bf16.msra.mxu0 %v6725
  %7276 = vmatprep.subr.bf16.mxu0 %v6732
  %7277 = vmatpush1.bf16.msra.mxu0 %v6731
  %7278 = vmatprep.subr.bf16.mxu0 %v6738
  %7279 = vmatpush1.bf16.msra.mxu0 %v6737
  %7280 = vmatprep.subr.bf16.mxu0 %v6744
  %7281 = vmatpush1.bf16.msra.mxu0 %v6743
  %7282 = vmatprep.mubr.bf16.mxu0 %v5588
  %7283 = vmatmul.mubr.bf16.gmra.mrb[0].mxu0 %v5587
  %v7284 = vpop.f32.mrb[0].mxu0
  %v7285 = vadd.f32 %v7242, %v7284
  %v7286 = vpop.f32.mrb[0].mxu0
  %v7287 = vadd.f32 %v7244, %v7286
  %v7288 = vpop.f32.mrb[0].mxu0
  %v7289 = vadd.f32 %v7246, %v7288
  %v7290 = vpop.f32.mrb[0].mxu0
  %v7291 = vadd.f32 %v7248, %v7290
  %7292 = vdwg.mxu0
  %7293 = vmatprep.subr.bf16.mxu0 %v6464
  %7294 = vmatpush1.bf16.msra.mxu0 %v6463
  %7295 = vmatprep.subr.bf16.mxu0 %v6470
  %7296 = vmatpush1.bf16.msra.mxu0 %v6469
  %7297 = vmatprep.subr.bf16.mxu0 %v6476
  %7298 = vmatpush1.bf16.msra.mxu0 %v6475
  %7299 = vmatprep.subr.bf16.mxu0 %v6482
  %7300 = vmatpush1.bf16.msra.mxu0 %v6481
  %7301 = vmatprep.subr.bf16.mxu0 %v6488
  %7302 = vmatpush1.bf16.msra.mxu0 %v6487
  %7303 = vmatprep.subr.bf16.mxu0 %v6494
  %7304 = vmatpush1.bf16.msra.mxu0 %v6493
  %7305 = vmatprep.subr.bf16.mxu0 %v6500
  %7306 = vmatpush1.bf16.msra.mxu0 %v6499
  %7307 = vmatprep.subr.bf16.mxu0 %v6506
  %7308 = vmatpush1.bf16.msra.mxu0 %v6505
  %7309 = vmatprep.subr.bf16.mxu0 %v6512
  %7310 = vmatpush1.bf16.msra.mxu0 %v6511
  %7311 = vmatprep.subr.bf16.mxu0 %v6518
  %7312 = vmatpush1.bf16.msra.mxu0 %v6517
  %7313 = vmatprep.subr.bf16.mxu0 %v6524
  %7314 = vmatpush1.bf16.msra.mxu0 %v6523
  %7315 = vmatprep.subr.bf16.mxu0 %v6530
  %7316 = vmatpush1.bf16.msra.mxu0 %v6529
  %7317 = vmatprep.subr.bf16.mxu0 %v6536
  %7318 = vmatpush1.bf16.msra.mxu0 %v6535
  %7319 = vmatprep.subr.bf16.mxu0 %v6542
  %7320 = vmatpush1.bf16.msra.mxu0 %v6541
  %7321 = vmatprep.subr.bf16.mxu0 %v6548
  %7322 = vmatpush1.bf16.msra.mxu0 %v6547
  %7323 = vmatprep.subr.bf16.mxu0 %v6554
  %7324 = vmatpush1.bf16.msra.mxu0 %v6553
  %7325 = vmatprep.mubr.bf16.mxu0 %v5584
  %7326 = vmatmul.mubr.bf16.gmra.mrb[0].mxu0 %v5583
  %v7327 = vpop.f32.mrb[0].mxu0
  %v7328 = vadd.f32 0.0, %v7327
  %v7329 = vpop.f32.mrb[0].mxu0
  %v7330 = vadd.f32 0.0, %v7329
  %v7331 = vpop.f32.mrb[0].mxu0
  %v7332 = vadd.f32 0.0, %v7331
  %v7333 = vpop.f32.mrb[0].mxu0
  %v7334 = vadd.f32 0.0, %v7333
  %7335 = vdwg.mxu0
  %7336 = vmatprep.subr.bf16.mxu0 %v6560
  %7337 = vmatpush1.bf16.msra.mxu0 %v6559
  %7338 = vmatprep.subr.bf16.mxu0 %v6566
  %7339 = vmatpush1.bf16.msra.mxu0 %v6565
  %7340 = vmatprep.subr.bf16.mxu0 %v6572
  %7341 = vmatpush1.bf16.msra.mxu0 %v6571
  %7342 = vmatprep.subr.bf16.mxu0 %v6578
  %7343 = vmatpush1.bf16.msra.mxu0 %v6577
  %7344 = vmatprep.subr.bf16.mxu0 %v6584
  %7345 = vmatpush1.bf16.msra.mxu0 %v6583
  %7346 = vmatprep.subr.bf16.mxu0 %v6590
  %7347 = vmatpush1.bf16.msra.mxu0 %v6589
  %7348 = vmatprep.subr.bf16.mxu0 %v6596
  %7349 = vmatpush1.bf16.msra.mxu0 %v6595
  %7350 = vmatprep.subr.bf16.mxu0 %v6602
  %7351 = vmatpush1.bf16.msra.mxu0 %v6601
  %7352 = vmatprep.subr.bf16.mxu0 %v6608
  %7353 = vmatpush1.bf16.msra.mxu0 %v6607
  %7354 = vmatprep.subr.bf16.mxu0 %v6614
  %7355 = vmatpush1.bf16.msra.mxu0 %v6613
  %7356 = vmatprep.subr.bf16.mxu0 %v6620
  %7357 = vmatpush1.bf16.msra.mxu0 %v6619
  %7358 = vmatprep.subr.bf16.mxu0 %v6626
  %7359 = vmatpush1.bf16.msra.mxu0 %v6625
  %7360 = vmatprep.subr.bf16.mxu0 %v6632
  %7361 = vmatpush1.bf16.msra.mxu0 %v6631
  %7362 = vmatprep.subr.bf16.mxu0 %v6638
  %7363 = vmatpush1.bf16.msra.mxu0 %v6637
  %7364 = vmatprep.subr.bf16.mxu0 %v6644
  %7365 = vmatpush1.bf16.msra.mxu0 %v6643
  %7366 = vmatprep.subr.bf16.mxu0 %v6650
  %7367 = vmatpush1.bf16.msra.mxu0 %v6649
  %7368 = vmatprep.mubr.bf16.mxu0 %v5586
  %7369 = vmatmul.mubr.bf16.gmra.mrb[0].mxu0 %v5585
  %v7370 = vpop.f32.mrb[0].mxu0
  %v7371 = vadd.f32 %v7328, %v7370
  %v7372 = vpop.f32.mrb[0].mxu0
  %v7373 = vadd.f32 %v7330, %v7372
  %v7374 = vpop.f32.mrb[0].mxu0
  %v7375 = vadd.f32 %v7332, %v7374
  %v7376 = vpop.f32.mrb[0].mxu0
  %v7377 = vadd.f32 %v7334, %v7376
  %7378 = vdwg.mxu0
  %7379 = vmatprep.subr.bf16.mxu0 %v6656
  %7380 = vmatpush1.bf16.msra.mxu0 %v6655
  %7381 = vmatprep.subr.bf16.mxu0 %v6662
  %7382 = vmatpush1.bf16.msra.mxu0 %v6661
  %7383 = vmatprep.subr.bf16.mxu0 %v6668
  %7384 = vmatpush1.bf16.msra.mxu0 %v6667
  %7385 = vmatprep.subr.bf16.mxu0 %v6674
  %7386 = vmatpush1.bf16.msra.mxu0 %v6673
  %7387 = vmatprep.subr.bf16.mxu0 %v6680
  %7388 = vmatpush1.bf16.msra.mxu0 %v6679
  %7389 = vmatprep.subr.bf16.mxu0 %v6686
  %7390 = vmatpush1.bf16.msra.mxu0 %v6685
  %7391 = vmatprep.subr.bf16.mxu0 %v6692
  %7392 = vmatpush1.bf16.msra.mxu0 %v6691
  %7393 = vmatprep.subr.bf16.mxu0 %v6698
  %7394 = vmatpush1.bf16.msra.mxu0 %v6697
  %7395 = vmatprep.subr.bf16.mxu0 %v6704
  %7396 = vmatpush1.bf16.msra.mxu0 %v6703
  %7397 = vmatprep.subr.bf16.mxu0 %v6710
  %7398 = vmatpush1.bf16.msra.mxu0 %v6709
  %7399 = vmatprep.subr.bf16.mxu0 %v6716
  %7400 = vmatpush1.bf16.msra.mxu0 %v6715
  %7401 = vmatprep.subr.bf16.mxu0 %v6722
  %7402 = vmatpush1.bf16.msra.mxu0 %v6721
  %7403 = vmatprep.subr.bf16.mxu0 %v6728
  %7404 = vmatpush1.bf16.msra.mxu0 %v6727
  %7405 = vmatprep.subr.bf16.mxu0 %v6734
  %7406 = vmatpush1.bf16.msra.mxu0 %v6733
  %7407 = vmatprep.subr.bf16.mxu0 %v6740
  %7408 = vmatpush1.bf16.msra.mxu0 %v6739
  %7409 = vmatprep.subr.bf16.mxu0 %v6746
  %7410 = vmatpush1.bf16.msra.mxu0 %v6745
  %7411 = vmatprep.mubr.bf16.mxu0 %v5588
  %7412 = vmatmul.mubr.bf16.gmra.mrb[0].mxu0 %v5587
  %v7413 = vpop.f32.mrb[0].mxu0
  %v7414 = vadd.f32 %v7371, %v7413
  %v7415 = vpop.f32.mrb[0].mxu0
  %v7416 = vadd.f32 %v7373, %v7415
  %v7417 = vpop.f32.mrb[0].mxu0
  %v7418 = vadd.f32 %v7375, %v7417
  %v7419 = vpop.f32.mrb[0].mxu0
  %v7420 = vadd.f32 %v7377, %v7419
  %7421 = vdwg.mxu0
  %v7422 = vunpack.c.l.b16 %v4877
  %v7423 = vunpack.c.h.b16 %v4877
  %v7424 = vunpack.c.l.b16 %v4891
  %v7425 = vunpack.c.h.b16 %v4891
  %v7426 = vunpack.c.l.b16 %v4905
  %v7427 = vunpack.c.h.b16 %v4905
  %v7428 = vunpack.c.l.b16 %v4919
  %v7429 = vunpack.c.h.b16 %v4919
  %v7430 = vunpack.c.l.b16 %v4933
  %v7431 = vunpack.c.h.b16 %v4933
  %v7432 = vunpack.c.l.b16 %v4947
  %v7433 = vunpack.c.h.b16 %v4947
  %v7434 = vpack.c.b16 %v7428, %v7422
  %v7435 = vpack.c.b16 %v7429, %v7423
  %v7436 = vpack.c.b16 %v7430, %v7424
  %v7437 = vpack.c.b16 %v7431, %v7425
  %v7438 = vpack.c.b16 %v7432, %v7426
  %v7439 = vpack.c.b16 %v7433, %v7427
  %v7734 = vunpack.c.l.b16 %v4949
  %v7735 = vunpack.c.h.b16 %v4949
  %v7736 = vunpack.c.l.b16 %v4950
  %v7737 = vunpack.c.h.b16 %v4950
  %v7738 = vunpack.c.l.b16 %v4951
  %v7739 = vunpack.c.h.b16 %v4951
  %v7740 = vunpack.c.l.b16 %v4952
  %v7741 = vunpack.c.h.b16 %v4952
  %v7742 = vunpack.c.l.b16 %v4953
  %v7743 = vunpack.c.h.b16 %v4953
  %v7744 = vunpack.c.l.b16 %v4954
  %v7745 = vunpack.c.h.b16 %v4954
  %v7746 = vunpack.c.l.b16 %v4955
  %v7747 = vunpack.c.h.b16 %v4955
  %v7748 = vunpack.c.l.b16 %v4956
  %v7749 = vunpack.c.h.b16 %v4956
  %v7750 = vunpack.c.l.b16 %v4957
  %v7751 = vunpack.c.h.b16 %v4957
  %v7752 = vunpack.c.l.b16 %v4958
  %v7753 = vunpack.c.h.b16 %v4958
  %v7754 = vunpack.c.l.b16 %v4959
  %v7755 = vunpack.c.h.b16 %v4959
  %v7756 = vunpack.c.l.b16 %v4960
  %v7757 = vunpack.c.h.b16 %v4960
  %v7758 = vunpack.c.l.b16 %v4961
  %v7759 = vunpack.c.h.b16 %v4961
  %v7760 = vunpack.c.l.b16 %v4962
  %v7761 = vunpack.c.h.b16 %v4962
  %v7762 = vunpack.c.l.b16 %v4963
  %v7763 = vunpack.c.h.b16 %v4963
  %v7764 = vunpack.c.l.b16 %v4964
  %v7765 = vunpack.c.h.b16 %v4964
  %v7766 = vunpack.c.l.b16 %v4965
  %v7767 = vunpack.c.h.b16 %v4965
  %v7768 = vunpack.c.l.b16 %v4966
  %v7769 = vunpack.c.h.b16 %v4966
  %v7770 = vunpack.c.l.b16 %v4967
  %v7771 = vunpack.c.h.b16 %v4967
  %v7772 = vunpack.c.l.b16 %v4968
  %v7773 = vunpack.c.h.b16 %v4968
  %v7774 = vunpack.c.l.b16 %v4969
  %v7775 = vunpack.c.h.b16 %v4969
  %v7776 = vunpack.c.l.b16 %v4970
  %v7777 = vunpack.c.h.b16 %v4970
  %v7778 = vunpack.c.l.b16 %v4971
  %v7779 = vunpack.c.h.b16 %v4971
  %v7780 = vunpack.c.l.b16 %v4972
  %v7781 = vunpack.c.h.b16 %v4972
  %v7782 = vunpack.c.l.b16 %v4973
  %v7783 = vunpack.c.h.b16 %v4973
  %v7784 = vunpack.c.l.b16 %v4974
  %v7785 = vunpack.c.h.b16 %v4974
  %v7786 = vunpack.c.l.b16 %v4975
  %v7787 = vunpack.c.h.b16 %v4975
  %v7788 = vunpack.c.l.b16 %v4976
  %v7789 = vunpack.c.h.b16 %v4976
  %v7790 = vunpack.c.l.b16 %v4977
  %v7791 = vunpack.c.h.b16 %v4977
  %v7792 = vunpack.c.l.b16 %v4978
  %v7793 = vunpack.c.h.b16 %v4978
  %v7794 = vunpack.c.l.b16 %v4979
  %v7795 = vunpack.c.h.b16 %v4979
  %v7796 = vunpack.c.l.b16 %v4980
  %v7797 = vunpack.c.h.b16 %v4980
  %v7798 = vunpack.c.l.b16 %v4981
  %v7799 = vunpack.c.h.b16 %v4981
  %v7800 = vunpack.c.l.b16 %v4982
  %v7801 = vunpack.c.h.b16 %v4982
  %v7802 = vunpack.c.l.b16 %v4983
  %v7803 = vunpack.c.h.b16 %v4983
  %v7804 = vunpack.c.l.b16 %v4984
  %v7805 = vunpack.c.h.b16 %v4984
  %v7806 = vunpack.c.l.b16 %v4985
  %v7807 = vunpack.c.h.b16 %v4985
  %v7808 = vunpack.c.l.b16 %v4986
  %v7809 = vunpack.c.h.b16 %v4986
  %v7810 = vunpack.c.l.b16 %v4987
  %v7811 = vunpack.c.h.b16 %v4987
  %v7812 = vunpack.c.l.b16 %v4988
  %v7813 = vunpack.c.h.b16 %v4988
  %v7814 = vunpack.c.l.b16 %v4989
  %v7815 = vunpack.c.h.b16 %v4989
  %v7816 = vunpack.c.l.b16 %v4990
  %v7817 = vunpack.c.h.b16 %v4990
  %v7818 = vunpack.c.l.b16 %v4991
  %v7819 = vunpack.c.h.b16 %v4991
  %v7820 = vunpack.c.l.b16 %v4992
  %v7821 = vunpack.c.h.b16 %v4992
  %v7822 = vunpack.c.l.b16 %v4993
  %v7823 = vunpack.c.h.b16 %v4993
  %v7824 = vunpack.c.l.b16 %v4994
  %v7825 = vunpack.c.h.b16 %v4994
  %v7826 = vunpack.c.l.b16 %v4995
  %v7827 = vunpack.c.h.b16 %v4995
  %v7828 = vunpack.c.l.b16 %v4996
  %v7829 = vunpack.c.h.b16 %v4996
  %v7830 = vunpack.c.l.b16 %v4997
  %v7831 = vunpack.c.h.b16 %v4997
  %v7832 = vunpack.c.l.b16 %v4998
  %v7833 = vunpack.c.h.b16 %v4998
  %v7834 = vunpack.c.l.b16 %v4999
  %v7835 = vunpack.c.h.b16 %v4999
  %v7836 = vunpack.c.l.b16 %v5000
  %v7837 = vunpack.c.h.b16 %v5000
  %v7838 = vunpack.c.l.b16 %v5001
  %v7839 = vunpack.c.h.b16 %v5001
  %v7840 = vunpack.c.l.b16 %v5002
  %v7841 = vunpack.c.h.b16 %v5002
  %v7842 = vunpack.c.l.b16 %v5003
  %v7843 = vunpack.c.h.b16 %v5003
  %v7844 = vunpack.c.l.b16 %v5004
  %v7845 = vunpack.c.h.b16 %v5004
  %v7846 = vunpack.c.l.b16 %v5005
  %v7847 = vunpack.c.h.b16 %v5005
  %v7848 = vunpack.c.l.b16 %v5006
  %v7849 = vunpack.c.h.b16 %v5006
  %v7850 = vunpack.c.l.b16 %v5007
  %v7851 = vunpack.c.h.b16 %v5007
  %v7852 = vunpack.c.l.b16 %v5008
  %v7853 = vunpack.c.h.b16 %v5008
  %v7854 = vunpack.c.l.b16 %v5009
  %v7855 = vunpack.c.h.b16 %v5009
  %v7856 = vunpack.c.l.b16 %v5010
  %v7857 = vunpack.c.h.b16 %v5010
  %v7858 = vunpack.c.l.b16 %v5011
  %v7859 = vunpack.c.h.b16 %v5011
  %v7860 = vunpack.c.l.b16 %v5012
  %v7861 = vunpack.c.h.b16 %v5012
  %v7862 = vunpack.c.l.b16 %v5013
  %v7863 = vunpack.c.h.b16 %v5013
  %v7864 = vunpack.c.l.b16 %v5014
  %v7865 = vunpack.c.h.b16 %v5014
  %v7866 = vunpack.c.l.b16 %v5015
  %v7867 = vunpack.c.h.b16 %v5015
  %v7868 = vunpack.c.l.b16 %v5016
  %v7869 = vunpack.c.h.b16 %v5016
  %v7870 = vunpack.c.l.b16 %v5017
  %v7871 = vunpack.c.h.b16 %v5017
  %v7872 = vunpack.c.l.b16 %v5018
  %v7873 = vunpack.c.h.b16 %v5018
  %v7874 = vunpack.c.l.b16 %v5019
  %v7875 = vunpack.c.h.b16 %v5019
  %v7876 = vunpack.c.l.b16 %v5020
  %v7877 = vunpack.c.h.b16 %v5020
  %v7878 = vunpack.c.l.b16 %v5021
  %v7879 = vunpack.c.h.b16 %v5021
  %v7880 = vunpack.c.l.b16 %v5022
  %v7881 = vunpack.c.h.b16 %v5022
  %v7882 = vunpack.c.l.b16 %v5023
  %v7883 = vunpack.c.h.b16 %v5023
  %v7884 = vunpack.c.l.b16 %v5024
  %v7885 = vunpack.c.h.b16 %v5024
  %v7886 = vunpack.c.l.b16 %v5025
  %v7887 = vunpack.c.h.b16 %v5025
  %v7888 = vunpack.c.l.b16 %v5026
  %v7889 = vunpack.c.h.b16 %v5026
  %v7890 = vunpack.c.l.b16 %v5027
  %v7891 = vunpack.c.h.b16 %v5027
  %v7892 = vunpack.c.l.b16 %v5028
  %v7893 = vunpack.c.h.b16 %v5028
  %v7894 = vunpack.c.l.b16 %v5029
  %v7895 = vunpack.c.h.b16 %v5029
  %v7896 = vunpack.c.l.b16 %v5030
  %v7897 = vunpack.c.h.b16 %v5030
  %v7898 = vunpack.c.l.b16 %v5031
  %v7899 = vunpack.c.h.b16 %v5031
  %v7900 = vunpack.c.l.b16 %v5032
  %v7901 = vunpack.c.h.b16 %v5032
  %v7902 = vunpack.c.l.b16 %v5033
  %v7903 = vunpack.c.h.b16 %v5033
  %v7904 = vunpack.c.l.b16 %v5034
  %v7905 = vunpack.c.h.b16 %v5034
  %v7906 = vunpack.c.l.b16 %v5035
  %v7907 = vunpack.c.h.b16 %v5035
  %v7908 = vunpack.c.l.b16 %v5036
  %v7909 = vunpack.c.h.b16 %v5036
  %v7910 = vunpack.c.l.b16 %v5037
  %v7911 = vunpack.c.h.b16 %v5037
  %v7912 = vunpack.c.l.b16 %v5038
  %v7913 = vunpack.c.h.b16 %v5038
  %v7914 = vunpack.c.l.b16 %v5039
  %v7915 = vunpack.c.h.b16 %v5039
  %v7916 = vunpack.c.l.b16 %v5040
  %v7917 = vunpack.c.h.b16 %v5040
  %v7918 = vunpack.c.l.b16 %v5041
  %v7919 = vunpack.c.h.b16 %v5041
  %v7920 = vunpack.c.l.b16 %v5042
  %v7921 = vunpack.c.h.b16 %v5042
  %v7922 = vunpack.c.l.b16 %v5043
  %v7923 = vunpack.c.h.b16 %v5043
  %v7924 = vunpack.c.l.b16 %v5044
  %v7925 = vunpack.c.h.b16 %v5044
  %v7926 = vunpack.c.l.b16 %v5045
  %v7927 = vunpack.c.h.b16 %v5045
  %v7928 = vunpack.c.l.b16 %v5046
  %v7929 = vunpack.c.h.b16 %v5046
  %v7930 = vunpack.c.l.b16 %v5047
  %v7931 = vunpack.c.h.b16 %v5047
  %v7932 = vunpack.c.l.b16 %v5048
  %v7933 = vunpack.c.h.b16 %v5048
  %v7934 = vunpack.c.l.b16 %v5049
  %v7935 = vunpack.c.h.b16 %v5049
  %v7936 = vunpack.c.l.b16 %v5050
  %v7937 = vunpack.c.h.b16 %v5050
  %v7938 = vunpack.c.l.b16 %v5051
  %v7939 = vunpack.c.h.b16 %v5051
  %v7940 = vunpack.c.l.b16 %v5052
  %v7941 = vunpack.c.h.b16 %v5052
  %v7942 = vunpack.c.l.b16 %v5053
  %v7943 = vunpack.c.h.b16 %v5053
  %v7944 = vunpack.c.l.b16 %v5054
  %v7945 = vunpack.c.h.b16 %v5054
  %v7946 = vunpack.c.l.b16 %v5055
  %v7947 = vunpack.c.h.b16 %v5055
  %v7948 = vunpack.c.l.b16 %v5056
  %v7949 = vunpack.c.h.b16 %v5056
  %v7950 = vunpack.c.l.b16 %v5057
  %v7951 = vunpack.c.h.b16 %v5057
  %v7952 = vunpack.c.l.b16 %v5058
  %v7953 = vunpack.c.h.b16 %v5058
  %v7954 = vunpack.c.l.b16 %v5059
  %v7955 = vunpack.c.h.b16 %v5059
  %v7956 = vunpack.c.l.b16 %v5060
  %v7957 = vunpack.c.h.b16 %v5060
  %v7958 = vunpack.c.l.b16 %v5061
  %v7959 = vunpack.c.h.b16 %v5061
  %v7960 = vunpack.c.l.b16 %v5062
  %v7961 = vunpack.c.h.b16 %v5062
  %v7962 = vunpack.c.l.b16 %v5063
  %v7963 = vunpack.c.h.b16 %v5063
  %v7964 = vunpack.c.l.b16 %v5064
  %v7965 = vunpack.c.h.b16 %v5064
  %v7966 = vunpack.c.l.b16 %v5065
  %v7967 = vunpack.c.h.b16 %v5065
  %v7968 = vunpack.c.l.b16 %v5066
  %v7969 = vunpack.c.h.b16 %v5066
  %v7970 = vunpack.c.l.b16 %v5067
  %v7971 = vunpack.c.h.b16 %v5067
  %v7972 = vunpack.c.l.b16 %v5068
  %v7973 = vunpack.c.h.b16 %v5068
  %v7974 = vunpack.c.l.b16 %v5069
  %v7975 = vunpack.c.h.b16 %v5069
  %v7976 = vunpack.c.l.b16 %v5070
  %v7977 = vunpack.c.h.b16 %v5070
  %v7978 = vunpack.c.l.b16 %v5071
  %v7979 = vunpack.c.h.b16 %v5071
  %v7980 = vunpack.c.l.b16 %v5072
  %v7981 = vunpack.c.h.b16 %v5072
  %v7982 = vunpack.c.l.b16 %v5073
  %v7983 = vunpack.c.h.b16 %v5073
  %v7984 = vunpack.c.l.b16 %v5074
  %v7985 = vunpack.c.h.b16 %v5074
  %v7986 = vunpack.c.l.b16 %v5075
  %v7987 = vunpack.c.h.b16 %v5075
  %v7988 = vunpack.c.l.b16 %v5076
  %v7989 = vunpack.c.h.b16 %v5076
  %v7990 = vunpack.c.l.b16 %v5077
  %v7991 = vunpack.c.h.b16 %v5077
  %v7992 = vunpack.c.l.b16 %v5078
  %v7993 = vunpack.c.h.b16 %v5078
  %v7994 = vunpack.c.l.b16 %v5079
  %v7995 = vunpack.c.h.b16 %v5079
  %v7996 = vunpack.c.l.b16 %v5080
  %v7997 = vunpack.c.h.b16 %v5080
  %v7998 = vunpack.c.l.b16 %v5081
  %v7999 = vunpack.c.h.b16 %v5081
  %v8000 = vunpack.c.l.b16 %v5082
  %v8001 = vunpack.c.h.b16 %v5082
  %v8002 = vunpack.c.l.b16 %v5083
  %v8003 = vunpack.c.h.b16 %v5083
  %v8004 = vunpack.c.l.b16 %v5084
  %v8005 = vunpack.c.h.b16 %v5084
  %v8006 = vunpack.c.l.b16 %v5085
  %v8007 = vunpack.c.h.b16 %v5085
  %v8008 = vunpack.c.l.b16 %v5086
  %v8009 = vunpack.c.h.b16 %v5086
  %v8010 = vunpack.c.l.b16 %v5087
  %v8011 = vunpack.c.h.b16 %v5087
  %v8012 = vunpack.c.l.b16 %v5088
  %v8013 = vunpack.c.h.b16 %v5088
  %v8014 = vunpack.c.l.b16 %v5089
  %v8015 = vunpack.c.h.b16 %v5089
  %v8016 = vunpack.c.l.b16 %v5090
  %v8017 = vunpack.c.h.b16 %v5090
  %v8018 = vunpack.c.l.b16 %v5091
  %v8019 = vunpack.c.h.b16 %v5091
  %v8020 = vunpack.c.l.b16 %v5092
  %v8021 = vunpack.c.h.b16 %v5092
  %v8022 = vunpack.c.l.b16 %v5093
  %v8023 = vunpack.c.h.b16 %v5093
  %v8024 = vunpack.c.l.b16 %v5094
  %v8025 = vunpack.c.h.b16 %v5094
  %v8026 = vunpack.c.l.b16 %v5095
  %v8027 = vunpack.c.h.b16 %v5095
  %v8028 = vunpack.c.l.b16 %v5096
  %v8029 = vunpack.c.h.b16 %v5096
  %v8030 = vunpack.c.l.b16 %v5097
  %v8031 = vunpack.c.h.b16 %v5097
  %v8032 = vunpack.c.l.b16 %v5098
  %v8033 = vunpack.c.h.b16 %v5098
  %v8034 = vunpack.c.l.b16 %v5099
  %v8035 = vunpack.c.h.b16 %v5099
  %v8036 = vunpack.c.l.b16 %v5100
  %v8037 = vunpack.c.h.b16 %v5100
  %v8038 = vunpack.c.l.b16 %v5101
  %v8039 = vunpack.c.h.b16 %v5101
  %v8040 = vunpack.c.l.b16 %v5102
  %v8041 = vunpack.c.h.b16 %v5102
  %v8042 = vunpack.c.l.b16 %v5103
  %v8043 = vunpack.c.h.b16 %v5103
  %v8044 = vunpack.c.l.b16 %v5104
  %v8045 = vunpack.c.h.b16 %v5104
  %v8046 = vunpack.c.l.b16 %v5105
  %v8047 = vunpack.c.h.b16 %v5105
  %v8048 = vunpack.c.l.b16 %v5106
  %v8049 = vunpack.c.h.b16 %v5106
  %v8050 = vunpack.c.l.b16 %v5107
  %v8051 = vunpack.c.h.b16 %v5107
  %v8052 = vunpack.c.l.b16 %v5108
  %v8053 = vunpack.c.h.b16 %v5108
  %v8054 = vunpack.c.l.b16 %v5109
  %v8055 = vunpack.c.h.b16 %v5109
  %v8056 = vunpack.c.l.b16 %v5110
  %v8057 = vunpack.c.h.b16 %v5110
  %v8058 = vunpack.c.l.b16 %v5111
  %v8059 = vunpack.c.h.b16 %v5111
  %v8060 = vunpack.c.l.b16 %v5112
  %v8061 = vunpack.c.h.b16 %v5112
  %v8062 = vunpack.c.l.b16 %v5113
  %v8063 = vunpack.c.h.b16 %v5113
  %v8064 = vunpack.c.l.b16 %v5114
  %v8065 = vunpack.c.h.b16 %v5114
  %v8066 = vunpack.c.l.b16 %v5115
  %v8067 = vunpack.c.h.b16 %v5115
  %v8068 = vunpack.c.l.b16 %v5116
  %v8069 = vunpack.c.h.b16 %v5116
  %v8070 = vunpack.c.l.b16 %v5117
  %v8071 = vunpack.c.h.b16 %v5117
  %v8072 = vunpack.c.l.b16 %v5118
  %v8073 = vunpack.c.h.b16 %v5118
  %v8074 = vunpack.c.l.b16 %v5119
  %v8075 = vunpack.c.h.b16 %v5119
  %v8076 = vunpack.c.l.b16 %v5120
  %v8077 = vunpack.c.h.b16 %v5120
  %v8078 = vunpack.c.l.b16 %v5121
  %v8079 = vunpack.c.h.b16 %v5121
  %v8080 = vunpack.c.l.b16 %v5122
  %v8081 = vunpack.c.h.b16 %v5122
  %v8082 = vunpack.c.l.b16 %v5123
  %v8083 = vunpack.c.h.b16 %v5123
  %v8084 = vunpack.c.l.b16 %v5124
  %v8085 = vunpack.c.h.b16 %v5124
  %v8086 = vunpack.c.l.b16 %v5125
  %v8087 = vunpack.c.h.b16 %v5125
  %v8088 = vunpack.c.l.b16 %v5126
  %v8089 = vunpack.c.h.b16 %v5126
  %v8090 = vunpack.c.l.b16 %v5127
  %v8091 = vunpack.c.h.b16 %v5127
  %v8092 = vunpack.c.l.b16 %v5128
  %v8093 = vunpack.c.h.b16 %v5128
  %v8094 = vunpack.c.l.b16 %v5129
  %v8095 = vunpack.c.h.b16 %v5129
  %v8096 = vunpack.c.l.b16 %v5130
  %v8097 = vunpack.c.h.b16 %v5130
  %v8098 = vunpack.c.l.b16 %v5131
  %v8099 = vunpack.c.h.b16 %v5131
  %v8100 = vunpack.c.l.b16 %v5132
  %v8101 = vunpack.c.h.b16 %v5132
  %v8102 = vunpack.c.l.b16 %v5133
  %v8103 = vunpack.c.h.b16 %v5133
  %v8104 = vunpack.c.l.b16 %v5134
  %v8105 = vunpack.c.h.b16 %v5134
  %v8106 = vunpack.c.l.b16 %v5135
  %v8107 = vunpack.c.h.b16 %v5135
  %v8108 = vunpack.c.l.b16 %v5136
  %v8109 = vunpack.c.h.b16 %v5136
  %v8110 = vunpack.c.l.b16 %v5137
  %v8111 = vunpack.c.h.b16 %v5137
  %v8112 = vunpack.c.l.b16 %v5138
  %v8113 = vunpack.c.h.b16 %v5138
  %v8114 = vunpack.c.l.b16 %v5139
  %v8115 = vunpack.c.h.b16 %v5139
  %v8116 = vunpack.c.l.b16 %v5140
  %v8117 = vunpack.c.h.b16 %v5140
  %v8118 = vunpack.c.l.b16 %v5141
  %v8119 = vunpack.c.h.b16 %v5141
  %v8120 = vunpack.c.l.b16 %v5142
  %v8121 = vunpack.c.h.b16 %v5142
  %v8122 = vunpack.c.l.b16 %v5143
  %v8123 = vunpack.c.h.b16 %v5143
  %v8124 = vunpack.c.l.b16 %v5144
  %v8125 = vunpack.c.h.b16 %v5144
  %v8126 = vunpack.c.l.b16 %v5145
  %v8127 = vunpack.c.h.b16 %v5145
  %v8128 = vunpack.c.l.b16 %v5146
  %v8129 = vunpack.c.h.b16 %v5146
  %v8130 = vunpack.c.l.b16 %v5147
  %v8131 = vunpack.c.h.b16 %v5147
  %v8132 = vunpack.c.l.b16 %v5148
  %v8133 = vunpack.c.h.b16 %v5148
  %v8134 = vunpack.c.l.b16 %v5149
  %v8135 = vunpack.c.h.b16 %v5149
  %v8136 = vunpack.c.l.b16 %v5150
  %v8137 = vunpack.c.h.b16 %v5150
  %v8138 = vunpack.c.l.b16 %v5151
  %v8139 = vunpack.c.h.b16 %v5151
  %v8140 = vunpack.c.l.b16 %v5152
  %v8141 = vunpack.c.h.b16 %v5152
  %v8142 = vunpack.c.l.b16 %v5153
  %v8143 = vunpack.c.h.b16 %v5153
  %v8144 = vunpack.c.l.b16 %v5154
  %v8145 = vunpack.c.h.b16 %v5154
  %v8146 = vunpack.c.l.b16 %v5155
  %v8147 = vunpack.c.h.b16 %v5155
  %v8148 = vunpack.c.l.b16 %v5156
  %v8149 = vunpack.c.h.b16 %v5156
  %v8150 = vunpack.c.l.b16 %v5157
  %v8151 = vunpack.c.h.b16 %v5157
  %v8152 = vunpack.c.l.b16 %v5158
  %v8153 = vunpack.c.h.b16 %v5158
  %v8154 = vunpack.c.l.b16 %v5159
  %v8155 = vunpack.c.h.b16 %v5159
  %v8156 = vunpack.c.l.b16 %v5160
  %v8157 = vunpack.c.h.b16 %v5160
  %v8158 = vunpack.c.l.b16 %v5161
  %v8159 = vunpack.c.h.b16 %v5161
  %v8160 = vunpack.c.l.b16 %v5162
  %v8161 = vunpack.c.h.b16 %v5162
  %v8162 = vunpack.c.l.b16 %v5163
  %v8163 = vunpack.c.h.b16 %v5163
  %v8164 = vunpack.c.l.b16 %v5164
  %v8165 = vunpack.c.h.b16 %v5164
  %v8166 = vunpack.c.l.b16 %v5165
  %v8167 = vunpack.c.h.b16 %v5165
  %v8168 = vunpack.c.l.b16 %v5166
  %v8169 = vunpack.c.h.b16 %v5166
  %v8170 = vunpack.c.l.b16 %v5167
  %v8171 = vunpack.c.h.b16 %v5167
  %v8172 = vunpack.c.l.b16 %v5168
  %v8173 = vunpack.c.h.b16 %v5168
  %v8174 = vunpack.c.l.b16 %v5169
  %v8175 = vunpack.c.h.b16 %v5169
  %v8176 = vunpack.c.l.b16 %v5170
  %v8177 = vunpack.c.h.b16 %v5170
  %v8178 = vunpack.c.l.b16 %v5171
  %v8179 = vunpack.c.h.b16 %v5171
  %v8180 = vunpack.c.l.b16 %v5172
  %v8181 = vunpack.c.h.b16 %v5172
  %v8182 = vunpack.c.l.b16 %v5173
  %v8183 = vunpack.c.h.b16 %v5173
  %v8184 = vunpack.c.l.b16 %v5174
  %v8185 = vunpack.c.h.b16 %v5174
  %v8186 = vunpack.c.l.b16 %v5175
  %v8187 = vunpack.c.h.b16 %v5175
  %v8188 = vunpack.c.l.b16 %v5176
  %v8189 = vunpack.c.h.b16 %v5176
  %v8190 = vunpack.c.l.b16 %v5177
  %v8191 = vunpack.c.h.b16 %v5177
  %v8192 = vunpack.c.l.b16 %v5178
  %v8193 = vunpack.c.h.b16 %v5178
  %v8194 = vunpack.c.l.b16 %v5179
  %v8195 = vunpack.c.h.b16 %v5179
  %v8196 = vunpack.c.l.b16 %v5180
  %v8197 = vunpack.c.h.b16 %v5180
  %v8198 = vunpack.c.l.b16 %v5181
  %v8199 = vunpack.c.h.b16 %v5181
  %v8200 = vunpack.c.l.b16 %v5182
  %v8201 = vunpack.c.h.b16 %v5182
  %v8202 = vunpack.c.l.b16 %v5183
  %v8203 = vunpack.c.h.b16 %v5183
  %v8204 = vunpack.c.l.b16 %v5184
  %v8205 = vunpack.c.h.b16 %v5184
  %v8206 = vunpack.c.l.b16 %v5185
  %v8207 = vunpack.c.h.b16 %v5185
  %v8208 = vunpack.c.l.b16 %v5186
  %v8209 = vunpack.c.h.b16 %v5186
  %v8210 = vunpack.c.l.b16 %v5187
  %v8211 = vunpack.c.h.b16 %v5187
  %v8212 = vunpack.c.l.b16 %v5188
  %v8213 = vunpack.c.h.b16 %v5188
  %v8214 = vunpack.c.l.b16 %v5189
  %v8215 = vunpack.c.h.b16 %v5189
  %v8216 = vunpack.c.l.b16 %v5190
  %v8217 = vunpack.c.h.b16 %v5190
  %v8218 = vunpack.c.l.b16 %v5191
  %v8219 = vunpack.c.h.b16 %v5191
  %v8220 = vunpack.c.l.b16 %v5192
  %v8221 = vunpack.c.h.b16 %v5192
  %v8222 = vunpack.c.l.b16 %v5193
  %v8223 = vunpack.c.h.b16 %v5193
  %v8224 = vunpack.c.l.b16 %v5194
  %v8225 = vunpack.c.h.b16 %v5194
  %v8226 = vunpack.c.l.b16 %v5195
  %v8227 = vunpack.c.h.b16 %v5195
  %v8228 = vunpack.c.l.b16 %v5196
  %v8229 = vunpack.c.h.b16 %v5196
  %v8230 = vunpack.c.l.b16 %v5197
  %v8231 = vunpack.c.h.b16 %v5197
  %v8232 = vunpack.c.l.b16 %v5198
  %v8233 = vunpack.c.h.b16 %v5198
  %v8234 = vunpack.c.l.b16 %v5199
  %v8235 = vunpack.c.h.b16 %v5199
  %v8236 = vunpack.c.l.b16 %v5200
  %v8237 = vunpack.c.h.b16 %v5200
  %v8238 = vunpack.c.l.b16 %v5201
  %v8239 = vunpack.c.h.b16 %v5201
  %v8240 = vunpack.c.l.b16 %v5202
  %v8241 = vunpack.c.h.b16 %v5202
  %v8242 = vunpack.c.l.b16 %v5203
  %v8243 = vunpack.c.h.b16 %v5203
  %v8244 = vunpack.c.l.b16 %v5204
  %v8245 = vunpack.c.h.b16 %v5204
  %v8246 = vunpack.c.l.b16 %v5205
  %v8247 = vunpack.c.h.b16 %v5205
  %v8248 = vunpack.c.l.b16 %v5206
  %v8249 = vunpack.c.h.b16 %v5206
  %v8250 = vunpack.c.l.b16 %v5207
  %v8251 = vunpack.c.h.b16 %v5207
  %v8252 = vunpack.c.l.b16 %v5208
  %v8253 = vunpack.c.h.b16 %v5208
  %v8254 = vunpack.c.l.b16 %v5209
  %v8255 = vunpack.c.h.b16 %v5209
  %v8256 = vunpack.c.l.b16 %v5210
  %v8257 = vunpack.c.h.b16 %v5210
  %v8258 = vunpack.c.l.b16 %v5211
  %v8259 = vunpack.c.h.b16 %v5211
  %v8260 = vunpack.c.l.b16 %v5212
  %v8261 = vunpack.c.h.b16 %v5212
  %v8262 = vunpack.c.l.b16 %v5213
  %v8263 = vunpack.c.h.b16 %v5213
  %v8264 = vunpack.c.l.b16 %v5214
  %v8265 = vunpack.c.h.b16 %v5214
  %v8266 = vunpack.c.l.b16 %v5215
  %v8267 = vunpack.c.h.b16 %v5215
  %v8268 = vunpack.c.l.b16 %v5216
  %v8269 = vunpack.c.h.b16 %v5216
  %v8270 = vunpack.c.l.b16 %v5217
  %v8271 = vunpack.c.h.b16 %v5217
  %v8272 = vunpack.c.l.b16 %v5218
  %v8273 = vunpack.c.h.b16 %v5218
  %v8274 = vunpack.c.l.b16 %v5219
  %v8275 = vunpack.c.h.b16 %v5219
  %v8276 = vunpack.c.l.b16 %v5220
  %v8277 = vunpack.c.h.b16 %v5220
  %v8278 = vunpack.c.l.b16 %v5221
  %v8279 = vunpack.c.h.b16 %v5221
  %v8280 = vunpack.c.l.b16 %v5222
  %v8281 = vunpack.c.h.b16 %v5222
  %v8282 = vunpack.c.l.b16 %v5223
  %v8283 = vunpack.c.h.b16 %v5223
  %v8284 = vunpack.c.l.b16 %v5224
  %v8285 = vunpack.c.h.b16 %v5224
  %v8286 = vunpack.c.l.b16 %v5225
  %v8287 = vunpack.c.h.b16 %v5225
  %v8288 = vunpack.c.l.b16 %v5226
  %v8289 = vunpack.c.h.b16 %v5226
  %v8290 = vunpack.c.l.b16 %v5227
  %v8291 = vunpack.c.h.b16 %v5227
  %v8292 = vunpack.c.l.b16 %v5228
  %v8293 = vunpack.c.h.b16 %v5228
  %v8294 = vunpack.c.l.b16 %v5229
  %v8295 = vunpack.c.h.b16 %v5229
  %v8296 = vunpack.c.l.b16 %v5230
  %v8297 = vunpack.c.h.b16 %v5230
  %v8298 = vunpack.c.l.b16 %v5231
  %v8299 = vunpack.c.h.b16 %v5231
  %v8300 = vunpack.c.l.b16 %v5232
  %v8301 = vunpack.c.h.b16 %v5232
  %v8302 = vunpack.c.l.b16 %v5233
  %v8303 = vunpack.c.h.b16 %v5233
  %v8304 = vunpack.c.l.b16 %v5234
  %v8305 = vunpack.c.h.b16 %v5234
  %v8306 = vunpack.c.l.b16 %v5235
  %v8307 = vunpack.c.h.b16 %v5235
  %v8308 = vunpack.c.l.b16 %v5236
  %v8309 = vunpack.c.h.b16 %v5236
  %v8310 = vpack.c.b16 %v7740, %v7734
  %v8311 = vpack.c.b16 %v7741, %v7735
  %v8312 = vpack.c.b16 %v7742, %v7736
  %v8313 = vpack.c.b16 %v7743, %v7737
  %v8314 = vpack.c.b16 %v7744, %v7738
  %v8315 = vpack.c.b16 %v7745, %v7739
  %v8316 = vpack.c.b16 %v7752, %v7746
  %v8317 = vpack.c.b16 %v7753, %v7747
  %v8318 = vpack.c.b16 %v7754, %v7748
  %v8319 = vpack.c.b16 %v7755, %v7749
  %v8320 = vpack.c.b16 %v7756, %v7750
  %v8321 = vpack.c.b16 %v7757, %v7751
  %v8322 = vpack.c.b16 %v7764, %v7758
  %v8323 = vpack.c.b16 %v7765, %v7759
  %v8324 = vpack.c.b16 %v7766, %v7760
  %v8325 = vpack.c.b16 %v7767, %v7761
  %v8326 = vpack.c.b16 %v7768, %v7762
  %v8327 = vpack.c.b16 %v7769, %v7763
  %v8328 = vpack.c.b16 %v7776, %v7770
  %v8329 = vpack.c.b16 %v7777, %v7771
  %v8330 = vpack.c.b16 %v7778, %v7772
  %v8331 = vpack.c.b16 %v7779, %v7773
  %v8332 = vpack.c.b16 %v7780, %v7774
  %v8333 = vpack.c.b16 %v7781, %v7775
  %v8334 = vpack.c.b16 %v7788, %v7782
  %v8335 = vpack.c.b16 %v7789, %v7783
  %v8336 = vpack.c.b16 %v7790, %v7784
  %v8337 = vpack.c.b16 %v7791, %v7785
  %v8338 = vpack.c.b16 %v7792, %v7786
  %v8339 = vpack.c.b16 %v7793, %v7787
  %v8340 = vpack.c.b16 %v7800, %v7794
  %v8341 = vpack.c.b16 %v7801, %v7795
  %v8342 = vpack.c.b16 %v7802, %v7796
  %v8343 = vpack.c.b16 %v7803, %v7797
  %v8344 = vpack.c.b16 %v7804, %v7798
  %v8345 = vpack.c.b16 %v7805, %v7799
  %v8346 = vpack.c.b16 %v7812, %v7806
  %v8347 = vpack.c.b16 %v7813, %v7807
  %v8348 = vpack.c.b16 %v7814, %v7808
  %v8349 = vpack.c.b16 %v7815, %v7809
  %v8350 = vpack.c.b16 %v7816, %v7810
  %v8351 = vpack.c.b16 %v7817, %v7811
  %v8352 = vpack.c.b16 %v7824, %v7818
  %v8353 = vpack.c.b16 %v7825, %v7819
  %v8354 = vpack.c.b16 %v7826, %v7820
  %v8355 = vpack.c.b16 %v7827, %v7821
  %v8356 = vpack.c.b16 %v7828, %v7822
  %v8357 = vpack.c.b16 %v7829, %v7823
  %v8358 = vpack.c.b16 %v7836, %v7830
  %v8359 = vpack.c.b16 %v7837, %v7831
  %v8360 = vpack.c.b16 %v7838, %v7832
  %v8361 = vpack.c.b16 %v7839, %v7833
  %v8362 = vpack.c.b16 %v7840, %v7834
  %v8363 = vpack.c.b16 %v7841, %v7835
  %v8364 = vpack.c.b16 %v7848, %v7842
  %v8365 = vpack.c.b16 %v7849, %v7843
  %v8366 = vpack.c.b16 %v7850, %v7844
  %v8367 = vpack.c.b16 %v7851, %v7845
  %v8368 = vpack.c.b16 %v7852, %v7846
  %v8369 = vpack.c.b16 %v7853, %v7847
  %v8370 = vpack.c.b16 %v7860, %v7854
  %v8371 = vpack.c.b16 %v7861, %v7855
  %v8372 = vpack.c.b16 %v7862, %v7856
  %v8373 = vpack.c.b16 %v7863, %v7857
  %v8374 = vpack.c.b16 %v7864, %v7858
  %v8375 = vpack.c.b16 %v7865, %v7859
  %v8376 = vpack.c.b16 %v7872, %v7866
  %v8377 = vpack.c.b16 %v7873, %v7867
  %v8378 = vpack.c.b16 %v7874, %v7868
  %v8379 = vpack.c.b16 %v7875, %v7869
  %v8380 = vpack.c.b16 %v7876, %v7870
  %v8381 = vpack.c.b16 %v7877, %v7871
  %v8382 = vpack.c.b16 %v7884, %v7878
  %v8383 = vpack.c.b16 %v7885, %v7879
  %v8384 = vpack.c.b16 %v7886, %v7880
  %v8385 = vpack.c.b16 %v7887, %v7881
  %v8386 = vpack.c.b16 %v7888, %v7882
  %v8387 = vpack.c.b16 %v7889, %v7883
  %v8388 = vpack.c.b16 %v7896, %v7890
  %v8389 = vpack.c.b16 %v7897, %v7891
  %v8390 = vpack.c.b16 %v7898, %v7892
  %v8391 = vpack.c.b16 %v7899, %v7893
  %v8392 = vpack.c.b16 %v7900, %v7894
  %v8393 = vpack.c.b16 %v7901, %v7895
  %v8394 = vpack.c.b16 %v7908, %v7902
  %v8395 = vpack.c.b16 %v7909, %v7903
  %v8396 = vpack.c.b16 %v7910, %v7904
  %v8397 = vpack.c.b16 %v7911, %v7905
  %v8398 = vpack.c.b16 %v7912, %v7906
  %v8399 = vpack.c.b16 %v7913, %v7907
  %v8400 = vpack.c.b16 %v7920, %v7914
  %v8401 = vpack.c.b16 %v7921, %v7915
  %v8402 = vpack.c.b16 %v7922, %v7916
  %v8403 = vpack.c.b16 %v7923, %v7917
  %v8404 = vpack.c.b16 %v7924, %v7918
  %v8405 = vpack.c.b16 %v7925, %v7919
  %v8406 = vpack.c.b16 %v7932, %v7926
  %v8407 = vpack.c.b16 %v7933, %v7927
  %v8408 = vpack.c.b16 %v7934, %v7928
  %v8409 = vpack.c.b16 %v7935, %v7929
  %v8410 = vpack.c.b16 %v7936, %v7930
  %v8411 = vpack.c.b16 %v7937, %v7931
  %v8412 = vpack.c.b16 %v7944, %v7938
  %v8413 = vpack.c.b16 %v7945, %v7939
  %v8414 = vpack.c.b16 %v7946, %v7940
  %v8415 = vpack.c.b16 %v7947, %v7941
  %v8416 = vpack.c.b16 %v7948, %v7942
  %v8417 = vpack.c.b16 %v7949, %v7943
  %v8418 = vpack.c.b16 %v7956, %v7950
  %v8419 = vpack.c.b16 %v7957, %v7951
  %v8420 = vpack.c.b16 %v7958, %v7952
  %v8421 = vpack.c.b16 %v7959, %v7953
  %v8422 = vpack.c.b16 %v7960, %v7954
  %v8423 = vpack.c.b16 %v7961, %v7955
  %v8424 = vpack.c.b16 %v7968, %v7962
  %v8425 = vpack.c.b16 %v7969, %v7963
  %v8426 = vpack.c.b16 %v7970, %v7964
  %v8427 = vpack.c.b16 %v7971, %v7965
  %v8428 = vpack.c.b16 %v7972, %v7966
  %v8429 = vpack.c.b16 %v7973, %v7967
  %v8430 = vpack.c.b16 %v7980, %v7974
  %v8431 = vpack.c.b16 %v7981, %v7975
  %v8432 = vpack.c.b16 %v7982, %v7976
  %v8433 = vpack.c.b16 %v7983, %v7977
  %v8434 = vpack.c.b16 %v7984, %v7978
  %v8435 = vpack.c.b16 %v7985, %v7979
  %v8436 = vpack.c.b16 %v7992, %v7986
  %v8437 = vpack.c.b16 %v7993, %v7987
  %v8438 = vpack.c.b16 %v7994, %v7988
  %v8439 = vpack.c.b16 %v7995, %v7989
  %v8440 = vpack.c.b16 %v7996, %v7990
  %v8441 = vpack.c.b16 %v7997, %v7991
  %v8442 = vpack.c.b16 %v8004, %v7998
  %v8443 = vpack.c.b16 %v8005, %v7999
  %v8444 = vpack.c.b16 %v8006, %v8000
  %v8445 = vpack.c.b16 %v8007, %v8001
  %v8446 = vpack.c.b16 %v8008, %v8002
  %v8447 = vpack.c.b16 %v8009, %v8003
  %v8448 = vpack.c.b16 %v8016, %v8010
  %v8449 = vpack.c.b16 %v8017, %v8011
  %v8450 = vpack.c.b16 %v8018, %v8012
  %v8451 = vpack.c.b16 %v8019, %v8013
  %v8452 = vpack.c.b16 %v8020, %v8014
  %v8453 = vpack.c.b16 %v8021, %v8015
  %v8454 = vpack.c.b16 %v8028, %v8022
  %v8455 = vpack.c.b16 %v8029, %v8023
  %v8456 = vpack.c.b16 %v8030, %v8024
  %v8457 = vpack.c.b16 %v8031, %v8025
  %v8458 = vpack.c.b16 %v8032, %v8026
  %v8459 = vpack.c.b16 %v8033, %v8027
  %v8460 = vpack.c.b16 %v8040, %v8034
  %v8461 = vpack.c.b16 %v8041, %v8035
  %v8462 = vpack.c.b16 %v8042, %v8036
  %v8463 = vpack.c.b16 %v8043, %v8037
  %v8464 = vpack.c.b16 %v8044, %v8038
  %v8465 = vpack.c.b16 %v8045, %v8039
  %v8466 = vpack.c.b16 %v8052, %v8046
  %v8467 = vpack.c.b16 %v8053, %v8047
  %v8468 = vpack.c.b16 %v8054, %v8048
  %v8469 = vpack.c.b16 %v8055, %v8049
  %v8470 = vpack.c.b16 %v8056, %v8050
  %v8471 = vpack.c.b16 %v8057, %v8051
  %v8472 = vpack.c.b16 %v8064, %v8058
  %v8473 = vpack.c.b16 %v8065, %v8059
  %v8474 = vpack.c.b16 %v8066, %v8060
  %v8475 = vpack.c.b16 %v8067, %v8061
  %v8476 = vpack.c.b16 %v8068, %v8062
  %v8477 = vpack.c.b16 %v8069, %v8063
  %v8478 = vpack.c.b16 %v8076, %v8070
  %v8479 = vpack.c.b16 %v8077, %v8071
  %v8480 = vpack.c.b16 %v8078, %v8072
  %v8481 = vpack.c.b16 %v8079, %v8073
  %v8482 = vpack.c.b16 %v8080, %v8074
  %v8483 = vpack.c.b16 %v8081, %v8075
  %v8484 = vpack.c.b16 %v8088, %v8082
  %v8485 = vpack.c.b16 %v8089, %v8083
  %v8486 = vpack.c.b16 %v8090, %v8084
  %v8487 = vpack.c.b16 %v8091, %v8085
  %v8488 = vpack.c.b16 %v8092, %v8086
  %v8489 = vpack.c.b16 %v8093, %v8087
  %v8490 = vpack.c.b16 %v8100, %v8094
  %v8491 = vpack.c.b16 %v8101, %v8095
  %v8492 = vpack.c.b16 %v8102, %v8096
  %v8493 = vpack.c.b16 %v8103, %v8097
  %v8494 = vpack.c.b16 %v8104, %v8098
  %v8495 = vpack.c.b16 %v8105, %v8099
  %v8496 = vpack.c.b16 %v8112, %v8106
  %v8497 = vpack.c.b16 %v8113, %v8107
  %v8498 = vpack.c.b16 %v8114, %v8108
  %v8499 = vpack.c.b16 %v8115, %v8109
  %v8500 = vpack.c.b16 %v8116, %v8110
  %v8501 = vpack.c.b16 %v8117, %v8111
  %v8502 = vpack.c.b16 %v8124, %v8118
  %v8503 = vpack.c.b16 %v8125, %v8119
  %v8504 = vpack.c.b16 %v8126, %v8120
  %v8505 = vpack.c.b16 %v8127, %v8121
  %v8506 = vpack.c.b16 %v8128, %v8122
  %v8507 = vpack.c.b16 %v8129, %v8123
  %v8508 = vpack.c.b16 %v8136, %v8130
  %v8509 = vpack.c.b16 %v8137, %v8131
  %v8510 = vpack.c.b16 %v8138, %v8132
  %v8511 = vpack.c.b16 %v8139, %v8133
  %v8512 = vpack.c.b16 %v8140, %v8134
  %v8513 = vpack.c.b16 %v8141, %v8135
  %v8514 = vpack.c.b16 %v8148, %v8142
  %v8515 = vpack.c.b16 %v8149, %v8143
  %v8516 = vpack.c.b16 %v8150, %v8144
  %v8517 = vpack.c.b16 %v8151, %v8145
  %v8518 = vpack.c.b16 %v8152, %v8146
  %v8519 = vpack.c.b16 %v8153, %v8147
  %v8520 = vpack.c.b16 %v8160, %v8154
  %v8521 = vpack.c.b16 %v8161, %v8155
  %v8522 = vpack.c.b16 %v8162, %v8156
  %v8523 = vpack.c.b16 %v8163, %v8157
  %v8524 = vpack.c.b16 %v8164, %v8158
  %v8525 = vpack.c.b16 %v8165, %v8159
  %v8526 = vpack.c.b16 %v8172, %v8166
  %v8527 = vpack.c.b16 %v8173, %v8167
  %v8528 = vpack.c.b16 %v8174, %v8168
  %v8529 = vpack.c.b16 %v8175, %v8169
  %v8530 = vpack.c.b16 %v8176, %v8170
  %v8531 = vpack.c.b16 %v8177, %v8171
  %v8532 = vpack.c.b16 %v8184, %v8178
  %v8533 = vpack.c.b16 %v8185, %v8179
  %v8534 = vpack.c.b16 %v8186, %v8180
  %v8535 = vpack.c.b16 %v8187, %v8181
  %v8536 = vpack.c.b16 %v8188, %v8182
  %v8537 = vpack.c.b16 %v8189, %v8183
  %v8538 = vpack.c.b16 %v8196, %v8190
  %v8539 = vpack.c.b16 %v8197, %v8191
  %v8540 = vpack.c.b16 %v8198, %v8192
  %v8541 = vpack.c.b16 %v8199, %v8193
  %v8542 = vpack.c.b16 %v8200, %v8194
  %v8543 = vpack.c.b16 %v8201, %v8195
  %v8544 = vpack.c.b16 %v8208, %v8202
  %v8545 = vpack.c.b16 %v8209, %v8203
  %v8546 = vpack.c.b16 %v8210, %v8204
  %v8547 = vpack.c.b16 %v8211, %v8205
  %v8548 = vpack.c.b16 %v8212, %v8206
  %v8549 = vpack.c.b16 %v8213, %v8207
  %v8550 = vpack.c.b16 %v8220, %v8214
  %v8551 = vpack.c.b16 %v8221, %v8215
  %v8552 = vpack.c.b16 %v8222, %v8216
  %v8553 = vpack.c.b16 %v8223, %v8217
  %v8554 = vpack.c.b16 %v8224, %v8218
  %v8555 = vpack.c.b16 %v8225, %v8219
  %v8556 = vpack.c.b16 %v8232, %v8226
  %v8557 = vpack.c.b16 %v8233, %v8227
  %v8558 = vpack.c.b16 %v8234, %v8228
  %v8559 = vpack.c.b16 %v8235, %v8229
  %v8560 = vpack.c.b16 %v8236, %v8230
  %v8561 = vpack.c.b16 %v8237, %v8231
  %v8562 = vpack.c.b16 %v8244, %v8238
  %v8563 = vpack.c.b16 %v8245, %v8239
  %v8564 = vpack.c.b16 %v8246, %v8240
  %v8565 = vpack.c.b16 %v8247, %v8241
  %v8566 = vpack.c.b16 %v8248, %v8242
  %v8567 = vpack.c.b16 %v8249, %v8243
  %v8568 = vpack.c.b16 %v8256, %v8250
  %v8569 = vpack.c.b16 %v8257, %v8251
  %v8570 = vpack.c.b16 %v8258, %v8252
  %v8571 = vpack.c.b16 %v8259, %v8253
  %v8572 = vpack.c.b16 %v8260, %v8254
  %v8573 = vpack.c.b16 %v8261, %v8255
  %v8574 = vpack.c.b16 %v8268, %v8262
  %v8575 = vpack.c.b16 %v8269, %v8263
  %v8576 = vpack.c.b16 %v8270, %v8264
  %v8577 = vpack.c.b16 %v8271, %v8265
  %v8578 = vpack.c.b16 %v8272, %v8266
  %v8579 = vpack.c.b16 %v8273, %v8267
  %v8580 = vpack.c.b16 %v8280, %v8274
  %v8581 = vpack.c.b16 %v8281, %v8275
  %v8582 = vpack.c.b16 %v8282, %v8276
  %v8583 = vpack.c.b16 %v8283, %v8277
  %v8584 = vpack.c.b16 %v8284, %v8278
  %v8585 = vpack.c.b16 %v8285, %v8279
  %v8586 = vpack.c.b16 %v8292, %v8286
  %v8587 = vpack.c.b16 %v8293, %v8287
  %v8588 = vpack.c.b16 %v8294, %v8288
  %v8589 = vpack.c.b16 %v8295, %v8289
  %v8590 = vpack.c.b16 %v8296, %v8290
  %v8591 = vpack.c.b16 %v8297, %v8291
  %v8592 = vpack.c.b16 %v8304, %v8298
  %v8593 = vpack.c.b16 %v8305, %v8299
  %v8594 = vpack.c.b16 %v8306, %v8300
  %v8595 = vpack.c.b16 %v8307, %v8301
  %v8596 = vpack.c.b16 %v8308, %v8302
  %v8597 = vpack.c.b16 %v8309, %v8303
  %8886 = vmatprep.subr.bf16.mxu0 %v8311
  %8887 = vmatpush1.bf16.msra.mxu0 %v8310
  %8888 = vmatprep.subr.bf16.mxu0 %v8317
  %8889 = vmatpush1.bf16.msra.mxu0 %v8316
  %8890 = vmatprep.subr.bf16.mxu0 %v8323
  %8891 = vmatpush1.bf16.msra.mxu0 %v8322
  %8892 = vmatprep.subr.bf16.mxu0 %v8329
  %8893 = vmatpush1.bf16.msra.mxu0 %v8328
  %8894 = vmatprep.subr.bf16.mxu0 %v8335
  %8895 = vmatpush1.bf16.msra.mxu0 %v8334
  %8896 = vmatprep.subr.bf16.mxu0 %v8341
  %8897 = vmatpush1.bf16.msra.mxu0 %v8340
  %8898 = vmatprep.subr.bf16.mxu0 %v8347
  %8899 = vmatpush1.bf16.msra.mxu0 %v8346
  %8900 = vmatprep.subr.bf16.mxu0 %v8353
  %8901 = vmatpush1.bf16.msra.mxu0 %v8352
  %8902 = vmatprep.subr.bf16.mxu0 %v8359
  %8903 = vmatpush1.bf16.msra.mxu0 %v8358
  %8904 = vmatprep.subr.bf16.mxu0 %v8365
  %8905 = vmatpush1.bf16.msra.mxu0 %v8364
  %8906 = vmatprep.subr.bf16.mxu0 %v8371
  %8907 = vmatpush1.bf16.msra.mxu0 %v8370
  %8908 = vmatprep.subr.bf16.mxu0 %v8377
  %8909 = vmatpush1.bf16.msra.mxu0 %v8376
  %8910 = vmatprep.subr.bf16.mxu0 %v8383
  %8911 = vmatpush1.bf16.msra.mxu0 %v8382
  %8912 = vmatprep.subr.bf16.mxu0 %v8389
  %8913 = vmatpush1.bf16.msra.mxu0 %v8388
  %8914 = vmatprep.subr.bf16.mxu0 %v8395
  %8915 = vmatpush1.bf16.msra.mxu0 %v8394
  %8916 = vmatprep.subr.bf16.mxu0 %v8401
  %8917 = vmatpush1.bf16.msra.mxu0 %v8400
  %8918 = vmatprep.mubr.bf16.mxu0 %v7435
  %8919 = vmatmul.mubr.bf16.gmra.mrb[0].mxu0 %v7434
  %v8920 = vpop.f32.mrb[0].mxu0
  %v8921 = vadd.f32 %v7156, %v8920
  %v8922 = vpop.f32.mrb[0].mxu0
  %v8923 = vadd.f32 %v7158, %v8922
  %v8924 = vpop.f32.mrb[0].mxu0
  %v8925 = vadd.f32 %v7160, %v8924
  %v8926 = vpop.f32.mrb[0].mxu0
  %v8927 = vadd.f32 %v7162, %v8926
  %8928 = vdwg.mxu0
  %8929 = vmatprep.subr.bf16.mxu0 %v8407
  %8930 = vmatpush1.bf16.msra.mxu0 %v8406
  %8931 = vmatprep.subr.bf16.mxu0 %v8413
  %8932 = vmatpush1.bf16.msra.mxu0 %v8412
  %8933 = vmatprep.subr.bf16.mxu0 %v8419
  %8934 = vmatpush1.bf16.msra.mxu0 %v8418
  %8935 = vmatprep.subr.bf16.mxu0 %v8425
  %8936 = vmatpush1.bf16.msra.mxu0 %v8424
  %8937 = vmatprep.subr.bf16.mxu0 %v8431
  %8938 = vmatpush1.bf16.msra.mxu0 %v8430
  %8939 = vmatprep.subr.bf16.mxu0 %v8437
  %8940 = vmatpush1.bf16.msra.mxu0 %v8436
  %8941 = vmatprep.subr.bf16.mxu0 %v8443
  %8942 = vmatpush1.bf16.msra.mxu0 %v8442
  %8943 = vmatprep.subr.bf16.mxu0 %v8449
  %8944 = vmatpush1.bf16.msra.mxu0 %v8448
  %8945 = vmatprep.subr.bf16.mxu0 %v8455
  %8946 = vmatpush1.bf16.msra.mxu0 %v8454
  %8947 = vmatprep.subr.bf16.mxu0 %v8461
  %8948 = vmatpush1.bf16.msra.mxu0 %v8460
  %8949 = vmatprep.subr.bf16.mxu0 %v8467
  %8950 = vmatpush1.bf16.msra.mxu0 %v8466
  %8951 = vmatprep.subr.bf16.mxu0 %v8473
  %8952 = vmatpush1.bf16.msra.mxu0 %v8472
  %8953 = vmatprep.subr.bf16.mxu0 %v8479
  %8954 = vmatpush1.bf16.msra.mxu0 %v8478
  %8955 = vmatprep.subr.bf16.mxu0 %v8485
  %8956 = vmatpush1.bf16.msra.mxu0 %v8484
  %8957 = vmatprep.subr.bf16.mxu0 %v8491
  %8958 = vmatpush1.bf16.msra.mxu0 %v8490
  %8959 = vmatprep.subr.bf16.mxu0 %v8497
  %8960 = vmatpush1.bf16.msra.mxu0 %v8496
  %8961 = vmatprep.mubr.bf16.mxu0 %v7437
  %8962 = vmatmul.mubr.bf16.gmra.mrb[0].mxu0 %v7436
  %v8963 = vpop.f32.mrb[0].mxu0
  %v8964 = vadd.f32 %v8921, %v8963
  %v8965 = vpop.f32.mrb[0].mxu0
  %v8966 = vadd.f32 %v8923, %v8965
  %v8967 = vpop.f32.mrb[0].mxu0
  %v8968 = vadd.f32 %v8925, %v8967
  %v8969 = vpop.f32.mrb[0].mxu0
  %v8970 = vadd.f32 %v8927, %v8969
  %8971 = vdwg.mxu0
  %8972 = vmatprep.subr.bf16.mxu0 %v8503
  %8973 = vmatpush1.bf16.msra.mxu0 %v8502
  %8974 = vmatprep.subr.bf16.mxu0 %v8509
  %8975 = vmatpush1.bf16.msra.mxu0 %v8508
  %8976 = vmatprep.subr.bf16.mxu0 %v8515
  %8977 = vmatpush1.bf16.msra.mxu0 %v8514
  %8978 = vmatprep.subr.bf16.mxu0 %v8521
  %8979 = vmatpush1.bf16.msra.mxu0 %v8520
  %8980 = vmatprep.subr.bf16.mxu0 %v8527
  %8981 = vmatpush1.bf16.msra.mxu0 %v8526
  %8982 = vmatprep.subr.bf16.mxu0 %v8533
  %8983 = vmatpush1.bf16.msra.mxu0 %v8532
  %8984 = vmatprep.subr.bf16.mxu0 %v8539
  %8985 = vmatpush1.bf16.msra.mxu0 %v8538
  %8986 = vmatprep.subr.bf16.mxu0 %v8545
  %8987 = vmatpush1.bf16.msra.mxu0 %v8544
  %8988 = vmatprep.subr.bf16.mxu0 %v8551
  %8989 = vmatpush1.bf16.msra.mxu0 %v8550
  %8990 = vmatprep.subr.bf16.mxu0 %v8557
  %8991 = vmatpush1.bf16.msra.mxu0 %v8556
  %8992 = vmatprep.subr.bf16.mxu0 %v8563
  %8993 = vmatpush1.bf16.msra.mxu0 %v8562
  %8994 = vmatprep.subr.bf16.mxu0 %v8569
  %8995 = vmatpush1.bf16.msra.mxu0 %v8568
  %8996 = vmatprep.subr.bf16.mxu0 %v8575
  %8997 = vmatpush1.bf16.msra.mxu0 %v8574
  %8998 = vmatprep.subr.bf16.mxu0 %v8581
  %8999 = vmatpush1.bf16.msra.mxu0 %v8580
  %9000 = vmatprep.subr.bf16.mxu0 %v8587
  %9001 = vmatpush1.bf16.msra.mxu0 %v8586
  %9002 = vmatprep.subr.bf16.mxu0 %v8593
  %9003 = vmatpush1.bf16.msra.mxu0 %v8592
  %9004 = vmatprep.mubr.bf16.mxu0 %v7439
  %9005 = vmatmul.mubr.bf16.gmra.mrb[0].mxu0 %v7438
  %v9006 = vpop.f32.mrb[0].mxu0
  %v9007 = vadd.f32 %v8964, %v9006
  %v9008 = vpop.f32.mrb[0].mxu0
  %v9009 = vadd.f32 %v8966, %v9008
  %v9010 = vpop.f32.mrb[0].mxu0
  %v9011 = vadd.f32 %v8968, %v9010
  %v9012 = vpop.f32.mrb[0].mxu0
  %v9013 = vadd.f32 %v8970, %v9012
  %9014 = vdwg.mxu0
  %9015 = vmatprep.subr.bf16.mxu0 %v8313
  %9016 = vmatpush1.bf16.msra.mxu0 %v8312
  %9017 = vmatprep.subr.bf16.mxu0 %v8319
  %9018 = vmatpush1.bf16.msra.mxu0 %v8318
  %9019 = vmatprep.subr.bf16.mxu0 %v8325
  %9020 = vmatpush1.bf16.msra.mxu0 %v8324
  %9021 = vmatprep.subr.bf16.mxu0 %v8331
  %9022 = vmatpush1.bf16.msra.mxu0 %v8330
  %9023 = vmatprep.subr.bf16.mxu0 %v8337
  %9024 = vmatpush1.bf16.msra.mxu0 %v8336
  %9025 = vmatprep.subr.bf16.mxu0 %v8343
  %9026 = vmatpush1.bf16.msra.mxu0 %v8342
  %9027 = vmatprep.subr.bf16.mxu0 %v8349
  %9028 = vmatpush1.bf16.msra.mxu0 %v8348
  %9029 = vmatprep.subr.bf16.mxu0 %v8355
  %9030 = vmatpush1.bf16.msra.mxu0 %v8354
  %9031 = vmatprep.subr.bf16.mxu0 %v8361
  %9032 = vmatpush1.bf16.msra.mxu0 %v8360
  %9033 = vmatprep.subr.bf16.mxu0 %v8367
  %9034 = vmatpush1.bf16.msra.mxu0 %v8366
  %9035 = vmatprep.subr.bf16.mxu0 %v8373
  %9036 = vmatpush1.bf16.msra.mxu0 %v8372
  %9037 = vmatprep.subr.bf16.mxu0 %v8379
  %9038 = vmatpush1.bf16.msra.mxu0 %v8378
  %9039 = vmatprep.subr.bf16.mxu0 %v8385
  %9040 = vmatpush1.bf16.msra.mxu0 %v8384
  %9041 = vmatprep.subr.bf16.mxu0 %v8391
  %9042 = vmatpush1.bf16.msra.mxu0 %v8390
  %9043 = vmatprep.subr.bf16.mxu0 %v8397
  %9044 = vmatpush1.bf16.msra.mxu0 %v8396
  %9045 = vmatprep.subr.bf16.mxu0 %v8403
  %9046 = vmatpush1.bf16.msra.mxu0 %v8402
  %9047 = vmatprep.mubr.bf16.mxu0 %v7435
  %9048 = vmatmul.mubr.bf16.gmra.mrb[0].mxu0 %v7434
  %v9049 = vpop.f32.mrb[0].mxu0
  %v9050 = vadd.f32 %v7285, %v9049
  %v9051 = vpop.f32.mrb[0].mxu0
  %v9052 = vadd.f32 %v7287, %v9051
  %v9053 = vpop.f32.mrb[0].mxu0
  %v9054 = vadd.f32 %v7289, %v9053
  %v9055 = vpop.f32.mrb[0].mxu0
  %v9056 = vadd.f32 %v7291, %v9055
  %9057 = vdwg.mxu0
  %9058 = vmatprep.subr.bf16.mxu0 %v8409
  %9059 = vmatpush1.bf16.msra.mxu0 %v8408
  %9060 = vmatprep.subr.bf16.mxu0 %v8415
  %9061 = vmatpush1.bf16.msra.mxu0 %v8414
  %9062 = vmatprep.subr.bf16.mxu0 %v8421
  %9063 = vmatpush1.bf16.msra.mxu0 %v8420
  %9064 = vmatprep.subr.bf16.mxu0 %v8427
  %9065 = vmatpush1.bf16.msra.mxu0 %v8426
  %9066 = vmatprep.subr.bf16.mxu0 %v8433
  %9067 = vmatpush1.bf16.msra.mxu0 %v8432
  %9068 = vmatprep.subr.bf16.mxu0 %v8439
  %9069 = vmatpush1.bf16.msra.mxu0 %v8438
  %9070 = vmatprep.subr.bf16.mxu0 %v8445
  %9071 = vmatpush1.bf16.msra.mxu0 %v8444
  %9072 = vmatprep.subr.bf16.mxu0 %v8451
  %9073 = vmatpush1.bf16.msra.mxu0 %v8450
  %9074 = vmatprep.subr.bf16.mxu0 %v8457
  %9075 = vmatpush1.bf16.msra.mxu0 %v8456
  %9076 = vmatprep.subr.bf16.mxu0 %v8463
  %9077 = vmatpush1.bf16.msra.mxu0 %v8462
  %9078 = vmatprep.subr.bf16.mxu0 %v8469
  %9079 = vmatpush1.bf16.msra.mxu0 %v8468
  %9080 = vmatprep.subr.bf16.mxu0 %v8475
  %9081 = vmatpush1.bf16.msra.mxu0 %v8474
  %9082 = vmatprep.subr.bf16.mxu0 %v8481
  %9083 = vmatpush1.bf16.msra.mxu0 %v8480
  %9084 = vmatprep.subr.bf16.mxu0 %v8487
  %9085 = vmatpush1.bf16.msra.mxu0 %v8486
  %9086 = vmatprep.subr.bf16.mxu0 %v8493
  %9087 = vmatpush1.bf16.msra.mxu0 %v8492
  %9088 = vmatprep.subr.bf16.mxu0 %v8499
  %9089 = vmatpush1.bf16.msra.mxu0 %v8498
  %9090 = vmatprep.mubr.bf16.mxu0 %v7437
  %9091 = vmatmul.mubr.bf16.gmra.mrb[0].mxu0 %v7436
  %v9092 = vpop.f32.mrb[0].mxu0
  %v9093 = vadd.f32 %v9050, %v9092
  %v9094 = vpop.f32.mrb[0].mxu0
  %v9095 = vadd.f32 %v9052, %v9094
  %v9096 = vpop.f32.mrb[0].mxu0
  %v9097 = vadd.f32 %v9054, %v9096
  %v9098 = vpop.f32.mrb[0].mxu0
  %v9099 = vadd.f32 %v9056, %v9098
  %9100 = vdwg.mxu0
  %9101 = vmatprep.subr.bf16.mxu0 %v8505
  %9102 = vmatpush1.bf16.msra.mxu0 %v8504
  %9103 = vmatprep.subr.bf16.mxu0 %v8511
  %9104 = vmatpush1.bf16.msra.mxu0 %v8510
  %9105 = vmatprep.subr.bf16.mxu0 %v8517
  %9106 = vmatpush1.bf16.msra.mxu0 %v8516
  %9107 = vmatprep.subr.bf16.mxu0 %v8523
  %9108 = vmatpush1.bf16.msra.mxu0 %v8522
  %9109 = vmatprep.subr.bf16.mxu0 %v8529
  %9110 = vmatpush1.bf16.msra.mxu0 %v8528
  %9111 = vmatprep.subr.bf16.mxu0 %v8535
  %9112 = vmatpush1.bf16.msra.mxu0 %v8534
  %9113 = vmatprep.subr.bf16.mxu0 %v8541
  %9114 = vmatpush1.bf16.msra.mxu0 %v8540
  %9115 = vmatprep.subr.bf16.mxu0 %v8547
  %9116 = vmatpush1.bf16.msra.mxu0 %v8546
  %9117 = vmatprep.subr.bf16.mxu0 %v8553
  %9118 = vmatpush1.bf16.msra.mxu0 %v8552
  %9119 = vmatprep.subr.bf16.mxu0 %v8559
  %9120 = vmatpush1.bf16.msra.mxu0 %v8558
  %9121 = vmatprep.subr.bf16.mxu0 %v8565
  %9122 = vmatpush1.bf16.msra.mxu0 %v8564
  %9123 = vmatprep.subr.bf16.mxu0 %v8571
  %9124 = vmatpush1.bf16.msra.mxu0 %v8570
  %9125 = vmatprep.subr.bf16.mxu0 %v8577
  %9126 = vmatpush1.bf16.msra.mxu0 %v8576
  %9127 = vmatprep.subr.bf16.mxu0 %v8583
  %9128 = vmatpush1.bf16.msra.mxu0 %v8582
  %9129 = vmatprep.subr.bf16.mxu0 %v8589
  %9130 = vmatpush1.bf16.msra.mxu0 %v8588
  %9131 = vmatprep.subr.bf16.mxu0 %v8595
  %9132 = vmatpush1.bf16.msra.mxu0 %v8594
  %9133 = vmatprep.mubr.bf16.mxu0 %v7439
  %9134 = vmatmul.mubr.bf16.gmra.mrb[0].mxu0 %v7438
  %v9135 = vpop.f32.mrb[0].mxu0
  %v9136 = vadd.f32 %v9093, %v9135
  %v9137 = vpop.f32.mrb[0].mxu0
  %v9138 = vadd.f32 %v9095, %v9137
  %v9139 = vpop.f32.mrb[0].mxu0
  %v9140 = vadd.f32 %v9097, %v9139
  %v9141 = vpop.f32.mrb[0].mxu0
  %v9142 = vadd.f32 %v9099, %v9141
  %9143 = vdwg.mxu0
  %9144 = vmatprep.subr.bf16.mxu0 %v8315
  %9145 = vmatpush1.bf16.msra.mxu0 %v8314
  %9146 = vmatprep.subr.bf16.mxu0 %v8321
  %9147 = vmatpush1.bf16.msra.mxu0 %v8320
  %9148 = vmatprep.subr.bf16.mxu0 %v8327
  %9149 = vmatpush1.bf16.msra.mxu0 %v8326
  %9150 = vmatprep.subr.bf16.mxu0 %v8333
  %9151 = vmatpush1.bf16.msra.mxu0 %v8332
  %9152 = vmatprep.subr.bf16.mxu0 %v8339
  %9153 = vmatpush1.bf16.msra.mxu0 %v8338
  %9154 = vmatprep.subr.bf16.mxu0 %v8345
  %9155 = vmatpush1.bf16.msra.mxu0 %v8344
  %9156 = vmatprep.subr.bf16.mxu0 %v8351
  %9157 = vmatpush1.bf16.msra.mxu0 %v8350
  %9158 = vmatprep.subr.bf16.mxu0 %v8357
  %9159 = vmatpush1.bf16.msra.mxu0 %v8356
  %9160 = vmatprep.subr.bf16.mxu0 %v8363
  %9161 = vmatpush1.bf16.msra.mxu0 %v8362
  %9162 = vmatprep.subr.bf16.mxu0 %v8369
  %9163 = vmatpush1.bf16.msra.mxu0 %v8368
  %9164 = vmatprep.subr.bf16.mxu0 %v8375
  %9165 = vmatpush1.bf16.msra.mxu0 %v8374
  %9166 = vmatprep.subr.bf16.mxu0 %v8381
  %9167 = vmatpush1.bf16.msra.mxu0 %v8380
  %9168 = vmatprep.subr.bf16.mxu0 %v8387
  %9169 = vmatpush1.bf16.msra.mxu0 %v8386
  %9170 = vmatprep.subr.bf16.mxu0 %v8393
  %9171 = vmatpush1.bf16.msra.mxu0 %v8392
  %9172 = vmatprep.subr.bf16.mxu0 %v8399
  %9173 = vmatpush1.bf16.msra.mxu0 %v8398
  %9174 = vmatprep.subr.bf16.mxu0 %v8405
  %9175 = vmatpush1.bf16.msra.mxu0 %v8404
  %9176 = vmatprep.mubr.bf16.mxu0 %v7435
  %9177 = vmatmul.mubr.bf16.gmra.mrb[0].mxu0 %v7434
  %v9178 = vpop.f32.mrb[0].mxu0
  %v9179 = vadd.f32 %v7414, %v9178
  %v9180 = vpop.f32.mrb[0].mxu0
  %v9181 = vadd.f32 %v7416, %v9180
  %v9182 = vpop.f32.mrb[0].mxu0
  %v9183 = vadd.f32 %v7418, %v9182
  %v9184 = vpop.f32.mrb[0].mxu0
  %v9185 = vadd.f32 %v7420, %v9184
  %9186 = vdwg.mxu0
  %9187 = vmatprep.subr.bf16.mxu0 %v8411
  %9188 = vmatpush1.bf16.msra.mxu0 %v8410
  %9189 = vmatprep.subr.bf16.mxu0 %v8417
  %9190 = vmatpush1.bf16.msra.mxu0 %v8416
  %9191 = vmatprep.subr.bf16.mxu0 %v8423
  %9192 = vmatpush1.bf16.msra.mxu0 %v8422
  %9193 = vmatprep.subr.bf16.mxu0 %v8429
  %9194 = vmatpush1.bf16.msra.mxu0 %v8428
  %9195 = vmatprep.subr.bf16.mxu0 %v8435
  %9196 = vmatpush1.bf16.msra.mxu0 %v8434
  %9197 = vmatprep.subr.bf16.mxu0 %v8441
  %9198 = vmatpush1.bf16.msra.mxu0 %v8440
  %9199 = vmatprep.subr.bf16.mxu0 %v8447
  %9200 = vmatpush1.bf16.msra.mxu0 %v8446
  %9201 = vmatprep.subr.bf16.mxu0 %v8453
  %9202 = vmatpush1.bf16.msra.mxu0 %v8452
  %9203 = vmatprep.subr.bf16.mxu0 %v8459
  %9204 = vmatpush1.bf16.msra.mxu0 %v8458
  %9205 = vmatprep.subr.bf16.mxu0 %v8465
  %9206 = vmatpush1.bf16.msra.mxu0 %v8464
  %9207 = vmatprep.subr.bf16.mxu0 %v8471
  %9208 = vmatpush1.bf16.msra.mxu0 %v8470
  %9209 = vmatprep.subr.bf16.mxu0 %v8477
  %9210 = vmatpush1.bf16.msra.mxu0 %v8476
  %9211 = vmatprep.subr.bf16.mxu0 %v8483
  %9212 = vmatpush1.bf16.msra.mxu0 %v8482
  %9213 = vmatprep.subr.bf16.mxu0 %v8489
  %9214 = vmatpush1.bf16.msra.mxu0 %v8488
  %9215 = vmatprep.subr.bf16.mxu0 %v8495
  %9216 = vmatpush1.bf16.msra.mxu0 %v8494
  %9217 = vmatprep.subr.bf16.mxu0 %v8501
  %9218 = vmatpush1.bf16.msra.mxu0 %v8500
  %9219 = vmatprep.mubr.bf16.mxu0 %v7437
  %9220 = vmatmul.mubr.bf16.gmra.mrb[0].mxu0 %v7436
  %v9221 = vpop.f32.mrb[0].mxu0
  %v9222 = vadd.f32 %v9179, %v9221
  %v9223 = vpop.f32.mrb[0].mxu0
  %v9224 = vadd.f32 %v9181, %v9223
  %v9225 = vpop.f32.mrb[0].mxu0
  %v9226 = vadd.f32 %v9183, %v9225
  %v9227 = vpop.f32.mrb[0].mxu0
  %v9228 = vadd.f32 %v9185, %v9227
  %9229 = vdwg.mxu0
  %9230 = vmatprep.subr.bf16.mxu0 %v8507
  %9231 = vmatpush1.bf16.msra.mxu0 %v8506
  %9232 = vmatprep.subr.bf16.mxu0 %v8513
  %9233 = vmatpush1.bf16.msra.mxu0 %v8512
  %9234 = vmatprep.subr.bf16.mxu0 %v8519
  %9235 = vmatpush1.bf16.msra.mxu0 %v8518
  %9236 = vmatprep.subr.bf16.mxu0 %v8525
  %9237 = vmatpush1.bf16.msra.mxu0 %v8524
  %9238 = vmatprep.subr.bf16.mxu0 %v8531
  %9239 = vmatpush1.bf16.msra.mxu0 %v8530
  %9240 = vmatprep.subr.bf16.mxu0 %v8537
  %9241 = vmatpush1.bf16.msra.mxu0 %v8536
  %9242 = vmatprep.subr.bf16.mxu0 %v8543
  %9243 = vmatpush1.bf16.msra.mxu0 %v8542
  %9244 = vmatprep.subr.bf16.mxu0 %v8549
  %9245 = vmatpush1.bf16.msra.mxu0 %v8548
  %9246 = vmatprep.subr.bf16.mxu0 %v8555
  %9247 = vmatpush1.bf16.msra.mxu0 %v8554
  %9248 = vmatprep.subr.bf16.mxu0 %v8561
  %9249 = vmatpush1.bf16.msra.mxu0 %v8560
  %9250 = vmatprep.subr.bf16.mxu0 %v8567
  %9251 = vmatpush1.bf16.msra.mxu0 %v8566
  %9252 = vmatprep.subr.bf16.mxu0 %v8573
  %9253 = vmatpush1.bf16.msra.mxu0 %v8572
  %9254 = vmatprep.subr.bf16.mxu0 %v8579
  %9255 = vmatpush1.bf16.msra.mxu0 %v8578
  %9256 = vmatprep.subr.bf16.mxu0 %v8585
  %9257 = vmatpush1.bf16.msra.mxu0 %v8584
  %9258 = vmatprep.subr.bf16.mxu0 %v8591
  %9259 = vmatpush1.bf16.msra.mxu0 %v8590
  %9260 = vmatprep.subr.bf16.mxu0 %v8597
  %9261 = vmatpush1.bf16.msra.mxu0 %v8596
  %9262 = vmatprep.mubr.bf16.mxu0 %v7439
  %9263 = vmatmul.mubr.bf16.gmra.mrb[0].mxu0 %v7438
  %v9264 = vpop.f32.mrb[0].mxu0
  %v9265 = vadd.f32 %v9222, %v9264
  %v9266 = vpop.f32.mrb[0].mxu0
  %v9267 = vadd.f32 %v9224, %v9266
  %v9268 = vpop.f32.mrb[0].mxu0
  %v9269 = vadd.f32 %v9226, %v9268
  %v9270 = vpop.f32.mrb[0].mxu0
  %v9271 = vadd.f32 %v9228, %v9270
  %9272 = vdwg.mxu0
  %v9273 = vadd.f32 %v9007, %v4559
  %v9274 = vadd.f32 %v9009, %v4563
  %v9275 = vadd.f32 %v9136, %v4567
  %v9276 = vadd.f32 %v9138, %v4571
  %v9277 = vadd.f32 %v9265, %v4575
  %v9278 = vadd.f32 %v9267, %v4579
  %v9279 = vadd.f32 %v9011, %v4559
  %v9280 = vadd.f32 %v9013, %v4563
  %v9281 = vadd.f32 %v9140, %v4567
  %v9282 = vadd.f32 %v9142, %v4571
  %v9283 = vadd.f32 %v9269, %v4575
  %v9284 = vadd.f32 %v9271, %v4579
  %v9285 = vmax.f32 %v9273, 0.0
  %v9286 = vmax.f32 %v9274, 0.0
  %v9287 = vmax.f32 %v9275, 0.0
  %v9288 = vmax.f32 %v9276, 0.0
  %v9289 = vmax.f32 %v9277, 0.0
  %v9290 = vmax.f32 %v9278, 0.0
  %v9291 = vmax.f32 %v9279, 0.0
  %v9292 = vmax.f32 %v9280, 0.0
  %v9293 = vmax.f32 %v9281, 0.0
  %v9294 = vmax.f32 %v9282, 0.0
  %v9295 = vmax.f32 %v9283, 0.0
  %v9296 = vmax.f32 %v9284, 0.0
  %v9297 = vpack.c.bf16 %v9291, %v9285
  %v9298 = vpack.c.bf16 %v9292, %v9286
  %v9299 = vpack.c.bf16 %v9293, %v9287
  %v9300 = vpack.c.bf16 %v9294, %v9288
  %v9301 = vpack.c.bf16 %v9295, %v9289
  %v9302 = vpack.c.bf16 %v9296, %v9290
  %v9309 = vcombine.low %v9297, %v9298
  %v9310 = vcombine.high %v9297, %v9298
  %v9311 = vcombine.low %v9299, %v9300
  %v9312 = vcombine.high %v9299, %v9300
  %v9313 = vcombine.low %v9301, %v9302
  %v9314 = vcombine.high %v9301, %v9302
  %v9316 = vunpack.c.l.s4 1966171168
  %v9317 = vunpack.c.0.s8 %v9316
  %v9318 = vlaneseq
  %v9319 = vshrl.u32 %v9318, 7
  %v9320 = vsub.s32 %v9317, %v9319
  %v9321 = vrot.slane %v9309, %v9320
  %v9323 = vunpack.c.l.s4 1966171168
  %v9324 = vunpack.c.0.s8 %v9323
  %v9325 = vlaneseq
  %v9326 = vshrl.u32 %v9325, 7
  %v9327 = vsub.s32 %v9324, %v9326
  %v9328 = vrot.slane %v9310, %v9327
  %v9330 = vunpack.c.l.s4 1966171168
  %v9331 = vunpack.c.0.s8 %v9330
  %v9332 = vlaneseq
  %v9333 = vshrl.u32 %v9332, 7
  %v9334 = vsub.s32 %v9331, %v9333
  %v9335 = vrot.slane %v9311, %v9334
  %v9337 = vunpack.c.l.s4 1966171168
  %v9338 = vunpack.c.0.s8 %v9337
  %v9339 = vlaneseq
  %v9340 = vshrl.u32 %v9339, 7
  %v9341 = vsub.s32 %v9338, %v9340
  %v9342 = vrot.slane %v9312, %v9341
  %v9344 = vunpack.c.l.s4 1966171168
  %v9345 = vunpack.c.0.s8 %v9344
  %v9346 = vlaneseq
  %v9347 = vshrl.u32 %v9346, 7
  %v9348 = vsub.s32 %v9345, %v9347
  %v9349 = vrot.slane %v9313, %v9348
  %v9351 = vunpack.c.l.s4 1966171168
  %v9352 = vunpack.c.0.s8 %v9351
  %v9353 = vlaneseq
  %v9354 = vshrl.u32 %v9353, 7
  %v9355 = vsub.s32 %v9352, %v9354
  %v9356 = vrot.slane %v9314, %v9355
  %v9357 = vcombine.low %v9321, %v9335
  %v9358 = vcombine.high %v9321, %v9335
  %v9359 = vcombine.low %v9328, %v9342
  %v9360 = vcombine.high %v9328, %v9342
  %v9361 = vcombine.high %v9349, %v9349
  %v9362 = vcombine.high %v9356, %v9356
  %v9364 = vunpack.c.l.s4 1966171168
  %v9365 = vunpack.c.0.s8 %v9364
  %v9366 = vlaneseq
  %v9367 = vshrl.u32 %v9366, 7
  %v9368 = vsub.s32 %v9365, %v9367
  %v9369 = vrot.slane %v9357, %v9368
  %v9371 = vunpack.c.l.s4 1966171168
  %v9372 = vunpack.c.0.s8 %v9371
  %v9373 = vlaneseq
  %v9374 = vshrl.u32 %v9373, 7
  %v9375 = vsub.s32 %v9372, %v9374
  %v9376 = vrot.slane %v9359, %v9375
  %v9378 = vunpack.c.l.s4 1966171168
  %v9379 = vunpack.c.0.s8 %v9378
  %v9380 = vlaneseq
  %v9381 = vshrl.u32 %v9380, 7
  %v9382 = vsub.s32 %v9379, %v9381
  %v9383 = vrot.slane %v9358, %v9382
  %v9385 = vunpack.c.l.s4 1966171168
  %v9386 = vunpack.c.0.s8 %v9385
  %v9387 = vlaneseq
  %v9388 = vshrl.u32 %v9387, 7
  %v9389 = vsub.s32 %v9386, %v9388
  %v9390 = vrot.slane %v9360, %v9389
  %v9392 = vunpack.c.l.s4 1966171168
  %v9393 = vunpack.c.0.s8 %v9392
  %v9394 = vlaneseq
  %v9395 = vshrl.u32 %v9394, 7
  %v9396 = vsub.s32 %v9393, %v9395
  %v9397 = vrot.slane %v9349, %v9396
  %v9399 = vunpack.c.l.s4 1966171168
  %v9400 = vunpack.c.0.s8 %v9399
  %v9401 = vlaneseq
  %v9402 = vshrl.u32 %v9401, 7
  %v9403 = vsub.s32 %v9400, %v9402
  %v9404 = vrot.slane %v9356, %v9403
  %v9406 = vunpack.c.l.s4 1966171168
  %v9407 = vunpack.c.0.s8 %v9406
  %v9408 = vlaneseq
  %v9409 = vshrl.u32 %v9408, 7
  %v9410 = vsub.s32 %v9407, %v9409
  %v9411 = vrot.slane %v9361, %v9410
  %v9413 = vunpack.c.l.s4 1966171168
  %v9414 = vunpack.c.0.s8 %v9413
  %v9415 = vlaneseq
  %v9416 = vshrl.u32 %v9415, 7
  %v9417 = vsub.s32 %v9414, %v9416
  %v9418 = vrot.slane %v9362, %v9417
  %v9419 = vcombine.low %v9369, %v9397
  %v9420 = vcombine.high %v9369, %v9397
  %v9421 = vcombine.low %v9376, %v9404
  %v9422 = vcombine.high %v9376, %v9404
  %v9423 = vcombine.low %v9383, %v9411
  %v9424 = vcombine.high %v9383, %v9411
  %v9425 = vcombine.low %v9390, %v9418
  %v9426 = vcombine.high %v9390, %v9418
  %v9427 = vunpack.i.l.s16 %v9419
  %v9428 = vunpack.i.h.s16 %v9419
  %v9429 = vunpack.i.l.s16 %v9423
  %v9430 = vunpack.i.h.s16 %v9423
  %v9431 = vunpack.i.l.s16 %v9420
  %v9432 = vunpack.i.h.s16 %v9420
  %v9433 = vunpack.i.l.s16 %v9424
  %v9434 = vunpack.i.h.s16 %v9424
  %v9435 = vunpack.i.l.s16 %v9421
  %v9436 = vunpack.i.h.s16 %v9421
  %v9437 = vunpack.i.l.s16 %v9425
  %v9438 = vunpack.i.h.s16 %v9425
  %v9439 = vunpack.i.l.s16 %v9422
  %v9440 = vunpack.i.h.s16 %v9422
  %v9441 = vunpack.i.l.s16 %v9426
  %v9442 = vunpack.i.h.s16 %v9426
  %v9443 = vpack.i.b16 %v9427, %v9427
  %v9444 = vpack.i.b16 %v9428, %v9428
  %v9445 = vpack.i.b16 %v9429, %v9429
  %v9446 = vpack.i.b16 %v9430, %v9430
  %v9447 = vpack.i.b16 %v9431, %v9431
  %v9448 = vpack.i.b16 %v9432, %v9432
  %v9449 = vpack.i.b16 %v9433, %v9433
  %v9450 = vpack.i.b16 %v9434, %v9434
  %v9451 = vpack.i.b16 %v9435, %v9435
  %v9452 = vpack.i.b16 %v9436, %v9436
  %v9453 = vpack.i.b16 %v9437, %v9437
  %v9454 = vpack.i.b16 %v9438, %v9438
  %v9455 = vpack.i.b16 %v9439, %v9439
  %v9456 = vpack.i.b16 %v9440, %v9440
  %v9457 = vpack.i.b16 %v9441, %v9441
  %v9458 = vpack.i.b16 %v9442, %v9442
  %vm9475 = vsmask.f32 7942
  %vm9476 = vmand %vm4788, %vm9475
  %vm9477 = vmor %vm9476, %vm41
  %vm9478 = vsmask.f32 7946
  %vm9479 = vmand %vm4792, %vm9478
  %vm9480 = vmor %vm9479, %vm9477
  %vm9481 = vsmask.f32 7950
  %vm9482 = vmand %vm4796, %vm9481
  %vm9483 = vmor %vm9482, %vm9480
  %vm9484 = vmor %vm43, %vm9483
  %vm9485 = vsmask.f32 7958
  %vm9486 = vmand %vm4800, %vm9485
  %vm9487 = vmor %vm9486, %vm9484
  %v9488 = vld [vmem:[%s3] sm:$0x3f]
  %v9489 = vsel %vm9487, %v9443, %v9488
  %9490 = vst [vmem:[%s3] sm:$0x3f] %v9489
  %v9491 = vld [vmem:[%s3 + $0x6] sm:$0x3f]
  %v9492 = vsel %vm9487, %v9444, %v9491
  %9493 = vst [vmem:[%s3 + $0x6] sm:$0x3f] %v9492
  %v9494 = vld [vmem:[%s3 + $0xc] sm:$0x3f]
  %v9495 = vsel %vm9487, %v9445, %v9494
  %9496 = vst [vmem:[%s3 + $0xc] sm:$0x3f] %v9495
  %v9497 = vld [vmem:[%s3 + $0x12] sm:$0x3f]
  %v9498 = vsel %vm9487, %v9446, %v9497
  %9499 = vst [vmem:[%s3 + $0x12] sm:$0x3f] %v9498
  %v9500 = vld [vmem:[%s3 + $0x18] sm:$0x3f]
  %v9501 = vsel %vm9487, %v9447, %v9500
  %9502 = vst [vmem:[%s3 + $0x18] sm:$0x3f] %v9501
  %v9503 = vld [vmem:[%s3 + $0x1e] sm:$0x3f]
  %v9504 = vsel %vm9487, %v9448, %v9503
  %9505 = vst [vmem:[%s3 + $0x1e] sm:$0x3f] %v9504
  %v9506 = vld [vmem:[%s3 + $0x24] sm:$0x3f]
  %v9507 = vsel %vm9487, %v9449, %v9506
  %9508 = vst [vmem:[%s3 + $0x24] sm:$0x3f] %v9507
  %v9509 = vld [vmem:[%s3 + $0x2a] sm:$0x3f]
  %v9510 = vsel %vm9487, %v9450, %v9509
  %9511 = vst [vmem:[%s3 + $0x2a] sm:$0x3f] %v9510
  %v9512 = vld [vmem:[%s3 + $0x30] sm:$0x3f]
  %v9513 = vsel %vm9487, %v9451, %v9512
  %9514 = vst [vmem:[%s3 + $0x30] sm:$0x3f] %v9513
  %v9515 = vld [vmem:[%s3 + $0x36] sm:$0x3f]
  %v9516 = vsel %vm9487, %v9452, %v9515
  %9517 = vst [vmem:[%s3 + $0x36] sm:$0x3f] %v9516
  %v9518 = vld [vmem:[%s3 + $0x3c] sm:$0x3f]
  %v9519 = vsel %vm9487, %v9453, %v9518
  %9520 = vst [vmem:[%s3 + $0x3c] sm:$0x3f] %v9519
  %v9521 = vld [vmem:[%s3 + $0x42] sm:$0x3f]
  %v9522 = vsel %vm9487, %v9454, %v9521
  %9523 = vst [vmem:[%s3 + $0x42] sm:$0x3f] %v9522
  %v9524 = vld [vmem:[%s3 + $0x48] sm:$0x3f]
  %v9525 = vsel %vm9487, %v9455, %v9524
  %9526 = vst [vmem:[%s3 + $0x48] sm:$0x3f] %v9525
  %v9527 = vld [vmem:[%s3 + $0x4e] sm:$0x3f]
  %v9528 = vsel %vm9487, %v9456, %v9527
  %9529 = vst [vmem:[%s3 + $0x4e] sm:$0x3f] %v9528
  %v9530 = vld [vmem:[%s3 + $0x54] sm:$0x3f]
  %v9531 = vsel %vm9487, %v9457, %v9530
  %9532 = vst [vmem:[%s3 + $0x54] sm:$0x3f] %v9531
  %v9533 = vld [vmem:[%s3 + $0x5a] sm:$0x3f]
  %v9534 = vsel %vm9487, %v9458, %v9533
  %9535 = vst [vmem:[%s3 + $0x5a] sm:$0x3f] %v9534
  // Predicated region
  $region14: #{forward.4} parent=0 // pred_check
    _
  $region15: #{forward.4} parent=0 // pred_check_branch
    %9537 = sbr.rel (0) target = $region17
  $region16: #{forward.4} parent=0 // pred_region
    _
  $region17: #{forward.4} parent=0 // pred_fallthru
    _
  // Predicated region
  $region18: #{forward.4} parent=0 // pred_check
    _
  $region19: #{forward.4} parent=0 // pred_check_branch
    %9539 = sbr.rel (0) target = $region21
  $region20: #{forward.4} parent=0 // pred_region
    _
  $region21: #{forward.4} parent=0 // pred_fallthru
    _

// kernel: tile.28
$region0: #{tile.28}
  #allocation0 [shape = 's32[1]{0}', space=sflag, size = 0x4, scoped, tag = 'scoped memory for tile.28']
  %s0 = inlined_call_operand.vmem [shape: f32[3], index: 0, kind: input, shape index: {}]
  %s1 = inlined_call_operand.vmem [shape: f32[32,3], index: 1, kind: output, shape index: {}]
  // Predicated region
  $region2: #{tile.28} parent=0 // pred_check
    _
  $region3: #{tile.28} parent=0 // pred_check_branch
    %3 = sbr.rel (0) target = $region5
  $region4: #{tile.28} parent=0 // pred_region
    _
  $region5: #{tile.28} parent=0 // pred_fallthru
    _
  %v4 = vld [vmem:[%s0] ss:$0 sm:$0xff]
  %5 = vst [vmem:[%s1] sm:$0xff] %v4
  %s6 = scalar_lea.vmem %s1, 8
  %7 = vst [vmem:[%s6] sm:$0xff] %v4
  %s8 = scalar_lea.vmem %s1, 16
  %9 = vst [vmem:[%s8] sm:$0xff] %v4
  %s10 = scalar_lea.vmem %s1, 24
  %11 = vst [vmem:[%s10] sm:$0xff] %v4

// kernel: tile.29
$region0: #{tile.29}
  %s0 = inlined_call_operand.vmem [shape: f32[32,3], index: 0, kind: input, shape index: {}]
  %s1 = inlined_call_operand.vmem [shape: f32[1,96], index: 1, kind: output, shape index: {}]
  $region1: #{tile.29} parent=0
    #allocation0 [shape = 'u8[4096]{0}', space=vmem, size = 0x1000, scoped, tag = 'scoped mem for output reshape']
    %v2 = vld [vmem:[%s0] sm:$0x1]
    %vm3 = vcmask 23552
    %4 = vst.msk [vmem:[#allocation0] sm:$0x1] %vm3, %v2
    %s5 = scalar_lea.vmem %s0, 31
    %v6 = vld [vmem:[%s5] sm:$0x1]
    %7 = vrot.lane.b32.xlu0 %v6, 93
    %v8 = vpop.permute.xlu0 %7
    %vm9 = vcmask 786152
    %10 = vst.msk [vmem:[#allocation0] sm:$0x1] %vm9, %v8
    %s11 = scalar_lea.vmem %s0, 30
    %v12 = vld [vmem:[%s11] sm:$0x1]
    %13 = vrot.lane.b32.xlu0 %v12, 90
    %v14 = vpop.permute.xlu0 %13
    %vm15 = vcmask 761552
    %16 = vst.msk [vmem:[#allocation0] sm:$0x1] %vm15, %v14
    %s17 = scalar_lea.vmem %s0, 29
    %v18 = vld [vmem:[%s17] sm:$0x1]
    %19 = vrot.lane.b32.xlu0 %v18, 87
    %v20 = vpop.permute.xlu0 %19
    %vm21 = vcmask 736952
    %22 = vst.msk [vmem:[#allocation0] sm:$0x1] %vm21, %v20
    %s23 = scalar_lea.vmem %s0, 28
    %v24 = vld [vmem:[%s23] sm:$0x1]
    %25 = vrot.lane.b32.xlu0 %v24, 84
    %v26 = vpop.permute.xlu0 %25
    %vm27 = vcmask 712352
    %28 = vst.msk [vmem:[#allocation0] sm:$0x1] %vm27, %v26
    %s29 = scalar_lea.vmem %s0, 27
    %v30 = vld [vmem:[%s29] sm:$0x1]
    %31 = vrot.lane.b32.xlu0 %v30, 81
    %v32 = vpop.permute.xlu0 %31
    %vm33 = vcmask 687752
    %34 = vst.msk [vmem:[#allocation0] sm:$0x1] %vm33, %v32
    %s35 = scalar_lea.vmem %s0, 26
    %v36 = vld [vmem:[%s35] sm:$0x1]
    %37 = vrot.lane.b32.xlu0 %v36, 78
    %v38 = vpop.permute.xlu0 %37
    %vm39 = vcmask 663152
    %40 = vst.msk [vmem:[#allocation0] sm:$0x1] %vm39, %v38
    %s41 = scalar_lea.vmem %s0, 25
    %v42 = vld [vmem:[%s41] sm:$0x1]
    %43 = vrot.lane.b32.xlu0 %v42, 75
    %v44 = vpop.permute.xlu0 %43
    %vm45 = vcmask 638552
    %46 = vst.msk [vmem:[#allocation0] sm:$0x1] %vm45, %v44
    %s47 = scalar_lea.vmem %s0, 24
    %v48 = vld [vmem:[%s47] sm:$0x1]
    %49 = vrot.lane.b32.xlu0 %v48, 72
    %v50 = vpop.permute.xlu0 %49
    %vm51 = vcmask 613952
    %52 = vst.msk [vmem:[#allocation0] sm:$0x1] %vm51, %v50
    %s53 = scalar_lea.vmem %s0, 23
    %v54 = vld [vmem:[%s53] sm:$0x1]
    %55 = vrot.lane.b32.xlu0 %v54, 69
    %v56 = vpop.permute.xlu0 %55
    %vm57 = vcmask 589352
    %58 = vst.msk [vmem:[#allocation0] sm:$0x1] %vm57, %v56
    %s59 = scalar_lea.vmem %s0, 22
    %v60 = vld [vmem:[%s59] sm:$0x1]
    %61 = vrot.lane.b32.xlu0 %v60, 66
    %v62 = vpop.permute.xlu0 %61
    %vm63 = vcmask 564752
    %64 = vst.msk [vmem:[#allocation0] sm:$0x1] %vm63, %v62
    %s65 = scalar_lea.vmem %s0, 21
    %v66 = vld [vmem:[%s65] sm:$0x1]
    %67 = vrot.lane.b32.xlu0 %v66, 63
    %v68 = vpop.permute.xlu0 %67
    %vm69 = vcmask 540152
    %70 = vst.msk [vmem:[#allocation0] sm:$0x1] %vm69, %v68
    %s71 = scalar_lea.vmem %s0, 20
    %v72 = vld [vmem:[%s71] sm:$0x1]
    %73 = vrot.lane.b32.xlu0 %v72, 60
    %v74 = vpop.permute.xlu0 %73
    %vm75 = vcmask 515552
    %76 = vst.msk [vmem:[#allocation0] sm:$0x1] %vm75, %v74
    %s77 = scalar_lea.vmem %s0, 19
    %v78 = vld [vmem:[%s77] sm:$0x1]
    %79 = vrot.lane.b32.xlu0 %v78, 57
    %v80 = vpop.permute.xlu0 %79
    %vm81 = vcmask 490952
    %82 = vst.msk [vmem:[#allocation0] sm:$0x1] %vm81, %v80
    %s83 = scalar_lea.vmem %s0, 18
    %v84 = vld [vmem:[%s83] sm:$0x1]
    %85 = vrot.lane.b32.xlu0 %v84, 54
    %v86 = vpop.permute.xlu0 %85
    %vm87 = vcmask 466352
    %88 = vst.msk [vmem:[#allocation0] sm:$0x1] %vm87, %v86
    %s89 = scalar_lea.vmem %s0, 17
    %v90 = vld [vmem:[%s89] sm:$0x1]
    %91 = vrot.lane.b32.xlu0 %v90, 51
    %v92 = vpop.permute.xlu0 %91
    %vm93 = vcmask 441752
    %94 = vst.msk [vmem:[#allocation0] sm:$0x1] %vm93, %v92
    %s95 = scalar_lea.vmem %s0, 16
    %v96 = vld [vmem:[%s95] sm:$0x1]
    %97 = vrot.lane.b32.xlu0 %v96, 48
    %v98 = vpop.permute.xlu0 %97
    %vm99 = vcmask 417152
    %100 = vst.msk [vmem:[#allocation0] sm:$0x1] %vm99, %v98
    %s101 = scalar_lea.vmem %s0, 15
    %v102 = vld [vmem:[%s101] sm:$0x1]
    %103 = vrot.lane.b32.xlu0 %v102, 45
    %v104 = vpop.permute.xlu0 %103
    %vm105 = vcmask 392552
    %106 = vst.msk [vmem:[#allocation0] sm:$0x1] %vm105, %v104
    %s107 = scalar_lea.vmem %s0, 14
    %v108 = vld [vmem:[%s107] sm:$0x1]
    %109 = vrot.lane.b32.xlu0 %v108, 42
    %v110 = vpop.permute.xlu0 %109
    %vm111 = vcmask 367952
    %112 = vst.msk [vmem:[#allocation0] sm:$0x1] %vm111, %v110
    %s113 = scalar_lea.vmem %s0, 13
    %v114 = vld [vmem:[%s113] sm:$0x1]
    %115 = vrot.lane.b32.xlu0 %v114, 39
    %v116 = vpop.permute.xlu0 %115
    %vm117 = vcmask 343352
    %118 = vst.msk [vmem:[#allocation0] sm:$0x1] %vm117, %v116
    %s119 = scalar_lea.vmem %s0, 12
    %v120 = vld [vmem:[%s119] sm:$0x1]
    %121 = vrot.lane.b32.xlu0 %v120, 36
    %v122 = vpop.permute.xlu0 %121
    %vm123 = vcmask 318752
    %124 = vst.msk [vmem:[#allocation0] sm:$0x1] %vm123, %v122
    %s125 = scalar_lea.vmem %s0, 11
    %v126 = vld [vmem:[%s125] sm:$0x1]
    %127 = vrot.lane.b32.xlu0 %v126, 33
    %v128 = vpop.permute.xlu0 %127
    %vm129 = vcmask 294152
    %130 = vst.msk [vmem:[#allocation0] sm:$0x1] %vm129, %v128
    %s131 = scalar_lea.vmem %s0, 10
    %v132 = vld [vmem:[%s131] sm:$0x1]
    %133 = vrot.lane.b32.xlu0 %v132, 30
    %v134 = vpop.permute.xlu0 %133
    %vm135 = vcmask 269552
    %136 = vst.msk [vmem:[#allocation0] sm:$0x1] %vm135, %v134
    %s137 = scalar_lea.vmem %s0, 9
    %v138 = vld [vmem:[%s137] sm:$0x1]
    %139 = vrot.lane.b32.xlu0 %v138, 27
    %v140 = vpop.permute.xlu0 %139
    %vm141 = vcmask 244952
    %142 = vst.msk [vmem:[#allocation0] sm:$0x1] %vm141, %v140
    %s143 = scalar_lea.vmem %s0, 8
    %v144 = vld [vmem:[%s143] sm:$0x1]
    %145 = vrot.lane.b32.xlu0 %v144, 24
    %v146 = vpop.permute.xlu0 %145
    %vm147 = vcmask 220352
    %148 = vst.msk [vmem:[#allocation0] sm:$0x1] %vm147, %v146
    %s149 = scalar_lea.vmem %s0, 7
    %v150 = vld [vmem:[%s149] sm:$0x1]
    %151 = vrot.lane.b32.xlu0 %v150, 21
    %v152 = vpop.permute.xlu0 %151
    %vm153 = vcmask 195752
    %154 = vst.msk [vmem:[#allocation0] sm:$0x1] %vm153, %v152
    %s155 = scalar_lea.vmem %s0, 6
    %v156 = vld [vmem:[%s155] sm:$0x1]
    %157 = vrot.lane.b32.xlu0 %v156, 18
    %v158 = vpop.permute.xlu0 %157
    %vm159 = vcmask 171152
    %160 = vst.msk [vmem:[#allocation0] sm:$0x1] %vm159, %v158
    %s161 = scalar_lea.vmem %s0, 5
    %v162 = vld [vmem:[%s161] sm:$0x1]
    %163 = vrot.lane.b32.xlu0 %v162, 15
    %v164 = vpop.permute.xlu0 %163
    %vm165 = vcmask 146552
    %166 = vst.msk [vmem:[#allocation0] sm:$0x1] %vm165, %v164
    %s167 = scalar_lea.vmem %s0, 4
    %v168 = vld [vmem:[%s167] sm:$0x1]
    %169 = vrot.lane.b32.xlu0 %v168, 12
    %v170 = vpop.permute.xlu0 %169
    %vm171 = vcmask 121952
    %172 = vst.msk [vmem:[#allocation0] sm:$0x1] %vm171, %v170
    %s173 = scalar_lea.vmem %s0, 3
    %v174 = vld [vmem:[%s173] sm:$0x1]
    %175 = vrot.lane.b32.xlu0 %v174, 9
    %v176 = vpop.permute.xlu0 %175
    %vm177 = vcmask 97352
    %178 = vst.msk [vmem:[#allocation0] sm:$0x1] %vm177, %v176
    %s179 = scalar_lea.vmem %s0, 2
    %v180 = vld [vmem:[%s179] sm:$0x1]
    %181 = vrot.lane.b32.xlu0 %v180, 6
    %v182 = vpop.permute.xlu0 %181
    %vm183 = vcmask 72752
    %184 = vst.msk [vmem:[#allocation0] sm:$0x1] %vm183, %v182
    %s185 = scalar_lea.vmem %s0, 1
    %v186 = vld [vmem:[%s185] sm:$0x1]
    %187 = vrot.lane.b32.xlu0 %v186, 3
    %v188 = vpop.permute.xlu0 %187
    %vm189 = vcmask 48152
    %190 = vst.msk [vmem:[#allocation0] sm:$0x1] %vm189, %v188
    %s192 = sshllo.u32 0, 1
    %v194 = vld [vmem:[#allocation0] sm:%s192]
    %s195 = sshllo.u32 0, 1
    %196 = vst [vmem:[%s1] sm:%s195] %v194

// kernel: forward.5
$region0: #{forward.5}
  #allocation0 [shape = 'u32[]', space=smem, size = 0x4, offset = 0x4, fixed_abs, tag = 'smem constant byte address 0x4 - core index']
  #allocation1 [shape = 'u32[144,128]{1,0:T(1,128)}', space=vmem, size = 0x12000, scoped, tag = 'internal scratch']
  #allocation2 [shape = 'bf16[2,18,768]{2,1,0:T(8,128)(2,1)}', space=vmem, size = 0x12000, scoped, tag = 'scratch operand']
  %s0 = inlined_call_operand.vmem [shape: bf16[2,16,768], index: 0, kind: input, shape index: {}]
  %s1 = inlined_call_operand.vmem [shape: bf16[2,2,768,96], index: 1, kind: input, shape index: {}]
  %s2 = inlined_call_operand.vmem [shape: f32[1,96], index: 2, kind: input, shape index: {}]
  %s3 = inlined_call_operand.vmem [shape: bf16[2,16,2,96], index: 3, kind: output, shape index: {}]
  %s4 = sld [smem:[#allocation0]]
  $region22: #{forward.5} parent=0
    _
  %s6 = ssub.s32 1, %s4
  %s7 = scalar_select 0, %s6, %s4
  // Predicated region
  $region2: #{forward.5} parent=0 // pred_check
    _
  $region3: #{forward.5} parent=0 // pred_check_branch
    %9 = sbr.rel (0) target = $region5
  $region4: #{forward.5} parent=0 // pred_region
    _
  $region5: #{forward.5} parent=0 // pred_fallthru
    _
  // Predicated region
  $region6: #{forward.5} parent=0 // pred_check
    _
  $region7: #{forward.5} parent=0 // pred_check_branch
    %11 = sbr.rel (0) target = $region9
  $region8: #{forward.5} parent=0 // pred_region
    _
  $region9: #{forward.5} parent=0 // pred_fallthru
    _
  // Predicated region
  $region10: #{forward.5} parent=0 // pred_check
    _
  $region11: #{forward.5} parent=0 // pred_check_branch
    %13 = sbr.rel (0) target = $region13
  $region12: #{forward.5} parent=0 // pred_region
    _
  $region13: #{forward.5} parent=0 // pred_fallthru
    _
  %vm15 = vcmask 1040384
  %vm16 = vsmask.f32 256
  %vm17 = vmand %vm15, %vm16
  %vm18 = vcmask 1044484
  %vm19 = vsmask.f32 4352
  %vm20 = vmand %vm18, %vm19
  %vm21 = vmor %vm20, %vm17
  %v22 = vld [vmem:[#allocation2] sm:$0x11]
  %v23 = vsel %vm21, 0, %v22
  %24 = vst [vmem:[#allocation2] sm:$0x11] %v23
  %v25 = vld [vmem:[#allocation2 + $0x8] sm:$0x11]
  %v26 = vsel %vm21, 0, %v25
  %27 = vst [vmem:[#allocation2 + $0x8] sm:$0x11] %v26
  %v28 = vld [vmem:[#allocation2 + $0x10] sm:$0x11]
  %v29 = vsel %vm21, 0, %v28
  %30 = vst [vmem:[#allocation2 + $0x10] sm:$0x11] %v29
  %v31 = vld [vmem:[#allocation2 + $0x48] sm:$0x11]
  %v32 = vsel %vm21, 0, %v31
  %33 = vst [vmem:[#allocation2 + $0x48] sm:$0x11] %v32
  %v34 = vld [vmem:[#allocation2 + $0x50] sm:$0x11]
  %v35 = vsel %vm21, 0, %v34
  %36 = vst [vmem:[#allocation2 + $0x50] sm:$0x11] %v35
  %v37 = vld [vmem:[#allocation2 + $0x58] sm:$0x11]
  %v38 = vsel %vm21, 0, %v37
  %39 = vst [vmem:[#allocation2 + $0x58] sm:$0x11] %v38
  %vm40 = vsmask.f32 7938
  %vm41 = vmand %vm15, %vm40
  %vm42 = vsmask.f32 7954
  %vm43 = vmand %vm18, %vm42
  %vm44 = vmor %vm43, %vm41
  %v45 = vld [vmem:[#allocation2 + $0x30] sm:$0x11]
  %v46 = vsel %vm44, 0, %v45
  %47 = vst [vmem:[#allocation2 + $0x30] sm:$0x11] %v46
  %v48 = vld [vmem:[#allocation2 + $0x38] sm:$0x11]
  %v49 = vsel %vm44, 0, %v48
  %50 = vst [vmem:[#allocation2 + $0x38] sm:$0x11] %v49
  %v51 = vld [vmem:[#allocation2 + $0x40] sm:$0x11]
  %v52 = vsel %vm44, 0, %v51
  %53 = vst [vmem:[#allocation2 + $0x40] sm:$0x11] %v52
  %v54 = vld [vmem:[#allocation2 + $0x78] sm:$0x11]
  %v55 = vsel %vm44, 0, %v54
  %56 = vst [vmem:[#allocation2 + $0x78] sm:$0x11] %v55
  %v57 = vld [vmem:[#allocation2 + $0x80] sm:$0x11]
  %v58 = vsel %vm44, 0, %v57
  %59 = vst [vmem:[#allocation2 + $0x80] sm:$0x11] %v58
  %v60 = vld [vmem:[#allocation2 + $0x88] sm:$0x11]
  %v61 = vsel %vm44, 0, %v60
  %62 = vst [vmem:[#allocation2 + $0x88] sm:$0x11] %v61
  %v63 = vld [vmem:[%s0] sm:$0xff]
  %v64 = vld [vmem:[%s0 + $0x8] sm:$0xff]
  %v65 = vld [vmem:[%s0 + $0x10] sm:$0xff]
  %v66 = vld [vmem:[%s0 + $0x18] sm:$0xff]
  %v67 = vld [vmem:[%s0 + $0x20] sm:$0xff]
  %v68 = vld [vmem:[%s0 + $0x28] sm:$0xff]
  %v69 = vld [vmem:[%s0 + $0x30] sm:$0xff]
  %v70 = vld [vmem:[%s0 + $0x38] sm:$0xff]
  %v71 = vld [vmem:[%s0 + $0x40] sm:$0xff]
  %v72 = vld [vmem:[%s0 + $0x48] sm:$0xff]
  %v73 = vld [vmem:[%s0 + $0x50] sm:$0xff]
  %v74 = vld [vmem:[%s0 + $0x58] sm:$0xff]
  %vm75 = vsmask.f32 4368
  %vm76 = vmor %vm16, %vm75
  %v78 = vshrl.u32 %v63, 16
  %v80 = vrot.slane %v78, 7
  %v81 = vshll.u32 %v63, 16
  %v83 = vor.u32 %v80, %v81
  %v85 = vshrl.u32 %v64, 16
  %v87 = vrot.slane %v85, 7
  %v88 = vshll.u32 %v64, 16
  %v90 = vor.u32 %v87, %v88
  %v92 = vshrl.u32 %v65, 16
  %v94 = vrot.slane %v92, 7
  %v95 = vshll.u32 %v65, 16
  %v97 = vor.u32 %v94, %v95
  %v98 = vrot.slane %v80, 4
  %v100 = vshrl.u32 %v66, 16
  %v102 = vrot.slane %v100, 7
  %v103 = vshll.u32 %v66, 16
  %v105 = vor.u32 %v102, %v103
  %v106 = vsel %vm76, %v98, %v105
  %v107 = vrot.slane %v87, 4
  %v109 = vshrl.u32 %v67, 16
  %v111 = vrot.slane %v109, 7
  %v112 = vshll.u32 %v67, 16
  %v114 = vor.u32 %v111, %v112
  %v115 = vsel %vm76, %v107, %v114
  %v116 = vrot.slane %v94, 4
  %v118 = vshrl.u32 %v68, 16
  %v120 = vrot.slane %v118, 7
  %v121 = vshll.u32 %v68, 16
  %v123 = vor.u32 %v120, %v121
  %v124 = vsel %vm76, %v116, %v123
  %v125 = vrot.slane %v102, 4
  %v126 = vrot.slane %v111, 4
  %v127 = vrot.slane %v120, 4
  %v129 = vshrl.u32 %v69, 16
  %v131 = vrot.slane %v129, 7
  %v132 = vshll.u32 %v69, 16
  %v134 = vor.u32 %v131, %v132
  %v136 = vshrl.u32 %v70, 16
  %v138 = vrot.slane %v136, 7
  %v139 = vshll.u32 %v70, 16
  %v141 = vor.u32 %v138, %v139
  %v143 = vshrl.u32 %v71, 16
  %v145 = vrot.slane %v143, 7
  %v146 = vshll.u32 %v71, 16
  %v148 = vor.u32 %v145, %v146
  %v149 = vrot.slane %v131, 4
  %v151 = vshrl.u32 %v72, 16
  %v153 = vrot.slane %v151, 7
  %v154 = vshll.u32 %v72, 16
  %v156 = vor.u32 %v153, %v154
  %v157 = vsel %vm76, %v149, %v156
  %v158 = vrot.slane %v138, 4
  %v160 = vshrl.u32 %v73, 16
  %v162 = vrot.slane %v160, 7
  %v163 = vshll.u32 %v73, 16
  %v165 = vor.u32 %v162, %v163
  %v166 = vsel %vm76, %v158, %v165
  %v167 = vrot.slane %v145, 4
  %v169 = vshrl.u32 %v74, 16
  %v171 = vrot.slane %v169, 7
  %v172 = vshll.u32 %v74, 16
  %v174 = vor.u32 %v171, %v172
  %v175 = vsel %vm76, %v167, %v174
  %v176 = vrot.slane %v153, 4
  %v177 = vrot.slane %v162, 4
  %v178 = vrot.slane %v171, 4
  %vm197 = vcmask 1043456
  %vm198 = vmand %vm197, %vm40
  %vm199 = vcmask 1047556
  %vm200 = vmand %vm199, %vm42
  %vm201 = vmor %vm200, %vm198
  %v202 = vld [vmem:[#allocation2] sm:$0xff]
  %v203 = vsel %vm201, %v83, %v202
  %204 = vst [vmem:[#allocation2] sm:$0xff] %v203
  %v205 = vld [vmem:[#allocation2 + $0x8] sm:$0xff]
  %v206 = vsel %vm201, %v90, %v205
  %207 = vst [vmem:[#allocation2 + $0x8] sm:$0xff] %v206
  %v208 = vld [vmem:[#allocation2 + $0x10] sm:$0xff]
  %v209 = vsel %vm201, %v97, %v208
  %210 = vst [vmem:[#allocation2 + $0x10] sm:$0xff] %v209
  %211 = vst [vmem:[#allocation2 + $0x18] sm:$0xff] %v106
  %212 = vst [vmem:[#allocation2 + $0x20] sm:$0xff] %v115
  %213 = vst [vmem:[#allocation2 + $0x28] sm:$0xff] %v124
  %v214 = vld [vmem:[#allocation2 + $0x30] sm:$0x11]
  %v215 = vsel %vm21, %v125, %v214
  %216 = vst [vmem:[#allocation2 + $0x30] sm:$0x11] %v215
  %v217 = vld [vmem:[#allocation2 + $0x38] sm:$0x11]
  %v218 = vsel %vm21, %v126, %v217
  %219 = vst [vmem:[#allocation2 + $0x38] sm:$0x11] %v218
  %v220 = vld [vmem:[#allocation2 + $0x40] sm:$0x11]
  %v221 = vsel %vm21, %v127, %v220
  %222 = vst [vmem:[#allocation2 + $0x40] sm:$0x11] %v221
  %v223 = vld [vmem:[#allocation2 + $0x48] sm:$0xff]
  %v224 = vsel %vm201, %v134, %v223
  %225 = vst [vmem:[#allocation2 + $0x48] sm:$0xff] %v224
  %v226 = vld [vmem:[#allocation2 + $0x50] sm:$0xff]
  %v227 = vsel %vm201, %v141, %v226
  %228 = vst [vmem:[#allocation2 + $0x50] sm:$0xff] %v227
  %v229 = vld [vmem:[#allocation2 + $0x58] sm:$0xff]
  %v230 = vsel %vm201, %v148, %v229
  %231 = vst [vmem:[#allocation2 + $0x58] sm:$0xff] %v230
  %232 = vst [vmem:[#allocation2 + $0x60] sm:$0xff] %v157
  %233 = vst [vmem:[#allocation2 + $0x68] sm:$0xff] %v166
  %234 = vst [vmem:[#allocation2 + $0x70] sm:$0xff] %v175
  %v235 = vld [vmem:[#allocation2 + $0x78] sm:$0x11]
  %v236 = vsel %vm21, %v176, %v235
  %237 = vst [vmem:[#allocation2 + $0x78] sm:$0x11] %v236
  %v238 = vld [vmem:[#allocation2 + $0x80] sm:$0x11]
  %v239 = vsel %vm21, %v177, %v238
  %240 = vst [vmem:[#allocation2 + $0x80] sm:$0x11] %v239
  %v241 = vld [vmem:[#allocation2 + $0x88] sm:$0x11]
  %v242 = vsel %vm21, %v178, %v241
  %243 = vst [vmem:[#allocation2 + $0x88] sm:$0x11] %v242
  %v244 = vld [vmem:[%s2] sm:$0x1]
  %v245 = vld [vmem:[#allocation2] sm:$0xff]
  %v246 = vld [vmem:[#allocation2 + $0x8] sm:$0xff]
  %v247 = vld [vmem:[#allocation2 + $0x10] sm:$0xff]
  %v248 = vld [vmem:[#allocation2 + $0x18] sm:$0xff]
  %v249 = vld [vmem:[#allocation2 + $0x20] sm:$0xff]
  %v250 = vld [vmem:[#allocation2 + $0x28] sm:$0xff]
  %v251 = vld [vmem:[#allocation2 + $0x48] sm:$0xff]
  %v252 = vld [vmem:[#allocation2 + $0x50] sm:$0xff]
  %v253 = vld [vmem:[#allocation2 + $0x58] sm:$0xff]
  %v254 = vld [vmem:[#allocation2 + $0x60] sm:$0xff]
  %v255 = vld [vmem:[#allocation2 + $0x68] sm:$0xff]
  %v256 = vld [vmem:[#allocation2 + $0x70] sm:$0xff]
  %v257 = vld [vmem:[%s1] sm:$0xf]
  %v258 = vld [vmem:[%s1 + $0x4] sm:$0xf]
  %v259 = vld [vmem:[%s1 + $0x8] sm:$0xf]
  %v260 = vld [vmem:[%s1 + $0xc] sm:$0xf]
  %v261 = vld [vmem:[%s1 + $0x10] sm:$0xf]
  %v262 = vld [vmem:[%s1 + $0x14] sm:$0xf]
  %v263 = vld [vmem:[%s1 + $0x18] sm:$0xf]
  %v264 = vld [vmem:[%s1 + $0x1c] sm:$0xf]
  %v265 = vld [vmem:[%s1 + $0x20] sm:$0xf]
  %v266 = vld [vmem:[%s1 + $0x24] sm:$0xf]
  %v267 = vld [vmem:[%s1 + $0x28] sm:$0xf]
  %v268 = vld [vmem:[%s1 + $0x2c] sm:$0xf]
  %v269 = vld [vmem:[%s1 + $0x30] sm:$0xf]
  %v270 = vld [vmem:[%s1 + $0x34] sm:$0xf]
  %v271 = vld [vmem:[%s1 + $0x38] sm:$0xf]
  %v272 = vld [vmem:[%s1 + $0x3c] sm:$0xf]
  %v273 = vld [vmem:[%s1 + $0x40] sm:$0xf]
  %v274 = vld [vmem:[%s1 + $0x44] sm:$0xf]
  %v275 = vld [vmem:[%s1 + $0x48] sm:$0xf]
  %v276 = vld [vmem:[%s1 + $0x4c] sm:$0xf]
  %v277 = vld [vmem:[%s1 + $0x50] sm:$0xf]
  %v278 = vld [vmem:[%s1 + $0x54] sm:$0xf]
  %v279 = vld [vmem:[%s1 + $0x58] sm:$0xf]
  %v280 = vld [vmem:[%s1 + $0x5c] sm:$0xf]
  %v281 = vld [vmem:[%s1 + $0x60] sm:$0xf]
  %v282 = vld [vmem:[%s1 + $0x64] sm:$0xf]
  %v283 = vld [vmem:[%s1 + $0x68] sm:$0xf]
  %v284 = vld [vmem:[%s1 + $0x6c] sm:$0xf]
  %v285 = vld [vmem:[%s1 + $0x70] sm:$0xf]
  %v286 = vld [vmem:[%s1 + $0x74] sm:$0xf]
  %v287 = vld [vmem:[%s1 + $0x78] sm:$0xf]
  %v288 = vld [vmem:[%s1 + $0x7c] sm:$0xf]
  %v289 = vld [vmem:[%s1 + $0x80] sm:$0xf]
  %v290 = vld [vmem:[%s1 + $0x84] sm:$0xf]
  %v291 = vld [vmem:[%s1 + $0x88] sm:$0xf]
  %v292 = vld [vmem:[%s1 + $0x8c] sm:$0xf]
  %v293 = vld [vmem:[%s1 + $0x90] sm:$0xf]
  %v294 = vld [vmem:[%s1 + $0x94] sm:$0xf]
  %v295 = vld [vmem:[%s1 + $0x98] sm:$0xf]
  %v296 = vld [vmem:[%s1 + $0x9c] sm:$0xf]
  %v297 = vld [vmem:[%s1 + $0xa0] sm:$0xf]
  %v298 = vld [vmem:[%s1 + $0xa4] sm:$0xf]
  %v299 = vld [vmem:[%s1 + $0xa8] sm:$0xf]
  %v300 = vld [vmem:[%s1 + $0xac] sm:$0xf]
  %v301 = vld [vmem:[%s1 + $0xb0] sm:$0xf]
  %v302 = vld [vmem:[%s1 + $0xb4] sm:$0xf]
  %v303 = vld [vmem:[%s1 + $0xb8] sm:$0xf]
  %v304 = vld [vmem:[%s1 + $0xbc] sm:$0xf]
  %v305 = vld [vmem:[%s1 + $0xc0] sm:$0xf]
  %v306 = vld [vmem:[%s1 + $0xc4] sm:$0xf]
  %v307 = vld [vmem:[%s1 + $0xc8] sm:$0xf]
  %v308 = vld [vmem:[%s1 + $0xcc] sm:$0xf]
  %v309 = vld [vmem:[%s1 + $0xd0] sm:$0xf]
  %v310 = vld [vmem:[%s1 + $0xd4] sm:$0xf]
  %v311 = vld [vmem:[%s1 + $0xd8] sm:$0xf]
  %v312 = vld [vmem:[%s1 + $0xdc] sm:$0xf]
  %v313 = vld [vmem:[%s1 + $0xe0] sm:$0xf]
  %v314 = vld [vmem:[%s1 + $0xe4] sm:$0xf]
  %v315 = vld [vmem:[%s1 + $0xe8] sm:$0xf]
  %v316 = vld [vmem:[%s1 + $0xec] sm:$0xf]
  %v317 = vld [vmem:[%s1 + $0xf0] sm:$0xf]
  %v318 = vld [vmem:[%s1 + $0xf4] sm:$0xf]
  %v319 = vld [vmem:[%s1 + $0xf8] sm:$0xf]
  %v320 = vld [vmem:[%s1 + $0xfc] sm:$0xf]
  %v321 = vld [vmem:[%s1 + $0x100] sm:$0xf]
  %v322 = vld [vmem:[%s1 + $0x104] sm:$0xf]
  %v323 = vld [vmem:[%s1 + $0x108] sm:$0xf]
  %v324 = vld [vmem:[%s1 + $0x10c] sm:$0xf]
  %v325 = vld [vmem:[%s1 + $0x110] sm:$0xf]
  %v326 = vld [vmem:[%s1 + $0x114] sm:$0xf]
  %v327 = vld [vmem:[%s1 + $0x118] sm:$0xf]
  %v328 = vld [vmem:[%s1 + $0x11c] sm:$0xf]
  %v329 = vld [vmem:[%s1 + $0x120] sm:$0xf]
  %v330 = vld [vmem:[%s1 + $0x124] sm:$0xf]
  %v331 = vld [vmem:[%s1 + $0x128] sm:$0xf]
  %v332 = vld [vmem:[%s1 + $0x12c] sm:$0xf]
  %v333 = vld [vmem:[%s1 + $0x130] sm:$0xf]
  %v334 = vld [vmem:[%s1 + $0x134] sm:$0xf]
  %v335 = vld [vmem:[%s1 + $0x138] sm:$0xf]
  %v336 = vld [vmem:[%s1 + $0x13c] sm:$0xf]
  %v337 = vld [vmem:[%s1 + $0x140] sm:$0xf]
  %v338 = vld [vmem:[%s1 + $0x144] sm:$0xf]
  %v339 = vld [vmem:[%s1 + $0x148] sm:$0xf]
  %v340 = vld [vmem:[%s1 + $0x14c] sm:$0xf]
  %v341 = vld [vmem:[%s1 + $0x150] sm:$0xf]
  %v342 = vld [vmem:[%s1 + $0x154] sm:$0xf]
  %v343 = vld [vmem:[%s1 + $0x158] sm:$0xf]
  %v344 = vld [vmem:[%s1 + $0x15c] sm:$0xf]
  %v345 = vld [vmem:[%s1 + $0x160] sm:$0xf]
  %v346 = vld [vmem:[%s1 + $0x164] sm:$0xf]
  %v347 = vld [vmem:[%s1 + $0x168] sm:$0xf]
  %v348 = vld [vmem:[%s1 + $0x16c] sm:$0xf]
  %v349 = vld [vmem:[%s1 + $0x170] sm:$0xf]
  %v350 = vld [vmem:[%s1 + $0x174] sm:$0xf]
  %v351 = vld [vmem:[%s1 + $0x178] sm:$0xf]
  %v352 = vld [vmem:[%s1 + $0x17c] sm:$0xf]
  %v353 = vld [vmem:[#allocation2 + $0x30] sm:$0x11]
  %v354 = vld [vmem:[#allocation2 + $0x38] sm:$0x11]
  %v355 = vld [vmem:[#allocation2 + $0x40] sm:$0x11]
  %v356 = vld [vmem:[#allocation2 + $0x78] sm:$0x11]
  %v357 = vld [vmem:[#allocation2 + $0x80] sm:$0x11]
  %v358 = vld [vmem:[#allocation2 + $0x88] sm:$0x11]
  %vm359 = vsmask.f32 3328
  %vm360 = vsmask.f32 7440
  %vm361 = vmor %vm359, %vm360
  %v363 = vshrl.u32 %v245, 16
  %v365 = vrot.slane %v363, 4
  %v366 = vshll.u32 %v245, 16
  %v368 = vrot.slane %v366, 5
  %v369 = vor.u32 %v365, %v368
  %v370 = vrot.slane %v369, 4
  %v372 = vshll.u32 %v248, 16
  %v374 = vrot.slane %v372, 5
  %v375 = vsel %vm361, %v370, %v374
  %v377 = vshrl.u32 %v246, 16
  %v379 = vrot.slane %v377, 4
  %v380 = vshll.u32 %v246, 16
  %v382 = vrot.slane %v380, 5
  %v383 = vor.u32 %v379, %v382
  %v384 = vrot.slane %v383, 4
  %v386 = vshll.u32 %v249, 16
  %v388 = vrot.slane %v386, 5
  %v389 = vsel %vm361, %v384, %v388
  %v391 = vshrl.u32 %v247, 16
  %v393 = vrot.slane %v391, 4
  %v394 = vshll.u32 %v247, 16
  %v396 = vrot.slane %v394, 5
  %v397 = vor.u32 %v393, %v396
  %v398 = vrot.slane %v397, 4
  %v400 = vshll.u32 %v250, 16
  %v402 = vrot.slane %v400, 5
  %v403 = vsel %vm361, %v398, %v402
  %v404 = vshrl.u32 %v248, 16
  %v406 = vrot.slane %v404, 4
  %v407 = vor.u32 %v406, %v374
  %v408 = vrot.slane %v407, 4
  %v410 = vshll.u32 %v353, 16
  %v412 = vrot.slane %v410, 5
  %v413 = vsel %vm361, %v408, %v412
  %v414 = vshrl.u32 %v249, 16
  %v416 = vrot.slane %v414, 4
  %v417 = vor.u32 %v416, %v388
  %v418 = vrot.slane %v417, 4
  %v420 = vshll.u32 %v354, 16
  %v422 = vrot.slane %v420, 5
  %v423 = vsel %vm361, %v418, %v422
  %v424 = vshrl.u32 %v250, 16
  %v426 = vrot.slane %v424, 4
  %v427 = vor.u32 %v426, %v402
  %v428 = vrot.slane %v427, 4
  %v430 = vshll.u32 %v355, 16
  %v432 = vrot.slane %v430, 5
  %v433 = vsel %vm361, %v428, %v432
  %v435 = vshrl.u32 %v251, 16
  %v437 = vrot.slane %v435, 4
  %v438 = vshll.u32 %v251, 16
  %v440 = vrot.slane %v438, 5
  %v441 = vor.u32 %v437, %v440
  %v442 = vrot.slane %v441, 4
  %v444 = vshll.u32 %v254, 16
  %v446 = vrot.slane %v444, 5
  %v447 = vsel %vm361, %v442, %v446
  %v449 = vshrl.u32 %v252, 16
  %v451 = vrot.slane %v449, 4
  %v452 = vshll.u32 %v252, 16
  %v454 = vrot.slane %v452, 5
  %v455 = vor.u32 %v451, %v454
  %v456 = vrot.slane %v455, 4
  %v458 = vshll.u32 %v255, 16
  %v460 = vrot.slane %v458, 5
  %v461 = vsel %vm361, %v456, %v460
  %v463 = vshrl.u32 %v253, 16
  %v465 = vrot.slane %v463, 4
  %v466 = vshll.u32 %v253, 16
  %v468 = vrot.slane %v466, 5
  %v469 = vor.u32 %v465, %v468
  %v470 = vrot.slane %v469, 4
  %v472 = vshll.u32 %v256, 16
  %v474 = vrot.slane %v472, 5
  %v475 = vsel %vm361, %v470, %v474
  %v476 = vshrl.u32 %v254, 16
  %v478 = vrot.slane %v476, 4
  %v479 = vor.u32 %v478, %v446
  %v480 = vrot.slane %v479, 4
  %v482 = vshll.u32 %v356, 16
  %v484 = vrot.slane %v482, 5
  %v485 = vsel %vm361, %v480, %v484
  %v486 = vshrl.u32 %v255, 16
  %v488 = vrot.slane %v486, 4
  %v489 = vor.u32 %v488, %v460
  %v490 = vrot.slane %v489, 4
  %v492 = vshll.u32 %v357, 16
  %v494 = vrot.slane %v492, 5
  %v495 = vsel %vm361, %v490, %v494
  %v496 = vshrl.u32 %v256, 16
  %v498 = vrot.slane %v496, 4
  %v499 = vor.u32 %v498, %v474
  %v500 = vrot.slane %v499, 4
  %v502 = vshll.u32 %v358, 16
  %v504 = vrot.slane %v502, 5
  %v505 = vsel %vm361, %v500, %v504
  %s506 = scalar_lea.vmem %s1, 384
  %v507 = vld [vmem:[%s506] sm:$0xf]
  %v508 = vld [vmem:[%s506 + $0x4] sm:$0xf]
  %v509 = vld [vmem:[%s506 + $0x8] sm:$0xf]
  %v510 = vld [vmem:[%s506 + $0xc] sm:$0xf]
  %v511 = vld [vmem:[%s506 + $0x10] sm:$0xf]
  %v512 = vld [vmem:[%s506 + $0x14] sm:$0xf]
  %v513 = vld [vmem:[%s506 + $0x18] sm:$0xf]
  %v514 = vld [vmem:[%s506 + $0x1c] sm:$0xf]
  %v515 = vld [vmem:[%s506 + $0x20] sm:$0xf]
  %v516 = vld [vmem:[%s506 + $0x24] sm:$0xf]
  %v517 = vld [vmem:[%s506 + $0x28] sm:$0xf]
  %v518 = vld [vmem:[%s506 + $0x2c] sm:$0xf]
  %v519 = vld [vmem:[%s506 + $0x30] sm:$0xf]
  %v520 = vld [vmem:[%s506 + $0x34] sm:$0xf]
  %v521 = vld [vmem:[%s506 + $0x38] sm:$0xf]
  %v522 = vld [vmem:[%s506 + $0x3c] sm:$0xf]
  %v523 = vld [vmem:[%s506 + $0x40] sm:$0xf]
  %v524 = vld [vmem:[%s506 + $0x44] sm:$0xf]
  %v525 = vld [vmem:[%s506 + $0x48] sm:$0xf]
  %v526 = vld [vmem:[%s506 + $0x4c] sm:$0xf]
  %v527 = vld [vmem:[%s506 + $0x50] sm:$0xf]
  %v528 = vld [vmem:[%s506 + $0x54] sm:$0xf]
  %v529 = vld [vmem:[%s506 + $0x58] sm:$0xf]
  %v530 = vld [vmem:[%s506 + $0x5c] sm:$0xf]
  %v531 = vld [vmem:[%s506 + $0x60] sm:$0xf]
  %v532 = vld [vmem:[%s506 + $0x64] sm:$0xf]
  %v533 = vld [vmem:[%s506 + $0x68] sm:$0xf]
  %v534 = vld [vmem:[%s506 + $0x6c] sm:$0xf]
  %v535 = vld [vmem:[%s506 + $0x70] sm:$0xf]
  %v536 = vld [vmem:[%s506 + $0x74] sm:$0xf]
  %v537 = vld [vmem:[%s506 + $0x78] sm:$0xf]
  %v538 = vld [vmem:[%s506 + $0x7c] sm:$0xf]
  %v539 = vld [vmem:[%s506 + $0x80] sm:$0xf]
  %v540 = vld [vmem:[%s506 + $0x84] sm:$0xf]
  %v541 = vld [vmem:[%s506 + $0x88] sm:$0xf]
  %v542 = vld [vmem:[%s506 + $0x8c] sm:$0xf]
  %v543 = vld [vmem:[%s506 + $0x90] sm:$0xf]
  %v544 = vld [vmem:[%s506 + $0x94] sm:$0xf]
  %v545 = vld [vmem:[%s506 + $0x98] sm:$0xf]
  %v546 = vld [vmem:[%s506 + $0x9c] sm:$0xf]
  %v547 = vld [vmem:[%s506 + $0xa0] sm:$0xf]
  %v548 = vld [vmem:[%s506 + $0xa4] sm:$0xf]
  %v549 = vld [vmem:[%s506 + $0xa8] sm:$0xf]
  %v550 = vld [vmem:[%s506 + $0xac] sm:$0xf]
  %v551 = vld [vmem:[%s506 + $0xb0] sm:$0xf]
  %v552 = vld [vmem:[%s506 + $0xb4] sm:$0xf]
  %v553 = vld [vmem:[%s506 + $0xb8] sm:$0xf]
  %v554 = vld [vmem:[%s506 + $0xbc] sm:$0xf]
  %v555 = vld [vmem:[%s506 + $0xc0] sm:$0xf]
  %v556 = vld [vmem:[%s506 + $0xc4] sm:$0xf]
  %v557 = vld [vmem:[%s506 + $0xc8] sm:$0xf]
  %v558 = vld [vmem:[%s506 + $0xcc] sm:$0xf]
  %v559 = vld [vmem:[%s506 + $0xd0] sm:$0xf]
  %v560 = vld [vmem:[%s506 + $0xd4] sm:$0xf]
  %v561 = vld [vmem:[%s506 + $0xd8] sm:$0xf]
  %v562 = vld [vmem:[%s506 + $0xdc] sm:$0xf]
  %v563 = vld [vmem:[%s506 + $0xe0] sm:$0xf]
  %v564 = vld [vmem:[%s506 + $0xe4] sm:$0xf]
  %v565 = vld [vmem:[%s506 + $0xe8] sm:$0xf]
  %v566 = vld [vmem:[%s506 + $0xec] sm:$0xf]
  %v567 = vld [vmem:[%s506 + $0xf0] sm:$0xf]
  %v568 = vld [vmem:[%s506 + $0xf4] sm:$0xf]
  %v569 = vld [vmem:[%s506 + $0xf8] sm:$0xf]
  %v570 = vld [vmem:[%s506 + $0xfc] sm:$0xf]
  %v571 = vld [vmem:[%s506 + $0x100] sm:$0xf]
  %v572 = vld [vmem:[%s506 + $0x104] sm:$0xf]
  %v573 = vld [vmem:[%s506 + $0x108] sm:$0xf]
  %v574 = vld [vmem:[%s506 + $0x10c] sm:$0xf]
  %v575 = vld [vmem:[%s506 + $0x110] sm:$0xf]
  %v576 = vld [vmem:[%s506 + $0x114] sm:$0xf]
  %v577 = vld [vmem:[%s506 + $0x118] sm:$0xf]
  %v578 = vld [vmem:[%s506 + $0x11c] sm:$0xf]
  %v579 = vld [vmem:[%s506 + $0x120] sm:$0xf]
  %v580 = vld [vmem:[%s506 + $0x124] sm:$0xf]
  %v581 = vld [vmem:[%s506 + $0x128] sm:$0xf]
  %v582 = vld [vmem:[%s506 + $0x12c] sm:$0xf]
  %v583 = vld [vmem:[%s506 + $0x130] sm:$0xf]
  %v584 = vld [vmem:[%s506 + $0x134] sm:$0xf]
  %v585 = vld [vmem:[%s506 + $0x138] sm:$0xf]
  %v586 = vld [vmem:[%s506 + $0x13c] sm:$0xf]
  %v587 = vld [vmem:[%s506 + $0x140] sm:$0xf]
  %v588 = vld [vmem:[%s506 + $0x144] sm:$0xf]
  %v589 = vld [vmem:[%s506 + $0x148] sm:$0xf]
  %v590 = vld [vmem:[%s506 + $0x14c] sm:$0xf]
  %v591 = vld [vmem:[%s506 + $0x150] sm:$0xf]
  %v592 = vld [vmem:[%s506 + $0x154] sm:$0xf]
  %v593 = vld [vmem:[%s506 + $0x158] sm:$0xf]
  %v594 = vld [vmem:[%s506 + $0x15c] sm:$0xf]
  %v595 = vld [vmem:[%s506 + $0x160] sm:$0xf]
  %v596 = vld [vmem:[%s506 + $0x164] sm:$0xf]
  %v597 = vld [vmem:[%s506 + $0x168] sm:$0xf]
  %v598 = vld [vmem:[%s506 + $0x16c] sm:$0xf]
  %v599 = vld [vmem:[%s506 + $0x170] sm:$0xf]
  %v600 = vld [vmem:[%s506 + $0x174] sm:$0xf]
  %v601 = vld [vmem:[%s506 + $0x178] sm:$0xf]
  %v602 = vld [vmem:[%s506 + $0x17c] sm:$0xf]
  %v603 = vunpack.c.l.b16 %v375
  %v604 = vunpack.c.h.b16 %v375
  %v605 = vunpack.c.l.b16 %v389
  %v606 = vunpack.c.h.b16 %v389
  %v607 = vunpack.c.l.b16 %v403
  %v608 = vunpack.c.h.b16 %v403
  %v609 = vunpack.c.l.b16 %v413
  %v610 = vunpack.c.h.b16 %v413
  %v611 = vunpack.c.l.b16 %v423
  %v612 = vunpack.c.h.b16 %v423
  %v613 = vunpack.c.l.b16 %v433
  %v614 = vunpack.c.h.b16 %v433
  %v615 = vunpack.c.l.b16 %v447
  %v616 = vunpack.c.h.b16 %v447
  %v617 = vunpack.c.l.b16 %v461
  %v618 = vunpack.c.h.b16 %v461
  %v619 = vunpack.c.l.b16 %v475
  %v620 = vunpack.c.h.b16 %v475
  %v621 = vunpack.c.l.b16 %v485
  %v622 = vunpack.c.h.b16 %v485
  %v623 = vunpack.c.l.b16 %v495
  %v624 = vunpack.c.h.b16 %v495
  %v625 = vunpack.c.l.b16 %v505
  %v626 = vunpack.c.h.b16 %v505
  %v627 = vpack.c.b16 %v609, %v603
  %v628 = vpack.c.b16 %v610, %v604
  %v629 = vpack.c.b16 %v611, %v605
  %v630 = vpack.c.b16 %v612, %v606
  %v631 = vpack.c.b16 %v613, %v607
  %v632 = vpack.c.b16 %v614, %v608
  %v633 = vpack.c.b16 %v621, %v615
  %v634 = vpack.c.b16 %v622, %v616
  %v635 = vpack.c.b16 %v623, %v617
  %v636 = vpack.c.b16 %v624, %v618
  %v637 = vpack.c.b16 %v625, %v619
  %v638 = vpack.c.b16 %v626, %v620
  %v747 = vunpack.c.l.b16 %v507
  %v748 = vunpack.c.l.b16 %v508
  %v749 = vunpack.c.l.b16 %v509
  %v750 = vunpack.c.l.b16 %v510
  %v751 = vunpack.c.l.b16 %v511
  %v752 = vunpack.c.l.b16 %v512
  %v753 = vunpack.c.l.b16 %v513
  %v754 = vunpack.c.l.b16 %v514
  %v755 = vunpack.c.l.b16 %v515
  %v756 = vunpack.c.l.b16 %v516
  %v757 = vunpack.c.l.b16 %v517
  %v758 = vunpack.c.l.b16 %v518
  %v759 = vunpack.c.l.b16 %v519
  %v760 = vunpack.c.l.b16 %v520
  %v761 = vunpack.c.l.b16 %v521
  %v762 = vunpack.c.l.b16 %v522
  %v763 = vunpack.c.l.b16 %v523
  %v764 = vunpack.c.l.b16 %v524
  %v765 = vunpack.c.l.b16 %v525
  %v766 = vunpack.c.l.b16 %v526
  %v767 = vunpack.c.l.b16 %v527
  %v768 = vunpack.c.l.b16 %v528
  %v769 = vunpack.c.l.b16 %v529
  %v770 = vunpack.c.l.b16 %v530
  %v771 = vunpack.c.l.b16 %v531
  %v772 = vunpack.c.l.b16 %v532
  %v773 = vunpack.c.l.b16 %v533
  %v774 = vunpack.c.l.b16 %v534
  %v775 = vunpack.c.l.b16 %v535
  %v776 = vunpack.c.l.b16 %v536
  %v777 = vunpack.c.l.b16 %v537
  %v778 = vunpack.c.l.b16 %v538
  %v779 = vunpack.c.l.b16 %v539
  %v780 = vunpack.c.l.b16 %v540
  %v781 = vunpack.c.l.b16 %v541
  %v782 = vunpack.c.l.b16 %v542
  %v783 = vunpack.c.l.b16 %v543
  %v784 = vunpack.c.l.b16 %v544
  %v785 = vunpack.c.l.b16 %v545
  %v786 = vunpack.c.l.b16 %v546
  %v787 = vunpack.c.l.b16 %v547
  %v788 = vunpack.c.l.b16 %v548
  %v789 = vunpack.c.l.b16 %v549
  %v790 = vunpack.c.l.b16 %v550
  %v791 = vunpack.c.l.b16 %v551
  %v792 = vunpack.c.l.b16 %v552
  %v793 = vunpack.c.l.b16 %v553
  %v794 = vunpack.c.l.b16 %v554
  %v795 = vunpack.c.l.b16 %v555
  %v796 = vunpack.c.l.b16 %v556
  %v797 = vunpack.c.l.b16 %v557
  %v798 = vunpack.c.l.b16 %v558
  %v799 = vunpack.c.l.b16 %v559
  %v800 = vunpack.c.l.b16 %v560
  %v801 = vunpack.c.l.b16 %v561
  %v802 = vunpack.c.l.b16 %v562
  %v803 = vunpack.c.l.b16 %v563
  %v804 = vunpack.c.l.b16 %v564
  %v805 = vunpack.c.l.b16 %v565
  %v806 = vunpack.c.l.b16 %v566
  %v807 = vunpack.c.l.b16 %v567
  %v808 = vunpack.c.l.b16 %v568
  %v809 = vunpack.c.l.b16 %v569
  %v810 = vunpack.c.l.b16 %v570
  %v811 = vunpack.c.l.b16 %v571
  %v812 = vunpack.c.l.b16 %v572
  %v813 = vunpack.c.l.b16 %v573
  %v814 = vunpack.c.l.b16 %v574
  %v815 = vunpack.c.l.b16 %v575
  %v816 = vunpack.c.l.b16 %v576
  %v817 = vunpack.c.l.b16 %v577
  %v818 = vunpack.c.l.b16 %v578
  %v819 = vunpack.c.l.b16 %v579
  %v820 = vunpack.c.l.b16 %v580
  %v821 = vunpack.c.l.b16 %v581
  %v822 = vunpack.c.l.b16 %v582
  %v823 = vunpack.c.l.b16 %v583
  %v824 = vunpack.c.l.b16 %v584
  %v825 = vunpack.c.l.b16 %v585
  %v826 = vunpack.c.l.b16 %v586
  %v827 = vunpack.c.l.b16 %v587
  %v828 = vunpack.c.l.b16 %v588
  %v829 = vunpack.c.l.b16 %v589
  %v830 = vunpack.c.l.b16 %v590
  %v831 = vunpack.c.l.b16 %v591
  %v832 = vunpack.c.l.b16 %v592
  %v833 = vunpack.c.l.b16 %v593
  %v834 = vunpack.c.l.b16 %v594
  %v835 = vunpack.c.l.b16 %v595
  %v836 = vunpack.c.l.b16 %v596
  %v837 = vunpack.c.l.b16 %v597
  %v838 = vunpack.c.l.b16 %v598
  %v839 = vunpack.c.l.b16 %v599
  %v840 = vunpack.c.l.b16 %v600
  %v841 = vunpack.c.l.b16 %v601
  %v842 = vunpack.c.l.b16 %v602
  %v843 = vpack.c.b16 %v748, %v747
  %v844 = vpack.c.b16 %v750, %v749
  %v845 = vpack.c.b16 %v752, %v751
  %v846 = vpack.c.b16 %v754, %v753
  %v847 = vpack.c.b16 %v756, %v755
  %v848 = vpack.c.b16 %v758, %v757
  %v849 = vpack.c.b16 %v760, %v759
  %v850 = vpack.c.b16 %v762, %v761
  %v851 = vpack.c.b16 %v764, %v763
  %v852 = vpack.c.b16 %v766, %v765
  %v853 = vpack.c.b16 %v768, %v767
  %v854 = vpack.c.b16 %v770, %v769
  %v855 = vpack.c.b16 %v772, %v771
  %v856 = vpack.c.b16 %v774, %v773
  %v857 = vpack.c.b16 %v776, %v775
  %v858 = vpack.c.b16 %v778, %v777
  %v859 = vpack.c.b16 %v780, %v779
  %v860 = vpack.c.b16 %v782, %v781
  %v861 = vpack.c.b16 %v784, %v783
  %v862 = vpack.c.b16 %v786, %v785
  %v863 = vpack.c.b16 %v788, %v787
  %v864 = vpack.c.b16 %v790, %v789
  %v865 = vpack.c.b16 %v792, %v791
  %v866 = vpack.c.b16 %v794, %v793
  %v867 = vpack.c.b16 %v796, %v795
  %v868 = vpack.c.b16 %v798, %v797
  %v869 = vpack.c.b16 %v800, %v799
  %v870 = vpack.c.b16 %v802, %v801
  %v871 = vpack.c.b16 %v804, %v803
  %v872 = vpack.c.b16 %v806, %v805
  %v873 = vpack.c.b16 %v808, %v807
  %v874 = vpack.c.b16 %v810, %v809
  %v875 = vpack.c.b16 %v812, %v811
  %v876 = vpack.c.b16 %v814, %v813
  %v877 = vpack.c.b16 %v816, %v815
  %v878 = vpack.c.b16 %v818, %v817
  %v879 = vpack.c.b16 %v820, %v819
  %v880 = vpack.c.b16 %v822, %v821
  %v881 = vpack.c.b16 %v824, %v823
  %v882 = vpack.c.b16 %v826, %v825
  %v883 = vpack.c.b16 %v828, %v827
  %v884 = vpack.c.b16 %v830, %v829
  %v885 = vpack.c.b16 %v832, %v831
  %v886 = vpack.c.b16 %v834, %v833
  %v887 = vpack.c.b16 %v836, %v835
  %v888 = vpack.c.b16 %v838, %v837
  %v889 = vpack.c.b16 %v840, %v839
  %v890 = vpack.c.b16 %v842, %v841
  %939 = vmatprep.subr.bf16.mxu0 0
  %940 = vmatpush1.bf16.msra.mxu0 %v843
  %941 = vmatprep.subr.bf16.mxu0 0
  %942 = vmatpush1.bf16.msra.mxu0 %v844
  %943 = vmatprep.subr.bf16.mxu0 0
  %944 = vmatpush1.bf16.msra.mxu0 %v845
  %945 = vmatprep.subr.bf16.mxu0 0
  %946 = vmatpush1.bf16.msra.mxu0 %v846
  %947 = vmatprep.subr.bf16.mxu0 0
  %948 = vmatpush1.bf16.msra.mxu0 %v847
  %949 = vmatprep.subr.bf16.mxu0 0
  %950 = vmatpush1.bf16.msra.mxu0 %v848
  %951 = vmatprep.subr.bf16.mxu0 0
  %952 = vmatpush1.bf16.msra.mxu0 %v849
  %953 = vmatprep.subr.bf16.mxu0 0
  %954 = vmatpush1.bf16.msra.mxu0 %v850
  %955 = vmatprep.subr.bf16.mxu0 0
  %956 = vmatpush1.bf16.msra.mxu0 %v851
  %957 = vmatprep.subr.bf16.mxu0 0
  %958 = vmatpush1.bf16.msra.mxu0 %v852
  %959 = vmatprep.subr.bf16.mxu0 0
  %960 = vmatpush1.bf16.msra.mxu0 %v853
  %961 = vmatprep.subr.bf16.mxu0 0
  %962 = vmatpush1.bf16.msra.mxu0 %v854
  %963 = vmatprep.subr.bf16.mxu0 0
  %964 = vmatpush1.bf16.msra.mxu0 %v855
  %965 = vmatprep.subr.bf16.mxu0 0
  %966 = vmatpush1.bf16.msra.mxu0 %v856
  %967 = vmatprep.subr.bf16.mxu0 0
  %968 = vmatpush1.bf16.msra.mxu0 %v857
  %969 = vmatprep.subr.bf16.mxu0 0
  %970 = vmatpush1.bf16.msra.mxu0 %v858
  %971 = vmatprep.mubr.bf16.mxu0 %v628
  %972 = vmatmul.mubr.bf16.gmra.mrb[0].mxu0 %v627
  %v973 = vpop.f32.mrb[0].mxu0
  %v974 = vadd.f32 0.0, %v973
  %v975 = vpop.f32.mrb[0].mxu0
  %v976 = vpop.f32.mrb[0].mxu0
  %v977 = vadd.f32 0.0, %v976
  %v978 = vpop.f32.mrb[0].mxu0
  %979 = vmatprep.mubr.bf16.mxu0 %v634
  %980 = vmatmul.mubr.bf16.gmra.mrb[0].mxu0 %v633
  %v981 = vpop.f32.mrb[0].mxu0
  %v982 = vadd.f32 0.0, %v981
  %v983 = vpop.f32.mrb[0].mxu0
  %v984 = vpop.f32.mrb[0].mxu0
  %v985 = vadd.f32 0.0, %v984
  %v986 = vpop.f32.mrb[0].mxu0
  %987 = vdwg.mxu0
  %988 = vmatprep.subr.bf16.mxu0 0
  %989 = vmatpush1.bf16.msra.mxu0 %v859
  %990 = vmatprep.subr.bf16.mxu0 0
  %991 = vmatpush1.bf16.msra.mxu0 %v860
  %992 = vmatprep.subr.bf16.mxu0 0
  %993 = vmatpush1.bf16.msra.mxu0 %v861
  %994 = vmatprep.subr.bf16.mxu0 0
  %995 = vmatpush1.bf16.msra.mxu0 %v862
  %996 = vmatprep.subr.bf16.mxu0 0
  %997 = vmatpush1.bf16.msra.mxu0 %v863
  %998 = vmatprep.subr.bf16.mxu0 0
  %999 = vmatpush1.bf16.msra.mxu0 %v864
  %1000 = vmatprep.subr.bf16.mxu0 0
  %1001 = vmatpush1.bf16.msra.mxu0 %v865
  %1002 = vmatprep.subr.bf16.mxu0 0
  %1003 = vmatpush1.bf16.msra.mxu0 %v866
  %1004 = vmatprep.subr.bf16.mxu0 0
  %1005 = vmatpush1.bf16.msra.mxu0 %v867
  %1006 = vmatprep.subr.bf16.mxu0 0
  %1007 = vmatpush1.bf16.msra.mxu0 %v868
  %1008 = vmatprep.subr.bf16.mxu0 0
  %1009 = vmatpush1.bf16.msra.mxu0 %v869
  %1010 = vmatprep.subr.bf16.mxu0 0
  %1011 = vmatpush1.bf16.msra.mxu0 %v870
  %1012 = vmatprep.subr.bf16.mxu0 0
  %1013 = vmatpush1.bf16.msra.mxu0 %v871
  %1014 = vmatprep.subr.bf16.mxu0 0
  %1015 = vmatpush1.bf16.msra.mxu0 %v872
  %1016 = vmatprep.subr.bf16.mxu0 0
  %1017 = vmatpush1.bf16.msra.mxu0 %v873
  %1018 = vmatprep.subr.bf16.mxu0 0
  %1019 = vmatpush1.bf16.msra.mxu0 %v874
  %1020 = vmatprep.mubr.bf16.mxu0 %v630
  %1021 = vmatmul.mubr.bf16.gmra.mrb[0].mxu0 %v629
  %v1022 = vpop.f32.mrb[0].mxu0
  %v1023 = vadd.f32 %v974, %v1022
  %v1024 = vpop.f32.mrb[0].mxu0
  %v1025 = vpop.f32.mrb[0].mxu0
  %v1026 = vadd.f32 %v977, %v1025
  %v1027 = vpop.f32.mrb[0].mxu0
  %1028 = vmatprep.mubr.bf16.mxu0 %v636
  %1029 = vmatmul.mubr.bf16.gmra.mrb[0].mxu0 %v635
  %v1030 = vpop.f32.mrb[0].mxu0
  %v1031 = vadd.f32 %v982, %v1030
  %v1032 = vpop.f32.mrb[0].mxu0
  %v1033 = vpop.f32.mrb[0].mxu0
  %v1034 = vadd.f32 %v985, %v1033
  %v1035 = vpop.f32.mrb[0].mxu0
  %1036 = vdwg.mxu0
  %1037 = vmatprep.subr.bf16.mxu0 0
  %1038 = vmatpush1.bf16.msra.mxu0 %v875
  %1039 = vmatprep.subr.bf16.mxu0 0
  %1040 = vmatpush1.bf16.msra.mxu0 %v876
  %1041 = vmatprep.subr.bf16.mxu0 0
  %1042 = vmatpush1.bf16.msra.mxu0 %v877
  %1043 = vmatprep.subr.bf16.mxu0 0
  %1044 = vmatpush1.bf16.msra.mxu0 %v878
  %1045 = vmatprep.subr.bf16.mxu0 0
  %1046 = vmatpush1.bf16.msra.mxu0 %v879
  %1047 = vmatprep.subr.bf16.mxu0 0
  %1048 = vmatpush1.bf16.msra.mxu0 %v880
  %1049 = vmatprep.subr.bf16.mxu0 0
  %1050 = vmatpush1.bf16.msra.mxu0 %v881
  %1051 = vmatprep.subr.bf16.mxu0 0
  %1052 = vmatpush1.bf16.msra.mxu0 %v882
  %1053 = vmatprep.subr.bf16.mxu0 0
  %1054 = vmatpush1.bf16.msra.mxu0 %v883
  %1055 = vmatprep.subr.bf16.mxu0 0
  %1056 = vmatpush1.bf16.msra.mxu0 %v884
  %1057 = vmatprep.subr.bf16.mxu0 0
  %1058 = vmatpush1.bf16.msra.mxu0 %v885
  %1059 = vmatprep.subr.bf16.mxu0 0
  %1060 = vmatpush1.bf16.msra.mxu0 %v886
  %1061 = vmatprep.subr.bf16.mxu0 0
  %1062 = vmatpush1.bf16.msra.mxu0 %v887
  %1063 = vmatprep.subr.bf16.mxu0 0
  %1064 = vmatpush1.bf16.msra.mxu0 %v888
  %1065 = vmatprep.subr.bf16.mxu0 0
  %1066 = vmatpush1.bf16.msra.mxu0 %v889
  %1067 = vmatprep.subr.bf16.mxu0 0
  %1068 = vmatpush1.bf16.msra.mxu0 %v890
  %1069 = vmatprep.mubr.bf16.mxu0 %v632
  %1070 = vmatmul.mubr.bf16.gmra.mrb[0].mxu0 %v631
  %v1071 = vpop.f32.mrb[0].mxu0
  %v1072 = vadd.f32 %v1023, %v1071
  %v1073 = vpop.f32.mrb[0].mxu0
  %v1074 = vpop.f32.mrb[0].mxu0
  %v1075 = vadd.f32 %v1026, %v1074
  %v1076 = vpop.f32.mrb[0].mxu0
  %1077 = vmatprep.mubr.bf16.mxu0 %v638
  %1078 = vmatmul.mubr.bf16.gmra.mrb[0].mxu0 %v637
  %v1079 = vpop.f32.mrb[0].mxu0
  %v1080 = vadd.f32 %v1031, %v1079
  %v1081 = vpop.f32.mrb[0].mxu0
  %v1082 = vpop.f32.mrb[0].mxu0
  %v1083 = vadd.f32 %v1034, %v1082
  %v1084 = vpop.f32.mrb[0].mxu0
  %1085 = vdwg.mxu0
  %v1098 = vunpack.c.l.b16 %v245
  %v1099 = vunpack.c.h.b16 %v245
  %v1100 = vunpack.c.l.b16 %v246
  %v1101 = vunpack.c.h.b16 %v246
  %v1102 = vunpack.c.l.b16 %v247
  %v1103 = vunpack.c.h.b16 %v247
  %v1104 = vunpack.c.l.b16 %v248
  %v1105 = vunpack.c.h.b16 %v248
  %v1106 = vunpack.c.l.b16 %v249
  %v1107 = vunpack.c.h.b16 %v249
  %v1108 = vunpack.c.l.b16 %v250
  %v1109 = vunpack.c.h.b16 %v250
  %v1110 = vunpack.c.l.b16 %v251
  %v1111 = vunpack.c.h.b16 %v251
  %v1112 = vunpack.c.l.b16 %v252
  %v1113 = vunpack.c.h.b16 %v252
  %v1114 = vunpack.c.l.b16 %v253
  %v1115 = vunpack.c.h.b16 %v253
  %v1116 = vunpack.c.l.b16 %v254
  %v1117 = vunpack.c.h.b16 %v254
  %v1118 = vunpack.c.l.b16 %v255
  %v1119 = vunpack.c.h.b16 %v255
  %v1120 = vunpack.c.l.b16 %v256
  %v1121 = vunpack.c.h.b16 %v256
  %v1122 = vpack.c.b16 %v1104, %v1098
  %v1123 = vpack.c.b16 %v1105, %v1099
  %v1124 = vpack.c.b16 %v1106, %v1100
  %v1125 = vpack.c.b16 %v1107, %v1101
  %v1126 = vpack.c.b16 %v1108, %v1102
  %v1127 = vpack.c.b16 %v1109, %v1103
  %v1128 = vpack.c.b16 %v1116, %v1110
  %v1129 = vpack.c.b16 %v1117, %v1111
  %v1130 = vpack.c.b16 %v1118, %v1112
  %v1131 = vpack.c.b16 %v1119, %v1113
  %v1132 = vpack.c.b16 %v1120, %v1114
  %v1133 = vpack.c.b16 %v1121, %v1115
  %v1242 = vunpack.c.l.b16 %v257
  %v1243 = vunpack.c.l.b16 %v258
  %v1244 = vunpack.c.l.b16 %v259
  %v1245 = vunpack.c.l.b16 %v260
  %v1246 = vunpack.c.l.b16 %v261
  %v1247 = vunpack.c.l.b16 %v262
  %v1248 = vunpack.c.l.b16 %v263
  %v1249 = vunpack.c.l.b16 %v264
  %v1250 = vunpack.c.l.b16 %v265
  %v1251 = vunpack.c.l.b16 %v266
  %v1252 = vunpack.c.l.b16 %v267
  %v1253 = vunpack.c.l.b16 %v268
  %v1254 = vunpack.c.l.b16 %v269
  %v1255 = vunpack.c.l.b16 %v270
  %v1256 = vunpack.c.l.b16 %v271
  %v1257 = vunpack.c.l.b16 %v272
  %v1258 = vunpack.c.l.b16 %v273
  %v1259 = vunpack.c.l.b16 %v274
  %v1260 = vunpack.c.l.b16 %v275
  %v1261 = vunpack.c.l.b16 %v276
  %v1262 = vunpack.c.l.b16 %v277
  %v1263 = vunpack.c.l.b16 %v278
  %v1264 = vunpack.c.l.b16 %v279
  %v1265 = vunpack.c.l.b16 %v280
  %v1266 = vunpack.c.l.b16 %v281
  %v1267 = vunpack.c.l.b16 %v282
  %v1268 = vunpack.c.l.b16 %v283
  %v1269 = vunpack.c.l.b16 %v284
  %v1270 = vunpack.c.l.b16 %v285
  %v1271 = vunpack.c.l.b16 %v286
  %v1272 = vunpack.c.l.b16 %v287
  %v1273 = vunpack.c.l.b16 %v288
  %v1274 = vunpack.c.l.b16 %v289
  %v1275 = vunpack.c.l.b16 %v290
  %v1276 = vunpack.c.l.b16 %v291
  %v1277 = vunpack.c.l.b16 %v292
  %v1278 = vunpack.c.l.b16 %v293
  %v1279 = vunpack.c.l.b16 %v294
  %v1280 = vunpack.c.l.b16 %v295
  %v1281 = vunpack.c.l.b16 %v296
  %v1282 = vunpack.c.l.b16 %v297
  %v1283 = vunpack.c.l.b16 %v298
  %v1284 = vunpack.c.l.b16 %v299
  %v1285 = vunpack.c.l.b16 %v300
  %v1286 = vunpack.c.l.b16 %v301
  %v1287 = vunpack.c.l.b16 %v302
  %v1288 = vunpack.c.l.b16 %v303
  %v1289 = vunpack.c.l.b16 %v304
  %v1290 = vunpack.c.l.b16 %v305
  %v1291 = vunpack.c.l.b16 %v306
  %v1292 = vunpack.c.l.b16 %v307
  %v1293 = vunpack.c.l.b16 %v308
  %v1294 = vunpack.c.l.b16 %v309
  %v1295 = vunpack.c.l.b16 %v310
  %v1296 = vunpack.c.l.b16 %v311
  %v1297 = vunpack.c.l.b16 %v312
  %v1298 = vunpack.c.l.b16 %v313
  %v1299 = vunpack.c.l.b16 %v314
  %v1300 = vunpack.c.l.b16 %v315
  %v1301 = vunpack.c.l.b16 %v316
  %v1302 = vunpack.c.l.b16 %v317
  %v1303 = vunpack.c.l.b16 %v318
  %v1304 = vunpack.c.l.b16 %v319
  %v1305 = vunpack.c.l.b16 %v320
  %v1306 = vunpack.c.l.b16 %v321
  %v1307 = vunpack.c.l.b16 %v322
  %v1308 = vunpack.c.l.b16 %v323
  %v1309 = vunpack.c.l.b16 %v324
  %v1310 = vunpack.c.l.b16 %v325
  %v1311 = vunpack.c.l.b16 %v326
  %v1312 = vunpack.c.l.b16 %v327
  %v1313 = vunpack.c.l.b16 %v328
  %v1314 = vunpack.c.l.b16 %v329
  %v1315 = vunpack.c.l.b16 %v330
  %v1316 = vunpack.c.l.b16 %v331
  %v1317 = vunpack.c.l.b16 %v332
  %v1318 = vunpack.c.l.b16 %v333
  %v1319 = vunpack.c.l.b16 %v334
  %v1320 = vunpack.c.l.b16 %v335
  %v1321 = vunpack.c.l.b16 %v336
  %v1322 = vunpack.c.l.b16 %v337
  %v1323 = vunpack.c.l.b16 %v338
  %v1324 = vunpack.c.l.b16 %v339
  %v1325 = vunpack.c.l.b16 %v340
  %v1326 = vunpack.c.l.b16 %v341
  %v1327 = vunpack.c.l.b16 %v342
  %v1328 = vunpack.c.l.b16 %v343
  %v1329 = vunpack.c.l.b16 %v344
  %v1330 = vunpack.c.l.b16 %v345
  %v1331 = vunpack.c.l.b16 %v346
  %v1332 = vunpack.c.l.b16 %v347
  %v1333 = vunpack.c.l.b16 %v348
  %v1334 = vunpack.c.l.b16 %v349
  %v1335 = vunpack.c.l.b16 %v350
  %v1336 = vunpack.c.l.b16 %v351
  %v1337 = vunpack.c.l.b16 %v352
  %v1338 = vpack.c.b16 %v1243, %v1242
  %v1339 = vpack.c.b16 %v1245, %v1244
  %v1340 = vpack.c.b16 %v1247, %v1246
  %v1341 = vpack.c.b16 %v1249, %v1248
  %v1342 = vpack.c.b16 %v1251, %v1250
  %v1343 = vpack.c.b16 %v1253, %v1252
  %v1344 = vpack.c.b16 %v1255, %v1254
  %v1345 = vpack.c.b16 %v1257, %v1256
  %v1346 = vpack.c.b16 %v1259, %v1258
  %v1347 = vpack.c.b16 %v1261, %v1260
  %v1348 = vpack.c.b16 %v1263, %v1262
  %v1349 = vpack.c.b16 %v1265, %v1264
  %v1350 = vpack.c.b16 %v1267, %v1266
  %v1351 = vpack.c.b16 %v1269, %v1268
  %v1352 = vpack.c.b16 %v1271, %v1270
  %v1353 = vpack.c.b16 %v1273, %v1272
  %v1354 = vpack.c.b16 %v1275, %v1274
  %v1355 = vpack.c.b16 %v1277, %v1276
  %v1356 = vpack.c.b16 %v1279, %v1278
  %v1357 = vpack.c.b16 %v1281, %v1280
  %v1358 = vpack.c.b16 %v1283, %v1282
  %v1359 = vpack.c.b16 %v1285, %v1284
  %v1360 = vpack.c.b16 %v1287, %v1286
  %v1361 = vpack.c.b16 %v1289, %v1288
  %v1362 = vpack.c.b16 %v1291, %v1290
  %v1363 = vpack.c.b16 %v1293, %v1292
  %v1364 = vpack.c.b16 %v1295, %v1294
  %v1365 = vpack.c.b16 %v1297, %v1296
  %v1366 = vpack.c.b16 %v1299, %v1298
  %v1367 = vpack.c.b16 %v1301, %v1300
  %v1368 = vpack.c.b16 %v1303, %v1302
  %v1369 = vpack.c.b16 %v1305, %v1304
  %v1370 = vpack.c.b16 %v1307, %v1306
  %v1371 = vpack.c.b16 %v1309, %v1308
  %v1372 = vpack.c.b16 %v1311, %v1310
  %v1373 = vpack.c.b16 %v1313, %v1312
  %v1374 = vpack.c.b16 %v1315, %v1314
  %v1375 = vpack.c.b16 %v1317, %v1316
  %v1376 = vpack.c.b16 %v1319, %v1318
  %v1377 = vpack.c.b16 %v1321, %v1320
  %v1378 = vpack.c.b16 %v1323, %v1322
  %v1379 = vpack.c.b16 %v1325, %v1324
  %v1380 = vpack.c.b16 %v1327, %v1326
  %v1381 = vpack.c.b16 %v1329, %v1328
  %v1382 = vpack.c.b16 %v1331, %v1330
  %v1383 = vpack.c.b16 %v1333, %v1332
  %v1384 = vpack.c.b16 %v1335, %v1334
  %v1385 = vpack.c.b16 %v1337, %v1336
  %1434 = vmatprep.subr.bf16.mxu0 0
  %1435 = vmatpush1.bf16.msra.mxu0 %v1338
  %1436 = vmatprep.subr.bf16.mxu0 0
  %1437 = vmatpush1.bf16.msra.mxu0 %v1339
  %1438 = vmatprep.subr.bf16.mxu0 0
  %1439 = vmatpush1.bf16.msra.mxu0 %v1340
  %1440 = vmatprep.subr.bf16.mxu0 0
  %1441 = vmatpush1.bf16.msra.mxu0 %v1341
  %1442 = vmatprep.subr.bf16.mxu0 0
  %1443 = vmatpush1.bf16.msra.mxu0 %v1342
  %1444 = vmatprep.subr.bf16.mxu0 0
  %1445 = vmatpush1.bf16.msra.mxu0 %v1343
  %1446 = vmatprep.subr.bf16.mxu0 0
  %1447 = vmatpush1.bf16.msra.mxu0 %v1344
  %1448 = vmatprep.subr.bf16.mxu0 0
  %1449 = vmatpush1.bf16.msra.mxu0 %v1345
  %1450 = vmatprep.subr.bf16.mxu0 0
  %1451 = vmatpush1.bf16.msra.mxu0 %v1346
  %1452 = vmatprep.subr.bf16.mxu0 0
  %1453 = vmatpush1.bf16.msra.mxu0 %v1347
  %1454 = vmatprep.subr.bf16.mxu0 0
  %1455 = vmatpush1.bf16.msra.mxu0 %v1348
  %1456 = vmatprep.subr.bf16.mxu0 0
  %1457 = vmatpush1.bf16.msra.mxu0 %v1349
  %1458 = vmatprep.subr.bf16.mxu0 0
  %1459 = vmatpush1.bf16.msra.mxu0 %v1350
  %1460 = vmatprep.subr.bf16.mxu0 0
  %1461 = vmatpush1.bf16.msra.mxu0 %v1351
  %1462 = vmatprep.subr.bf16.mxu0 0
  %1463 = vmatpush1.bf16.msra.mxu0 %v1352
  %1464 = vmatprep.subr.bf16.mxu0 0
  %1465 = vmatpush1.bf16.msra.mxu0 %v1353
  %1466 = vmatprep.mubr.bf16.mxu0 %v1123
  %1467 = vmatmul.mubr.bf16.gmra.mrb[0].mxu0 %v1122
  %v1468 = vpop.f32.mrb[0].mxu0
  %v1469 = vadd.f32 %v1072, %v1468
  %v1470 = vpop.f32.mrb[0].mxu0
  %v1471 = vpop.f32.mrb[0].mxu0
  %v1472 = vadd.f32 %v1075, %v1471
  %v1473 = vpop.f32.mrb[0].mxu0
  %1474 = vmatprep.mubr.bf16.mxu0 %v1129
  %1475 = vmatmul.mubr.bf16.gmra.mrb[0].mxu0 %v1128
  %v1476 = vpop.f32.mrb[0].mxu0
  %v1477 = vadd.f32 %v1080, %v1476
  %v1478 = vpop.f32.mrb[0].mxu0
  %v1479 = vpop.f32.mrb[0].mxu0
  %v1480 = vadd.f32 %v1083, %v1479
  %v1481 = vpop.f32.mrb[0].mxu0
  %1482 = vdwg.mxu0
  %1483 = vmatprep.subr.bf16.mxu0 0
  %1484 = vmatpush1.bf16.msra.mxu0 %v1354
  %1485 = vmatprep.subr.bf16.mxu0 0
  %1486 = vmatpush1.bf16.msra.mxu0 %v1355
  %1487 = vmatprep.subr.bf16.mxu0 0
  %1488 = vmatpush1.bf16.msra.mxu0 %v1356
  %1489 = vmatprep.subr.bf16.mxu0 0
  %1490 = vmatpush1.bf16.msra.mxu0 %v1357
  %1491 = vmatprep.subr.bf16.mxu0 0
  %1492 = vmatpush1.bf16.msra.mxu0 %v1358
  %1493 = vmatprep.subr.bf16.mxu0 0
  %1494 = vmatpush1.bf16.msra.mxu0 %v1359
  %1495 = vmatprep.subr.bf16.mxu0 0
  %1496 = vmatpush1.bf16.msra.mxu0 %v1360
  %1497 = vmatprep.subr.bf16.mxu0 0
  %1498 = vmatpush1.bf16.msra.mxu0 %v1361
  %1499 = vmatprep.subr.bf16.mxu0 0
  %1500 = vmatpush1.bf16.msra.mxu0 %v1362
  %1501 = vmatprep.subr.bf16.mxu0 0
  %1502 = vmatpush1.bf16.msra.mxu0 %v1363
  %1503 = vmatprep.subr.bf16.mxu0 0
  %1504 = vmatpush1.bf16.msra.mxu0 %v1364
  %1505 = vmatprep.subr.bf16.mxu0 0
  %1506 = vmatpush1.bf16.msra.mxu0 %v1365
  %1507 = vmatprep.subr.bf16.mxu0 0
  %1508 = vmatpush1.bf16.msra.mxu0 %v1366
  %1509 = vmatprep.subr.bf16.mxu0 0
  %1510 = vmatpush1.bf16.msra.mxu0 %v1367
  %1511 = vmatprep.subr.bf16.mxu0 0
  %1512 = vmatpush1.bf16.msra.mxu0 %v1368
  %1513 = vmatprep.subr.bf16.mxu0 0
  %1514 = vmatpush1.bf16.msra.mxu0 %v1369
  %1515 = vmatprep.mubr.bf16.mxu0 %v1125
  %1516 = vmatmul.mubr.bf16.gmra.mrb[0].mxu0 %v1124
  %v1517 = vpop.f32.mrb[0].mxu0
  %v1518 = vadd.f32 %v1469, %v1517
  %v1519 = vpop.f32.mrb[0].mxu0
  %v1520 = vpop.f32.mrb[0].mxu0
  %v1521 = vadd.f32 %v1472, %v1520
  %v1522 = vpop.f32.mrb[0].mxu0
  %1523 = vmatprep.mubr.bf16.mxu0 %v1131
  %1524 = vmatmul.mubr.bf16.gmra.mrb[0].mxu0 %v1130
  %v1525 = vpop.f32.mrb[0].mxu0
  %v1526 = vadd.f32 %v1477, %v1525
  %v1527 = vpop.f32.mrb[0].mxu0
  %v1528 = vpop.f32.mrb[0].mxu0
  %v1529 = vadd.f32 %v1480, %v1528
  %v1530 = vpop.f32.mrb[0].mxu0
  %1531 = vdwg.mxu0
  %1532 = vmatprep.subr.bf16.mxu0 0
  %1533 = vmatpush1.bf16.msra.mxu0 %v1370
  %1534 = vmatprep.subr.bf16.mxu0 0
  %1535 = vmatpush1.bf16.msra.mxu0 %v1371
  %1536 = vmatprep.subr.bf16.mxu0 0
  %1537 = vmatpush1.bf16.msra.mxu0 %v1372
  %1538 = vmatprep.subr.bf16.mxu0 0
  %1539 = vmatpush1.bf16.msra.mxu0 %v1373
  %1540 = vmatprep.subr.bf16.mxu0 0
  %1541 = vmatpush1.bf16.msra.mxu0 %v1374
  %1542 = vmatprep.subr.bf16.mxu0 0
  %1543 = vmatpush1.bf16.msra.mxu0 %v1375
  %1544 = vmatprep.subr.bf16.mxu0 0
  %1545 = vmatpush1.bf16.msra.mxu0 %v1376
  %1546 = vmatprep.subr.bf16.mxu0 0
  %1547 = vmatpush1.bf16.msra.mxu0 %v1377
  %1548 = vmatprep.subr.bf16.mxu0 0
  %1549 = vmatpush1.bf16.msra.mxu0 %v1378
  %1550 = vmatprep.subr.bf16.mxu0 0
  %1551 = vmatpush1.bf16.msra.mxu0 %v1379
  %1552 = vmatprep.subr.bf16.mxu0 0
  %1553 = vmatpush1.bf16.msra.mxu0 %v1380
  %1554 = vmatprep.subr.bf16.mxu0 0
  %1555 = vmatpush1.bf16.msra.mxu0 %v1381
  %1556 = vmatprep.subr.bf16.mxu0 0
  %1557 = vmatpush1.bf16.msra.mxu0 %v1382
  %1558 = vmatprep.subr.bf16.mxu0 0
  %1559 = vmatpush1.bf16.msra.mxu0 %v1383
  %1560 = vmatprep.subr.bf16.mxu0 0
  %1561 = vmatpush1.bf16.msra.mxu0 %v1384
  %1562 = vmatprep.subr.bf16.mxu0 0
  %1563 = vmatpush1.bf16.msra.mxu0 %v1385
  %1564 = vmatprep.mubr.bf16.mxu0 %v1127
  %1565 = vmatmul.mubr.bf16.gmra.mrb[0].mxu0 %v1126
  %v1566 = vpop.f32.mrb[0].mxu0
  %v1567 = vadd.f32 %v1518, %v1566
  %v1568 = vpop.f32.mrb[0].mxu0
  %v1569 = vpop.f32.mrb[0].mxu0
  %v1570 = vadd.f32 %v1521, %v1569
  %v1571 = vpop.f32.mrb[0].mxu0
  %1572 = vmatprep.mubr.bf16.mxu0 %v1133
  %1573 = vmatmul.mubr.bf16.gmra.mrb[0].mxu0 %v1132
  %v1574 = vpop.f32.mrb[0].mxu0
  %v1575 = vadd.f32 %v1526, %v1574
  %v1576 = vpop.f32.mrb[0].mxu0
  %v1577 = vpop.f32.mrb[0].mxu0
  %v1578 = vadd.f32 %v1529, %v1577
  %v1579 = vpop.f32.mrb[0].mxu0
  %1580 = vdwg.mxu0
  %v1582 = vlaneseq
  %v1583 = vshrl.u32 %v1582, 7
  %v1584 = vsub.s32 0, %v1583
  %v1585 = vrot.slane %v244, %v1584
  %v1587 = vadd.f32 %v1567, %v1585
  %v1588 = vadd.f32 %v1570, %v1585
  %v1589 = vadd.f32 %v1575, %v1585
  %v1590 = vadd.f32 %v1578, %v1585
  %v1591 = vxor.u32 %v1587, 2147483648
  %v1592 = vxor.u32 %v1588, 2147483648
  %v1593 = vxor.u32 %v1589, 2147483648
  %v1594 = vxor.u32 %v1590, 2147483648
  %v1595 = vmul.f32 %v1591, 1.442695
  %v1596 = vpow.pop %v1595
  %v1597 = vmul.f32 %v1592, 1.442695
  %v1598 = vpow.pop %v1597
  %v1599 = vmul.f32 %v1593, 1.442695
  %v1600 = vpow.pop %v1599
  %v1601 = vmul.f32 %v1594, 1.442695
  %v1602 = vpow.pop %v1601
  %v1603 = vadd.f32 %v1596, 1.0
  %v1604 = vadd.f32 %v1598, 1.0
  %v1605 = vadd.f32 %v1600, 1.0
  %v1606 = vadd.f32 %v1602, 1.0
  %v1607 = vrcp.pop %v1603
  %v1608 = vmul.f32 1.0, %v1607
  %v1609 = vrcp.pop %v1604
  %v1610 = vmul.f32 1.0, %v1609
  %v1611 = vrcp.pop %v1605
  %v1612 = vmul.f32 1.0, %v1611
  %v1613 = vrcp.pop %v1606
  %v1614 = vmul.f32 1.0, %v1613
  %v1615 = vpack.c.bf16 %v1610, %v1608
  %v1616 = vpack.c.bf16 %v1614, %v1612
  %v1619 = vcombine.high %v1615, %v1615
  %v1621 = vunpack.c.l.s4 1966171168
  %v1622 = vunpack.c.0.s8 %v1621
  %v1623 = vlaneseq
  %v1624 = vshrl.u32 %v1623, 7
  %v1625 = vsub.s32 %v1622, %v1624
  %v1626 = vrot.slane %v1615, %v1625
  %v1628 = vunpack.c.l.s4 1966171168
  %v1629 = vunpack.c.0.s8 %v1628
  %v1630 = vlaneseq
  %v1631 = vshrl.u32 %v1630, 7
  %v1632 = vsub.s32 %v1629, %v1631
  %v1633 = vrot.slane %v1619, %v1632
  %v1634 = vcombine.high %v1626, %v1626
  %v1635 = vcombine.high %v1633, %v1633
  %v1637 = vunpack.c.l.s4 1966171168
  %v1638 = vunpack.c.0.s8 %v1637
  %v1639 = vlaneseq
  %v1640 = vshrl.u32 %v1639, 7
  %v1641 = vsub.s32 %v1638, %v1640
  %v1642 = vrot.slane %v1626, %v1641
  %v1644 = vunpack.c.l.s4 1966171168
  %v1645 = vunpack.c.0.s8 %v1644
  %v1646 = vlaneseq
  %v1647 = vshrl.u32 %v1646, 7
  %v1648 = vsub.s32 %v1645, %v1647
  %v1649 = vrot.slane %v1633, %v1648
  %v1651 = vunpack.c.l.s4 1966171168
  %v1652 = vunpack.c.0.s8 %v1651
  %v1653 = vlaneseq
  %v1654 = vshrl.u32 %v1653, 7
  %v1655 = vsub.s32 %v1652, %v1654
  %v1656 = vrot.slane %v1634, %v1655
  %v1658 = vunpack.c.l.s4 1966171168
  %v1659 = vunpack.c.0.s8 %v1658
  %v1660 = vlaneseq
  %v1661 = vshrl.u32 %v1660, 7
  %v1662 = vsub.s32 %v1659, %v1661
  %v1663 = vrot.slane %v1635, %v1662
  %v1664 = vcombine.high %v1642, %v1642
  %v1665 = vcombine.high %v1649, %v1649
  %v1666 = vcombine.high %v1656, %v1656
  %v1667 = vcombine.high %v1663, %v1663
  %v1668 = vcombine.high %v1616, %v1616
  %v1670 = vunpack.c.l.s4 1966171168
  %v1671 = vunpack.c.0.s8 %v1670
  %v1672 = vlaneseq
  %v1673 = vshrl.u32 %v1672, 7
  %v1674 = vsub.s32 %v1671, %v1673
  %v1675 = vrot.slane %v1616, %v1674
  %v1677 = vunpack.c.l.s4 1966171168
  %v1678 = vunpack.c.0.s8 %v1677
  %v1679 = vlaneseq
  %v1680 = vshrl.u32 %v1679, 7
  %v1681 = vsub.s32 %v1678, %v1680
  %v1682 = vrot.slane %v1668, %v1681
  %v1683 = vcombine.high %v1675, %v1675
  %v1684 = vcombine.high %v1682, %v1682
  %v1686 = vunpack.c.l.s4 1966171168
  %v1687 = vunpack.c.0.s8 %v1686
  %v1688 = vlaneseq
  %v1689 = vshrl.u32 %v1688, 7
  %v1690 = vsub.s32 %v1687, %v1689
  %v1691 = vrot.slane %v1675, %v1690
  %v1693 = vunpack.c.l.s4 1966171168
  %v1694 = vunpack.c.0.s8 %v1693
  %v1695 = vlaneseq
  %v1696 = vshrl.u32 %v1695, 7
  %v1697 = vsub.s32 %v1694, %v1696
  %v1698 = vrot.slane %v1682, %v1697
  %v1700 = vunpack.c.l.s4 1966171168
  %v1701 = vunpack.c.0.s8 %v1700
  %v1702 = vlaneseq
  %v1703 = vshrl.u32 %v1702, 7
  %v1704 = vsub.s32 %v1701, %v1703
  %v1705 = vrot.slane %v1683, %v1704
  %v1707 = vunpack.c.l.s4 1966171168
  %v1708 = vunpack.c.0.s8 %v1707
  %v1709 = vlaneseq
  %v1710 = vshrl.u32 %v1709, 7
  %v1711 = vsub.s32 %v1708, %v1710
  %v1712 = vrot.slane %v1684, %v1711
  %v1713 = vcombine.high %v1691, %v1691
  %v1714 = vcombine.high %v1698, %v1698
  %v1715 = vcombine.high %v1705, %v1705
  %v1716 = vcombine.high %v1712, %v1712
  %v1717 = vunpack.i.l.s16 %v1642
  %v1718 = vunpack.i.h.s16 %v1642
  %v1719 = vunpack.i.l.s16 %v1656
  %v1720 = vunpack.i.h.s16 %v1656
  %v1721 = vunpack.i.l.s16 %v1664
  %v1722 = vunpack.i.h.s16 %v1664
  %v1723 = vunpack.i.l.s16 %v1666
  %v1724 = vunpack.i.h.s16 %v1666
  %v1725 = vunpack.i.l.s16 %v1649
  %v1726 = vunpack.i.h.s16 %v1649
  %v1727 = vunpack.i.l.s16 %v1663
  %v1728 = vunpack.i.h.s16 %v1663
  %v1729 = vunpack.i.l.s16 %v1665
  %v1730 = vunpack.i.h.s16 %v1665
  %v1731 = vunpack.i.l.s16 %v1667
  %v1732 = vunpack.i.h.s16 %v1667
  %v1733 = vunpack.i.l.s16 %v1691
  %v1734 = vunpack.i.h.s16 %v1691
  %v1735 = vunpack.i.l.s16 %v1705
  %v1736 = vunpack.i.h.s16 %v1705
  %v1737 = vunpack.i.l.s16 %v1713
  %v1738 = vunpack.i.h.s16 %v1713
  %v1739 = vunpack.i.l.s16 %v1715
  %v1740 = vunpack.i.h.s16 %v1715
  %v1741 = vunpack.i.l.s16 %v1698
  %v1742 = vunpack.i.h.s16 %v1698
  %v1743 = vunpack.i.l.s16 %v1712
  %v1744 = vunpack.i.h.s16 %v1712
  %v1745 = vunpack.i.l.s16 %v1714
  %v1746 = vunpack.i.h.s16 %v1714
  %v1747 = vunpack.i.l.s16 %v1716
  %v1748 = vunpack.i.h.s16 %v1716
  %v1749 = vpack.i.b16 %v1717, %v1717
  %v1750 = vpack.i.b16 %v1718, %v1718
  %v1751 = vpack.i.b16 %v1719, %v1719
  %v1752 = vpack.i.b16 %v1720, %v1720
  %v1753 = vpack.i.b16 %v1721, %v1721
  %v1754 = vpack.i.b16 %v1722, %v1722
  %v1755 = vpack.i.b16 %v1723, %v1723
  %v1756 = vpack.i.b16 %v1724, %v1724
  %v1757 = vpack.i.b16 %v1725, %v1725
  %v1758 = vpack.i.b16 %v1726, %v1726
  %v1759 = vpack.i.b16 %v1727, %v1727
  %v1760 = vpack.i.b16 %v1728, %v1728
  %v1761 = vpack.i.b16 %v1729, %v1729
  %v1762 = vpack.i.b16 %v1730, %v1730
  %v1763 = vpack.i.b16 %v1731, %v1731
  %v1764 = vpack.i.b16 %v1732, %v1732
  %v1765 = vpack.i.b16 %v1733, %v1733
  %v1766 = vpack.i.b16 %v1734, %v1734
  %v1767 = vpack.i.b16 %v1735, %v1735
  %v1768 = vpack.i.b16 %v1736, %v1736
  %v1769 = vpack.i.b16 %v1737, %v1737
  %v1770 = vpack.i.b16 %v1738, %v1738
  %v1771 = vpack.i.b16 %v1739, %v1739
  %v1772 = vpack.i.b16 %v1740, %v1740
  %v1773 = vpack.i.b16 %v1741, %v1741
  %v1774 = vpack.i.b16 %v1742, %v1742
  %v1775 = vpack.i.b16 %v1743, %v1743
  %v1776 = vpack.i.b16 %v1744, %v1744
  %v1777 = vpack.i.b16 %v1745, %v1745
  %v1778 = vpack.i.b16 %v1746, %v1746
  %v1779 = vpack.i.b16 %v1747, %v1747
  %v1780 = vpack.i.b16 %v1748, %v1748
  %vm1813 = vcmask 778240
  %vm1814 = vmand %vm1813, %vm16
  %v1815 = vld [vmem:[%s3] sm:$0x1]
  %v1816 = vsel %vm1814, %v1749, %v1815
  %1817 = vst [vmem:[%s3] sm:$0x1] %v1816
  %v1818 = vld [vmem:[%s3 + $0x1] sm:$0x1]
  %v1819 = vsel %vm1814, %v1750, %v1818
  %1820 = vst [vmem:[%s3 + $0x1] sm:$0x1] %v1819
  %v1821 = vld [vmem:[%s3 + $0x2] sm:$0x1]
  %v1822 = vsel %vm1814, %v1751, %v1821
  %1823 = vst [vmem:[%s3 + $0x2] sm:$0x1] %v1822
  %v1824 = vld [vmem:[%s3 + $0x3] sm:$0x1]
  %v1825 = vsel %vm1814, %v1752, %v1824
  %1826 = vst [vmem:[%s3 + $0x3] sm:$0x1] %v1825
  %v1827 = vld [vmem:[%s3 + $0x4] sm:$0x1]
  %v1828 = vsel %vm1814, %v1753, %v1827
  %1829 = vst [vmem:[%s3 + $0x4] sm:$0x1] %v1828
  %v1830 = vld [vmem:[%s3 + $0x5] sm:$0x1]
  %v1831 = vsel %vm1814, %v1754, %v1830
  %1832 = vst [vmem:[%s3 + $0x5] sm:$0x1] %v1831
  %v1833 = vld [vmem:[%s3 + $0x6] sm:$0x1]
  %v1834 = vsel %vm1814, %v1755, %v1833
  %1835 = vst [vmem:[%s3 + $0x6] sm:$0x1] %v1834
  %v1836 = vld [vmem:[%s3 + $0x7] sm:$0x1]
  %v1837 = vsel %vm1814, %v1756, %v1836
  %1838 = vst [vmem:[%s3 + $0x7] sm:$0x1] %v1837
  %v1839 = vld [vmem:[%s3 + $0x8] sm:$0x1]
  %v1840 = vsel %vm1814, %v1757, %v1839
  %1841 = vst [vmem:[%s3 + $0x8] sm:$0x1] %v1840
  %v1842 = vld [vmem:[%s3 + $0x9] sm:$0x1]
  %v1843 = vsel %vm1814, %v1758, %v1842
  %1844 = vst [vmem:[%s3 + $0x9] sm:$0x1] %v1843
  %v1845 = vld [vmem:[%s3 + $0xa] sm:$0x1]
  %v1846 = vsel %vm1814, %v1759, %v1845
  %1847 = vst [vmem:[%s3 + $0xa] sm:$0x1] %v1846
  %v1848 = vld [vmem:[%s3 + $0xb] sm:$0x1]
  %v1849 = vsel %vm1814, %v1760, %v1848
  %1850 = vst [vmem:[%s3 + $0xb] sm:$0x1] %v1849
  %v1851 = vld [vmem:[%s3 + $0xc] sm:$0x1]
  %v1852 = vsel %vm1814, %v1761, %v1851
  %1853 = vst [vmem:[%s3 + $0xc] sm:$0x1] %v1852
  %v1854 = vld [vmem:[%s3 + $0xd] sm:$0x1]
  %v1855 = vsel %vm1814, %v1762, %v1854
  %1856 = vst [vmem:[%s3 + $0xd] sm:$0x1] %v1855
  %v1857 = vld [vmem:[%s3 + $0xe] sm:$0x1]
  %v1858 = vsel %vm1814, %v1763, %v1857
  %1859 = vst [vmem:[%s3 + $0xe] sm:$0x1] %v1858
  %v1860 = vld [vmem:[%s3 + $0xf] sm:$0x1]
  %v1861 = vsel %vm1814, %v1764, %v1860
  %1862 = vst [vmem:[%s3 + $0xf] sm:$0x1] %v1861
  %v1863 = vld [vmem:[%s3 + $0x10] sm:$0x1]
  %v1864 = vsel %vm1814, %v1765, %v1863
  %1865 = vst [vmem:[%s3 + $0x10] sm:$0x1] %v1864
  %v1866 = vld [vmem:[%s3 + $0x11] sm:$0x1]
  %v1867 = vsel %vm1814, %v1766, %v1866
  %1868 = vst [vmem:[%s3 + $0x11] sm:$0x1] %v1867
  %v1869 = vld [vmem:[%s3 + $0x12] sm:$0x1]
  %v1870 = vsel %vm1814, %v1767, %v1869
  %1871 = vst [vmem:[%s3 + $0x12] sm:$0x1] %v1870
  %v1872 = vld [vmem:[%s3 + $0x13] sm:$0x1]
  %v1873 = vsel %vm1814, %v1768, %v1872
  %1874 = vst [vmem:[%s3 + $0x13] sm:$0x1] %v1873
  %v1875 = vld [vmem:[%s3 + $0x14] sm:$0x1]
  %v1876 = vsel %vm1814, %v1769, %v1875
  %1877 = vst [vmem:[%s3 + $0x14] sm:$0x1] %v1876
  %v1878 = vld [vmem:[%s3 + $0x15] sm:$0x1]
  %v1879 = vsel %vm1814, %v1770, %v1878
  %1880 = vst [vmem:[%s3 + $0x15] sm:$0x1] %v1879
  %v1881 = vld [vmem:[%s3 + $0x16] sm:$0x1]
  %v1882 = vsel %vm1814, %v1771, %v1881
  %1883 = vst [vmem:[%s3 + $0x16] sm:$0x1] %v1882
  %v1884 = vld [vmem:[%s3 + $0x17] sm:$0x1]
  %v1885 = vsel %vm1814, %v1772, %v1884
  %1886 = vst [vmem:[%s3 + $0x17] sm:$0x1] %v1885
  %v1887 = vld [vmem:[%s3 + $0x18] sm:$0x1]
  %v1888 = vsel %vm1814, %v1773, %v1887
  %1889 = vst [vmem:[%s3 + $0x18] sm:$0x1] %v1888
  %v1890 = vld [vmem:[%s3 + $0x19] sm:$0x1]
  %v1891 = vsel %vm1814, %v1774, %v1890
  %1892 = vst [vmem:[%s3 + $0x19] sm:$0x1] %v1891
  %v1893 = vld [vmem:[%s3 + $0x1a] sm:$0x1]
  %v1894 = vsel %vm1814, %v1775, %v1893
  %1895 = vst [vmem:[%s3 + $0x1a] sm:$0x1] %v1894
  %v1896 = vld [vmem:[%s3 + $0x1b] sm:$0x1]
  %v1897 = vsel %vm1814, %v1776, %v1896
  %1898 = vst [vmem:[%s3 + $0x1b] sm:$0x1] %v1897
  %v1899 = vld [vmem:[%s3 + $0x1c] sm:$0x1]
  %v1900 = vsel %vm1814, %v1777, %v1899
  %1901 = vst [vmem:[%s3 + $0x1c] sm:$0x1] %v1900
  %v1902 = vld [vmem:[%s3 + $0x1d] sm:$0x1]
  %v1903 = vsel %vm1814, %v1778, %v1902
  %1904 = vst [vmem:[%s3 + $0x1d] sm:$0x1] %v1903
  %v1905 = vld [vmem:[%s3 + $0x1e] sm:$0x1]
  %v1906 = vsel %vm1814, %v1779, %v1905
  %1907 = vst [vmem:[%s3 + $0x1e] sm:$0x1] %v1906
  %v1908 = vld [vmem:[%s3 + $0x1f] sm:$0x1]
  %v1909 = vsel %vm1814, %v1780, %v1908
  %1910 = vst [vmem:[%s3 + $0x1f] sm:$0x1] %v1909
  %v1911 = vld [vmem:[#allocation2] sm:$0xff]
  %v1912 = vld [vmem:[#allocation2 + $0x8] sm:$0xff]
  %v1913 = vld [vmem:[#allocation2 + $0x10] sm:$0xff]
  %v1914 = vld [vmem:[#allocation2 + $0x18] sm:$0xff]
  %v1915 = vld [vmem:[#allocation2 + $0x20] sm:$0xff]
  %v1916 = vld [vmem:[#allocation2 + $0x28] sm:$0xff]
  %v1917 = vld [vmem:[#allocation2 + $0x30] sm:$0x11]
  %v1918 = vld [vmem:[#allocation2 + $0x38] sm:$0x11]
  %v1919 = vld [vmem:[#allocation2 + $0x40] sm:$0x11]
  %v1920 = vld [vmem:[#allocation2 + $0x48] sm:$0xff]
  %v1921 = vld [vmem:[#allocation2 + $0x50] sm:$0xff]
  %v1922 = vld [vmem:[#allocation2 + $0x58] sm:$0xff]
  %v1923 = vld [vmem:[#allocation2 + $0x60] sm:$0xff]
  %v1924 = vld [vmem:[#allocation2 + $0x68] sm:$0xff]
  %v1925 = vld [vmem:[#allocation2 + $0x70] sm:$0xff]
  %v1926 = vld [vmem:[#allocation2 + $0x78] sm:$0x11]
  %v1927 = vld [vmem:[#allocation2 + $0x80] sm:$0x11]
  %v1928 = vld [vmem:[#allocation2 + $0x88] sm:$0x11]
  %v1930 = vshrl.u32 %v1911, 16
  %v1932 = vrot.slane %v1930, 4
  %v1933 = vshll.u32 %v1911, 16
  %v1935 = vrot.slane %v1933, 5
  %v1936 = vor.u32 %v1932, %v1935
  %v1937 = vrot.slane %v1936, 4
  %v1939 = vshll.u32 %v1914, 16
  %v1941 = vrot.slane %v1939, 5
  %v1942 = vsel %vm361, %v1937, %v1941
  %v1944 = vshrl.u32 %v1912, 16
  %v1946 = vrot.slane %v1944, 4
  %v1947 = vshll.u32 %v1912, 16
  %v1949 = vrot.slane %v1947, 5
  %v1950 = vor.u32 %v1946, %v1949
  %v1951 = vrot.slane %v1950, 4
  %v1953 = vshll.u32 %v1915, 16
  %v1955 = vrot.slane %v1953, 5
  %v1956 = vsel %vm361, %v1951, %v1955
  %v1958 = vshrl.u32 %v1913, 16
  %v1960 = vrot.slane %v1958, 4
  %v1961 = vshll.u32 %v1913, 16
  %v1963 = vrot.slane %v1961, 5
  %v1964 = vor.u32 %v1960, %v1963
  %v1965 = vrot.slane %v1964, 4
  %v1967 = vshll.u32 %v1916, 16
  %v1969 = vrot.slane %v1967, 5
  %v1970 = vsel %vm361, %v1965, %v1969
  %v1971 = vshrl.u32 %v1914, 16
  %v1973 = vrot.slane %v1971, 4
  %v1974 = vor.u32 %v1973, %v1941
  %v1975 = vrot.slane %v1974, 4
  %v1977 = vshll.u32 %v1917, 16
  %v1979 = vrot.slane %v1977, 5
  %v1980 = vsel %vm361, %v1975, %v1979
  %v1981 = vshrl.u32 %v1915, 16
  %v1983 = vrot.slane %v1981, 4
  %v1984 = vor.u32 %v1983, %v1955
  %v1985 = vrot.slane %v1984, 4
  %v1987 = vshll.u32 %v1918, 16
  %v1989 = vrot.slane %v1987, 5
  %v1990 = vsel %vm361, %v1985, %v1989
  %v1991 = vshrl.u32 %v1916, 16
  %v1993 = vrot.slane %v1991, 4
  %v1994 = vor.u32 %v1993, %v1969
  %v1995 = vrot.slane %v1994, 4
  %v1997 = vshll.u32 %v1919, 16
  %v1999 = vrot.slane %v1997, 5
  %v2000 = vsel %vm361, %v1995, %v1999
  %v2002 = vshrl.u32 %v1920, 16
  %v2004 = vrot.slane %v2002, 4
  %v2005 = vshll.u32 %v1920, 16
  %v2007 = vrot.slane %v2005, 5
  %v2008 = vor.u32 %v2004, %v2007
  %v2009 = vrot.slane %v2008, 4
  %v2011 = vshll.u32 %v1923, 16
  %v2013 = vrot.slane %v2011, 5
  %v2014 = vsel %vm361, %v2009, %v2013
  %v2016 = vshrl.u32 %v1921, 16
  %v2018 = vrot.slane %v2016, 4
  %v2019 = vshll.u32 %v1921, 16
  %v2021 = vrot.slane %v2019, 5
  %v2022 = vor.u32 %v2018, %v2021
  %v2023 = vrot.slane %v2022, 4
  %v2025 = vshll.u32 %v1924, 16
  %v2027 = vrot.slane %v2025, 5
  %v2028 = vsel %vm361, %v2023, %v2027
  %v2030 = vshrl.u32 %v1922, 16
  %v2032 = vrot.slane %v2030, 4
  %v2033 = vshll.u32 %v1922, 16
  %v2035 = vrot.slane %v2033, 5
  %v2036 = vor.u32 %v2032, %v2035
  %v2037 = vrot.slane %v2036, 4
  %v2039 = vshll.u32 %v1925, 16
  %v2041 = vrot.slane %v2039, 5
  %v2042 = vsel %vm361, %v2037, %v2041
  %v2043 = vshrl.u32 %v1923, 16
  %v2045 = vrot.slane %v2043, 4
  %v2046 = vor.u32 %v2045, %v2013
  %v2047 = vrot.slane %v2046, 4
  %v2049 = vshll.u32 %v1926, 16
  %v2051 = vrot.slane %v2049, 5
  %v2052 = vsel %vm361, %v2047, %v2051
  %v2053 = vshrl.u32 %v1924, 16
  %v2055 = vrot.slane %v2053, 4
  %v2056 = vor.u32 %v2055, %v2027
  %v2057 = vrot.slane %v2056, 4
  %v2059 = vshll.u32 %v1927, 16
  %v2061 = vrot.slane %v2059, 5
  %v2062 = vsel %vm361, %v2057, %v2061
  %v2063 = vshrl.u32 %v1925, 16
  %v2065 = vrot.slane %v2063, 4
  %v2066 = vor.u32 %v2065, %v2041
  %v2067 = vrot.slane %v2066, 4
  %v2069 = vshll.u32 %v1928, 16
  %v2071 = vrot.slane %v2069, 5
  %v2072 = vsel %vm361, %v2067, %v2071
  %s2073 = scalar_lea.vmem %s1, 768
  %v2074 = vld [vmem:[%s2073] sm:$0xf]
  %v2075 = vld [vmem:[%s2073 + $0x4] sm:$0xf]
  %v2076 = vld [vmem:[%s2073 + $0x8] sm:$0xf]
  %v2077 = vld [vmem:[%s2073 + $0xc] sm:$0xf]
  %v2078 = vld [vmem:[%s2073 + $0x10] sm:$0xf]
  %v2079 = vld [vmem:[%s2073 + $0x14] sm:$0xf]
  %v2080 = vld [vmem:[%s2073 + $0x18] sm:$0xf]
  %v2081 = vld [vmem:[%s2073 + $0x1c] sm:$0xf]
  %v2082 = vld [vmem:[%s2073 + $0x20] sm:$0xf]
  %v2083 = vld [vmem:[%s2073 + $0x24] sm:$0xf]
  %v2084 = vld [vmem:[%s2073 + $0x28] sm:$0xf]
  %v2085 = vld [vmem:[%s2073 + $0x2c] sm:$0xf]
  %v2086 = vld [vmem:[%s2073 + $0x30] sm:$0xf]
  %v2087 = vld [vmem:[%s2073 + $0x34] sm:$0xf]
  %v2088 = vld [vmem:[%s2073 + $0x38] sm:$0xf]
  %v2089 = vld [vmem:[%s2073 + $0x3c] sm:$0xf]
  %v2090 = vld [vmem:[%s2073 + $0x40] sm:$0xf]
  %v2091 = vld [vmem:[%s2073 + $0x44] sm:$0xf]
  %v2092 = vld [vmem:[%s2073 + $0x48] sm:$0xf]
  %v2093 = vld [vmem:[%s2073 + $0x4c] sm:$0xf]
  %v2094 = vld [vmem:[%s2073 + $0x50] sm:$0xf]
  %v2095 = vld [vmem:[%s2073 + $0x54] sm:$0xf]
  %v2096 = vld [vmem:[%s2073 + $0x58] sm:$0xf]
  %v2097 = vld [vmem:[%s2073 + $0x5c] sm:$0xf]
  %v2098 = vld [vmem:[%s2073 + $0x60] sm:$0xf]
  %v2099 = vld [vmem:[%s2073 + $0x64] sm:$0xf]
  %v2100 = vld [vmem:[%s2073 + $0x68] sm:$0xf]
  %v2101 = vld [vmem:[%s2073 + $0x6c] sm:$0xf]
  %v2102 = vld [vmem:[%s2073 + $0x70] sm:$0xf]
  %v2103 = vld [vmem:[%s2073 + $0x74] sm:$0xf]
  %v2104 = vld [vmem:[%s2073 + $0x78] sm:$0xf]
  %v2105 = vld [vmem:[%s2073 + $0x7c] sm:$0xf]
  %v2106 = vld [vmem:[%s2073 + $0x80] sm:$0xf]
  %v2107 = vld [vmem:[%s2073 + $0x84] sm:$0xf]
  %v2108 = vld [vmem:[%s2073 + $0x88] sm:$0xf]
  %v2109 = vld [vmem:[%s2073 + $0x8c] sm:$0xf]
  %v2110 = vld [vmem:[%s2073 + $0x90] sm:$0xf]
  %v2111 = vld [vmem:[%s2073 + $0x94] sm:$0xf]
  %v2112 = vld [vmem:[%s2073 + $0x98] sm:$0xf]
  %v2113 = vld [vmem:[%s2073 + $0x9c] sm:$0xf]
  %v2114 = vld [vmem:[%s2073 + $0xa0] sm:$0xf]
  %v2115 = vld [vmem:[%s2073 + $0xa4] sm:$0xf]
  %v2116 = vld [vmem:[%s2073 + $0xa8] sm:$0xf]
  %v2117 = vld [vmem:[%s2073 + $0xac] sm:$0xf]
  %v2118 = vld [vmem:[%s2073 + $0xb0] sm:$0xf]
  %v2119 = vld [vmem:[%s2073 + $0xb4] sm:$0xf]
  %v2120 = vld [vmem:[%s2073 + $0xb8] sm:$0xf]
  %v2121 = vld [vmem:[%s2073 + $0xbc] sm:$0xf]
  %v2122 = vld [vmem:[%s2073 + $0xc0] sm:$0xf]
  %v2123 = vld [vmem:[%s2073 + $0xc4] sm:$0xf]
  %v2124 = vld [vmem:[%s2073 + $0xc8] sm:$0xf]
  %v2125 = vld [vmem:[%s2073 + $0xcc] sm:$0xf]
  %v2126 = vld [vmem:[%s2073 + $0xd0] sm:$0xf]
  %v2127 = vld [vmem:[%s2073 + $0xd4] sm:$0xf]
  %v2128 = vld [vmem:[%s2073 + $0xd8] sm:$0xf]
  %v2129 = vld [vmem:[%s2073 + $0xdc] sm:$0xf]
  %v2130 = vld [vmem:[%s2073 + $0xe0] sm:$0xf]
  %v2131 = vld [vmem:[%s2073 + $0xe4] sm:$0xf]
  %v2132 = vld [vmem:[%s2073 + $0xe8] sm:$0xf]
  %v2133 = vld [vmem:[%s2073 + $0xec] sm:$0xf]
  %v2134 = vld [vmem:[%s2073 + $0xf0] sm:$0xf]
  %v2135 = vld [vmem:[%s2073 + $0xf4] sm:$0xf]
  %v2136 = vld [vmem:[%s2073 + $0xf8] sm:$0xf]
  %v2137 = vld [vmem:[%s2073 + $0xfc] sm:$0xf]
  %v2138 = vld [vmem:[%s2073 + $0x100] sm:$0xf]
  %v2139 = vld [vmem:[%s2073 + $0x104] sm:$0xf]
  %v2140 = vld [vmem:[%s2073 + $0x108] sm:$0xf]
  %v2141 = vld [vmem:[%s2073 + $0x10c] sm:$0xf]
  %v2142 = vld [vmem:[%s2073 + $0x110] sm:$0xf]
  %v2143 = vld [vmem:[%s2073 + $0x114] sm:$0xf]
  %v2144 = vld [vmem:[%s2073 + $0x118] sm:$0xf]
  %v2145 = vld [vmem:[%s2073 + $0x11c] sm:$0xf]
  %v2146 = vld [vmem:[%s2073 + $0x120] sm:$0xf]
  %v2147 = vld [vmem:[%s2073 + $0x124] sm:$0xf]
  %v2148 = vld [vmem:[%s2073 + $0x128] sm:$0xf]
  %v2149 = vld [vmem:[%s2073 + $0x12c] sm:$0xf]
  %v2150 = vld [vmem:[%s2073 + $0x130] sm:$0xf]
  %v2151 = vld [vmem:[%s2073 + $0x134] sm:$0xf]
  %v2152 = vld [vmem:[%s2073 + $0x138] sm:$0xf]
  %v2153 = vld [vmem:[%s2073 + $0x13c] sm:$0xf]
  %v2154 = vld [vmem:[%s2073 + $0x140] sm:$0xf]
  %v2155 = vld [vmem:[%s2073 + $0x144] sm:$0xf]
  %v2156 = vld [vmem:[%s2073 + $0x148] sm:$0xf]
  %v2157 = vld [vmem:[%s2073 + $0x14c] sm:$0xf]
  %v2158 = vld [vmem:[%s2073 + $0x150] sm:$0xf]
  %v2159 = vld [vmem:[%s2073 + $0x154] sm:$0xf]
  %v2160 = vld [vmem:[%s2073 + $0x158] sm:$0xf]
  %v2161 = vld [vmem:[%s2073 + $0x15c] sm:$0xf]
  %v2162 = vld [vmem:[%s2073 + $0x160] sm:$0xf]
  %v2163 = vld [vmem:[%s2073 + $0x164] sm:$0xf]
  %v2164 = vld [vmem:[%s2073 + $0x168] sm:$0xf]
  %v2165 = vld [vmem:[%s2073 + $0x16c] sm:$0xf]
  %v2166 = vld [vmem:[%s2073 + $0x170] sm:$0xf]
  %v2167 = vld [vmem:[%s2073 + $0x174] sm:$0xf]
  %v2168 = vld [vmem:[%s2073 + $0x178] sm:$0xf]
  %v2169 = vld [vmem:[%s2073 + $0x17c] sm:$0xf]
  %v2170 = vld [vmem:[#allocation2] sm:$0xee]
  %v2171 = vld [vmem:[#allocation2 + $0x8] sm:$0xee]
  %v2172 = vld [vmem:[#allocation2 + $0x10] sm:$0xee]
  %v2173 = vld [vmem:[#allocation2 + $0x48] sm:$0xee]
  %v2174 = vld [vmem:[#allocation2 + $0x50] sm:$0xee]
  %v2175 = vld [vmem:[#allocation2 + $0x58] sm:$0xee]
  %vm2194 = vcmask 1042432
  %vm2195 = vcmask 1046532
  %vm2196 = vmor %vm2194, %vm2195
  %v2197 = vrot.slane %v2170, 5
  %v2198 = vrot.slane %v2197, 4
  %v2199 = vrot.slane %v1914, 5
  %v2200 = vsel %vm2196, %v2198, %v2199
  %v2201 = vrot.slane %v2171, 5
  %v2202 = vrot.slane %v2201, 4
  %v2203 = vrot.slane %v1915, 5
  %v2204 = vsel %vm2196, %v2202, %v2203
  %v2205 = vrot.slane %v2172, 5
  %v2206 = vrot.slane %v2205, 4
  %v2207 = vrot.slane %v1916, 5
  %v2208 = vsel %vm2196, %v2206, %v2207
  %v2209 = vrot.slane %v2199, 4
  %v2210 = vrot.slane %v1917, 5
  %v2211 = vsel %vm2196, %v2209, %v2210
  %v2212 = vrot.slane %v2203, 4
  %v2213 = vrot.slane %v1918, 5
  %v2214 = vsel %vm2196, %v2212, %v2213
  %v2215 = vrot.slane %v2207, 4
  %v2216 = vrot.slane %v1919, 5
  %v2217 = vsel %vm2196, %v2215, %v2216
  %v2218 = vrot.slane %v2173, 5
  %v2219 = vrot.slane %v2218, 4
  %v2220 = vrot.slane %v1923, 5
  %v2221 = vsel %vm2196, %v2219, %v2220
  %v2222 = vrot.slane %v2174, 5
  %v2223 = vrot.slane %v2222, 4
  %v2224 = vrot.slane %v1924, 5
  %v2225 = vsel %vm2196, %v2223, %v2224
  %v2226 = vrot.slane %v2175, 5
  %v2227 = vrot.slane %v2226, 4
  %v2228 = vrot.slane %v1925, 5
  %v2229 = vsel %vm2196, %v2227, %v2228
  %v2230 = vrot.slane %v2220, 4
  %v2231 = vrot.slane %v1926, 5
  %v2232 = vsel %vm2196, %v2230, %v2231
  %v2233 = vrot.slane %v2224, 4
  %v2234 = vrot.slane %v1927, 5
  %v2235 = vsel %vm2196, %v2233, %v2234
  %v2236 = vrot.slane %v2228, 4
  %v2237 = vrot.slane %v1928, 5
  %v2238 = vsel %vm2196, %v2236, %v2237
  %s2239 = scalar_lea.vmem %s1, 1152
  %v2240 = vld [vmem:[%s2239] sm:$0xf]
  %v2241 = vld [vmem:[%s2239 + $0x4] sm:$0xf]
  %v2242 = vld [vmem:[%s2239 + $0x8] sm:$0xf]
  %v2243 = vld [vmem:[%s2239 + $0xc] sm:$0xf]
  %v2244 = vld [vmem:[%s2239 + $0x10] sm:$0xf]
  %v2245 = vld [vmem:[%s2239 + $0x14] sm:$0xf]
  %v2246 = vld [vmem:[%s2239 + $0x18] sm:$0xf]
  %v2247 = vld [vmem:[%s2239 + $0x1c] sm:$0xf]
  %v2248 = vld [vmem:[%s2239 + $0x20] sm:$0xf]
  %v2249 = vld [vmem:[%s2239 + $0x24] sm:$0xf]
  %v2250 = vld [vmem:[%s2239 + $0x28] sm:$0xf]
  %v2251 = vld [vmem:[%s2239 + $0x2c] sm:$0xf]
  %v2252 = vld [vmem:[%s2239 + $0x30] sm:$0xf]
  %v2253 = vld [vmem:[%s2239 + $0x34] sm:$0xf]
  %v2254 = vld [vmem:[%s2239 + $0x38] sm:$0xf]
  %v2255 = vld [vmem:[%s2239 + $0x3c] sm:$0xf]
  %v2256 = vld [vmem:[%s2239 + $0x40] sm:$0xf]
  %v2257 = vld [vmem:[%s2239 + $0x44] sm:$0xf]
  %v2258 = vld [vmem:[%s2239 + $0x48] sm:$0xf]
  %v2259 = vld [vmem:[%s2239 + $0x4c] sm:$0xf]
  %v2260 = vld [vmem:[%s2239 + $0x50] sm:$0xf]
  %v2261 = vld [vmem:[%s2239 + $0x54] sm:$0xf]
  %v2262 = vld [vmem:[%s2239 + $0x58] sm:$0xf]
  %v2263 = vld [vmem:[%s2239 + $0x5c] sm:$0xf]
  %v2264 = vld [vmem:[%s2239 + $0x60] sm:$0xf]
  %v2265 = vld [vmem:[%s2239 + $0x64] sm:$0xf]
  %v2266 = vld [vmem:[%s2239 + $0x68] sm:$0xf]
  %v2267 = vld [vmem:[%s2239 + $0x6c] sm:$0xf]
  %v2268 = vld [vmem:[%s2239 + $0x70] sm:$0xf]
  %v2269 = vld [vmem:[%s2239 + $0x74] sm:$0xf]
  %v2270 = vld [vmem:[%s2239 + $0x78] sm:$0xf]
  %v2271 = vld [vmem:[%s2239 + $0x7c] sm:$0xf]
  %v2272 = vld [vmem:[%s2239 + $0x80] sm:$0xf]
  %v2273 = vld [vmem:[%s2239 + $0x84] sm:$0xf]
  %v2274 = vld [vmem:[%s2239 + $0x88] sm:$0xf]
  %v2275 = vld [vmem:[%s2239 + $0x8c] sm:$0xf]
  %v2276 = vld [vmem:[%s2239 + $0x90] sm:$0xf]
  %v2277 = vld [vmem:[%s2239 + $0x94] sm:$0xf]
  %v2278 = vld [vmem:[%s2239 + $0x98] sm:$0xf]
  %v2279 = vld [vmem:[%s2239 + $0x9c] sm:$0xf]
  %v2280 = vld [vmem:[%s2239 + $0xa0] sm:$0xf]
  %v2281 = vld [vmem:[%s2239 + $0xa4] sm:$0xf]
  %v2282 = vld [vmem:[%s2239 + $0xa8] sm:$0xf]
  %v2283 = vld [vmem:[%s2239 + $0xac] sm:$0xf]
  %v2284 = vld [vmem:[%s2239 + $0xb0] sm:$0xf]
  %v2285 = vld [vmem:[%s2239 + $0xb4] sm:$0xf]
  %v2286 = vld [vmem:[%s2239 + $0xb8] sm:$0xf]
  %v2287 = vld [vmem:[%s2239 + $0xbc] sm:$0xf]
  %v2288 = vld [vmem:[%s2239 + $0xc0] sm:$0xf]
  %v2289 = vld [vmem:[%s2239 + $0xc4] sm:$0xf]
  %v2290 = vld [vmem:[%s2239 + $0xc8] sm:$0xf]
  %v2291 = vld [vmem:[%s2239 + $0xcc] sm:$0xf]
  %v2292 = vld [vmem:[%s2239 + $0xd0] sm:$0xf]
  %v2293 = vld [vmem:[%s2239 + $0xd4] sm:$0xf]
  %v2294 = vld [vmem:[%s2239 + $0xd8] sm:$0xf]
  %v2295 = vld [vmem:[%s2239 + $0xdc] sm:$0xf]
  %v2296 = vld [vmem:[%s2239 + $0xe0] sm:$0xf]
  %v2297 = vld [vmem:[%s2239 + $0xe4] sm:$0xf]
  %v2298 = vld [vmem:[%s2239 + $0xe8] sm:$0xf]
  %v2299 = vld [vmem:[%s2239 + $0xec] sm:$0xf]
  %v2300 = vld [vmem:[%s2239 + $0xf0] sm:$0xf]
  %v2301 = vld [vmem:[%s2239 + $0xf4] sm:$0xf]
  %v2302 = vld [vmem:[%s2239 + $0xf8] sm:$0xf]
  %v2303 = vld [vmem:[%s2239 + $0xfc] sm:$0xf]
  %v2304 = vld [vmem:[%s2239 + $0x100] sm:$0xf]
  %v2305 = vld [vmem:[%s2239 + $0x104] sm:$0xf]
  %v2306 = vld [vmem:[%s2239 + $0x108] sm:$0xf]
  %v2307 = vld [vmem:[%s2239 + $0x10c] sm:$0xf]
  %v2308 = vld [vmem:[%s2239 + $0x110] sm:$0xf]
  %v2309 = vld [vmem:[%s2239 + $0x114] sm:$0xf]
  %v2310 = vld [vmem:[%s2239 + $0x118] sm:$0xf]
  %v2311 = vld [vmem:[%s2239 + $0x11c] sm:$0xf]
  %v2312 = vld [vmem:[%s2239 + $0x120] sm:$0xf]
  %v2313 = vld [vmem:[%s2239 + $0x124] sm:$0xf]
  %v2314 = vld [vmem:[%s2239 + $0x128] sm:$0xf]
  %v2315 = vld [vmem:[%s2239 + $0x12c] sm:$0xf]
  %v2316 = vld [vmem:[%s2239 + $0x130] sm:$0xf]
  %v2317 = vld [vmem:[%s2239 + $0x134] sm:$0xf]
  %v2318 = vld [vmem:[%s2239 + $0x138] sm:$0xf]
  %v2319 = vld [vmem:[%s2239 + $0x13c] sm:$0xf]
  %v2320 = vld [vmem:[%s2239 + $0x140] sm:$0xf]
  %v2321 = vld [vmem:[%s2239 + $0x144] sm:$0xf]
  %v2322 = vld [vmem:[%s2239 + $0x148] sm:$0xf]
  %v2323 = vld [vmem:[%s2239 + $0x14c] sm:$0xf]
  %v2324 = vld [vmem:[%s2239 + $0x150] sm:$0xf]
  %v2325 = vld [vmem:[%s2239 + $0x154] sm:$0xf]
  %v2326 = vld [vmem:[%s2239 + $0x158] sm:$0xf]
  %v2327 = vld [vmem:[%s2239 + $0x15c] sm:$0xf]
  %v2328 = vld [vmem:[%s2239 + $0x160] sm:$0xf]
  %v2329 = vld [vmem:[%s2239 + $0x164] sm:$0xf]
  %v2330 = vld [vmem:[%s2239 + $0x168] sm:$0xf]
  %v2331 = vld [vmem:[%s2239 + $0x16c] sm:$0xf]
  %v2332 = vld [vmem:[%s2239 + $0x170] sm:$0xf]
  %v2333 = vld [vmem:[%s2239 + $0x174] sm:$0xf]
  %v2334 = vld [vmem:[%s2239 + $0x178] sm:$0xf]
  %v2335 = vld [vmem:[%s2239 + $0x17c] sm:$0xf]
  %v2336 = vunpack.c.l.b16 %v2200
  %v2337 = vunpack.c.h.b16 %v2200
  %v2338 = vunpack.c.l.b16 %v2204
  %v2339 = vunpack.c.h.b16 %v2204
  %v2340 = vunpack.c.l.b16 %v2208
  %v2341 = vunpack.c.h.b16 %v2208
  %v2342 = vunpack.c.l.b16 %v2211
  %v2343 = vunpack.c.h.b16 %v2211
  %v2344 = vunpack.c.l.b16 %v2214
  %v2345 = vunpack.c.h.b16 %v2214
  %v2346 = vunpack.c.l.b16 %v2217
  %v2347 = vunpack.c.h.b16 %v2217
  %v2348 = vunpack.c.l.b16 %v2221
  %v2349 = vunpack.c.h.b16 %v2221
  %v2350 = vunpack.c.l.b16 %v2225
  %v2351 = vunpack.c.h.b16 %v2225
  %v2352 = vunpack.c.l.b16 %v2229
  %v2353 = vunpack.c.h.b16 %v2229
  %v2354 = vunpack.c.l.b16 %v2232
  %v2355 = vunpack.c.h.b16 %v2232
  %v2356 = vunpack.c.l.b16 %v2235
  %v2357 = vunpack.c.h.b16 %v2235
  %v2358 = vunpack.c.l.b16 %v2238
  %v2359 = vunpack.c.h.b16 %v2238
  %v2360 = vpack.c.b16 %v2342, %v2336
  %v2361 = vpack.c.b16 %v2343, %v2337
  %v2362 = vpack.c.b16 %v2344, %v2338
  %v2363 = vpack.c.b16 %v2345, %v2339
  %v2364 = vpack.c.b16 %v2346, %v2340
  %v2365 = vpack.c.b16 %v2347, %v2341
  %v2366 = vpack.c.b16 %v2354, %v2348
  %v2367 = vpack.c.b16 %v2355, %v2349
  %v2368 = vpack.c.b16 %v2356, %v2350
  %v2369 = vpack.c.b16 %v2357, %v2351
  %v2370 = vpack.c.b16 %v2358, %v2352
  %v2371 = vpack.c.b16 %v2359, %v2353
  %v2480 = vunpack.c.l.b16 %v2240
  %v2481 = vunpack.c.l.b16 %v2241
  %v2482 = vunpack.c.l.b16 %v2242
  %v2483 = vunpack.c.l.b16 %v2243
  %v2484 = vunpack.c.l.b16 %v2244
  %v2485 = vunpack.c.l.b16 %v2245
  %v2486 = vunpack.c.l.b16 %v2246
  %v2487 = vunpack.c.l.b16 %v2247
  %v2488 = vunpack.c.l.b16 %v2248
  %v2489 = vunpack.c.l.b16 %v2249
  %v2490 = vunpack.c.l.b16 %v2250
  %v2491 = vunpack.c.l.b16 %v2251
  %v2492 = vunpack.c.l.b16 %v2252
  %v2493 = vunpack.c.l.b16 %v2253
  %v2494 = vunpack.c.l.b16 %v2254
  %v2495 = vunpack.c.l.b16 %v2255
  %v2496 = vunpack.c.l.b16 %v2256
  %v2497 = vunpack.c.l.b16 %v2257
  %v2498 = vunpack.c.l.b16 %v2258
  %v2499 = vunpack.c.l.b16 %v2259
  %v2500 = vunpack.c.l.b16 %v2260
  %v2501 = vunpack.c.l.b16 %v2261
  %v2502 = vunpack.c.l.b16 %v2262
  %v2503 = vunpack.c.l.b16 %v2263
  %v2504 = vunpack.c.l.b16 %v2264
  %v2505 = vunpack.c.l.b16 %v2265
  %v2506 = vunpack.c.l.b16 %v2266
  %v2507 = vunpack.c.l.b16 %v2267
  %v2508 = vunpack.c.l.b16 %v2268
  %v2509 = vunpack.c.l.b16 %v2269
  %v2510 = vunpack.c.l.b16 %v2270
  %v2511 = vunpack.c.l.b16 %v2271
  %v2512 = vunpack.c.l.b16 %v2272
  %v2513 = vunpack.c.l.b16 %v2273
  %v2514 = vunpack.c.l.b16 %v2274
  %v2515 = vunpack.c.l.b16 %v2275
  %v2516 = vunpack.c.l.b16 %v2276
  %v2517 = vunpack.c.l.b16 %v2277
  %v2518 = vunpack.c.l.b16 %v2278
  %v2519 = vunpack.c.l.b16 %v2279
  %v2520 = vunpack.c.l.b16 %v2280
  %v2521 = vunpack.c.l.b16 %v2281
  %v2522 = vunpack.c.l.b16 %v2282
  %v2523 = vunpack.c.l.b16 %v2283
  %v2524 = vunpack.c.l.b16 %v2284
  %v2525 = vunpack.c.l.b16 %v2285
  %v2526 = vunpack.c.l.b16 %v2286
  %v2527 = vunpack.c.l.b16 %v2287
  %v2528 = vunpack.c.l.b16 %v2288
  %v2529 = vunpack.c.l.b16 %v2289
  %v2530 = vunpack.c.l.b16 %v2290
  %v2531 = vunpack.c.l.b16 %v2291
  %v2532 = vunpack.c.l.b16 %v2292
  %v2533 = vunpack.c.l.b16 %v2293
  %v2534 = vunpack.c.l.b16 %v2294
  %v2535 = vunpack.c.l.b16 %v2295
  %v2536 = vunpack.c.l.b16 %v2296
  %v2537 = vunpack.c.l.b16 %v2297
  %v2538 = vunpack.c.l.b16 %v2298
  %v2539 = vunpack.c.l.b16 %v2299
  %v2540 = vunpack.c.l.b16 %v2300
  %v2541 = vunpack.c.l.b16 %v2301
  %v2542 = vunpack.c.l.b16 %v2302
  %v2543 = vunpack.c.l.b16 %v2303
  %v2544 = vunpack.c.l.b16 %v2304
  %v2545 = vunpack.c.l.b16 %v2305
  %v2546 = vunpack.c.l.b16 %v2306
  %v2547 = vunpack.c.l.b16 %v2307
  %v2548 = vunpack.c.l.b16 %v2308
  %v2549 = vunpack.c.l.b16 %v2309
  %v2550 = vunpack.c.l.b16 %v2310
  %v2551 = vunpack.c.l.b16 %v2311
  %v2552 = vunpack.c.l.b16 %v2312
  %v2553 = vunpack.c.l.b16 %v2313
  %v2554 = vunpack.c.l.b16 %v2314
  %v2555 = vunpack.c.l.b16 %v2315
  %v2556 = vunpack.c.l.b16 %v2316
  %v2557 = vunpack.c.l.b16 %v2317
  %v2558 = vunpack.c.l.b16 %v2318
  %v2559 = vunpack.c.l.b16 %v2319
  %v2560 = vunpack.c.l.b16 %v2320
  %v2561 = vunpack.c.l.b16 %v2321
  %v2562 = vunpack.c.l.b16 %v2322
  %v2563 = vunpack.c.l.b16 %v2323
  %v2564 = vunpack.c.l.b16 %v2324
  %v2565 = vunpack.c.l.b16 %v2325
  %v2566 = vunpack.c.l.b16 %v2326
  %v2567 = vunpack.c.l.b16 %v2327
  %v2568 = vunpack.c.l.b16 %v2328
  %v2569 = vunpack.c.l.b16 %v2329
  %v2570 = vunpack.c.l.b16 %v2330
  %v2571 = vunpack.c.l.b16 %v2331
  %v2572 = vunpack.c.l.b16 %v2332
  %v2573 = vunpack.c.l.b16 %v2333
  %v2574 = vunpack.c.l.b16 %v2334
  %v2575 = vunpack.c.l.b16 %v2335
  %v2576 = vpack.c.b16 %v2481, %v2480
  %v2577 = vpack.c.b16 %v2483, %v2482
  %v2578 = vpack.c.b16 %v2485, %v2484
  %v2579 = vpack.c.b16 %v2487, %v2486
  %v2580 = vpack.c.b16 %v2489, %v2488
  %v2581 = vpack.c.b16 %v2491, %v2490
  %v2582 = vpack.c.b16 %v2493, %v2492
  %v2583 = vpack.c.b16 %v2495, %v2494
  %v2584 = vpack.c.b16 %v2497, %v2496
  %v2585 = vpack.c.b16 %v2499, %v2498
  %v2586 = vpack.c.b16 %v2501, %v2500
  %v2587 = vpack.c.b16 %v2503, %v2502
  %v2588 = vpack.c.b16 %v2505, %v2504
  %v2589 = vpack.c.b16 %v2507, %v2506
  %v2590 = vpack.c.b16 %v2509, %v2508
  %v2591 = vpack.c.b16 %v2511, %v2510
  %v2592 = vpack.c.b16 %v2513, %v2512
  %v2593 = vpack.c.b16 %v2515, %v2514
  %v2594 = vpack.c.b16 %v2517, %v2516
  %v2595 = vpack.c.b16 %v2519, %v2518
  %v2596 = vpack.c.b16 %v2521, %v2520
  %v2597 = vpack.c.b16 %v2523, %v2522
  %v2598 = vpack.c.b16 %v2525, %v2524
  %v2599 = vpack.c.b16 %v2527, %v2526
  %v2600 = vpack.c.b16 %v2529, %v2528
  %v2601 = vpack.c.b16 %v2531, %v2530
  %v2602 = vpack.c.b16 %v2533, %v2532
  %v2603 = vpack.c.b16 %v2535, %v2534
  %v2604 = vpack.c.b16 %v2537, %v2536
  %v2605 = vpack.c.b16 %v2539, %v2538
  %v2606 = vpack.c.b16 %v2541, %v2540
  %v2607 = vpack.c.b16 %v2543, %v2542
  %v2608 = vpack.c.b16 %v2545, %v2544
  %v2609 = vpack.c.b16 %v2547, %v2546
  %v2610 = vpack.c.b16 %v2549, %v2548
  %v2611 = vpack.c.b16 %v2551, %v2550
  %v2612 = vpack.c.b16 %v2553, %v2552
  %v2613 = vpack.c.b16 %v2555, %v2554
  %v2614 = vpack.c.b16 %v2557, %v2556
  %v2615 = vpack.c.b16 %v2559, %v2558
  %v2616 = vpack.c.b16 %v2561, %v2560
  %v2617 = vpack.c.b16 %v2563, %v2562
  %v2618 = vpack.c.b16 %v2565, %v2564
  %v2619 = vpack.c.b16 %v2567, %v2566
  %v2620 = vpack.c.b16 %v2569, %v2568
  %v2621 = vpack.c.b16 %v2571, %v2570
  %v2622 = vpack.c.b16 %v2573, %v2572
  %v2623 = vpack.c.b16 %v2575, %v2574
  %2672 = vmatprep.subr.bf16.mxu0 0
  %2673 = vmatpush1.bf16.msra.mxu0 %v2576
  %2674 = vmatprep.subr.bf16.mxu0 0
  %2675 = vmatpush1.bf16.msra.mxu0 %v2577
  %2676 = vmatprep.subr.bf16.mxu0 0
  %2677 = vmatpush1.bf16.msra.mxu0 %v2578
  %2678 = vmatprep.subr.bf16.mxu0 0
  %2679 = vmatpush1.bf16.msra.mxu0 %v2579
  %2680 = vmatprep.subr.bf16.mxu0 0
  %2681 = vmatpush1.bf16.msra.mxu0 %v2580
  %2682 = vmatprep.subr.bf16.mxu0 0
  %2683 = vmatpush1.bf16.msra.mxu0 %v2581
  %2684 = vmatprep.subr.bf16.mxu0 0
  %2685 = vmatpush1.bf16.msra.mxu0 %v2582
  %2686 = vmatprep.subr.bf16.mxu0 0
  %2687 = vmatpush1.bf16.msra.mxu0 %v2583
  %2688 = vmatprep.subr.bf16.mxu0 0
  %2689 = vmatpush1.bf16.msra.mxu0 %v2584
  %2690 = vmatprep.subr.bf16.mxu0 0
  %2691 = vmatpush1.bf16.msra.mxu0 %v2585
  %2692 = vmatprep.subr.bf16.mxu0 0
  %2693 = vmatpush1.bf16.msra.mxu0 %v2586
  %2694 = vmatprep.subr.bf16.mxu0 0
  %2695 = vmatpush1.bf16.msra.mxu0 %v2587
  %2696 = vmatprep.subr.bf16.mxu0 0
  %2697 = vmatpush1.bf16.msra.mxu0 %v2588
  %2698 = vmatprep.subr.bf16.mxu0 0
  %2699 = vmatpush1.bf16.msra.mxu0 %v2589
  %2700 = vmatprep.subr.bf16.mxu0 0
  %2701 = vmatpush1.bf16.msra.mxu0 %v2590
  %2702 = vmatprep.subr.bf16.mxu0 0
  %2703 = vmatpush1.bf16.msra.mxu0 %v2591
  %2704 = vmatprep.mubr.bf16.mxu0 %v2361
  %2705 = vmatmul.mubr.bf16.gmra.mrb[0].mxu0 %v2360
  %v2706 = vpop.f32.mrb[0].mxu0
  %v2707 = vadd.f32 0.0, %v2706
  %v2708 = vpop.f32.mrb[0].mxu0
  %v2709 = vpop.f32.mrb[0].mxu0
  %v2710 = vadd.f32 0.0, %v2709
  %v2711 = vpop.f32.mrb[0].mxu0
  %2712 = vmatprep.mubr.bf16.mxu0 %v2367
  %2713 = vmatmul.mubr.bf16.gmra.mrb[0].mxu0 %v2366
  %v2714 = vpop.f32.mrb[0].mxu0
  %v2715 = vadd.f32 0.0, %v2714
  %v2716 = vpop.f32.mrb[0].mxu0
  %v2717 = vpop.f32.mrb[0].mxu0
  %v2718 = vadd.f32 0.0, %v2717
  %v2719 = vpop.f32.mrb[0].mxu0
  %2720 = vdwg.mxu0
  %2721 = vmatprep.subr.bf16.mxu0 0
  %2722 = vmatpush1.bf16.msra.mxu0 %v2592
  %2723 = vmatprep.subr.bf16.mxu0 0
  %2724 = vmatpush1.bf16.msra.mxu0 %v2593
  %2725 = vmatprep.subr.bf16.mxu0 0
  %2726 = vmatpush1.bf16.msra.mxu0 %v2594
  %2727 = vmatprep.subr.bf16.mxu0 0
  %2728 = vmatpush1.bf16.msra.mxu0 %v2595
  %2729 = vmatprep.subr.bf16.mxu0 0
  %2730 = vmatpush1.bf16.msra.mxu0 %v2596
  %2731 = vmatprep.subr.bf16.mxu0 0
  %2732 = vmatpush1.bf16.msra.mxu0 %v2597
  %2733 = vmatprep.subr.bf16.mxu0 0
  %2734 = vmatpush1.bf16.msra.mxu0 %v2598
  %2735 = vmatprep.subr.bf16.mxu0 0
  %2736 = vmatpush1.bf16.msra.mxu0 %v2599
  %2737 = vmatprep.subr.bf16.mxu0 0
  %2738 = vmatpush1.bf16.msra.mxu0 %v2600
  %2739 = vmatprep.subr.bf16.mxu0 0
  %2740 = vmatpush1.bf16.msra.mxu0 %v2601
  %2741 = vmatprep.subr.bf16.mxu0 0
  %2742 = vmatpush1.bf16.msra.mxu0 %v2602
  %2743 = vmatprep.subr.bf16.mxu0 0
  %2744 = vmatpush1.bf16.msra.mxu0 %v2603
  %2745 = vmatprep.subr.bf16.mxu0 0
  %2746 = vmatpush1.bf16.msra.mxu0 %v2604
  %2747 = vmatprep.subr.bf16.mxu0 0
  %2748 = vmatpush1.bf16.msra.mxu0 %v2605
  %2749 = vmatprep.subr.bf16.mxu0 0
  %2750 = vmatpush1.bf16.msra.mxu0 %v2606
  %2751 = vmatprep.subr.bf16.mxu0 0
  %2752 = vmatpush1.bf16.msra.mxu0 %v2607
  %2753 = vmatprep.mubr.bf16.mxu0 %v2363
  %2754 = vmatmul.mubr.bf16.gmra.mrb[0].mxu0 %v2362
  %v2755 = vpop.f32.mrb[0].mxu0
  %v2756 = vadd.f32 %v2707, %v2755
  %v2757 = vpop.f32.mrb[0].mxu0
  %v2758 = vpop.f32.mrb[0].mxu0
  %v2759 = vadd.f32 %v2710, %v2758
  %v2760 = vpop.f32.mrb[0].mxu0
  %2761 = vmatprep.mubr.bf16.mxu0 %v2369
  %2762 = vmatmul.mubr.bf16.gmra.mrb[0].mxu0 %v2368
  %v2763 = vpop.f32.mrb[0].mxu0
  %v2764 = vadd.f32 %v2715, %v2763
  %v2765 = vpop.f32.mrb[0].mxu0
  %v2766 = vpop.f32.mrb[0].mxu0
  %v2767 = vadd.f32 %v2718, %v2766
  %v2768 = vpop.f32.mrb[0].mxu0
  %2769 = vdwg.mxu0
  %2770 = vmatprep.subr.bf16.mxu0 0
  %2771 = vmatpush1.bf16.msra.mxu0 %v2608
  %2772 = vmatprep.subr.bf16.mxu0 0
  %2773 = vmatpush1.bf16.msra.mxu0 %v2609
  %2774 = vmatprep.subr.bf16.mxu0 0
  %2775 = vmatpush1.bf16.msra.mxu0 %v2610
  %2776 = vmatprep.subr.bf16.mxu0 0
  %2777 = vmatpush1.bf16.msra.mxu0 %v2611
  %2778 = vmatprep.subr.bf16.mxu0 0
  %2779 = vmatpush1.bf16.msra.mxu0 %v2612
  %2780 = vmatprep.subr.bf16.mxu0 0
  %2781 = vmatpush1.bf16.msra.mxu0 %v2613
  %2782 = vmatprep.subr.bf16.mxu0 0
  %2783 = vmatpush1.bf16.msra.mxu0 %v2614
  %2784 = vmatprep.subr.bf16.mxu0 0
  %2785 = vmatpush1.bf16.msra.mxu0 %v2615
  %2786 = vmatprep.subr.bf16.mxu0 0
  %2787 = vmatpush1.bf16.msra.mxu0 %v2616
  %2788 = vmatprep.subr.bf16.mxu0 0
  %2789 = vmatpush1.bf16.msra.mxu0 %v2617
  %2790 = vmatprep.subr.bf16.mxu0 0
  %2791 = vmatpush1.bf16.msra.mxu0 %v2618
  %2792 = vmatprep.subr.bf16.mxu0 0
  %2793 = vmatpush1.bf16.msra.mxu0 %v2619
  %2794 = vmatprep.subr.bf16.mxu0 0
  %2795 = vmatpush1.bf16.msra.mxu0 %v2620
  %2796 = vmatprep.subr.bf16.mxu0 0
  %2797 = vmatpush1.bf16.msra.mxu0 %v2621
  %2798 = vmatprep.subr.bf16.mxu0 0
  %2799 = vmatpush1.bf16.msra.mxu0 %v2622
  %2800 = vmatprep.subr.bf16.mxu0 0
  %2801 = vmatpush1.bf16.msra.mxu0 %v2623
  %2802 = vmatprep.mubr.bf16.mxu0 %v2365
  %2803 = vmatmul.mubr.bf16.gmra.mrb[0].mxu0 %v2364
  %v2804 = vpop.f32.mrb[0].mxu0
  %v2805 = vadd.f32 %v2756, %v2804
  %v2806 = vpop.f32.mrb[0].mxu0
  %v2807 = vpop.f32.mrb[0].mxu0
  %v2808 = vadd.f32 %v2759, %v2807
  %v2809 = vpop.f32.mrb[0].mxu0
  %2810 = vmatprep.mubr.bf16.mxu0 %v2371
  %2811 = vmatmul.mubr.bf16.gmra.mrb[0].mxu0 %v2370
  %v2812 = vpop.f32.mrb[0].mxu0
  %v2813 = vadd.f32 %v2764, %v2812
  %v2814 = vpop.f32.mrb[0].mxu0
  %v2815 = vpop.f32.mrb[0].mxu0
  %v2816 = vadd.f32 %v2767, %v2815
  %v2817 = vpop.f32.mrb[0].mxu0
  %2818 = vdwg.mxu0
  %v2819 = vunpack.c.l.b16 %v1942
  %v2820 = vunpack.c.h.b16 %v1942
  %v2821 = vunpack.c.l.b16 %v1956
  %v2822 = vunpack.c.h.b16 %v1956
  %v2823 = vunpack.c.l.b16 %v1970
  %v2824 = vunpack.c.h.b16 %v1970
  %v2825 = vunpack.c.l.b16 %v1980
  %v2826 = vunpack.c.h.b16 %v1980
  %v2827 = vunpack.c.l.b16 %v1990
  %v2828 = vunpack.c.h.b16 %v1990
  %v2829 = vunpack.c.l.b16 %v2000
  %v2830 = vunpack.c.h.b16 %v2000
  %v2831 = vunpack.c.l.b16 %v2014
  %v2832 = vunpack.c.h.b16 %v2014
  %v2833 = vunpack.c.l.b16 %v2028
  %v2834 = vunpack.c.h.b16 %v2028
  %v2835 = vunpack.c.l.b16 %v2042
  %v2836 = vunpack.c.h.b16 %v2042
  %v2837 = vunpack.c.l.b16 %v2052
  %v2838 = vunpack.c.h.b16 %v2052
  %v2839 = vunpack.c.l.b16 %v2062
  %v2840 = vunpack.c.h.b16 %v2062
  %v2841 = vunpack.c.l.b16 %v2072
  %v2842 = vunpack.c.h.b16 %v2072
  %v2843 = vpack.c.b16 %v2825, %v2819
  %v2844 = vpack.c.b16 %v2826, %v2820
  %v2845 = vpack.c.b16 %v2827, %v2821
  %v2846 = vpack.c.b16 %v2828, %v2822
  %v2847 = vpack.c.b16 %v2829, %v2823
  %v2848 = vpack.c.b16 %v2830, %v2824
  %v2849 = vpack.c.b16 %v2837, %v2831
  %v2850 = vpack.c.b16 %v2838, %v2832
  %v2851 = vpack.c.b16 %v2839, %v2833
  %v2852 = vpack.c.b16 %v2840, %v2834
  %v2853 = vpack.c.b16 %v2841, %v2835
  %v2854 = vpack.c.b16 %v2842, %v2836
  %v2963 = vunpack.c.l.b16 %v2074
  %v2964 = vunpack.c.l.b16 %v2075
  %v2965 = vunpack.c.l.b16 %v2076
  %v2966 = vunpack.c.l.b16 %v2077
  %v2967 = vunpack.c.l.b16 %v2078
  %v2968 = vunpack.c.l.b16 %v2079
  %v2969 = vunpack.c.l.b16 %v2080
  %v2970 = vunpack.c.l.b16 %v2081
  %v2971 = vunpack.c.l.b16 %v2082
  %v2972 = vunpack.c.l.b16 %v2083
  %v2973 = vunpack.c.l.b16 %v2084
  %v2974 = vunpack.c.l.b16 %v2085
  %v2975 = vunpack.c.l.b16 %v2086
  %v2976 = vunpack.c.l.b16 %v2087
  %v2977 = vunpack.c.l.b16 %v2088
  %v2978 = vunpack.c.l.b16 %v2089
  %v2979 = vunpack.c.l.b16 %v2090
  %v2980 = vunpack.c.l.b16 %v2091
  %v2981 = vunpack.c.l.b16 %v2092
  %v2982 = vunpack.c.l.b16 %v2093
  %v2983 = vunpack.c.l.b16 %v2094
  %v2984 = vunpack.c.l.b16 %v2095
  %v2985 = vunpack.c.l.b16 %v2096
  %v2986 = vunpack.c.l.b16 %v2097
  %v2987 = vunpack.c.l.b16 %v2098
  %v2988 = vunpack.c.l.b16 %v2099
  %v2989 = vunpack.c.l.b16 %v2100
  %v2990 = vunpack.c.l.b16 %v2101
  %v2991 = vunpack.c.l.b16 %v2102
  %v2992 = vunpack.c.l.b16 %v2103
  %v2993 = vunpack.c.l.b16 %v2104
  %v2994 = vunpack.c.l.b16 %v2105
  %v2995 = vunpack.c.l.b16 %v2106
  %v2996 = vunpack.c.l.b16 %v2107
  %v2997 = vunpack.c.l.b16 %v2108
  %v2998 = vunpack.c.l.b16 %v2109
  %v2999 = vunpack.c.l.b16 %v2110
  %v3000 = vunpack.c.l.b16 %v2111
  %v3001 = vunpack.c.l.b16 %v2112
  %v3002 = vunpack.c.l.b16 %v2113
  %v3003 = vunpack.c.l.b16 %v2114
  %v3004 = vunpack.c.l.b16 %v2115
  %v3005 = vunpack.c.l.b16 %v2116
  %v3006 = vunpack.c.l.b16 %v2117
  %v3007 = vunpack.c.l.b16 %v2118
  %v3008 = vunpack.c.l.b16 %v2119
  %v3009 = vunpack.c.l.b16 %v2120
  %v3010 = vunpack.c.l.b16 %v2121
  %v3011 = vunpack.c.l.b16 %v2122
  %v3012 = vunpack.c.l.b16 %v2123
  %v3013 = vunpack.c.l.b16 %v2124
  %v3014 = vunpack.c.l.b16 %v2125
  %v3015 = vunpack.c.l.b16 %v2126
  %v3016 = vunpack.c.l.b16 %v2127
  %v3017 = vunpack.c.l.b16 %v2128
  %v3018 = vunpack.c.l.b16 %v2129
  %v3019 = vunpack.c.l.b16 %v2130
  %v3020 = vunpack.c.l.b16 %v2131
  %v3021 = vunpack.c.l.b16 %v2132
  %v3022 = vunpack.c.l.b16 %v2133
  %v3023 = vunpack.c.l.b16 %v2134
  %v3024 = vunpack.c.l.b16 %v2135
  %v3025 = vunpack.c.l.b16 %v2136
  %v3026 = vunpack.c.l.b16 %v2137
  %v3027 = vunpack.c.l.b16 %v2138
  %v3028 = vunpack.c.l.b16 %v2139
  %v3029 = vunpack.c.l.b16 %v2140
  %v3030 = vunpack.c.l.b16 %v2141
  %v3031 = vunpack.c.l.b16 %v2142
  %v3032 = vunpack.c.l.b16 %v2143
  %v3033 = vunpack.c.l.b16 %v2144
  %v3034 = vunpack.c.l.b16 %v2145
  %v3035 = vunpack.c.l.b16 %v2146
  %v3036 = vunpack.c.l.b16 %v2147
  %v3037 = vunpack.c.l.b16 %v2148
  %v3038 = vunpack.c.l.b16 %v2149
  %v3039 = vunpack.c.l.b16 %v2150
  %v3040 = vunpack.c.l.b16 %v2151
  %v3041 = vunpack.c.l.b16 %v2152
  %v3042 = vunpack.c.l.b16 %v2153
  %v3043 = vunpack.c.l.b16 %v2154
  %v3044 = vunpack.c.l.b16 %v2155
  %v3045 = vunpack.c.l.b16 %v2156
  %v3046 = vunpack.c.l.b16 %v2157
  %v3047 = vunpack.c.l.b16 %v2158
  %v3048 = vunpack.c.l.b16 %v2159
  %v3049 = vunpack.c.l.b16 %v2160
  %v3050 = vunpack.c.l.b16 %v2161
  %v3051 = vunpack.c.l.b16 %v2162
  %v3052 = vunpack.c.l.b16 %v2163
  %v3053 = vunpack.c.l.b16 %v2164
  %v3054 = vunpack.c.l.b16 %v2165
  %v3055 = vunpack.c.l.b16 %v2166
  %v3056 = vunpack.c.l.b16 %v2167
  %v3057 = vunpack.c.l.b16 %v2168
  %v3058 = vunpack.c.l.b16 %v2169
  %v3059 = vpack.c.b16 %v2964, %v2963
  %v3060 = vpack.c.b16 %v2966, %v2965
  %v3061 = vpack.c.b16 %v2968, %v2967
  %v3062 = vpack.c.b16 %v2970, %v2969
  %v3063 = vpack.c.b16 %v2972, %v2971
  %v3064 = vpack.c.b16 %v2974, %v2973
  %v3065 = vpack.c.b16 %v2976, %v2975
  %v3066 = vpack.c.b16 %v2978, %v2977
  %v3067 = vpack.c.b16 %v2980, %v2979
  %v3068 = vpack.c.b16 %v2982, %v2981
  %v3069 = vpack.c.b16 %v2984, %v2983
  %v3070 = vpack.c.b16 %v2986, %v2985
  %v3071 = vpack.c.b16 %v2988, %v2987
  %v3072 = vpack.c.b16 %v2990, %v2989
  %v3073 = vpack.c.b16 %v2992, %v2991
  %v3074 = vpack.c.b16 %v2994, %v2993
  %v3075 = vpack.c.b16 %v2996, %v2995
  %v3076 = vpack.c.b16 %v2998, %v2997
  %v3077 = vpack.c.b16 %v3000, %v2999
  %v3078 = vpack.c.b16 %v3002, %v3001
  %v3079 = vpack.c.b16 %v3004, %v3003
  %v3080 = vpack.c.b16 %v3006, %v3005
  %v3081 = vpack.c.b16 %v3008, %v3007
  %v3082 = vpack.c.b16 %v3010, %v3009
  %v3083 = vpack.c.b16 %v3012, %v3011
  %v3084 = vpack.c.b16 %v3014, %v3013
  %v3085 = vpack.c.b16 %v3016, %v3015
  %v3086 = vpack.c.b16 %v3018, %v3017
  %v3087 = vpack.c.b16 %v3020, %v3019
  %v3088 = vpack.c.b16 %v3022, %v3021
  %v3089 = vpack.c.b16 %v3024, %v3023
  %v3090 = vpack.c.b16 %v3026, %v3025
  %v3091 = vpack.c.b16 %v3028, %v3027
  %v3092 = vpack.c.b16 %v3030, %v3029
  %v3093 = vpack.c.b16 %v3032, %v3031
  %v3094 = vpack.c.b16 %v3034, %v3033
  %v3095 = vpack.c.b16 %v3036, %v3035
  %v3096 = vpack.c.b16 %v3038, %v3037
  %v3097 = vpack.c.b16 %v3040, %v3039
  %v3098 = vpack.c.b16 %v3042, %v3041
  %v3099 = vpack.c.b16 %v3044, %v3043
  %v3100 = vpack.c.b16 %v3046, %v3045
  %v3101 = vpack.c.b16 %v3048, %v3047
  %v3102 = vpack.c.b16 %v3050, %v3049
  %v3103 = vpack.c.b16 %v3052, %v3051
  %v3104 = vpack.c.b16 %v3054, %v3053
  %v3105 = vpack.c.b16 %v3056, %v3055
  %v3106 = vpack.c.b16 %v3058, %v3057
  %3155 = vmatprep.subr.bf16.mxu0 0
  %3156 = vmatpush1.bf16.msra.mxu0 %v3059
  %3157 = vmatprep.subr.bf16.mxu0 0
  %3158 = vmatpush1.bf16.msra.mxu0 %v3060
  %3159 = vmatprep.subr.bf16.mxu0 0
  %3160 = vmatpush1.bf16.msra.mxu0 %v3061
  %3161 = vmatprep.subr.bf16.mxu0 0
  %3162 = vmatpush1.bf16.msra.mxu0 %v3062
  %3163 = vmatprep.subr.bf16.mxu0 0
  %3164 = vmatpush1.bf16.msra.mxu0 %v3063
  %3165 = vmatprep.subr.bf16.mxu0 0
  %3166 = vmatpush1.bf16.msra.mxu0 %v3064
  %3167 = vmatprep.subr.bf16.mxu0 0
  %3168 = vmatpush1.bf16.msra.mxu0 %v3065
  %3169 = vmatprep.subr.bf16.mxu0 0
  %3170 = vmatpush1.bf16.msra.mxu0 %v3066
  %3171 = vmatprep.subr.bf16.mxu0 0
  %3172 = vmatpush1.bf16.msra.mxu0 %v3067
  %3173 = vmatprep.subr.bf16.mxu0 0
  %3174 = vmatpush1.bf16.msra.mxu0 %v3068
  %3175 = vmatprep.subr.bf16.mxu0 0
  %3176 = vmatpush1.bf16.msra.mxu0 %v3069
  %3177 = vmatprep.subr.bf16.mxu0 0
  %3178 = vmatpush1.bf16.msra.mxu0 %v3070
  %3179 = vmatprep.subr.bf16.mxu0 0
  %3180 = vmatpush1.bf16.msra.mxu0 %v3071
  %3181 = vmatprep.subr.bf16.mxu0 0
  %3182 = vmatpush1.bf16.msra.mxu0 %v3072
  %3183 = vmatprep.subr.bf16.mxu0 0
  %3184 = vmatpush1.bf16.msra.mxu0 %v3073
  %3185 = vmatprep.subr.bf16.mxu0 0
  %3186 = vmatpush1.bf16.msra.mxu0 %v3074
  %3187 = vmatprep.mubr.bf16.mxu0 %v2844
  %3188 = vmatmul.mubr.bf16.gmra.mrb[0].mxu0 %v2843
  %v3189 = vpop.f32.mrb[0].mxu0
  %v3190 = vadd.f32 %v2805, %v3189
  %v3191 = vpop.f32.mrb[0].mxu0
  %v3192 = vpop.f32.mrb[0].mxu0
  %v3193 = vadd.f32 %v2808, %v3192
  %v3194 = vpop.f32.mrb[0].mxu0
  %3195 = vmatprep.mubr.bf16.mxu0 %v2850
  %3196 = vmatmul.mubr.bf16.gmra.mrb[0].mxu0 %v2849
  %v3197 = vpop.f32.mrb[0].mxu0
  %v3198 = vadd.f32 %v2813, %v3197
  %v3199 = vpop.f32.mrb[0].mxu0
  %v3200 = vpop.f32.mrb[0].mxu0
  %v3201 = vadd.f32 %v2816, %v3200
  %v3202 = vpop.f32.mrb[0].mxu0
  %3203 = vdwg.mxu0
  %3204 = vmatprep.subr.bf16.mxu0 0
  %3205 = vmatpush1.bf16.msra.mxu0 %v3075
  %3206 = vmatprep.subr.bf16.mxu0 0
  %3207 = vmatpush1.bf16.msra.mxu0 %v3076
  %3208 = vmatprep.subr.bf16.mxu0 0
  %3209 = vmatpush1.bf16.msra.mxu0 %v3077
  %3210 = vmatprep.subr.bf16.mxu0 0
  %3211 = vmatpush1.bf16.msra.mxu0 %v3078
  %3212 = vmatprep.subr.bf16.mxu0 0
  %3213 = vmatpush1.bf16.msra.mxu0 %v3079
  %3214 = vmatprep.subr.bf16.mxu0 0
  %3215 = vmatpush1.bf16.msra.mxu0 %v3080
  %3216 = vmatprep.subr.bf16.mxu0 0
  %3217 = vmatpush1.bf16.msra.mxu0 %v3081
  %3218 = vmatprep.subr.bf16.mxu0 0
  %3219 = vmatpush1.bf16.msra.mxu0 %v3082
  %3220 = vmatprep.subr.bf16.mxu0 0
  %3221 = vmatpush1.bf16.msra.mxu0 %v3083
  %3222 = vmatprep.subr.bf16.mxu0 0
  %3223 = vmatpush1.bf16.msra.mxu0 %v3084
  %3224 = vmatprep.subr.bf16.mxu0 0
  %3225 = vmatpush1.bf16.msra.mxu0 %v3085
  %3226 = vmatprep.subr.bf16.mxu0 0
  %3227 = vmatpush1.bf16.msra.mxu0 %v3086
  %3228 = vmatprep.subr.bf16.mxu0 0
  %3229 = vmatpush1.bf16.msra.mxu0 %v3087
  %3230 = vmatprep.subr.bf16.mxu0 0
  %3231 = vmatpush1.bf16.msra.mxu0 %v3088
  %3232 = vmatprep.subr.bf16.mxu0 0
  %3233 = vmatpush1.bf16.msra.mxu0 %v3089
  %3234 = vmatprep.subr.bf16.mxu0 0
  %3235 = vmatpush1.bf16.msra.mxu0 %v3090
  %3236 = vmatprep.mubr.bf16.mxu0 %v2846
  %3237 = vmatmul.mubr.bf16.gmra.mrb[0].mxu0 %v2845
  %v3238 = vpop.f32.mrb[0].mxu0
  %v3239 = vadd.f32 %v3190, %v3238
  %v3240 = vpop.f32.mrb[0].mxu0
  %v3241 = vpop.f32.mrb[0].mxu0
  %v3242 = vadd.f32 %v3193, %v3241
  %v3243 = vpop.f32.mrb[0].mxu0
  %3244 = vmatprep.mubr.bf16.mxu0 %v2852
  %3245 = vmatmul.mubr.bf16.gmra.mrb[0].mxu0 %v2851
  %v3246 = vpop.f32.mrb[0].mxu0
  %v3247 = vadd.f32 %v3198, %v3246
  %v3248 = vpop.f32.mrb[0].mxu0
  %v3249 = vpop.f32.mrb[0].mxu0
  %v3250 = vadd.f32 %v3201, %v3249
  %v3251 = vpop.f32.mrb[0].mxu0
  %3252 = vdwg.mxu0
  %3253 = vmatprep.subr.bf16.mxu0 0
  %3254 = vmatpush1.bf16.msra.mxu0 %v3091
  %3255 = vmatprep.subr.bf16.mxu0 0
  %3256 = vmatpush1.bf16.msra.mxu0 %v3092
  %3257 = vmatprep.subr.bf16.mxu0 0
  %3258 = vmatpush1.bf16.msra.mxu0 %v3093
  %3259 = vmatprep.subr.bf16.mxu0 0
  %3260 = vmatpush1.bf16.msra.mxu0 %v3094
  %3261 = vmatprep.subr.bf16.mxu0 0
  %3262 = vmatpush1.bf16.msra.mxu0 %v3095
  %3263 = vmatprep.subr.bf16.mxu0 0
  %3264 = vmatpush1.bf16.msra.mxu0 %v3096
  %3265 = vmatprep.subr.bf16.mxu0 0
  %3266 = vmatpush1.bf16.msra.mxu0 %v3097
  %3267 = vmatprep.subr.bf16.mxu0 0
  %3268 = vmatpush1.bf16.msra.mxu0 %v3098
  %3269 = vmatprep.subr.bf16.mxu0 0
  %3270 = vmatpush1.bf16.msra.mxu0 %v3099
  %3271 = vmatprep.subr.bf16.mxu0 0
  %3272 = vmatpush1.bf16.msra.mxu0 %v3100
  %3273 = vmatprep.subr.bf16.mxu0 0
  %3274 = vmatpush1.bf16.msra.mxu0 %v3101
  %3275 = vmatprep.subr.bf16.mxu0 0
  %3276 = vmatpush1.bf16.msra.mxu0 %v3102
  %3277 = vmatprep.subr.bf16.mxu0 0
  %3278 = vmatpush1.bf16.msra.mxu0 %v3103
  %3279 = vmatprep.subr.bf16.mxu0 0
  %3280 = vmatpush1.bf16.msra.mxu0 %v3104
  %3281 = vmatprep.subr.bf16.mxu0 0
  %3282 = vmatpush1.bf16.msra.mxu0 %v3105
  %3283 = vmatprep.subr.bf16.mxu0 0
  %3284 = vmatpush1.bf16.msra.mxu0 %v3106
  %3285 = vmatprep.mubr.bf16.mxu0 %v2848
  %3286 = vmatmul.mubr.bf16.gmra.mrb[0].mxu0 %v2847
  %v3287 = vpop.f32.mrb[0].mxu0
  %v3288 = vadd.f32 %v3239, %v3287
  %v3289 = vpop.f32.mrb[0].mxu0
  %v3290 = vpop.f32.mrb[0].mxu0
  %v3291 = vadd.f32 %v3242, %v3290
  %v3292 = vpop.f32.mrb[0].mxu0
  %3293 = vmatprep.mubr.bf16.mxu0 %v2854
  %3294 = vmatmul.mubr.bf16.gmra.mrb[0].mxu0 %v2853
  %v3295 = vpop.f32.mrb[0].mxu0
  %v3296 = vadd.f32 %v3247, %v3295
  %v3297 = vpop.f32.mrb[0].mxu0
  %v3298 = vpop.f32.mrb[0].mxu0
  %v3299 = vadd.f32 %v3250, %v3298
  %v3300 = vpop.f32.mrb[0].mxu0
  %3301 = vdwg.mxu0
  %v3302 = vadd.f32 %v3288, %v1585
  %v3303 = vadd.f32 %v3291, %v1585
  %v3304 = vadd.f32 %v3296, %v1585
  %v3305 = vadd.f32 %v3299, %v1585
  %v3306 = vxor.u32 %v3302, 2147483648
  %v3307 = vxor.u32 %v3303, 2147483648
  %v3308 = vxor.u32 %v3304, 2147483648
  %v3309 = vxor.u32 %v3305, 2147483648
  %v3310 = vmul.f32 %v3306, 1.442695
  %v3311 = vpow.pop %v3310
  %v3312 = vmul.f32 %v3307, 1.442695
  %v3313 = vpow.pop %v3312
  %v3314 = vmul.f32 %v3308, 1.442695
  %v3315 = vpow.pop %v3314
  %v3316 = vmul.f32 %v3309, 1.442695
  %v3317 = vpow.pop %v3316
  %v3318 = vadd.f32 %v3311, 1.0
  %v3319 = vadd.f32 %v3313, 1.0
  %v3320 = vadd.f32 %v3315, 1.0
  %v3321 = vadd.f32 %v3317, 1.0
  %v3322 = vrcp.pop %v3318
  %v3323 = vmul.f32 1.0, %v3322
  %v3324 = vrcp.pop %v3319
  %v3325 = vmul.f32 1.0, %v3324
  %v3326 = vrcp.pop %v3320
  %v3327 = vmul.f32 1.0, %v3326
  %v3328 = vrcp.pop %v3321
  %v3329 = vmul.f32 1.0, %v3328
  %v3330 = vpack.c.bf16 %v3325, %v3323
  %v3331 = vpack.c.bf16 %v3329, %v3327
  %v3334 = vcombine.high %v3330, %v3330
  %v3336 = vunpack.c.l.s4 1966171168
  %v3337 = vunpack.c.0.s8 %v3336
  %v3338 = vlaneseq
  %v3339 = vshrl.u32 %v3338, 7
  %v3340 = vsub.s32 %v3337, %v3339
  %v3341 = vrot.slane %v3330, %v3340
  %v3343 = vunpack.c.l.s4 1966171168
  %v3344 = vunpack.c.0.s8 %v3343
  %v3345 = vlaneseq
  %v3346 = vshrl.u32 %v3345, 7
  %v3347 = vsub.s32 %v3344, %v3346
  %v3348 = vrot.slane %v3334, %v3347
  %v3349 = vcombine.high %v3341, %v3341
  %v3350 = vcombine.high %v3348, %v3348
  %v3352 = vunpack.c.l.s4 1966171168
  %v3353 = vunpack.c.0.s8 %v3352
  %v3354 = vlaneseq
  %v3355 = vshrl.u32 %v3354, 7
  %v3356 = vsub.s32 %v3353, %v3355
  %v3357 = vrot.slane %v3341, %v3356
  %v3359 = vunpack.c.l.s4 1966171168
  %v3360 = vunpack.c.0.s8 %v3359
  %v3361 = vlaneseq
  %v3362 = vshrl.u32 %v3361, 7
  %v3363 = vsub.s32 %v3360, %v3362
  %v3364 = vrot.slane %v3348, %v3363
  %v3366 = vunpack.c.l.s4 1966171168
  %v3367 = vunpack.c.0.s8 %v3366
  %v3368 = vlaneseq
  %v3369 = vshrl.u32 %v3368, 7
  %v3370 = vsub.s32 %v3367, %v3369
  %v3371 = vrot.slane %v3349, %v3370
  %v3373 = vunpack.c.l.s4 1966171168
  %v3374 = vunpack.c.0.s8 %v3373
  %v3375 = vlaneseq
  %v3376 = vshrl.u32 %v3375, 7
  %v3377 = vsub.s32 %v3374, %v3376
  %v3378 = vrot.slane %v3350, %v3377
  %v3379 = vcombine.high %v3357, %v3357
  %v3380 = vcombine.high %v3364, %v3364
  %v3381 = vcombine.high %v3371, %v3371
  %v3382 = vcombine.high %v3378, %v3378
  %v3383 = vcombine.high %v3331, %v3331
  %v3385 = vunpack.c.l.s4 1966171168
  %v3386 = vunpack.c.0.s8 %v3385
  %v3387 = vlaneseq
  %v3388 = vshrl.u32 %v3387, 7
  %v3389 = vsub.s32 %v3386, %v3388
  %v3390 = vrot.slane %v3331, %v3389
  %v3392 = vunpack.c.l.s4 1966171168
  %v3393 = vunpack.c.0.s8 %v3392
  %v3394 = vlaneseq
  %v3395 = vshrl.u32 %v3394, 7
  %v3396 = vsub.s32 %v3393, %v3395
  %v3397 = vrot.slane %v3383, %v3396
  %v3398 = vcombine.high %v3390, %v3390
  %v3399 = vcombine.high %v3397, %v3397
  %v3401 = vunpack.c.l.s4 1966171168
  %v3402 = vunpack.c.0.s8 %v3401
  %v3403 = vlaneseq
  %v3404 = vshrl.u32 %v3403, 7
  %v3405 = vsub.s32 %v3402, %v3404
  %v3406 = vrot.slane %v3390, %v3405
  %v3408 = vunpack.c.l.s4 1966171168
  %v3409 = vunpack.c.0.s8 %v3408
  %v3410 = vlaneseq
  %v3411 = vshrl.u32 %v3410, 7
  %v3412 = vsub.s32 %v3409, %v3411
  %v3413 = vrot.slane %v3397, %v3412
  %v3415 = vunpack.c.l.s4 1966171168
  %v3416 = vunpack.c.0.s8 %v3415
  %v3417 = vlaneseq
  %v3418 = vshrl.u32 %v3417, 7
  %v3419 = vsub.s32 %v3416, %v3418
  %v3420 = vrot.slane %v3398, %v3419
  %v3422 = vunpack.c.l.s4 1966171168
  %v3423 = vunpack.c.0.s8 %v3422
  %v3424 = vlaneseq
  %v3425 = vshrl.u32 %v3424, 7
  %v3426 = vsub.s32 %v3423, %v3425
  %v3427 = vrot.slane %v3399, %v3426
  %v3428 = vcombine.high %v3406, %v3406
  %v3429 = vcombine.high %v3413, %v3413
  %v3430 = vcombine.high %v3420, %v3420
  %v3431 = vcombine.high %v3427, %v3427
  %v3432 = vunpack.i.l.s16 %v3357
  %v3433 = vunpack.i.h.s16 %v3357
  %v3434 = vunpack.i.l.s16 %v3371
  %v3435 = vunpack.i.h.s16 %v3371
  %v3436 = vunpack.i.l.s16 %v3379
  %v3437 = vunpack.i.h.s16 %v3379
  %v3438 = vunpack.i.l.s16 %v3381
  %v3439 = vunpack.i.h.s16 %v3381
  %v3440 = vunpack.i.l.s16 %v3364
  %v3441 = vunpack.i.h.s16 %v3364
  %v3442 = vunpack.i.l.s16 %v3378
  %v3443 = vunpack.i.h.s16 %v3378
  %v3444 = vunpack.i.l.s16 %v3380
  %v3445 = vunpack.i.h.s16 %v3380
  %v3446 = vunpack.i.l.s16 %v3382
  %v3447 = vunpack.i.h.s16 %v3382
  %v3448 = vunpack.i.l.s16 %v3406
  %v3449 = vunpack.i.h.s16 %v3406
  %v3450 = vunpack.i.l.s16 %v3420
  %v3451 = vunpack.i.h.s16 %v3420
  %v3452 = vunpack.i.l.s16 %v3428
  %v3453 = vunpack.i.h.s16 %v3428
  %v3454 = vunpack.i.l.s16 %v3430
  %v3455 = vunpack.i.h.s16 %v3430
  %v3456 = vunpack.i.l.s16 %v3413
  %v3457 = vunpack.i.h.s16 %v3413
  %v3458 = vunpack.i.l.s16 %v3427
  %v3459 = vunpack.i.h.s16 %v3427
  %v3460 = vunpack.i.l.s16 %v3429
  %v3461 = vunpack.i.h.s16 %v3429
  %v3462 = vunpack.i.l.s16 %v3431
  %v3463 = vunpack.i.h.s16 %v3431
  %v3464 = vpack.i.b16 %v3432, %v3432
  %v3465 = vpack.i.b16 %v3433, %v3433
  %v3466 = vpack.i.b16 %v3434, %v3434
  %v3467 = vpack.i.b16 %v3435, %v3435
  %v3468 = vpack.i.b16 %v3436, %v3436
  %v3469 = vpack.i.b16 %v3437, %v3437
  %v3470 = vpack.i.b16 %v3438, %v3438
  %v3471 = vpack.i.b16 %v3439, %v3439
  %v3472 = vpack.i.b16 %v3440, %v3440
  %v3473 = vpack.i.b16 %v3441, %v3441
  %v3474 = vpack.i.b16 %v3442, %v3442
  %v3475 = vpack.i.b16 %v3443, %v3443
  %v3476 = vpack.i.b16 %v3444, %v3444
  %v3477 = vpack.i.b16 %v3445, %v3445
  %v3478 = vpack.i.b16 %v3446, %v3446
  %v3479 = vpack.i.b16 %v3447, %v3447
  %v3480 = vpack.i.b16 %v3448, %v3448
  %v3481 = vpack.i.b16 %v3449, %v3449
  %v3482 = vpack.i.b16 %v3450, %v3450
  %v3483 = vpack.i.b16 %v3451, %v3451
  %v3484 = vpack.i.b16 %v3452, %v3452
  %v3485 = vpack.i.b16 %v3453, %v3453
  %v3486 = vpack.i.b16 %v3454, %v3454
  %v3487 = vpack.i.b16 %v3455, %v3455
  %v3488 = vpack.i.b16 %v3456, %v3456
  %v3489 = vpack.i.b16 %v3457, %v3457
  %v3490 = vpack.i.b16 %v3458, %v3458
  %v3491 = vpack.i.b16 %v3459, %v3459
  %v3492 = vpack.i.b16 %v3460, %v3460
  %v3493 = vpack.i.b16 %v3461, %v3461
  %v3494 = vpack.i.b16 %v3462, %v3462
  %v3495 = vpack.i.b16 %v3463, %v3463
  %vm3528 = vmand %vm1813, %vm40
  %v3529 = vld [vmem:[%s3] sm:$0x1]
  %v3530 = vsel %vm3528, %v3464, %v3529
  %3531 = vst [vmem:[%s3] sm:$0x1] %v3530
  %v3532 = vld [vmem:[%s3 + $0x1] sm:$0x1]
  %v3533 = vsel %vm3528, %v3465, %v3532
  %3534 = vst [vmem:[%s3 + $0x1] sm:$0x1] %v3533
  %v3535 = vld [vmem:[%s3 + $0x2] sm:$0x1]
  %v3536 = vsel %vm3528, %v3466, %v3535
  %3537 = vst [vmem:[%s3 + $0x2] sm:$0x1] %v3536
  %v3538 = vld [vmem:[%s3 + $0x3] sm:$0x1]
  %v3539 = vsel %vm3528, %v3467, %v3538
  %3540 = vst [vmem:[%s3 + $0x3] sm:$0x1] %v3539
  %v3541 = vld [vmem:[%s3 + $0x4] sm:$0x1]
  %v3542 = vsel %vm3528, %v3468, %v3541
  %3543 = vst [vmem:[%s3 + $0x4] sm:$0x1] %v3542
  %v3544 = vld [vmem:[%s3 + $0x5] sm:$0x1]
  %v3545 = vsel %vm3528, %v3469, %v3544
  %3546 = vst [vmem:[%s3 + $0x5] sm:$0x1] %v3545
  %v3547 = vld [vmem:[%s3 + $0x6] sm:$0x1]
  %v3548 = vsel %vm3528, %v3470, %v3547
  %3549 = vst [vmem:[%s3 + $0x6] sm:$0x1] %v3548
  %v3550 = vld [vmem:[%s3 + $0x7] sm:$0x1]
  %v3551 = vsel %vm3528, %v3471, %v3550
  %3552 = vst [vmem:[%s3 + $0x7] sm:$0x1] %v3551
  %v3553 = vld [vmem:[%s3 + $0x8] sm:$0x1]
  %v3554 = vsel %vm3528, %v3472, %v3553
  %3555 = vst [vmem:[%s3 + $0x8] sm:$0x1] %v3554
  %v3556 = vld [vmem:[%s3 + $0x9] sm:$0x1]
  %v3557 = vsel %vm3528, %v3473, %v3556
  %3558 = vst [vmem:[%s3 + $0x9] sm:$0x1] %v3557
  %v3559 = vld [vmem:[%s3 + $0xa] sm:$0x1]
  %v3560 = vsel %vm3528, %v3474, %v3559
  %3561 = vst [vmem:[%s3 + $0xa] sm:$0x1] %v3560
  %v3562 = vld [vmem:[%s3 + $0xb] sm:$0x1]
  %v3563 = vsel %vm3528, %v3475, %v3562
  %3564 = vst [vmem:[%s3 + $0xb] sm:$0x1] %v3563
  %v3565 = vld [vmem:[%s3 + $0xc] sm:$0x1]
  %v3566 = vsel %vm3528, %v3476, %v3565
  %3567 = vst [vmem:[%s3 + $0xc] sm:$0x1] %v3566
  %v3568 = vld [vmem:[%s3 + $0xd] sm:$0x1]
  %v3569 = vsel %vm3528, %v3477, %v3568
  %3570 = vst [vmem:[%s3 + $0xd] sm:$0x1] %v3569
  %v3571 = vld [vmem:[%s3 + $0xe] sm:$0x1]
  %v3572 = vsel %vm3528, %v3478, %v3571
  %3573 = vst [vmem:[%s3 + $0xe] sm:$0x1] %v3572
  %v3574 = vld [vmem:[%s3 + $0xf] sm:$0x1]
  %v3575 = vsel %vm3528, %v3479, %v3574
  %3576 = vst [vmem:[%s3 + $0xf] sm:$0x1] %v3575
  %v3577 = vld [vmem:[%s3 + $0x10] sm:$0x1]
  %v3578 = vsel %vm3528, %v3480, %v3577
  %3579 = vst [vmem:[%s3 + $0x10] sm:$0x1] %v3578
  %v3580 = vld [vmem:[%s3 + $0x11] sm:$0x1]
  %v3581 = vsel %vm3528, %v3481, %v3580
  %3582 = vst [vmem:[%s3 + $0x11] sm:$0x1] %v3581
  %v3583 = vld [vmem:[%s3 + $0x12] sm:$0x1]
  %v3584 = vsel %vm3528, %v3482, %v3583
  %3585 = vst [vmem:[%s3 + $0x12] sm:$0x1] %v3584
  %v3586 = vld [vmem:[%s3 + $0x13] sm:$0x1]
  %v3587 = vsel %vm3528, %v3483, %v3586
  %3588 = vst [vmem:[%s3 + $0x13] sm:$0x1] %v3587
  %v3589 = vld [vmem:[%s3 + $0x14] sm:$0x1]
  %v3590 = vsel %vm3528, %v3484, %v3589
  %3591 = vst [vmem:[%s3 + $0x14] sm:$0x1] %v3590
  %v3592 = vld [vmem:[%s3 + $0x15] sm:$0x1]
  %v3593 = vsel %vm3528, %v3485, %v3592
  %3594 = vst [vmem:[%s3 + $0x15] sm:$0x1] %v3593
  %v3595 = vld [vmem:[%s3 + $0x16] sm:$0x1]
  %v3596 = vsel %vm3528, %v3486, %v3595
  %3597 = vst [vmem:[%s3 + $0x16] sm:$0x1] %v3596
  %v3598 = vld [vmem:[%s3 + $0x17] sm:$0x1]
  %v3599 = vsel %vm3528, %v3487, %v3598
  %3600 = vst [vmem:[%s3 + $0x17] sm:$0x1] %v3599
  %v3601 = vld [vmem:[%s3 + $0x18] sm:$0x1]
  %v3602 = vsel %vm3528, %v3488, %v3601
  %3603 = vst [vmem:[%s3 + $0x18] sm:$0x1] %v3602
  %v3604 = vld [vmem:[%s3 + $0x19] sm:$0x1]
  %v3605 = vsel %vm3528, %v3489, %v3604
  %3606 = vst [vmem:[%s3 + $0x19] sm:$0x1] %v3605
  %v3607 = vld [vmem:[%s3 + $0x1a] sm:$0x1]
  %v3608 = vsel %vm3528, %v3490, %v3607
  %3609 = vst [vmem:[%s3 + $0x1a] sm:$0x1] %v3608
  %v3610 = vld [vmem:[%s3 + $0x1b] sm:$0x1]
  %v3611 = vsel %vm3528, %v3491, %v3610
  %3612 = vst [vmem:[%s3 + $0x1b] sm:$0x1] %v3611
  %v3613 = vld [vmem:[%s3 + $0x1c] sm:$0x1]
  %v3614 = vsel %vm3528, %v3492, %v3613
  %3615 = vst [vmem:[%s3 + $0x1c] sm:$0x1] %v3614
  %v3616 = vld [vmem:[%s3 + $0x1d] sm:$0x1]
  %v3617 = vsel %vm3528, %v3493, %v3616
  %3618 = vst [vmem:[%s3 + $0x1d] sm:$0x1] %v3617
  %v3619 = vld [vmem:[%s3 + $0x1e] sm:$0x1]
  %v3620 = vsel %vm3528, %v3494, %v3619
  %3621 = vst [vmem:[%s3 + $0x1e] sm:$0x1] %v3620
  %v3622 = vld [vmem:[%s3 + $0x1f] sm:$0x1]
  %v3623 = vsel %vm3528, %v3495, %v3622
  %3624 = vst [vmem:[%s3 + $0x1f] sm:$0x1] %v3623
  // Predicated region
  $region14: #{forward.5} parent=0 // pred_check
    _
  $region15: #{forward.5} parent=0 // pred_check_branch
    %3626 = sbr.rel (0) target = $region17
  $region16: #{forward.5} parent=0 // pred_region
    _
  $region17: #{forward.5} parent=0 // pred_fallthru
    _
  // Predicated region
  $region18: #{forward.5} parent=0 // pred_check
    _
  $region19: #{forward.5} parent=0 // pred_check_branch
    %3628 = sbr.rel (0) target = $region21
  $region20: #{forward.5} parent=0 // pred_region
    _
  $region21: #{forward.5} parent=0 // pred_fallthru
    _

</llo_original>
